<compile_context>
chip_gen: v7x
topology: tpu7x:2x2x1
jax: 0.10.0
libtpu: 0.0.40
codegen_flags: <defaults>
</compile_context>

<pallas_src>
import functools

import jax
import jax.numpy as jnp
from jax.experimental import pallas as pl
from jax.experimental.pallas import tpu as pltpu


# ----------------------------------------------------------------------------
# In-kernel conv helper (shared by both kernels)
# ----------------------------------------------------------------------------
def _accumulate_conv(x_ref, w_ref, acc_ref, *, taps, groups, s, Ho, Wo, cin):
    """Accumulate a 3x3 conv as grouped shifted bf16 matmuls into acc_ref (f32 VMEM).

    x_ref : (s*s, Hph, Wph, cin) stride-phase-decomposed padded input, bf16
    w_ref : (9*cin, Cout)        BN-scale-folded weights (tap-major), bf16
    Taps are grouped along the contraction axis (K_group = group*cin ~ 256).
    Returns the centre-tap (1,1) LHS slab for reuse by a fused 1x1 conv.
    """
    hw = Ho * Wo
    center = None
    k = 0
    first = True
    for gn in groups:
        slabs = []
        for m in range(gn):
            i, j = taps[k + m]
            p = (i % s) * s + (j % s)          # stride-phase holding this tap
            di, dj = i // s, j // s            # unit-stride window offset
            win = x_ref[p, di:di + Ho, dj:dj + Wo, :].reshape(hw, cin)
            if (i, j) == (1, 1):
                center = win
            slabs.append(win)
        lhs = slabs[0] if gn == 1 else jnp.concatenate(slabs, axis=-1)
        prod = jnp.dot(lhs, w_ref[k * cin:(k + gn) * cin, :],
                       preferred_element_type=jnp.float32)
        if first:
            acc_ref[...] = prod                # first group initializes (no zero-fill pass)
            first = False
        else:
            acc_ref[...] += prod
        k += gn
    return center


# ----------------------------------------------------------------------------
# Pallas kernels
# ----------------------------------------------------------------------------
def _conv1_kernel(x_ref, w_ref, b_ref, r_ref, acc_ref,
                  *, taps, groups, s, Ho, Wo, cin):
    """conv3x3(stride) + folded BN + ReLU (identity-shortcut variant)."""
    _accumulate_conv(x_ref, w_ref, acc_ref, taps=taps, groups=groups,
                     s=s, Ho=Ho, Wo=Wo, cin=cin)
    r_ref[0] = jnp.maximum(acc_ref[...] + b_ref[...], 0.0).astype(r_ref.dtype)


def _conv1_shortcut_kernel(x_ref, w_ref, b_ref, wsc_ref, bsc_ref,
                           r_ref, sc_ref, acc_ref,
                           *, taps, groups, s, Ho, Wo, cin):
    """conv3x3(stride)+BN+ReLU and the fused 1x1(stride) shortcut conv + BN."""
    center = _accumulate_conv(x_ref, w_ref, acc_ref, taps=taps, groups=groups,
                              s=s, Ho=Ho, Wo=Wo, cin=cin)
    r_ref[0] = jnp.maximum(acc_ref[...] + b_ref[...], 0.0).astype(r_ref.dtype)
    # The 1x1 conv at stride s reads x[oh*s, ow*s] == padded-x centre tap (1,1).
    sc = jnp.dot(center, wsc_ref[...],
                 preferred_element_type=jnp.float32) + bsc_ref[...]
    sc_ref[0] = sc.astype(sc_ref.dtype)


def _conv2_se_gate_kernel(x_ref, w_ref, b_ref, sc_ref,
                          w1_ref, b1_ref, w2_ref, b2_ref,
                          o_ref, acc_ref, *, taps, groups, Ho, Wo, cin):
    """conv3x3(s=1)+BN fused with avg-pool + SE MLP + sigmoid gate + shortcut + ReLU."""
    _accumulate_conv(x_ref, w_ref, acc_ref, taps=taps, groups=groups,
                     s=1, Ho=Ho, Wo=Wo, cin=cin)
    res = acc_ref[...] + b_ref[...]                       # (HW, C) f32 residual
    # Global average pool (AvgPool2d over the full extent) from the f32 accumulator.
    pool = jnp.mean(res, axis=0, keepdims=True)           # (1, C) f32
    pool8 = jnp.broadcast_to(pool, (8, res.shape[1])).astype(jnp.bfloat16)
    h = jnp.dot(pool8, w1_ref[...],
                preferred_element_type=jnp.float32) + b1_ref[...]
    h = jnp.maximum(h, 0.0)
    z = jnp.dot(h.astype(jnp.bfloat16), w2_ref[...],
                preferred_element_type=jnp.float32) + b2_ref[...]
    gate = jax.nn.sigmoid(z[0:1, :])                      # (1, C)
    sc = sc_ref[0].astype(jnp.float32)                    # (HW, C)
    o_ref[0] = jnp.maximum(gate * res + sc, 0.0).astype(o_ref.dtype)


# ----------------------------------------------------------------------------
# Wrappers (layout plumbing: one pad/transpose pass + weight folding)
# ----------------------------------------------------------------------------
def _phase_decompose(x, pad, s):
    """Pad once (bf16 cast fused) and split into s*s stride phases.

    Returns ((B*s*s, Hph, Wph, C) bf16, Hph, Wph, s*s); single XLA pass over x.
    """
    B, H, W, C = x.shape
    Hph = -(-(H + 2 * pad) // s)
    Wph = -(-(W + 2 * pad) // s)
    xq = jnp.pad(x.astype(jnp.bfloat16),
                 ((0, 0), (pad, s * Hph - H - pad), (pad, s * Wph - W - pad), (0, 0)))
    if s > 1:
        xq = xq.reshape(B, Hph, s, Wph, s, C).transpose(0, 2, 4, 1, 3, 5)
        xq = xq.reshape(B * s * s, Hph, Wph, C)
    return xq, Hph, Wph, s * s


def _fold_conv3_weights(w, bn_scale):
    """(Cout,Cin,3,3) PyTorch weights * BN scale -> (9*Cin, Cout) bf16, tap-major."""
    cout, cin, kh, kw = w.shape
    wf = w.astype(jnp.float32) * bn_scale[:, None, None, None]
    return wf.transpose(2, 3, 1, 0).reshape(kh * kw * cin, cout).astype(jnp.bfloat16)


def _tap_groups(n_taps, cin, k_target=256):
    g = max(1, min(n_taps, k_target // cin))
    return tuple(min(g, n_taps - k) for k in range(0, n_taps, g))


def conv1_bn_relu(x, w, bn_s, bn_b, stride, wsc=None, sc_s=None, sc_b=None):
    """conv3x3(stride)+BN1+ReLU with the projection shortcut (1x1 conv + BN) fused.

    x: (B,H,W,Cin) f32.  Returns (r1, shortcut) as (B,Ho,Wo,Cout) bf16;
    shortcut is None when no projection shortcut is requested.
    """
    B, H, W, Cin = x.shape
    Cout = w.shape[0]
    s = stride
    Ho = (H - 1) // s + 1
    Wo = (W - 1) // s + 1
    hw = Ho * Wo
    xs, Hph, Wph, P = _phase_decompose(x, pad=1, s=s)
    wm = _fold_conv3_weights(w, bn_s)
    bb = bn_b.reshape(1, Cout).astype(jnp.float32)
    taps = tuple((i, j) for i in range(3) for j in range(3))
    groups = _tap_groups(len(taps), Cin)

    in_specs = [
        pl.BlockSpec((P, Hph, Wph, Cin), lambda b: (b, 0, 0, 0)),
        pl.BlockSpec((9 * Cin, Cout), lambda b: (0, 0)),
        pl.BlockSpec((1, Cout), lambda b: (0, 0)),
    ]
    scratch = [pltpu.VMEM((hw, Cout), jnp.float32)]
    cparams = pltpu.CompilerParams(dimension_semantics=("parallel",))

    if wsc is None:
        kern = functools.partial(_conv1_kernel, taps=taps, groups=groups,
                                 s=s, Ho=Ho, Wo=Wo, cin=Cin)
        r1 = pl.pallas_call(
            kern,
            out_shape=jax.ShapeDtypeStruct((B, hw, Cout), jnp.bfloat16),
            grid=(B,),
            in_specs=in_specs,
            out_specs=pl.BlockSpec((1, hw, Cout), lambda b: (b, 0, 0)),
            scratch_shapes=scratch,
            compiler_params=cparams,
        )(xs, wm, bb)
        return r1.reshape(B, Ho, Wo, Cout), None

    wscm = (wsc.astype(jnp.float32) * sc_s[:, None, None, None])[:, :, 0, 0]
    wscm = wscm.transpose(1, 0).astype(jnp.bfloat16)          # (Cin, Cout)
    bscm = sc_b.reshape(1, Cout).astype(jnp.float32)
    kern = functools.partial(_conv1_shortcut_kernel, taps=taps, groups=groups,
                             s=s, Ho=Ho, Wo=Wo, cin=Cin)
    r1, sc = pl.pallas_call(
        kern,
        out_shape=(jax.ShapeDtypeStruct((B, hw, Cout), jnp.bfloat16),
                   jax.ShapeDtypeStruct((B, hw, Cout), jnp.bfloat16)),
        grid=(B,),
        in_specs=in_specs + [
            pl.BlockSpec((Cin, Cout), lambda b: (0, 0)),
            pl.BlockSpec((1, Cout), lambda b: (0, 0)),
        ],
        out_specs=(pl.BlockSpec((1, hw, Cout), lambda b: (b, 0, 0)),
                   pl.BlockSpec((1, hw, Cout), lambda b: (b, 0, 0))),
        scratch_shapes=scratch,
        compiler_params=cparams,
    )(xs, wm, bb, wscm, bscm)
    return r1.reshape(B, Ho, Wo, Cout), sc.reshape(B, Ho, Wo, Cout)


def conv2_se_gate(r1, shortcut, w, bn_s, bn_b, fc1_w, fc1_b, fc2_w, fc2_b):
    """conv3x3(s=1)+BN2 fused with global avg-pool, SE MLP, gate, shortcut add, ReLU."""
    B, H, W, C = r1.shape
    hw = H * W
    xs, Hph, Wph, P = _phase_decompose(r1, pad=1, s=1)
    wm = _fold_conv3_weights(w, bn_s)
    bb = bn_b.reshape(1, C).astype(jnp.float32)
    Cr = fc1_w.shape[0]
    w1 = fc1_w.transpose(1, 0).astype(jnp.bfloat16)           # (C, Cr)
    b1 = fc1_b.reshape(1, Cr).astype(jnp.float32)
    w2 = fc2_w.transpose(1, 0).astype(jnp.bfloat16)           # (Cr, C)
    b2 = fc2_b.reshape(1, C).astype(jnp.float32)
    sc2 = shortcut.astype(jnp.bfloat16).reshape(B, hw, C)
    taps = tuple((i, j) for i in range(3) for j in range(3))
    groups = _tap_groups(len(taps), C)
    kern = functools.partial(_conv2_se_gate_kernel, taps=taps, groups=groups,
                             Ho=H, Wo=W, cin=C)
    out = pl.pallas_call(
        kern,
        out_shape=jax.ShapeDtypeStruct((B, hw, C), jnp.float32),
        grid=(B,),
        in_specs=[
            pl.BlockSpec((P, Hph, Wph, C), lambda b: (b, 0, 0, 0)),
            pl.BlockSpec((9 * C, C), lambda b: (0, 0)),
            pl.BlockSpec((1, C), lambda b: (0, 0)),
            pl.BlockSpec((1, hw, C), lambda b: (b, 0, 0)),
            pl.BlockSpec((C, Cr), lambda b: (0, 0)),
            pl.BlockSpec((1, Cr), lambda b: (0, 0)),
            pl.BlockSpec((Cr, C), lambda b: (0, 0)),
            pl.BlockSpec((1, C), lambda b: (0, 0)),
        ],
        out_specs=pl.BlockSpec((1, hw, C), lambda b: (b, 0, 0)),
        scratch_shapes=[pltpu.VMEM((hw, C), jnp.float32)],
        compiler_params=pltpu.CompilerParams(dimension_semantics=("parallel",)),
    )(xs, wm, bb, sc2, w1, b1, w2, b2)
    return out.reshape(B, H, W, C)


# ----------------------------------------------------------------------------
# Parameter construction (deterministic, in-script)
# ----------------------------------------------------------------------------
def init_conv(key, cout, cin, k):
    fan_in = cin * k * k
    return jax.random.normal(key, (cout, cin, k, k), jnp.float32) * (2.0 / fan_in) ** 0.5


def init_bn_folded(key, c, eps=1e-5):
    k1, k2, k3, k4 = jax.random.split(key, 4)
    gamma = 1.0 + 0.1 * jax.random.normal(k1, (c,), jnp.float32)
    beta = 0.1 * jax.random.normal(k2, (c,), jnp.float32)
    mean = 0.1 * jax.random.normal(k3, (c,), jnp.float32)
    var = 1.0 + 0.1 * jax.random.uniform(k4, (c,), jnp.float32)
    scale = gamma / jnp.sqrt(var + eps)
    bias = beta - mean * scale
    return scale, bias


def init_linear(key, cin, cout):
    k1, k2 = jax.random.split(key)
    bound = 1.0 / (cin ** 0.5)
    w = jax.random.uniform(k1, (cout, cin), jnp.float32, -bound, bound)
    b = jax.random.uniform(k2, (cout,), jnp.float32, -bound, bound)
    return w, b


def build_block_params(key, in_c, out_c, stride):
    p = {}
    key, k = jax.random.split(key); p["conv1_w"] = init_conv(k, out_c, in_c, 3)
    key, k = jax.random.split(key); p["bn1_s"], p["bn1_b"] = init_bn_folded(k, out_c)
    key, k = jax.random.split(key); p["conv2_w"] = init_conv(k, out_c, out_c, 3)
    key, k = jax.random.split(key); p["bn2_s"], p["bn2_b"] = init_bn_folded(k, out_c)
    if stride != 1 or in_c != out_c:
        key, k = jax.random.split(key); p["sc_w"] = init_conv(k, out_c, in_c, 1)
        key, k = jax.random.split(key); p["sc_s"], p["sc_b"] = init_bn_folded(k, out_c)
    key, k = jax.random.split(key); p["fc1_w"], p["fc1_b"] = init_linear(k, out_c, out_c // 16)
    key, k = jax.random.split(key); p["fc2_w"], p["fc2_b"] = init_linear(k, out_c // 16, out_c)
    return p


# ----------------------------------------------------------------------------
# BasicBlock forward (matches the PyTorch module, inference semantics)
# ----------------------------------------------------------------------------
def basic_block_forward(x_nchw, p, *, stride, has_shortcut):
    x = jnp.transpose(x_nchw.astype(jnp.float32), (0, 2, 3, 1))     # NCHW -> NHWC
    if has_shortcut:
        r1, sc = conv1_bn_relu(x, p["conv1_w"], p["bn1_s"], p["bn1_b"], stride,
                               p["sc_w"], p["sc_s"], p["sc_b"])
    else:
        r1, _ = conv1_bn_relu(x, p["conv1_w"], p["bn1_s"], p["bn1_b"], stride)
        sc = x.astype(jnp.bfloat16)          # identity shortcut (stride==1, same C)
    out = conv2_se_gate(r1, sc, p["conv2_w"], p["bn2_s"], p["bn2_b"],
                        p["fc1_w"], p["fc1_b"], p["fc2_w"], p["fc2_b"])
    return jnp.transpose(out, (0, 3, 1, 2))                         # NHWC -> NCHW


# ----------------------------------------------------------------------------
if __name__ == "__main__":
    key = jax.random.PRNGKey(0)
    kp, kx = jax.random.split(key)

    # BasicBlock(in_channel=64, out_channels=128, stride=2): residual map is
    # 16x16, so the module's AvgPool2d(16) is the global mean -- consistent.
    in_c, out_c, stride = 64, 128, 2
    params = build_block_params(kp, in_c, out_c, stride)
    x = jax.random.normal(kx, (2, in_c, 32, 32), jnp.float32)

    fwd = jax.jit(functools.partial(basic_block_forward,
                                    stride=stride, has_shortcut=True))
    out = jax.block_until_ready(fwd(x, params))

    assert out.shape == (2, out_c, 16, 16), out.shape
    assert bool(jnp.all(jnp.isfinite(out)))
    assert bool(jnp.all(out >= 0.0))        # final op is a ReLU
    print("KERNEL_OK")
</pallas_src>

<mosaic_0001>
module attributes {stable_mosaic.version = 11 : i64} {
  func.func @_conv1_shortcut_kernel(%arg0: i32, %arg1: memref<4x17x17x64xbf16, #tpu.memory_space<vmem>>, %arg2: memref<576x128xbf16, #tpu.memory_space<vmem>>, %arg3: memref<1x128xf32, #tpu.memory_space<vmem>>, %arg4: memref<64x128xbf16, #tpu.memory_space<vmem>>, %arg5: memref<1x128xf32, #tpu.memory_space<vmem>>, %arg6: memref<1x256x128xbf16, #tpu.memory_space<vmem>>, %arg7: memref<1x256x128xbf16, #tpu.memory_space<vmem>>, %arg8: memref<256x128xf32, #tpu.memory_space<vmem>>) attributes {dimension_semantics = [#tpu.dimension_semantics<parallel>], iteration_bounds = array<i64: 2>, scalar_prefetch = 0 : i64, scratch_operands = 1 : i64, tpu.core_type = #tpu.core_type<tc>, window_params = [{transform_indices = @transform_0, window_bounds = array<i64: 4, 17, 17, 64>}, {pipeline_mode = #tpu.pipeline_mode<synchronous>, transform_indices = @transform_1, window_bounds = array<i64: 576, 128>}, {pipeline_mode = #tpu.pipeline_mode<synchronous>, transform_indices = @transform_2, window_bounds = array<i64: 1, 128>}, {pipeline_mode = #tpu.pipeline_mode<synchronous>, transform_indices = @transform_3, window_bounds = array<i64: 64, 128>}, {pipeline_mode = #tpu.pipeline_mode<synchronous>, transform_indices = @transform_4, window_bounds = array<i64: 1, 128>}, {transform_indices = @transform_5, window_bounds = array<i64: 1, 256, 128>}, {transform_indices = @transform_6, window_bounds = array<i64: 1, 256, 128>}]} {
    %c0 = arith.constant 0 : index
    %c0_0 = arith.constant 0 : index
    %c0_1 = arith.constant 0 : index
    %c0_2 = arith.constant 0 : index
    %0 = vector.load %arg1[%c0, %c0_0, %c0_1, %c0_2] : memref<4x17x17x64xbf16, #tpu.memory_space<vmem>>, vector<1x16x16x64xbf16>
    %1 = vector.shape_cast %0 : vector<1x16x16x64xbf16> to vector<16x16x64xbf16>
    %2 = vector.shape_cast %1 : vector<16x16x64xbf16> to vector<256x64xbf16>
    %c1 = arith.constant 1 : index
    %c0_3 = arith.constant 0 : index
    %c0_4 = arith.constant 0 : index
    %c0_5 = arith.constant 0 : index
    %3 = vector.load %arg1[%c1, %c0_3, %c0_4, %c0_5] : memref<4x17x17x64xbf16, #tpu.memory_space<vmem>>, vector<1x16x16x64xbf16>
    %4 = vector.shape_cast %3 : vector<1x16x16x64xbf16> to vector<16x16x64xbf16>
    %5 = vector.shape_cast %4 : vector<16x16x64xbf16> to vector<256x64xbf16>
    %c0_6 = arith.constant 0 : index
    %c0_7 = arith.constant 0 : index
    %c1_8 = arith.constant 1 : index
    %c0_9 = arith.constant 0 : index
    %6 = vector.load %arg1[%c0_6, %c0_7, %c1_8, %c0_9] : memref<4x17x17x64xbf16, #tpu.memory_space<vmem>>, vector<1x16x16x64xbf16>
    %7 = vector.shape_cast %6 : vector<1x16x16x64xbf16> to vector<16x16x64xbf16>
    %8 = vector.shape_cast %7 : vector<16x16x64xbf16> to vector<256x64xbf16>
    %c2 = arith.constant 2 : index
    %c0_10 = arith.constant 0 : index
    %c0_11 = arith.constant 0 : index
    %c0_12 = arith.constant 0 : index
    %9 = vector.load %arg1[%c2, %c0_10, %c0_11, %c0_12] : memref<4x17x17x64xbf16, #tpu.memory_space<vmem>>, vector<1x16x16x64xbf16>
    %10 = vector.shape_cast %9 : vector<1x16x16x64xbf16> to vector<16x16x64xbf16>
    %11 = vector.shape_cast %10 : vector<16x16x64xbf16> to vector<256x64xbf16>
    %12 = tpu.concatenate %2, %5, %8, %11 in 1 : vector<256x64xbf16>, vector<256x64xbf16>, vector<256x64xbf16>, vector<256x64xbf16> -> vector<256x256xbf16>
    %c0_13 = arith.constant 0 : index
    %c0_14 = arith.constant 0 : index
    %13 = vector.load %arg2[%c0_13, %c0_14] : memref<576x128xbf16, #tpu.memory_space<vmem>>, vector<256x128xbf16>
    %cst = arith.constant dense<0.000000e+00> : vector<256x128xf32>
    %14 = tpu.matmul %12, %13, %cst {dimension_numbers = #tpu.dot_dimension_numbers<[1], [0], [0], [1], [0, 0, 1, 1], [], []>} : vector<256x256xbf16>, vector<256x128xbf16>, vector<256x128xf32> -> vector<256x128xf32>
    %c0_15 = arith.constant 0 : index
    %c0_16 = arith.constant 0 : index
    %15 = vector.load %arg8[%c0_15, %c0_16] : memref<256x128xf32, #tpu.memory_space<vmem>>, vector<256x128xf32>
    tpu.vector_store %arg8[%c0_15, %c0_16], %14 {strides = array<i32>} : memref<256x128xf32, #tpu.memory_space<vmem>>, vector<256x128xf32>,
    %c3 = arith.constant 3 : index
    %c0_17 = arith.constant 0 : index
    %c0_18 = arith.constant 0 : index
    %c0_19 = arith.constant 0 : index
    %16 = vector.load %arg1[%c3, %c0_17, %c0_18, %c0_19] : memref<4x17x17x64xbf16, #tpu.memory_space<vmem>>, vector<1x16x16x64xbf16>
    %17 = vector.shape_cast %16 : vector<1x16x16x64xbf16> to vector<16x16x64xbf16>
    %18 = vector.shape_cast %17 : vector<16x16x64xbf16> to vector<256x64xbf16>
    %c2_20 = arith.constant 2 : index
    %c0_21 = arith.constant 0 : index
    %c1_22 = arith.constant 1 : index
    %c0_23 = arith.constant 0 : index
    %19 = vector.load %arg1[%c2_20, %c0_21, %c1_22, %c0_23] : memref<4x17x17x64xbf16, #tpu.memory_space<vmem>>, vector<1x16x16x64xbf16>
    %20 = vector.shape_cast %19 : vector<1x16x16x64xbf16> to vector<16x16x64xbf16>
    %21 = vector.shape_cast %20 : vector<16x16x64xbf16> to vector<256x64xbf16>
    %c0_24 = arith.constant 0 : index
    %c1_25 = arith.constant 1 : index
    %c0_26 = arith.constant 0 : index
    %c0_27 = arith.constant 0 : index
    %22 = vector.load %arg1[%c0_24, %c1_25, %c0_26, %c0_27] : memref<4x17x17x64xbf16, #tpu.memory_space<vmem>>, vector<1x16x16x64xbf16>
    %23 = vector.shape_cast %22 : vector<1x16x16x64xbf16> to vector<16x16x64xbf16>
    %24 = vector.shape_cast %23 : vector<16x16x64xbf16> to vector<256x64xbf16>
    %c1_28 = arith.constant 1 : index
    %c1_29 = arith.constant 1 : index
    %c0_30 = arith.constant 0 : index
    %c0_31 = arith.constant 0 : index
    %25 = vector.load %arg1[%c1_28, %c1_29, %c0_30, %c0_31] : memref<4x17x17x64xbf16, #tpu.memory_space<vmem>>, vector<1x16x16x64xbf16>
    %26 = vector.shape_cast %25 : vector<1x16x16x64xbf16> to vector<16x16x64xbf16>
    %27 = vector.shape_cast %26 : vector<16x16x64xbf16> to vector<256x64xbf16>
    %28 = tpu.concatenate %18, %21, %24, %27 in 1 : vector<256x64xbf16>, vector<256x64xbf16>, vector<256x64xbf16>, vector<256x64xbf16> -> vector<256x256xbf16>
    %c256 = arith.constant 256 : index
    %c0_32 = arith.constant 0 : index
    %29 = vector.load %arg2[%c256, %c0_32] : memref<576x128xbf16, #tpu.memory_space<vmem>>, vector<256x128xbf16>
    %cst_33 = arith.constant dense<0.000000e+00> : vector<256x128xf32>
    %30 = tpu.matmul %28, %29, %cst_33 {dimension_numbers = #tpu.dot_dimension_numbers<[1], [0], [0], [1], [0, 0, 1, 1], [], []>} : vector<256x256xbf16>, vector<256x128xbf16>, vector<256x128xf32> -> vector<256x128xf32>
    %c0_34 = arith.constant 0 : index
    %c0_35 = arith.constant 0 : index
    %31 = vector.load %arg8[%c0_34, %c0_35] : memref<256x128xf32, #tpu.memory_space<vmem>>, vector<256x128xf32>
    %32 = arith.addf %31, %30 : vector<256x128xf32>
    %c0_36 = arith.constant 0 : index
    %c0_37 = arith.constant 0 : index
    %33 = vector.load %arg8[%c0_36, %c0_37] : memref<256x128xf32, #tpu.memory_space<vmem>>, vector<256x128xf32>
    tpu.vector_store %arg8[%c0_36, %c0_37], %32 {strides = array<i32>} : memref<256x128xf32, #tpu.memory_space<vmem>>, vector<256x128xf32>,
    %c0_38 = arith.constant 0 : index
    %c1_39 = arith.constant 1 : index
    %c1_40 = arith.constant 1 : index
    %c0_41 = arith.constant 0 : index
    %34 = vector.load %arg1[%c0_38, %c1_39, %c1_40, %c0_41] : memref<4x17x17x64xbf16, #tpu.memory_space<vmem>>, vector<1x16x16x64xbf16>
    %35 = vector.shape_cast %34 : vector<1x16x16x64xbf16> to vector<16x16x64xbf16>
    %36 = vector.shape_cast %35 : vector<16x16x64xbf16> to vector<256x64xbf16>
    %c512 = arith.constant 512 : index
    %c0_42 = arith.constant 0 : index
    %37 = vector.load %arg2[%c512, %c0_42] : memref<576x128xbf16, #tpu.memory_space<vmem>>, vector<64x128xbf16>
    %cst_43 = arith.constant dense<0.000000e+00> : vector<256x128xf32>
    %38 = tpu.matmul %36, %37, %cst_43 {dimension_numbers = #tpu.dot_dimension_numbers<[1], [0], [0], [1], [0, 0, 1, 1], [], []>} : vector<256x64xbf16>, vector<64x128xbf16>, vector<256x128xf32> -> vector<256x128xf32>
    %c0_44 = arith.constant 0 : index
    %c0_45 = arith.constant 0 : index
    %39 = vector.load %arg8[%c0_44, %c0_45] : memref<256x128xf32, #tpu.memory_space<vmem>>, vector<256x128xf32>
    %40 = arith.addf %39, %38 : vector<256x128xf32>
    %c0_46 = arith.constant 0 : index
    %c0_47 = arith.constant 0 : index
    %41 = vector.load %arg8[%c0_46, %c0_47] : memref<256x128xf32, #tpu.memory_space<vmem>>, vector<256x128xf32>
    tpu.vector_store %arg8[%c0_46, %c0_47], %40 {strides = array<i32>} : memref<256x128xf32, #tpu.memory_space<vmem>>, vector<256x128xf32>,
    %c0_48 = arith.constant 0 : index
    %c0_49 = arith.constant 0 : index
    %42 = vector.load %arg8[%c0_48, %c0_49] : memref<256x128xf32, #tpu.memory_space<vmem>>, vector<256x128xf32>
    %c0_50 = arith.constant 0 : index
    %c0_51 = arith.constant 0 : index
    %43 = vector.load %arg3[%c0_50, %c0_51] : memref<1x128xf32, #tpu.memory_space<vmem>>, vector<1x128xf32>
    %44 = vector.broadcast %43 : vector<1x128xf32> to vector<256x128xf32>
    %45 = arith.addf %42, %44 : vector<256x128xf32>
    %cst_52 = arith.constant 0.000000e+00 : f32
    %46 = vector.broadcast %cst_52 : f32 to vector<256x128xf32>
    %47 = arith.maximumf %45, %46 : vector<256x128xf32>
    %48 = arith.truncf %47 : vector<256x128xf32> to vector<256x128xbf16>
    %c0_53 = arith.constant 0 : index
    %c0_54 = arith.constant 0 : index
    %c0_55 = arith.constant 0 : index
    %49 = vector.load %arg6[%c0_53, %c0_54, %c0_55] : memref<1x256x128xbf16, #tpu.memory_space<vmem>>, vector<1x256x128xbf16>
    %50 = vector.shape_cast %49 : vector<1x256x128xbf16> to vector<256x128xbf16>
    %51 = vector.shape_cast %48 : vector<256x128xbf16> to vector<1x256x128xbf16>
    tpu.vector_store %arg6[%c0_53, %c0_54, %c0_55], %51 {strides = array<i32>} : memref<1x256x128xbf16, #tpu.memory_space<vmem>>, vector<1x256x128xbf16>,
    %c0_56 = arith.constant 0 : index
    %c0_57 = arith.constant 0 : index
    %52 = vector.load %arg4[%c0_56, %c0_57] : memref<64x128xbf16, #tpu.memory_space<vmem>>, vector<64x128xbf16>
    %cst_58 = arith.constant dense<0.000000e+00> : vector<256x128xf32>
    %53 = tpu.matmul %18, %52, %cst_58 {dimension_numbers = #tpu.dot_dimension_numbers<[1], [0], [0], [1], [0, 0, 1, 1], [], []>} : vector<256x64xbf16>, vector<64x128xbf16>, vector<256x128xf32> -> vector<256x128xf32>
    %c0_59 = arith.constant 0 : index
    %c0_60 = arith.constant 0 : index
    %54 = vector.load %arg5[%c0_59, %c0_60] : memref<1x128xf32, #tpu.memory_space<vmem>>, vector<1x128xf32>
    %55 = vector.broadcast %54 : vector<1x128xf32> to vector<256x128xf32>
    %56 = arith.addf %53, %55 : vector<256x128xf32>
    %57 = arith.truncf %56 : vector<256x128xf32> to vector<256x128xbf16>
    %c0_61 = arith.constant 0 : index
    %c0_62 = arith.constant 0 : index
    %c0_63 = arith.constant 0 : index
    %58 = vector.load %arg7[%c0_61, %c0_62, %c0_63] : memref<1x256x128xbf16, #tpu.memory_space<vmem>>, vector<1x256x128xbf16>
    %59 = vector.shape_cast %58 : vector<1x256x128xbf16> to vector<256x128xbf16>
    %60 = vector.shape_cast %57 : vector<256x128xbf16> to vector<1x256x128xbf16>
    tpu.vector_store %arg7[%c0_61, %c0_62, %c0_63], %60 {strides = array<i32>} : memref<1x256x128xbf16, #tpu.memory_space<vmem>>, vector<1x256x128xbf16>,
    return
  }
  func.func @transform_0(%arg0: i32) -> (i32, i32, i32, i32) {
    %c0_i32 = arith.constant 0 : i32
    %c0_i32_0 = arith.constant 0 : i32
    %c0_i32_1 = arith.constant 0 : i32
    %c0_i32_2 = arith.constant 0 : i32
    return %arg0, %c0_i32, %c0_i32_0, %c0_i32_1 : i32, i32, i32, i32
  }
  func.func @transform_1(%arg0: i32) -> (i32, i32) {
    %c0_i32 = arith.constant 0 : i32
    %c0_i32_0 = arith.constant 0 : i32
    %c0_i32_1 = arith.constant 0 : i32
    return %c0_i32, %c0_i32_0 : i32, i32
  }
  func.func @transform_2(%arg0: i32) -> (i32, i32) {
    %c0_i32 = arith.constant 0 : i32
    %c0_i32_0 = arith.constant 0 : i32
    %c0_i32_1 = arith.constant 0 : i32
    return %c0_i32, %c0_i32_0 : i32, i32
  }
  func.func @transform_3(%arg0: i32) -> (i32, i32) {
    %c0_i32 = arith.constant 0 : i32
    %c0_i32_0 = arith.constant 0 : i32
    %c0_i32_1 = arith.constant 0 : i32
    return %c0_i32, %c0_i32_0 : i32, i32
  }
  func.func @transform_4(%arg0: i32) -> (i32, i32) {
    %c0_i32 = arith.constant 0 : i32
    %c0_i32_0 = arith.constant 0 : i32
    %c0_i32_1 = arith.constant 0 : i32
    return %c0_i32, %c0_i32_0 : i32, i32
  }
  func.func @transform_5(%arg0: i32) -> (i32, i32, i32) {
    %c0_i32 = arith.constant 0 : i32
    %c0_i32_0 = arith.constant 0 : i32
    %c0_i32_1 = arith.constant 0 : i32
    return %arg0, %c0_i32, %c0_i32_0 : i32, i32, i32
  }
  func.func @transform_6(%arg0: i32) -> (i32, i32, i32) {
    %c0_i32 = arith.constant 0 : i32
    %c0_i32_0 = arith.constant 0 : i32
    %c0_i32_1 = arith.constant 0 : i32
    return %arg0, %c0_i32, %c0_i32_0 : i32, i32, i32
  }
}

module attributes {stable_mosaic.version = 11 : i64} {
  func.func @_conv2_se_gate_kernel(%arg0: i32, %arg1: memref<1x18x18x128xbf16, #tpu.memory_space<vmem>>, %arg2: memref<1152x128xbf16, #tpu.memory_space<vmem>>, %arg3: memref<1x128xf32, #tpu.memory_space<vmem>>, %arg4: memref<1x256x128xbf16, #tpu.memory_space<vmem>>, %arg5: memref<128x8xbf16, #tpu.memory_space<vmem>>, %arg6: memref<1x8xf32, #tpu.memory_space<vmem>>, %arg7: memref<8x128xbf16, #tpu.memory_space<vmem>>, %arg8: memref<1x128xf32, #tpu.memory_space<vmem>>, %arg9: memref<1x256x128xf32, #tpu.memory_space<vmem>>, %arg10: memref<256x128xf32, #tpu.memory_space<vmem>>) attributes {dimension_semantics = [#tpu.dimension_semantics<parallel>], iteration_bounds = array<i64: 2>, scalar_prefetch = 0 : i64, scratch_operands = 1 : i64, tpu.core_type = #tpu.core_type<tc>, window_params = [{transform_indices = @transform_0, window_bounds = array<i64: 1, 18, 18, 128>}, {pipeline_mode = #tpu.pipeline_mode<synchronous>, transform_indices = @transform_1, window_bounds = array<i64: 1152, 128>}, {pipeline_mode = #tpu.pipeline_mode<synchronous>, transform_indices = @transform_2, window_bounds = array<i64: 1, 128>}, {transform_indices = @transform_3, window_bounds = array<i64: 1, 256, 128>}, {pipeline_mode = #tpu.pipeline_mode<synchronous>, transform_indices = @transform_4, window_bounds = array<i64: 128, 8>}, {pipeline_mode = #tpu.pipeline_mode<synchronous>, transform_indices = @transform_5, window_bounds = array<i64: 1, 8>}, {pipeline_mode = #tpu.pipeline_mode<synchronous>, transform_indices = @transform_6, window_bounds = array<i64: 8, 128>}, {pipeline_mode = #tpu.pipeline_mode<synchronous>, transform_indices = @transform_7, window_bounds = array<i64: 1, 128>}, {transform_indices = @transform_8, window_bounds = array<i64: 1, 256, 128>}]} {
    %c0 = arith.constant 0 : index
    %c0_0 = arith.constant 0 : index
    %c0_1 = arith.constant 0 : index
    %c0_2 = arith.constant 0 : index
    %0 = vector.load %arg1[%c0, %c0_0, %c0_1, %c0_2] : memref<1x18x18x128xbf16, #tpu.memory_space<vmem>>, vector<1x16x16x128xbf16>
    %1 = vector.shape_cast %0 : vector<1x16x16x128xbf16> to vector<16x16x128xbf16>
    %2 = vector.shape_cast %1 : vector<16x16x128xbf16> to vector<256x128xbf16>
    %c0_3 = arith.constant 0 : index
    %c0_4 = arith.constant 0 : index
    %c1 = arith.constant 1 : index
    %c0_5 = arith.constant 0 : index
    %3 = vector.load %arg1[%c0_3, %c0_4, %c1, %c0_5] : memref<1x18x18x128xbf16, #tpu.memory_space<vmem>>, vector<1x16x16x128xbf16>
    %4 = vector.shape_cast %3 : vector<1x16x16x128xbf16> to vector<16x16x128xbf16>
    %5 = vector.shape_cast %4 : vector<16x16x128xbf16> to vector<256x128xbf16>
    %6 = tpu.concatenate %2, %5 in 1 : vector<256x128xbf16>, vector<256x128xbf16> -> vector<256x256xbf16>
    %c0_6 = arith.constant 0 : index
    %c0_7 = arith.constant 0 : index
    %7 = vector.load %arg2[%c0_6, %c0_7] : memref<1152x128xbf16, #tpu.memory_space<vmem>>, vector<256x128xbf16>
    %cst = arith.constant dense<0.000000e+00> : vector<256x128xf32>
    %8 = tpu.matmul %6, %7, %cst {dimension_numbers = #tpu.dot_dimension_numbers<[1], [0], [0], [1], [0, 0, 1, 1], [], []>} : vector<256x256xbf16>, vector<256x128xbf16>, vector<256x128xf32> -> vector<256x128xf32>
    %c0_8 = arith.constant 0 : index
    %c0_9 = arith.constant 0 : index
    %9 = vector.load %arg10[%c0_8, %c0_9] : memref<256x128xf32, #tpu.memory_space<vmem>>, vector<256x128xf32>
    tpu.vector_store %arg10[%c0_8, %c0_9], %8 {strides = array<i32>} : memref<256x128xf32, #tpu.memory_space<vmem>>, vector<256x128xf32>,
    %c0_10 = arith.constant 0 : index
    %c0_11 = arith.constant 0 : index
    %c2 = arith.constant 2 : index
    %c0_12 = arith.constant 0 : index
    %10 = vector.load %arg1[%c0_10, %c0_11, %c2, %c0_12] : memref<1x18x18x128xbf16, #tpu.memory_space<vmem>>, vector<1x16x16x128xbf16>
    %11 = vector.shape_cast %10 : vector<1x16x16x128xbf16> to vector<16x16x128xbf16>
    %12 = vector.shape_cast %11 : vector<16x16x128xbf16> to vector<256x128xbf16>
    %c0_13 = arith.constant 0 : index
    %c1_14 = arith.constant 1 : index
    %c0_15 = arith.constant 0 : index
    %c0_16 = arith.constant 0 : index
    %13 = vector.load %arg1[%c0_13, %c1_14, %c0_15, %c0_16] : memref<1x18x18x128xbf16, #tpu.memory_space<vmem>>, vector<1x16x16x128xbf16>
    %14 = vector.shape_cast %13 : vector<1x16x16x128xbf16> to vector<16x16x128xbf16>
    %15 = vector.shape_cast %14 : vector<16x16x128xbf16> to vector<256x128xbf16>
    %16 = tpu.concatenate %12, %15 in 1 : vector<256x128xbf16>, vector<256x128xbf16> -> vector<256x256xbf16>
    %c256 = arith.constant 256 : index
    %c0_17 = arith.constant 0 : index
    %17 = vector.load %arg2[%c256, %c0_17] : memref<1152x128xbf16, #tpu.memory_space<vmem>>, vector<256x128xbf16>
    %cst_18 = arith.constant dense<0.000000e+00> : vector<256x128xf32>
    %18 = tpu.matmul %16, %17, %cst_18 {dimension_numbers = #tpu.dot_dimension_numbers<[1], [0], [0], [1], [0, 0, 1, 1], [], []>} : vector<256x256xbf16>, vector<256x128xbf16>, vector<256x128xf32> -> vector<256x128xf32>
    %c0_19 = arith.constant 0 : index
    %c0_20 = arith.constant 0 : index
    %19 = vector.load %arg10[%c0_19, %c0_20] : memref<256x128xf32, #tpu.memory_space<vmem>>, vector<256x128xf32>
    %20 = arith.addf %19, %18 : vector<256x128xf32>
    %c0_21 = arith.constant 0 : index
    %c0_22 = arith.constant 0 : index
    %21 = vector.load %arg10[%c0_21, %c0_22] : memref<256x128xf32, #tpu.memory_space<vmem>>, vector<256x128xf32>
    tpu.vector_store %arg10[%c0_21, %c0_22], %20 {strides = array<i32>} : memref<256x128xf32, #tpu.memory_space<vmem>>, vector<256x128xf32>,
    %c0_23 = arith.constant 0 : index
    %c1_24 = arith.constant 1 : index
    %c1_25 = arith.constant 1 : index
    %c0_26 = arith.constant 0 : index
    %22 = vector.load %arg1[%c0_23, %c1_24, %c1_25, %c0_26] : memref<1x18x18x128xbf16, #tpu.memory_space<vmem>>, vector<1x16x16x128xbf16>
    %23 = vector.shape_cast %22 : vector<1x16x16x128xbf16> to vector<16x16x128xbf16>
    %24 = vector.shape_cast %23 : vector<16x16x128xbf16> to vector<256x128xbf16>
    %c0_27 = arith.constant 0 : index
    %c1_28 = arith.constant 1 : index
    %c2_29 = arith.constant 2 : index
    %c0_30 = arith.constant 0 : index
    %25 = vector.load %arg1[%c0_27, %c1_28, %c2_29, %c0_30] : memref<1x18x18x128xbf16, #tpu.memory_space<vmem>>, vector<1x16x16x128xbf16>
    %26 = vector.shape_cast %25 : vector<1x16x16x128xbf16> to vector<16x16x128xbf16>
    %27 = vector.shape_cast %26 : vector<16x16x128xbf16> to vector<256x128xbf16>
    %28 = tpu.concatenate %24, %27 in 1 : vector<256x128xbf16>, vector<256x128xbf16> -> vector<256x256xbf16>
    %c512 = arith.constant 512 : index
    %c0_31 = arith.constant 0 : index
    %29 = vector.load %arg2[%c512, %c0_31] : memref<1152x128xbf16, #tpu.memory_space<vmem>>, vector<256x128xbf16>
    %cst_32 = arith.constant dense<0.000000e+00> : vector<256x128xf32>
    %30 = tpu.matmul %28, %29, %cst_32 {dimension_numbers = #tpu.dot_dimension_numbers<[1], [0], [0], [1], [0, 0, 1, 1], [], []>} : vector<256x256xbf16>, vector<256x128xbf16>, vector<256x128xf32> -> vector<256x128xf32>
    %c0_33 = arith.constant 0 : index
    %c0_34 = arith.constant 0 : index
    %31 = vector.load %arg10[%c0_33, %c0_34] : memref<256x128xf32, #tpu.memory_space<vmem>>, vector<256x128xf32>
    %32 = arith.addf %31, %30 : vector<256x128xf32>
    %c0_35 = arith.constant 0 : index
    %c0_36 = arith.constant 0 : index
    %33 = vector.load %arg10[%c0_35, %c0_36] : memref<256x128xf32, #tpu.memory_space<vmem>>, vector<256x128xf32>
    tpu.vector_store %arg10[%c0_35, %c0_36], %32 {strides = array<i32>} : memref<256x128xf32, #tpu.memory_space<vmem>>, vector<256x128xf32>,
    %c0_37 = arith.constant 0 : index
    %c2_38 = arith.constant 2 : index
    %c0_39 = arith.constant 0 : index
    %c0_40 = arith.constant 0 : index
    %34 = vector.load %arg1[%c0_37, %c2_38, %c0_39, %c0_40] : memref<1x18x18x128xbf16, #tpu.memory_space<vmem>>, vector<1x16x16x128xbf16>
    %35 = vector.shape_cast %34 : vector<1x16x16x128xbf16> to vector<16x16x128xbf16>
    %36 = vector.shape_cast %35 : vector<16x16x128xbf16> to vector<256x128xbf16>
    %c0_41 = arith.constant 0 : index
    %c2_42 = arith.constant 2 : index
    %c1_43 = arith.constant 1 : index
    %c0_44 = arith.constant 0 : index
    %37 = vector.load %arg1[%c0_41, %c2_42, %c1_43, %c0_44] : memref<1x18x18x128xbf16, #tpu.memory_space<vmem>>, vector<1x16x16x128xbf16>
    %38 = vector.shape_cast %37 : vector<1x16x16x128xbf16> to vector<16x16x128xbf16>
    %39 = vector.shape_cast %38 : vector<16x16x128xbf16> to vector<256x128xbf16>
    %40 = tpu.concatenate %36, %39 in 1 : vector<256x128xbf16>, vector<256x128xbf16> -> vector<256x256xbf16>
    %c768 = arith.constant 768 : index
    %c0_45 = arith.constant 0 : index
    %41 = vector.load %arg2[%c768, %c0_45] : memref<1152x128xbf16, #tpu.memory_space<vmem>>, vector<256x128xbf16>
    %cst_46 = arith.constant dense<0.000000e+00> : vector<256x128xf32>
    %42 = tpu.matmul %40, %41, %cst_46 {dimension_numbers = #tpu.dot_dimension_numbers<[1], [0], [0], [1], [0, 0, 1, 1], [], []>} : vector<256x256xbf16>, vector<256x128xbf16>, vector<256x128xf32> -> vector<256x128xf32>
    %c0_47 = arith.constant 0 : index
    %c0_48 = arith.constant 0 : index
    %43 = vector.load %arg10[%c0_47, %c0_48] : memref<256x128xf32, #tpu.memory_space<vmem>>, vector<256x128xf32>
    %44 = arith.addf %43, %42 : vector<256x128xf32>
    %c0_49 = arith.constant 0 : index
    %c0_50 = arith.constant 0 : index
    %45 = vector.load %arg10[%c0_49, %c0_50] : memref<256x128xf32, #tpu.memory_space<vmem>>, vector<256x128xf32>
    tpu.vector_store %arg10[%c0_49, %c0_50], %44 {strides = array<i32>} : memref<256x128xf32, #tpu.memory_space<vmem>>, vector<256x128xf32>,
    %c0_51 = arith.constant 0 : index
    %c2_52 = arith.constant 2 : index
    %c2_53 = arith.constant 2 : index
    %c0_54 = arith.constant 0 : index
    %46 = vector.load %arg1[%c0_51, %c2_52, %c2_53, %c0_54] : memref<1x18x18x128xbf16, #tpu.memory_space<vmem>>, vector<1x16x16x128xbf16>
    %47 = vector.shape_cast %46 : vector<1x16x16x128xbf16> to vector<16x16x128xbf16>
    %48 = vector.shape_cast %47 : vector<16x16x128xbf16> to vector<256x128xbf16>
    %c1024 = arith.constant 1024 : index
    %c0_55 = arith.constant 0 : index
    %49 = vector.load %arg2[%c1024, %c0_55] : memref<1152x128xbf16, #tpu.memory_space<vmem>>, vector<128x128xbf16>
    %cst_56 = arith.constant dense<0.000000e+00> : vector<256x128xf32>
    %50 = tpu.matmul %48, %49, %cst_56 {dimension_numbers = #tpu.dot_dimension_numbers<[1], [0], [0], [1], [0, 0, 1, 1], [], []>} : vector<256x128xbf16>, vector<128x128xbf16>, vector<256x128xf32> -> vector<256x128xf32>
    %c0_57 = arith.constant 0 : index
    %c0_58 = arith.constant 0 : index
    %51 = vector.load %arg10[%c0_57, %c0_58] : memref<256x128xf32, #tpu.memory_space<vmem>>, vector<256x128xf32>
    %52 = arith.addf %51, %50 : vector<256x128xf32>
    %c0_59 = arith.constant 0 : index
    %c0_60 = arith.constant 0 : index
    %53 = vector.load %arg10[%c0_59, %c0_60] : memref<256x128xf32, #tpu.memory_space<vmem>>, vector<256x128xf32>
    tpu.vector_store %arg10[%c0_59, %c0_60], %52 {strides = array<i32>} : memref<256x128xf32, #tpu.memory_space<vmem>>, vector<256x128xf32>,
    %c0_61 = arith.constant 0 : index
    %c0_62 = arith.constant 0 : index
    %54 = vector.load %arg10[%c0_61, %c0_62] : memref<256x128xf32, #tpu.memory_space<vmem>>, vector<256x128xf32>
    %c0_63 = arith.constant 0 : index
    %c0_64 = arith.constant 0 : index
    %55 = vector.load %arg3[%c0_63, %c0_64] : memref<1x128xf32, #tpu.memory_space<vmem>>, vector<1x128xf32>
    %56 = vector.broadcast %55 : vector<1x128xf32> to vector<256x128xf32>
    %57 = arith.addf %54, %56 : vector<256x128xf32>
    %cst_65 = arith.constant dense<0.000000e+00> : vector<128xf32>
    %58 = vector.multi_reduction <add>, %57, %cst_65 [0] : vector<256x128xf32> to vector<128xf32>
    %59 = vector.shape_cast %58 : vector<128xf32> to vector<1x128xf32>
    %cst_66 = arith.constant 2.560000e+02 : f32
    %60 = vector.broadcast %cst_66 : f32 to vector<1x128xf32>
    %61 = arith.divf %59, %60 : vector<1x128xf32>
    %62 = vector.shape_cast %61 : vector<1x128xf32> to vector<1x128xf32>
    %63 = vector.broadcast %62 : vector<1x128xf32> to vector<8x128xf32>
    %64 = arith.truncf %63 : vector<8x128xf32> to vector<8x128xbf16>
    %c0_67 = arith.constant 0 : index
    %c0_68 = arith.constant 0 : index
    %65 = vector.load %arg5[%c0_67, %c0_68] : memref<128x8xbf16, #tpu.memory_space<vmem>>, vector<128x8xbf16>
    %cst_69 = arith.constant dense<0.000000e+00> : vector<8x8xf32>
    %66 = tpu.matmul %64, %65, %cst_69 {dimension_numbers = #tpu.dot_dimension_numbers<[1], [0], [0], [1], [0, 0, 1, 1], [], []>} : vector<8x128xbf16>, vector<128x8xbf16>, vector<8x8xf32> -> vector<8x8xf32>
    %c0_70 = arith.constant 0 : index
    %c0_71 = arith.constant 0 : index
    %67 = vector.load %arg6[%c0_70, %c0_71] : memref<1x8xf32, #tpu.memory_space<vmem>>, vector<1x8xf32>
    %68 = vector.broadcast %67 : vector<1x8xf32> to vector<8x8xf32>
    %69 = arith.addf %66, %68 : vector<8x8xf32>
    %cst_72 = arith.constant 0.000000e+00 : f32
    %70 = vector.broadcast %cst_72 : f32 to vector<8x8xf32>
    %71 = arith.maximumf %69, %70 : vector<8x8xf32>
    %72 = arith.truncf %71 : vector<8x8xf32> to vector<8x8xbf16>
    %c0_73 = arith.constant 0 : index
    %c0_74 = arith.constant 0 : index
    %73 = vector.load %arg7[%c0_73, %c0_74] : memref<8x128xbf16, #tpu.memory_space<vmem>>, vector<8x128xbf16>
    %cst_75 = arith.constant dense<0.000000e+00> : vector<8x128xf32>
    %74 = tpu.matmul %72, %73, %cst_75 {dimension_numbers = #tpu.dot_dimension_numbers<[1], [0], [0], [1], [0, 0, 1, 1], [], []>} : vector<8x8xbf16>, vector<8x128xbf16>, vector<8x128xf32> -> vector<8x128xf32>
    %c0_76 = arith.constant 0 : index
    %c0_77 = arith.constant 0 : index
    %75 = vector.load %arg8[%c0_76, %c0_77] : memref<1x128xf32, #tpu.memory_space<vmem>>, vector<1x128xf32>
    %76 = vector.broadcast %75 : vector<1x128xf32> to vector<8x128xf32>
    %77 = arith.addf %74, %76 : vector<8x128xf32>
    %78 = vector.extract_strided_slice %77 {offsets = [0, 0], sizes = [1, 128], strides = [1, 1]} : vector<8x128xf32> to vector<1x128xf32>
    %79 = arith.negf %78 : vector<1x128xf32>
    %80 = math.exp %79 : vector<1x128xf32>
    %cst_78 = arith.constant 1.000000e+00 : f32
    %81 = vector.broadcast %cst_78 : f32 to vector<1x128xf32>
    %82 = arith.addf %81, %80 : vector<1x128xf32>
    %83 = arith.divf %81, %82 : vector<1x128xf32>
    %c0_79 = arith.constant 0 : index
    %c0_80 = arith.constant 0 : index
    %c0_81 = arith.constant 0 : index
    %84 = vector.load %arg4[%c0_79, %c0_80, %c0_81] : memref<1x256x128xbf16, #tpu.memory_space<vmem>>, vector<1x256x128xbf16>
    %85 = vector.shape_cast %84 : vector<1x256x128xbf16> to vector<256x128xbf16>
    %86 = arith.extf %85 : vector<256x128xbf16> to vector<256x128xf32>
    %87 = vector.broadcast %83 : vector<1x128xf32> to vector<256x128xf32>
    %88 = arith.mulf %87, %57 : vector<256x128xf32>
    %89 = arith.addf %88, %86 : vector<256x128xf32>
    %cst_82 = arith.constant 0.000000e+00 : f32
    %90 = vector.broadcast %cst_82 : f32 to vector<256x128xf32>
    %91 = arith.maximumf %89, %90 : vector<256x128xf32>
    %c0_83 = arith.constant 0 : index
    %c0_84 = arith.constant 0 : index
    %c0_85 = arith.constant 0 : index
    %92 = vector.load %arg9[%c0_83, %c0_84, %c0_85] : memref<1x256x128xf32, #tpu.memory_space<vmem>>, vector<1x256x128xf32>
    %93 = vector.shape_cast %92 : vector<1x256x128xf32> to vector<256x128xf32>
    %94 = vector.shape_cast %91 : vector<256x128xf32> to vector<1x256x128xf32>
    tpu.vector_store %arg9[%c0_83, %c0_84, %c0_85], %94 {strides = array<i32>} : memref<1x256x128xf32, #tpu.memory_space<vmem>>, vector<1x256x128xf32>,
    return
  }
  func.func @transform_0(%arg0: i32) -> (i32, i32, i32, i32) {
    %c0_i32 = arith.constant 0 : i32
    %c0_i32_0 = arith.constant 0 : i32
    %c0_i32_1 = arith.constant 0 : i32
    %c0_i32_2 = arith.constant 0 : i32
    return %arg0, %c0_i32, %c0_i32_0, %c0_i32_1 : i32, i32, i32, i32
  }
  func.func @transform_1(%arg0: i32) -> (i32, i32) {
    %c0_i32 = arith.constant 0 : i32
    %c0_i32_0 = arith.constant 0 : i32
    %c0_i32_1 = arith.constant 0 : i32
    return %c0_i32, %c0_i32_0 : i32, i32
  }
  func.func @transform_2(%arg0: i32) -> (i32, i32) {
    %c0_i32 = arith.constant 0 : i32
    %c0_i32_0 = arith.constant 0 : i32
    %c0_i32_1 = arith.constant 0 : i32
    return %c0_i32, %c0_i32_0 : i32, i32
  }
  func.func @transform_3(%arg0: i32) -> (i32, i32, i32) {
    %c0_i32 = arith.constant 0 : i32
    %c0_i32_0 = arith.constant 0 : i32
    %c0_i32_1 = arith.constant 0 : i32
    return %arg0, %c0_i32, %c0_i32_0 : i32, i32, i32
  }
  func.func @transform_4(%arg0: i32) -> (i32, i32) {
    %c0_i32 = arith.constant 0 : i32
    %c0_i32_0 = arith.constant 0 : i32
    %c0_i32_1 = arith.constant 0 : i32
    return %c0_i32, %c0_i32_0 : i32, i32
  }
  func.func @transform_5(%arg0: i32) -> (i32, i32) {
    %c0_i32 = arith.constant 0 : i32
    %c0_i32_0 = arith.constant 0 : i32
    %c0_i32_1 = arith.constant 0 : i32
    return %c0_i32, %c0_i32_0 : i32, i32
  }
  func.func @transform_6(%arg0: i32) -> (i32, i32) {
    %c0_i32 = arith.constant 0 : i32
    %c0_i32_0 = arith.constant 0 : i32
    %c0_i32_1 = arith.constant 0 : i32
    return %c0_i32, %c0_i32_0 : i32, i32
  }
  func.func @transform_7(%arg0: i32) -> (i32, i32) {
    %c0_i32 = arith.constant 0 : i32
    %c0_i32_0 = arith.constant 0 : i32
    %c0_i32_1 = arith.constant 0 : i32
    return %c0_i32, %c0_i32_0 : i32, i32
  }
  func.func @transform_8(%arg0: i32) -> (i32, i32, i32) {
    %c0_i32 = arith.constant 0 : i32
    %c0_i32_0 = arith.constant 0 : i32
    %c0_i32_1 = arith.constant 0 : i32
    return %arg0, %c0_i32, %c0_i32_0 : i32, i32, i32
  }
}

</mosaic_0001>

<llo_original>
// kernel: basic_block_forward.2
$region0: #{basic_block_forward.2}
  #allocation0 [shape = 'u32[]', space=smem, size = 0x4, offset = 0x4, fixed_abs, tag = 'smem constant byte address 0x4 - core index']
  #allocation1 [shape = 'u32[144,128]{1,0:T(1,128)}', space=vmem, size = 0x12000, scoped, tag = 'internal scratch']
  #allocation2 [shape = 'f32[256,128]{1,0:T(8,128)}', space=vmem, size = 0x20000, scoped, tag = 'scratch operand']
  %s0 = inlined_call_operand.vmem [shape: bf16[8,17,17,64], index: 0, kind: input, shape index: {}]
  %s1 = inlined_call_operand.vmem [shape: bf16[576,128], index: 1, kind: input, shape index: {}]
  %s2 = inlined_call_operand.vmem [shape: f32[1,128], index: 2, kind: input, shape index: {}]
  %s3 = inlined_call_operand.vmem [shape: bf16[64,128], index: 3, kind: input, shape index: {}]
  %s4 = inlined_call_operand.vmem [shape: f32[1,128], index: 4, kind: input, shape index: {}]
  %s5 = inlined_call_operand.vmem [shape: bf16[2,256,128], index: 5, kind: output, shape index: {0}]
  %s6 = inlined_call_operand.vmem [shape: bf16[2,256,128], index: 6, kind: output, shape index: {1}]
  %7 = xla_tuple %s5, %s6
  %s8 = sld [smem:[#allocation0]]
  $region61: #{basic_block_forward.2} parent=0
    _
  %s10 = ssub.s32 1, %s8
  %s11 = scalar_select 0, %s10, %s8
  loop: start=0, step=1, limit=4
  $region2: #{basic_block_forward.2} parent=0 // loop_pre_header
    _
  $region3: #{basic_block_forward.2} parent=0 // loop_header
    %s13 = sphi 0, %s17
    %p14 = scmp.ge.s32.totalorder %s13, 4
    %s23 = sphi 0, %s25
    %s26 = sphi 0, %s23
    %s27 = sphi 0, %s26
    %s43 = sphi 0, %s27
    %s47 = sphi 0, %s47
    %s49 = sphi 0, %s47
    %s50 = sphi 0, %s49
    %s64 = sphi 0, %s50
    %s68 = sphi 0, %s68
    %s70 = sphi 0, %s68
    %s71 = sphi 0, %s70
    %s85 = sphi 0, %s71
    %s89 = sphi 0, %s89
    %s91 = sphi 0, %s89
    %s92 = sphi 0, %s91
    %s106 = sphi 0, %s92
    %s110 = sphi 0, %s110
    %s112 = sphi 0, %s110
    %s113 = sphi 0, %s112
    %s127 = sphi 0, %s113
    %s133 = sphi 0, %s135
    %s136 = sphi 0, %s133
    %s137 = sphi 0, %s136
    %s153 = sphi 0, %s137
    %s159 = sphi 0, %s161
    %s162 = sphi 0, %s159
    %s163 = sphi 0, %s162
    %s179 = sphi 0, %s163
  $region4: #{basic_block_forward.2} parent=0 // loop_header_branch
    %16 = sbr.rel (%p14) target = $region8
  $region5: #{basic_block_forward.2} parent=0 // loop_body
    %s18 = ssub.s32 %s13, 1
    %s19 = ssub.s32 %s13, 2
    %s20 = sadd.s32 %s13, 1
    %s21 = ssub.s32 %s13, %s20
    %p22 = scmp.eq.s32.totalorder %s21, 0
    %s24 = sadd.s32 %s23, 1
    %s25 = scalar_select %p22, %s23, %s24
    %p28 = pneg %p22
    %p29 = scmp.eq.s32.totalorder %s13, 1
    %p30 = por %p28, %p29
    %p31 = scmp.ne.s32.totalorder %s23, %s26
    %p32 = scmp.eq.s32.totalorder %s13, 0
    %p33 = por %p31, %p32
    %p34 = scmp.ne.s32.totalorder %s23, %s26
    %p35 = scmp.eq.s32.totalorder %s18, 1
    %p36 = por %p34, %p35
    %p37 = scmp.ne.s32.totalorder %s26, %s27
    %p38 = scmp.eq.s32.totalorder %s18, 0
    %p39 = por %p37, %p38
    %p40 = scmp.ne.s32.totalorder %s26, %s27
    %p41 = scmp.eq.s32.totalorder %s19, 1
    %p42 = por %p40, %p41
    %p44 = scmp.ne.s32.totalorder %s27, %s43
    %p45 = scmp.eq.s32.totalorder %s19, 0
    %p46 = por %p44, %p45
    %s48 = sadd.s32 %s47, 1
    %p51 = scmp.eq.s32.totalorder %s13, 1
    %p52 = scmp.ne.s32.totalorder %s47, %s49
    %p53 = scmp.eq.s32.totalorder %s13, 0
    %p54 = por %p52, %p53
    %p55 = scmp.ne.s32.totalorder %s47, %s49
    %p56 = scmp.eq.s32.totalorder %s18, 1
    %p57 = por %p55, %p56
    %p58 = scmp.ne.s32.totalorder %s49, %s50
    %p59 = scmp.eq.s32.totalorder %s18, 0
    %p60 = por %p58, %p59
    %p61 = scmp.ne.s32.totalorder %s49, %s50
    %p62 = scmp.eq.s32.totalorder %s19, 1
    %p63 = por %p61, %p62
    %p65 = scmp.ne.s32.totalorder %s50, %s64
    %p66 = scmp.eq.s32.totalorder %s19, 0
    %p67 = por %p65, %p66
    %s69 = sadd.s32 %s68, 1
    %p72 = scmp.eq.s32.totalorder %s13, 1
    %p73 = scmp.ne.s32.totalorder %s68, %s70
    %p74 = scmp.eq.s32.totalorder %s13, 0
    %p75 = por %p73, %p74
    %p76 = scmp.ne.s32.totalorder %s68, %s70
    %p77 = scmp.eq.s32.totalorder %s18, 1
    %p78 = por %p76, %p77
    %p79 = scmp.ne.s32.totalorder %s70, %s71
    %p80 = scmp.eq.s32.totalorder %s18, 0
    %p81 = por %p79, %p80
    %p82 = scmp.ne.s32.totalorder %s70, %s71
    %p83 = scmp.eq.s32.totalorder %s19, 1
    %p84 = por %p82, %p83
    %p86 = scmp.ne.s32.totalorder %s71, %s85
    %p87 = scmp.eq.s32.totalorder %s19, 0
    %p88 = por %p86, %p87
    %s90 = sadd.s32 %s89, 1
    %p93 = scmp.eq.s32.totalorder %s13, 1
    %p94 = scmp.ne.s32.totalorder %s89, %s91
    %p95 = scmp.eq.s32.totalorder %s13, 0
    %p96 = por %p94, %p95
    %p97 = scmp.ne.s32.totalorder %s89, %s91
    %p98 = scmp.eq.s32.totalorder %s18, 1
    %p99 = por %p97, %p98
    %p100 = scmp.ne.s32.totalorder %s91, %s92
    %p101 = scmp.eq.s32.totalorder %s18, 0
    %p102 = por %p100, %p101
    %p103 = scmp.ne.s32.totalorder %s91, %s92
    %p104 = scmp.eq.s32.totalorder %s19, 1
    %p105 = por %p103, %p104
    %p107 = scmp.ne.s32.totalorder %s92, %s106
    %p108 = scmp.eq.s32.totalorder %s19, 0
    %p109 = por %p107, %p108
    %s111 = sadd.s32 %s110, 1
    %p114 = scmp.eq.s32.totalorder %s13, 1
    %p115 = scmp.ne.s32.totalorder %s110, %s112
    %p116 = scmp.eq.s32.totalorder %s13, 0
    %p117 = por %p115, %p116
    %p118 = scmp.ne.s32.totalorder %s110, %s112
    %p119 = scmp.eq.s32.totalorder %s18, 1
    %p120 = por %p118, %p119
    %p121 = scmp.ne.s32.totalorder %s112, %s113
    %p122 = scmp.eq.s32.totalorder %s18, 0
    %p123 = por %p121, %p122
    %p124 = scmp.ne.s32.totalorder %s112, %s113
    %p125 = scmp.eq.s32.totalorder %s19, 1
    %p126 = por %p124, %p125
    %p128 = scmp.ne.s32.totalorder %s113, %s127
    %p129 = scmp.eq.s32.totalorder %s19, 0
    %p130 = por %p128, %p129
    %s131 = ssub.s32 %s13, %s20
    %p132 = scmp.eq.s32.totalorder %s131, 0
    %s134 = sadd.s32 %s133, 1
    %s135 = scalar_select %p132, %s133, %s134
    %p138 = pneg %p132
    %p139 = scmp.eq.s32.totalorder %s13, 1
    %p140 = por %p138, %p139
    %p141 = scmp.ne.s32.totalorder %s133, %s136
    %p142 = scmp.eq.s32.totalorder %s13, 0
    %p143 = por %p141, %p142
    %p144 = scmp.ne.s32.totalorder %s133, %s136
    %p145 = scmp.eq.s32.totalorder %s18, 1
    %p146 = por %p144, %p145
    %p147 = scmp.ne.s32.totalorder %s136, %s137
    %p148 = scmp.eq.s32.totalorder %s18, 0
    %p149 = por %p147, %p148
    %p150 = scmp.ne.s32.totalorder %s136, %s137
    %p151 = scmp.eq.s32.totalorder %s19, 1
    %p152 = por %p150, %p151
    %p154 = scmp.ne.s32.totalorder %s137, %s153
    %p155 = scmp.eq.s32.totalorder %s19, 0
    %p156 = por %p154, %p155
    %s157 = ssub.s32 %s13, %s20
    %p158 = scmp.eq.s32.totalorder %s157, 0
    %s160 = sadd.s32 %s159, 1
    %s161 = scalar_select %p158, %s159, %s160
    %p164 = pneg %p158
    %p165 = scmp.eq.s32.totalorder %s13, 1
    %p166 = por %p164, %p165
    %p167 = scmp.ne.s32.totalorder %s159, %s162
    %p168 = scmp.eq.s32.totalorder %s13, 0
    %p169 = por %p167, %p168
    %p170 = scmp.ne.s32.totalorder %s159, %s162
    %p171 = scmp.eq.s32.totalorder %s18, 1
    %p172 = por %p170, %p171
    %p173 = scmp.ne.s32.totalorder %s162, %s163
    %p174 = scmp.eq.s32.totalorder %s18, 0
    %p175 = por %p173, %p174
    %p176 = scmp.ne.s32.totalorder %s162, %s163
    %p177 = scmp.eq.s32.totalorder %s19, 1
    %p178 = por %p176, %p177
    %p180 = scmp.ne.s32.totalorder %s163, %s179
    %p181 = scmp.eq.s32.totalorder %s19, 0
    %p182 = por %p180, %p181
    %p183 = scmp.le.s32.totalorder 1, %s13
    %p184 = scmp.lt.s32.totalorder %s13, 3
    %p185 = pnand %p183, %p184
    %p186 = pneg %p185
    // Predicated region
    $region9: #{basic_block_forward.2} parent=5 // pred_check
      _
    $region10: #{basic_block_forward.2} parent=5 // pred_check_branch
      %188 = sbr.rel (%p185) target = $region12
    $region11: #{basic_block_forward.2} parent=5 // pred_region
      %s189 = ssub.s32 %s13, 1
      // Predicated region
      $region13: #{basic_block_forward.2} parent=11 // pred_check
        %p190 = pneg %p60
      $region14: #{basic_block_forward.2} parent=11 // pred_check_branch
        %192 = sbr.rel (%p190) target = $region16
      $region15: #{basic_block_forward.2} parent=11 // pred_region
        _
      $region16: #{basic_block_forward.2} parent=11 // pred_fallthru
        _
      // Predicated region
      $region17: #{basic_block_forward.2} parent=11 // pred_check
        %p193 = pneg %p81
      $region18: #{basic_block_forward.2} parent=11 // pred_check_branch
        %195 = sbr.rel (%p193) target = $region20
      $region19: #{basic_block_forward.2} parent=11 // pred_region
        _
      $region20: #{basic_block_forward.2} parent=11 // pred_fallthru
        _
      // Predicated region
      $region21: #{basic_block_forward.2} parent=11 // pred_check
        %p196 = pneg %p102
      $region22: #{basic_block_forward.2} parent=11 // pred_check_branch
        %198 = sbr.rel (%p196) target = $region24
      $region23: #{basic_block_forward.2} parent=11 // pred_region
        _
      $region24: #{basic_block_forward.2} parent=11 // pred_fallthru
        _
      // Predicated region
      $region25: #{basic_block_forward.2} parent=11 // pred_check
        %p199 = pneg %p123
      $region26: #{basic_block_forward.2} parent=11 // pred_check_branch
        %201 = sbr.rel (%p199) target = $region28
      $region27: #{basic_block_forward.2} parent=11 // pred_region
        _
      $region28: #{basic_block_forward.2} parent=11 // pred_fallthru
        _
    $region12: #{basic_block_forward.2} parent=5 // pred_fallthru
      _
    %p202 = scmp.lt.s32.totalorder %s13, 2
    // Predicated region
    $region29: #{basic_block_forward.2} parent=5 // pred_check
      %p203 = pneg %p202
    $region30: #{basic_block_forward.2} parent=5 // pred_check_branch
      %205 = sbr.rel (%p203) target = $region32
    $region31: #{basic_block_forward.2} parent=5 // pred_region
      // Predicated region
      $region33: #{basic_block_forward.2} parent=31 // pred_check
        %p206 = pneg %p33
      $region34: #{basic_block_forward.2} parent=31 // pred_check_branch
        %208 = sbr.rel (%p206) target = $region36
      $region35: #{basic_block_forward.2} parent=31 // pred_region
        %s209 = smul.u32 4, %s13
        %p210 = scmp.lt.s32.totalorder %s209, 7
        %s211 = scalar_select %p210, %s209, 7
        %s212 = smul.addr %s211, 51
        %s213 = smul.addr %s212, 4
        %s214 = scalar_lea.vmem %s0, %s213
        %s215 = smul.u32 4, %s13
      $region36: #{basic_block_forward.2} parent=31 // pred_fallthru
        _
    $region32: #{basic_block_forward.2} parent=5 // pred_fallthru
      _
    %p216 = scmp.le.s32.totalorder 1, %s13
    %p217 = scmp.lt.s32.totalorder %s13, 3
    %p218 = pnand %p216, %p217
    %p219 = pneg %p218
    // Predicated region
    $region37: #{basic_block_forward.2} parent=5 // pred_check
      _
    $region38: #{basic_block_forward.2} parent=5 // pred_check_branch
      %221 = sbr.rel (%p218) target = $region40
    $region39: #{basic_block_forward.2} parent=5 // pred_region
      %s222 = ssub.s32 %s13, 1
      %s223 = smul.u32 4, %s18
      %p224 = scmp.lt.s32.totalorder %s223, 7
      %s225 = scalar_select %p224, %s223, 7
      %s226 = smul.addr %s225, 51
      %s227 = smul.addr %s226, 4
      %s228 = scalar_lea.vmem %s0, %s227
      %p229 = pneg %p39
      %p230 = pneg %p36
      %p231 = pneg %p60
      %p232 = pneg %p57
      %p233 = pneg %p81
      %p234 = pneg %p78
      %p235 = pneg %p102
      %p236 = pneg %p99
      %p237 = pneg %p123
      %p238 = pneg %p120
      %p239 = pneg %p149
      %p240 = pneg %p146
      %p241 = scmp.lt.s32.totalorder %s18, 1
      %s242 = scalar_select %p241, %s18, 1
      %s243 = smul.addr %s242, 32
      %s244 = smul.addr %s243, 4
      %s245 = scalar_lea.vmem %s5, %s244
      %p246 = pneg %p175
      %p247 = pneg %p172
      %p248 = scmp.lt.s32.totalorder %s18, 1
      %s249 = scalar_select %p248, %s18, 1
      %s250 = smul.addr %s249, 32
      %s251 = smul.addr %s250, 4
      %s252 = scalar_lea.vmem %s6, %s251
      %s253 = smul.u32 4, %s18
      %p254 = scmp.lt.s32.totalorder %s253, 7
      %s255 = scalar_select %p254, %s253, 7
      %s256 = smul.addr %s255, 51
      %s257 = smul.addr %s256, 4
      %s258 = scalar_lea.vmem %s0, %s257
      %s259 = smul.u32 4, %s18
      %p260 = scmp.lt.s32.totalorder %s18, 1
      %s261 = scalar_select %p260, %s18, 1
      %s262 = smul.addr %s261, 32
      %s263 = smul.addr %s262, 4
      %s264 = scalar_lea.vmem %s5, %s263
      %p265 = scmp.lt.s32.totalorder %s18, 1
      %s266 = scalar_select %p265, %s18, 1
      %s267 = smul.addr %s266, 32
      %s268 = smul.addr %s267, 4
      %s269 = scalar_lea.vmem %s6, %s268
      %v271 = vld [vmem:[%s258] sm:$0xf]
      %v272 = vld [vmem:[%s258 + $0x4] sm:$0xf]
      %v273 = vld [vmem:[%s258 + $0xc] sm:$0xf]
      %v274 = vld [vmem:[%s258 + $0x10] sm:$0xf]
      %v275 = vld [vmem:[%s258 + $0x18] sm:$0xf]
      %v276 = vld [vmem:[%s258 + $0x1c] sm:$0xf]
      %v277 = vld [vmem:[%s258 + $0x24] sm:$0xf]
      %v278 = vld [vmem:[%s258 + $0x28] sm:$0xf]
      %v279 = vld [vmem:[%s258 + $0x30] sm:$0xf]
      %v280 = vld [vmem:[%s258 + $0x34] sm:$0xf]
      %v281 = vld [vmem:[%s258 + $0x3c] sm:$0xf]
      %v282 = vld [vmem:[%s258 + $0x40] sm:$0xf]
      %v283 = vld [vmem:[%s258 + $0x48] sm:$0xf]
      %v284 = vld [vmem:[%s258 + $0x4c] sm:$0xf]
      %v285 = vld [vmem:[%s258 + $0x54] sm:$0xf]
      %v286 = vld [vmem:[%s258 + $0x58] sm:$0xf]
      %v287 = vld [vmem:[%s258 + $0x60] sm:$0xf]
      %v288 = vld [vmem:[%s258 + $0x64] sm:$0xf]
      %v289 = vld [vmem:[%s258 + $0x6c] sm:$0xf]
      %v290 = vld [vmem:[%s258 + $0x70] sm:$0xf]
      %v291 = vld [vmem:[%s258 + $0x78] sm:$0xf]
      %v292 = vld [vmem:[%s258 + $0x7c] sm:$0xf]
      %v293 = vld [vmem:[%s258 + $0x84] sm:$0xf]
      %v294 = vld [vmem:[%s258 + $0x88] sm:$0xf]
      %v295 = vld [vmem:[%s258 + $0x90] sm:$0xf]
      %v296 = vld [vmem:[%s258 + $0x94] sm:$0xf]
      %v297 = vld [vmem:[%s258 + $0x9c] sm:$0xf]
      %v298 = vld [vmem:[%s258 + $0xa0] sm:$0xf]
      %v299 = vld [vmem:[%s258 + $0xa8] sm:$0xf]
      %v300 = vld [vmem:[%s258 + $0xac] sm:$0xf]
      %v301 = vld [vmem:[%s258 + $0xb4] sm:$0xf]
      %v302 = vld [vmem:[%s258 + $0xb8] sm:$0xf]
      %s303 = scalar_lea.vmem %s258, 204
      %v304 = vld [vmem:[%s303] sm:$0xf]
      %v305 = vld [vmem:[%s303 + $0x4] sm:$0xf]
      %v306 = vld [vmem:[%s303 + $0xc] sm:$0xf]
      %v307 = vld [vmem:[%s303 + $0x10] sm:$0xf]
      %v308 = vld [vmem:[%s303 + $0x18] sm:$0xf]
      %v309 = vld [vmem:[%s303 + $0x1c] sm:$0xf]
      %v310 = vld [vmem:[%s303 + $0x24] sm:$0xf]
      %v311 = vld [vmem:[%s303 + $0x28] sm:$0xf]
      %v312 = vld [vmem:[%s303 + $0x30] sm:$0xf]
      %v313 = vld [vmem:[%s303 + $0x34] sm:$0xf]
      %v314 = vld [vmem:[%s303 + $0x3c] sm:$0xf]
      %v315 = vld [vmem:[%s303 + $0x40] sm:$0xf]
      %v316 = vld [vmem:[%s303 + $0x48] sm:$0xf]
      %v317 = vld [vmem:[%s303 + $0x4c] sm:$0xf]
      %v318 = vld [vmem:[%s303 + $0x54] sm:$0xf]
      %v319 = vld [vmem:[%s303 + $0x58] sm:$0xf]
      %v320 = vld [vmem:[%s303 + $0x60] sm:$0xf]
      %v321 = vld [vmem:[%s303 + $0x64] sm:$0xf]
      %v322 = vld [vmem:[%s303 + $0x6c] sm:$0xf]
      %v323 = vld [vmem:[%s303 + $0x70] sm:$0xf]
      %v324 = vld [vmem:[%s303 + $0x78] sm:$0xf]
      %v325 = vld [vmem:[%s303 + $0x7c] sm:$0xf]
      %v326 = vld [vmem:[%s303 + $0x84] sm:$0xf]
      %v327 = vld [vmem:[%s303 + $0x88] sm:$0xf]
      %v328 = vld [vmem:[%s303 + $0x90] sm:$0xf]
      %v329 = vld [vmem:[%s303 + $0x94] sm:$0xf]
      %v330 = vld [vmem:[%s303 + $0x9c] sm:$0xf]
      %v331 = vld [vmem:[%s303 + $0xa0] sm:$0xf]
      %v332 = vld [vmem:[%s303 + $0xa8] sm:$0xf]
      %v333 = vld [vmem:[%s303 + $0xac] sm:$0xf]
      %v334 = vld [vmem:[%s303 + $0xb4] sm:$0xf]
      %v335 = vld [vmem:[%s303 + $0xb8] sm:$0xf]
      %v336 = vld [vmem:[%s258 + $0x8] sm:$0x1]
      %v337 = vld [vmem:[%s258 + $0x14] sm:$0x1]
      %v338 = vld [vmem:[%s258 + $0x20] sm:$0x1]
      %v339 = vld [vmem:[%s258 + $0x2c] sm:$0x1]
      %v340 = vld [vmem:[%s258 + $0x38] sm:$0x1]
      %v341 = vld [vmem:[%s258 + $0x44] sm:$0x1]
      %v342 = vld [vmem:[%s258 + $0x50] sm:$0x1]
      %v343 = vld [vmem:[%s258 + $0x5c] sm:$0x1]
      %v344 = vld [vmem:[%s258 + $0x68] sm:$0x1]
      %v345 = vld [vmem:[%s258 + $0x74] sm:$0x1]
      %v346 = vld [vmem:[%s258 + $0x80] sm:$0x1]
      %v347 = vld [vmem:[%s258 + $0x8c] sm:$0x1]
      %v348 = vld [vmem:[%s258 + $0x98] sm:$0x1]
      %v349 = vld [vmem:[%s258 + $0xa4] sm:$0x1]
      %v350 = vld [vmem:[%s258 + $0xb0] sm:$0x1]
      %v351 = vld [vmem:[%s258 + $0xbc] sm:$0x1]
      %vm352 = vsmask.f32 3328
      %vm353 = vsmask.f32 7440
      %vm354 = vmor %vm352, %vm353
      %v356 = vshrl.u32 %v271, 16
      %v358 = vrot.slane %v356, 4
      %v359 = vshll.u32 %v271, 16
      %v361 = vrot.slane %v359, 5
      %v362 = vor.u32 %v358, %v361
      %v363 = vrot.slane %v362, 4
      %v365 = vshll.u32 %v272, 16
      %v367 = vrot.slane %v365, 5
      %v368 = vsel %vm354, %v363, %v367
      %v369 = vshrl.u32 %v272, 16
      %v371 = vrot.slane %v369, 4
      %v372 = vor.u32 %v371, %v367
      %v373 = vrot.slane %v372, 4
      %v375 = vshll.u32 %v336, 16
      %v377 = vrot.slane %v375, 5
      %v378 = vsel %vm354, %v373, %v377
      %v380 = vshrl.u32 %v273, 16
      %v382 = vrot.slane %v380, 4
      %v383 = vshll.u32 %v273, 16
      %v385 = vrot.slane %v383, 5
      %v386 = vor.u32 %v382, %v385
      %v387 = vrot.slane %v386, 4
      %v389 = vshll.u32 %v274, 16
      %v391 = vrot.slane %v389, 5
      %v392 = vsel %vm354, %v387, %v391
      %v393 = vshrl.u32 %v274, 16
      %v395 = vrot.slane %v393, 4
      %v396 = vor.u32 %v395, %v391
      %v397 = vrot.slane %v396, 4
      %v399 = vshll.u32 %v337, 16
      %v401 = vrot.slane %v399, 5
      %v402 = vsel %vm354, %v397, %v401
      %v404 = vshrl.u32 %v275, 16
      %v406 = vrot.slane %v404, 4
      %v407 = vshll.u32 %v275, 16
      %v409 = vrot.slane %v407, 5
      %v410 = vor.u32 %v406, %v409
      %v411 = vrot.slane %v410, 4
      %v413 = vshll.u32 %v276, 16
      %v415 = vrot.slane %v413, 5
      %v416 = vsel %vm354, %v411, %v415
      %v417 = vshrl.u32 %v276, 16
      %v419 = vrot.slane %v417, 4
      %v420 = vor.u32 %v419, %v415
      %v421 = vrot.slane %v420, 4
      %v423 = vshll.u32 %v338, 16
      %v425 = vrot.slane %v423, 5
      %v426 = vsel %vm354, %v421, %v425
      %v428 = vshrl.u32 %v277, 16
      %v430 = vrot.slane %v428, 4
      %v431 = vshll.u32 %v277, 16
      %v433 = vrot.slane %v431, 5
      %v434 = vor.u32 %v430, %v433
      %v435 = vrot.slane %v434, 4
      %v437 = vshll.u32 %v278, 16
      %v439 = vrot.slane %v437, 5
      %v440 = vsel %vm354, %v435, %v439
      %v441 = vshrl.u32 %v278, 16
      %v443 = vrot.slane %v441, 4
      %v444 = vor.u32 %v443, %v439
      %v445 = vrot.slane %v444, 4
      %v447 = vshll.u32 %v339, 16
      %v449 = vrot.slane %v447, 5
      %v450 = vsel %vm354, %v445, %v449
      %v452 = vshrl.u32 %v279, 16
      %v454 = vrot.slane %v452, 4
      %v455 = vshll.u32 %v279, 16
      %v457 = vrot.slane %v455, 5
      %v458 = vor.u32 %v454, %v457
      %v459 = vrot.slane %v458, 4
      %v461 = vshll.u32 %v280, 16
      %v463 = vrot.slane %v461, 5
      %v464 = vsel %vm354, %v459, %v463
      %v465 = vshrl.u32 %v280, 16
      %v467 = vrot.slane %v465, 4
      %v468 = vor.u32 %v467, %v463
      %v469 = vrot.slane %v468, 4
      %v471 = vshll.u32 %v340, 16
      %v473 = vrot.slane %v471, 5
      %v474 = vsel %vm354, %v469, %v473
      %v476 = vshrl.u32 %v281, 16
      %v478 = vrot.slane %v476, 4
      %v479 = vshll.u32 %v281, 16
      %v481 = vrot.slane %v479, 5
      %v482 = vor.u32 %v478, %v481
      %v483 = vrot.slane %v482, 4
      %v485 = vshll.u32 %v282, 16
      %v487 = vrot.slane %v485, 5
      %v488 = vsel %vm354, %v483, %v487
      %v489 = vshrl.u32 %v282, 16
      %v491 = vrot.slane %v489, 4
      %v492 = vor.u32 %v491, %v487
      %v493 = vrot.slane %v492, 4
      %v495 = vshll.u32 %v341, 16
      %v497 = vrot.slane %v495, 5
      %v498 = vsel %vm354, %v493, %v497
      %v500 = vshrl.u32 %v283, 16
      %v502 = vrot.slane %v500, 4
      %v503 = vshll.u32 %v283, 16
      %v505 = vrot.slane %v503, 5
      %v506 = vor.u32 %v502, %v505
      %v507 = vrot.slane %v506, 4
      %v509 = vshll.u32 %v284, 16
      %v511 = vrot.slane %v509, 5
      %v512 = vsel %vm354, %v507, %v511
      %v513 = vshrl.u32 %v284, 16
      %v515 = vrot.slane %v513, 4
      %v516 = vor.u32 %v515, %v511
      %v517 = vrot.slane %v516, 4
      %v519 = vshll.u32 %v342, 16
      %v521 = vrot.slane %v519, 5
      %v522 = vsel %vm354, %v517, %v521
      %v524 = vshrl.u32 %v285, 16
      %v526 = vrot.slane %v524, 4
      %v527 = vshll.u32 %v285, 16
      %v529 = vrot.slane %v527, 5
      %v530 = vor.u32 %v526, %v529
      %v531 = vrot.slane %v530, 4
      %v533 = vshll.u32 %v286, 16
      %v535 = vrot.slane %v533, 5
      %v536 = vsel %vm354, %v531, %v535
      %v537 = vshrl.u32 %v286, 16
      %v539 = vrot.slane %v537, 4
      %v540 = vor.u32 %v539, %v535
      %v541 = vrot.slane %v540, 4
      %v543 = vshll.u32 %v343, 16
      %v545 = vrot.slane %v543, 5
      %v546 = vsel %vm354, %v541, %v545
      %v548 = vshrl.u32 %v287, 16
      %v550 = vrot.slane %v548, 4
      %v551 = vshll.u32 %v287, 16
      %v553 = vrot.slane %v551, 5
      %v554 = vor.u32 %v550, %v553
      %v555 = vrot.slane %v554, 4
      %v557 = vshll.u32 %v288, 16
      %v559 = vrot.slane %v557, 5
      %v560 = vsel %vm354, %v555, %v559
      %v561 = vshrl.u32 %v288, 16
      %v563 = vrot.slane %v561, 4
      %v564 = vor.u32 %v563, %v559
      %v565 = vrot.slane %v564, 4
      %v567 = vshll.u32 %v344, 16
      %v569 = vrot.slane %v567, 5
      %v570 = vsel %vm354, %v565, %v569
      %v572 = vshrl.u32 %v289, 16
      %v574 = vrot.slane %v572, 4
      %v575 = vshll.u32 %v289, 16
      %v577 = vrot.slane %v575, 5
      %v578 = vor.u32 %v574, %v577
      %v579 = vrot.slane %v578, 4
      %v581 = vshll.u32 %v290, 16
      %v583 = vrot.slane %v581, 5
      %v584 = vsel %vm354, %v579, %v583
      %v585 = vshrl.u32 %v290, 16
      %v587 = vrot.slane %v585, 4
      %v588 = vor.u32 %v587, %v583
      %v589 = vrot.slane %v588, 4
      %v591 = vshll.u32 %v345, 16
      %v593 = vrot.slane %v591, 5
      %v594 = vsel %vm354, %v589, %v593
      %v596 = vshrl.u32 %v291, 16
      %v598 = vrot.slane %v596, 4
      %v599 = vshll.u32 %v291, 16
      %v601 = vrot.slane %v599, 5
      %v602 = vor.u32 %v598, %v601
      %v603 = vrot.slane %v602, 4
      %v605 = vshll.u32 %v292, 16
      %v607 = vrot.slane %v605, 5
      %v608 = vsel %vm354, %v603, %v607
      %v609 = vshrl.u32 %v292, 16
      %v611 = vrot.slane %v609, 4
      %v612 = vor.u32 %v611, %v607
      %v613 = vrot.slane %v612, 4
      %v615 = vshll.u32 %v346, 16
      %v617 = vrot.slane %v615, 5
      %v618 = vsel %vm354, %v613, %v617
      %v620 = vshrl.u32 %v293, 16
      %v622 = vrot.slane %v620, 4
      %v623 = vshll.u32 %v293, 16
      %v625 = vrot.slane %v623, 5
      %v626 = vor.u32 %v622, %v625
      %v627 = vrot.slane %v626, 4
      %v629 = vshll.u32 %v294, 16
      %v631 = vrot.slane %v629, 5
      %v632 = vsel %vm354, %v627, %v631
      %v633 = vshrl.u32 %v294, 16
      %v635 = vrot.slane %v633, 4
      %v636 = vor.u32 %v635, %v631
      %v637 = vrot.slane %v636, 4
      %v639 = vshll.u32 %v347, 16
      %v641 = vrot.slane %v639, 5
      %v642 = vsel %vm354, %v637, %v641
      %v644 = vshrl.u32 %v295, 16
      %v646 = vrot.slane %v644, 4
      %v647 = vshll.u32 %v295, 16
      %v649 = vrot.slane %v647, 5
      %v650 = vor.u32 %v646, %v649
      %v651 = vrot.slane %v650, 4
      %v653 = vshll.u32 %v296, 16
      %v655 = vrot.slane %v653, 5
      %v656 = vsel %vm354, %v651, %v655
      %v657 = vshrl.u32 %v296, 16
      %v659 = vrot.slane %v657, 4
      %v660 = vor.u32 %v659, %v655
      %v661 = vrot.slane %v660, 4
      %v663 = vshll.u32 %v348, 16
      %v665 = vrot.slane %v663, 5
      %v666 = vsel %vm354, %v661, %v665
      %v668 = vshrl.u32 %v297, 16
      %v670 = vrot.slane %v668, 4
      %v671 = vshll.u32 %v297, 16
      %v673 = vrot.slane %v671, 5
      %v674 = vor.u32 %v670, %v673
      %v675 = vrot.slane %v674, 4
      %v677 = vshll.u32 %v298, 16
      %v679 = vrot.slane %v677, 5
      %v680 = vsel %vm354, %v675, %v679
      %v681 = vshrl.u32 %v298, 16
      %v683 = vrot.slane %v681, 4
      %v684 = vor.u32 %v683, %v679
      %v685 = vrot.slane %v684, 4
      %v687 = vshll.u32 %v349, 16
      %v689 = vrot.slane %v687, 5
      %v690 = vsel %vm354, %v685, %v689
      %v692 = vshrl.u32 %v299, 16
      %v694 = vrot.slane %v692, 4
      %v695 = vshll.u32 %v299, 16
      %v697 = vrot.slane %v695, 5
      %v698 = vor.u32 %v694, %v697
      %v699 = vrot.slane %v698, 4
      %v701 = vshll.u32 %v300, 16
      %v703 = vrot.slane %v701, 5
      %v704 = vsel %vm354, %v699, %v703
      %v705 = vshrl.u32 %v300, 16
      %v707 = vrot.slane %v705, 4
      %v708 = vor.u32 %v707, %v703
      %v709 = vrot.slane %v708, 4
      %v711 = vshll.u32 %v350, 16
      %v713 = vrot.slane %v711, 5
      %v714 = vsel %vm354, %v709, %v713
      %v716 = vshrl.u32 %v301, 16
      %v718 = vrot.slane %v716, 4
      %v719 = vshll.u32 %v301, 16
      %v721 = vrot.slane %v719, 5
      %v722 = vor.u32 %v718, %v721
      %v723 = vrot.slane %v722, 4
      %v725 = vshll.u32 %v302, 16
      %v727 = vrot.slane %v725, 5
      %v728 = vsel %vm354, %v723, %v727
      %v729 = vshrl.u32 %v302, 16
      %v731 = vrot.slane %v729, 4
      %v732 = vor.u32 %v731, %v727
      %v733 = vrot.slane %v732, 4
      %v735 = vshll.u32 %v351, 16
      %v737 = vrot.slane %v735, 5
      %v738 = vsel %vm354, %v733, %v737
      %s739 = scalar_lea.vmem %s258, 408
      %v740 = vld [vmem:[%s739] sm:$0xf]
      %v741 = vld [vmem:[%s739 + $0x4] sm:$0xf]
      %v742 = vld [vmem:[%s739 + $0xc] sm:$0xf]
      %v743 = vld [vmem:[%s739 + $0x10] sm:$0xf]
      %v744 = vld [vmem:[%s739 + $0x18] sm:$0xf]
      %v745 = vld [vmem:[%s739 + $0x1c] sm:$0xf]
      %v746 = vld [vmem:[%s739 + $0x24] sm:$0xf]
      %v747 = vld [vmem:[%s739 + $0x28] sm:$0xf]
      %v748 = vld [vmem:[%s739 + $0x30] sm:$0xf]
      %v749 = vld [vmem:[%s739 + $0x34] sm:$0xf]
      %v750 = vld [vmem:[%s739 + $0x3c] sm:$0xf]
      %v751 = vld [vmem:[%s739 + $0x40] sm:$0xf]
      %v752 = vld [vmem:[%s739 + $0x48] sm:$0xf]
      %v753 = vld [vmem:[%s739 + $0x4c] sm:$0xf]
      %v754 = vld [vmem:[%s739 + $0x54] sm:$0xf]
      %v755 = vld [vmem:[%s739 + $0x58] sm:$0xf]
      %v756 = vld [vmem:[%s739 + $0x60] sm:$0xf]
      %v757 = vld [vmem:[%s739 + $0x64] sm:$0xf]
      %v758 = vld [vmem:[%s739 + $0x6c] sm:$0xf]
      %v759 = vld [vmem:[%s739 + $0x70] sm:$0xf]
      %v760 = vld [vmem:[%s739 + $0x78] sm:$0xf]
      %v761 = vld [vmem:[%s739 + $0x7c] sm:$0xf]
      %v762 = vld [vmem:[%s739 + $0x84] sm:$0xf]
      %v763 = vld [vmem:[%s739 + $0x88] sm:$0xf]
      %v764 = vld [vmem:[%s739 + $0x90] sm:$0xf]
      %v765 = vld [vmem:[%s739 + $0x94] sm:$0xf]
      %v766 = vld [vmem:[%s739 + $0x9c] sm:$0xf]
      %v767 = vld [vmem:[%s739 + $0xa0] sm:$0xf]
      %v768 = vld [vmem:[%s739 + $0xa8] sm:$0xf]
      %v769 = vld [vmem:[%s739 + $0xac] sm:$0xf]
      %v770 = vld [vmem:[%s739 + $0xb4] sm:$0xf]
      %v771 = vld [vmem:[%s739 + $0xb8] sm:$0xf]
      %v804 = vunpack.c.l.b16 %v271
      %v805 = vunpack.c.l.b16 %v272
      %v806 = vunpack.c.l.b16 %v273
      %v807 = vunpack.c.l.b16 %v274
      %v808 = vunpack.c.l.b16 %v275
      %v809 = vunpack.c.l.b16 %v276
      %v810 = vunpack.c.l.b16 %v277
      %v811 = vunpack.c.l.b16 %v278
      %v812 = vunpack.c.l.b16 %v279
      %v813 = vunpack.c.l.b16 %v280
      %v814 = vunpack.c.l.b16 %v281
      %v815 = vunpack.c.l.b16 %v282
      %v816 = vunpack.c.l.b16 %v283
      %v817 = vunpack.c.l.b16 %v284
      %v818 = vunpack.c.l.b16 %v285
      %v819 = vunpack.c.l.b16 %v286
      %v820 = vunpack.c.l.b16 %v287
      %v821 = vunpack.c.l.b16 %v288
      %v822 = vunpack.c.l.b16 %v289
      %v823 = vunpack.c.l.b16 %v290
      %v824 = vunpack.c.l.b16 %v291
      %v825 = vunpack.c.l.b16 %v292
      %v826 = vunpack.c.l.b16 %v293
      %v827 = vunpack.c.l.b16 %v294
      %v828 = vunpack.c.l.b16 %v295
      %v829 = vunpack.c.l.b16 %v296
      %v830 = vunpack.c.l.b16 %v297
      %v831 = vunpack.c.l.b16 %v298
      %v832 = vunpack.c.l.b16 %v299
      %v833 = vunpack.c.l.b16 %v300
      %v834 = vunpack.c.l.b16 %v301
      %v835 = vunpack.c.l.b16 %v302
      %v836 = vpack.c.b16 %v805, %v804
      %v837 = vpack.c.b16 %v807, %v806
      %v838 = vpack.c.b16 %v809, %v808
      %v839 = vpack.c.b16 %v811, %v810
      %v840 = vpack.c.b16 %v813, %v812
      %v841 = vpack.c.b16 %v815, %v814
      %v842 = vpack.c.b16 %v817, %v816
      %v843 = vpack.c.b16 %v819, %v818
      %v844 = vpack.c.b16 %v821, %v820
      %v845 = vpack.c.b16 %v823, %v822
      %v846 = vpack.c.b16 %v825, %v824
      %v847 = vpack.c.b16 %v827, %v826
      %v848 = vpack.c.b16 %v829, %v828
      %v849 = vpack.c.b16 %v831, %v830
      %v850 = vpack.c.b16 %v833, %v832
      %v851 = vpack.c.b16 %v835, %v834
      %v884 = vunpack.c.l.b16 %v304
      %v885 = vunpack.c.l.b16 %v305
      %v886 = vunpack.c.l.b16 %v306
      %v887 = vunpack.c.l.b16 %v307
      %v888 = vunpack.c.l.b16 %v308
      %v889 = vunpack.c.l.b16 %v309
      %v890 = vunpack.c.l.b16 %v310
      %v891 = vunpack.c.l.b16 %v311
      %v892 = vunpack.c.l.b16 %v312
      %v893 = vunpack.c.l.b16 %v313
      %v894 = vunpack.c.l.b16 %v314
      %v895 = vunpack.c.l.b16 %v315
      %v896 = vunpack.c.l.b16 %v316
      %v897 = vunpack.c.l.b16 %v317
      %v898 = vunpack.c.l.b16 %v318
      %v899 = vunpack.c.l.b16 %v319
      %v900 = vunpack.c.l.b16 %v320
      %v901 = vunpack.c.l.b16 %v321
      %v902 = vunpack.c.l.b16 %v322
      %v903 = vunpack.c.l.b16 %v323
      %v904 = vunpack.c.l.b16 %v324
      %v905 = vunpack.c.l.b16 %v325
      %v906 = vunpack.c.l.b16 %v326
      %v907 = vunpack.c.l.b16 %v327
      %v908 = vunpack.c.l.b16 %v328
      %v909 = vunpack.c.l.b16 %v329
      %v910 = vunpack.c.l.b16 %v330
      %v911 = vunpack.c.l.b16 %v331
      %v912 = vunpack.c.l.b16 %v332
      %v913 = vunpack.c.l.b16 %v333
      %v914 = vunpack.c.l.b16 %v334
      %v915 = vunpack.c.l.b16 %v335
      %v916 = vpack.c.b16 %v885, %v884
      %v917 = vpack.c.b16 %v887, %v886
      %v918 = vpack.c.b16 %v889, %v888
      %v919 = vpack.c.b16 %v891, %v890
      %v920 = vpack.c.b16 %v893, %v892
      %v921 = vpack.c.b16 %v895, %v894
      %v922 = vpack.c.b16 %v897, %v896
      %v923 = vpack.c.b16 %v899, %v898
      %v924 = vpack.c.b16 %v901, %v900
      %v925 = vpack.c.b16 %v903, %v902
      %v926 = vpack.c.b16 %v905, %v904
      %v927 = vpack.c.b16 %v907, %v906
      %v928 = vpack.c.b16 %v909, %v908
      %v929 = vpack.c.b16 %v911, %v910
      %v930 = vpack.c.b16 %v913, %v912
      %v931 = vpack.c.b16 %v915, %v914
      %932 = vrot.lane.b32.xlu0 %v916, 64
      %v933 = vpop.permute.xlu0 %932
      %934 = vrot.lane.b32.xlu0 %v917, 64
      %v935 = vpop.permute.xlu0 %934
      %936 = vrot.lane.b32.xlu0 %v918, 64
      %v937 = vpop.permute.xlu0 %936
      %938 = vrot.lane.b32.xlu0 %v919, 64
      %v939 = vpop.permute.xlu0 %938
      %940 = vrot.lane.b32.xlu0 %v920, 64
      %v941 = vpop.permute.xlu0 %940
      %942 = vrot.lane.b32.xlu0 %v921, 64
      %v943 = vpop.permute.xlu0 %942
      %944 = vrot.lane.b32.xlu0 %v922, 64
      %v945 = vpop.permute.xlu0 %944
      %946 = vrot.lane.b32.xlu0 %v923, 64
      %v947 = vpop.permute.xlu0 %946
      %948 = vrot.lane.b32.xlu0 %v924, 64
      %v949 = vpop.permute.xlu0 %948
      %950 = vrot.lane.b32.xlu0 %v925, 64
      %v951 = vpop.permute.xlu0 %950
      %952 = vrot.lane.b32.xlu0 %v926, 64
      %v953 = vpop.permute.xlu0 %952
      %954 = vrot.lane.b32.xlu0 %v927, 64
      %v955 = vpop.permute.xlu0 %954
      %956 = vrot.lane.b32.xlu0 %v928, 64
      %v957 = vpop.permute.xlu0 %956
      %958 = vrot.lane.b32.xlu0 %v929, 64
      %v959 = vpop.permute.xlu0 %958
      %960 = vrot.lane.b32.xlu0 %v930, 64
      %v961 = vpop.permute.xlu0 %960
      %962 = vrot.lane.b32.xlu0 %v931, 64
      %v963 = vpop.permute.xlu0 %962
      %v964 = vunpack.c.l.b16 %v368
      %v965 = vunpack.c.l.b16 %v378
      %v966 = vunpack.c.l.b16 %v392
      %v967 = vunpack.c.l.b16 %v402
      %v968 = vunpack.c.l.b16 %v416
      %v969 = vunpack.c.l.b16 %v426
      %v970 = vunpack.c.l.b16 %v440
      %v971 = vunpack.c.l.b16 %v450
      %v972 = vunpack.c.l.b16 %v464
      %v973 = vunpack.c.l.b16 %v474
      %v974 = vunpack.c.l.b16 %v488
      %v975 = vunpack.c.l.b16 %v498
      %v976 = vunpack.c.l.b16 %v512
      %v977 = vunpack.c.l.b16 %v522
      %v978 = vunpack.c.l.b16 %v536
      %v979 = vunpack.c.l.b16 %v546
      %v980 = vunpack.c.l.b16 %v560
      %v981 = vunpack.c.l.b16 %v570
      %v982 = vunpack.c.l.b16 %v584
      %v983 = vunpack.c.l.b16 %v594
      %v984 = vunpack.c.l.b16 %v608
      %v985 = vunpack.c.l.b16 %v618
      %v986 = vunpack.c.l.b16 %v632
      %v987 = vunpack.c.l.b16 %v642
      %v988 = vunpack.c.l.b16 %v656
      %v989 = vunpack.c.l.b16 %v666
      %v990 = vunpack.c.l.b16 %v680
      %v991 = vunpack.c.l.b16 %v690
      %v992 = vunpack.c.l.b16 %v704
      %v993 = vunpack.c.l.b16 %v714
      %v994 = vunpack.c.l.b16 %v728
      %v995 = vunpack.c.l.b16 %v738
      %v996 = vpack.c.b16 %v965, %v964
      %v997 = vpack.c.b16 %v967, %v966
      %v998 = vpack.c.b16 %v969, %v968
      %v999 = vpack.c.b16 %v971, %v970
      %v1000 = vpack.c.b16 %v973, %v972
      %v1001 = vpack.c.b16 %v975, %v974
      %v1002 = vpack.c.b16 %v977, %v976
      %v1003 = vpack.c.b16 %v979, %v978
      %v1004 = vpack.c.b16 %v981, %v980
      %v1005 = vpack.c.b16 %v983, %v982
      %v1006 = vpack.c.b16 %v985, %v984
      %v1007 = vpack.c.b16 %v987, %v986
      %v1008 = vpack.c.b16 %v989, %v988
      %v1009 = vpack.c.b16 %v991, %v990
      %v1010 = vpack.c.b16 %v993, %v992
      %v1011 = vpack.c.b16 %v995, %v994
      %v1044 = vunpack.c.l.b16 %v740
      %v1045 = vunpack.c.l.b16 %v741
      %v1046 = vunpack.c.l.b16 %v742
      %v1047 = vunpack.c.l.b16 %v743
      %v1048 = vunpack.c.l.b16 %v744
      %v1049 = vunpack.c.l.b16 %v745
      %v1050 = vunpack.c.l.b16 %v746
      %v1051 = vunpack.c.l.b16 %v747
      %v1052 = vunpack.c.l.b16 %v748
      %v1053 = vunpack.c.l.b16 %v749
      %v1054 = vunpack.c.l.b16 %v750
      %v1055 = vunpack.c.l.b16 %v751
      %v1056 = vunpack.c.l.b16 %v752
      %v1057 = vunpack.c.l.b16 %v753
      %v1058 = vunpack.c.l.b16 %v754
      %v1059 = vunpack.c.l.b16 %v755
      %v1060 = vunpack.c.l.b16 %v756
      %v1061 = vunpack.c.l.b16 %v757
      %v1062 = vunpack.c.l.b16 %v758
      %v1063 = vunpack.c.l.b16 %v759
      %v1064 = vunpack.c.l.b16 %v760
      %v1065 = vunpack.c.l.b16 %v761
      %v1066 = vunpack.c.l.b16 %v762
      %v1067 = vunpack.c.l.b16 %v763
      %v1068 = vunpack.c.l.b16 %v764
      %v1069 = vunpack.c.l.b16 %v765
      %v1070 = vunpack.c.l.b16 %v766
      %v1071 = vunpack.c.l.b16 %v767
      %v1072 = vunpack.c.l.b16 %v768
      %v1073 = vunpack.c.l.b16 %v769
      %v1074 = vunpack.c.l.b16 %v770
      %v1075 = vunpack.c.l.b16 %v771
      %v1076 = vpack.c.b16 %v1045, %v1044
      %v1077 = vpack.c.b16 %v1047, %v1046
      %v1078 = vpack.c.b16 %v1049, %v1048
      %v1079 = vpack.c.b16 %v1051, %v1050
      %v1080 = vpack.c.b16 %v1053, %v1052
      %v1081 = vpack.c.b16 %v1055, %v1054
      %v1082 = vpack.c.b16 %v1057, %v1056
      %v1083 = vpack.c.b16 %v1059, %v1058
      %v1084 = vpack.c.b16 %v1061, %v1060
      %v1085 = vpack.c.b16 %v1063, %v1062
      %v1086 = vpack.c.b16 %v1065, %v1064
      %v1087 = vpack.c.b16 %v1067, %v1066
      %v1088 = vpack.c.b16 %v1069, %v1068
      %v1089 = vpack.c.b16 %v1071, %v1070
      %v1090 = vpack.c.b16 %v1073, %v1072
      %v1091 = vpack.c.b16 %v1075, %v1074
      %1092 = vrot.lane.b32.xlu0 %v1076, 64
      %v1093 = vpop.permute.xlu0 %1092
      %1094 = vrot.lane.b32.xlu0 %v1077, 64
      %v1095 = vpop.permute.xlu0 %1094
      %1096 = vrot.lane.b32.xlu0 %v1078, 64
      %v1097 = vpop.permute.xlu0 %1096
      %1098 = vrot.lane.b32.xlu0 %v1079, 64
      %v1099 = vpop.permute.xlu0 %1098
      %1100 = vrot.lane.b32.xlu0 %v1080, 64
      %v1101 = vpop.permute.xlu0 %1100
      %1102 = vrot.lane.b32.xlu0 %v1081, 64
      %v1103 = vpop.permute.xlu0 %1102
      %1104 = vrot.lane.b32.xlu0 %v1082, 64
      %v1105 = vpop.permute.xlu0 %1104
      %1106 = vrot.lane.b32.xlu0 %v1083, 64
      %v1107 = vpop.permute.xlu0 %1106
      %1108 = vrot.lane.b32.xlu0 %v1084, 64
      %v1109 = vpop.permute.xlu0 %1108
      %1110 = vrot.lane.b32.xlu0 %v1085, 64
      %v1111 = vpop.permute.xlu0 %1110
      %1112 = vrot.lane.b32.xlu0 %v1086, 64
      %v1113 = vpop.permute.xlu0 %1112
      %1114 = vrot.lane.b32.xlu0 %v1087, 64
      %v1115 = vpop.permute.xlu0 %1114
      %1116 = vrot.lane.b32.xlu0 %v1088, 64
      %v1117 = vpop.permute.xlu0 %1116
      %1118 = vrot.lane.b32.xlu0 %v1089, 64
      %v1119 = vpop.permute.xlu0 %1118
      %1120 = vrot.lane.b32.xlu0 %v1090, 64
      %v1121 = vpop.permute.xlu0 %1120
      %1122 = vrot.lane.b32.xlu0 %v1091, 64
      %v1123 = vpop.permute.xlu0 %1122
      %vm1124 = vcmask 523264
      %v1127 = vsel %vm1124, %v836, %v933
      %v1131 = vsel %vm1124, %v837, %v935
      %v1135 = vsel %vm1124, %v838, %v937
      %v1139 = vsel %vm1124, %v839, %v939
      %v1143 = vsel %vm1124, %v840, %v941
      %v1147 = vsel %vm1124, %v841, %v943
      %v1151 = vsel %vm1124, %v842, %v945
      %v1155 = vsel %vm1124, %v843, %v947
      %v1159 = vsel %vm1124, %v844, %v949
      %v1163 = vsel %vm1124, %v845, %v951
      %v1167 = vsel %vm1124, %v846, %v953
      %v1171 = vsel %vm1124, %v847, %v955
      %v1175 = vsel %vm1124, %v848, %v957
      %v1179 = vsel %vm1124, %v849, %v959
      %v1183 = vsel %vm1124, %v850, %v961
      %v1187 = vsel %vm1124, %v851, %v963
      %v1191 = vsel %vm1124, %v996, %v1093
      %v1195 = vsel %vm1124, %v997, %v1095
      %v1199 = vsel %vm1124, %v998, %v1097
      %v1203 = vsel %vm1124, %v999, %v1099
      %v1207 = vsel %vm1124, %v1000, %v1101
      %v1211 = vsel %vm1124, %v1001, %v1103
      %v1215 = vsel %vm1124, %v1002, %v1105
      %v1219 = vsel %vm1124, %v1003, %v1107
      %v1223 = vsel %vm1124, %v1004, %v1109
      %v1227 = vsel %vm1124, %v1005, %v1111
      %v1231 = vsel %vm1124, %v1006, %v1113
      %v1235 = vsel %vm1124, %v1007, %v1115
      %v1239 = vsel %vm1124, %v1008, %v1117
      %v1243 = vsel %vm1124, %v1009, %v1119
      %v1247 = vsel %vm1124, %v1010, %v1121
      %v1251 = vsel %vm1124, %v1011, %v1123
      %v1253 = vld [vmem:[%s1] sm:$0xf]
      %v1254 = vld [vmem:[%s1 + $0x4] sm:$0xf]
      %v1255 = vld [vmem:[%s1 + $0x8] sm:$0xf]
      %v1256 = vld [vmem:[%s1 + $0xc] sm:$0xf]
      %v1257 = vld [vmem:[%s1 + $0x10] sm:$0xf]
      %v1258 = vld [vmem:[%s1 + $0x14] sm:$0xf]
      %v1259 = vld [vmem:[%s1 + $0x18] sm:$0xf]
      %v1260 = vld [vmem:[%s1 + $0x1c] sm:$0xf]
      %v1261 = vld [vmem:[%s1 + $0x20] sm:$0xf]
      %v1262 = vld [vmem:[%s1 + $0x24] sm:$0xf]
      %v1263 = vld [vmem:[%s1 + $0x28] sm:$0xf]
      %v1264 = vld [vmem:[%s1 + $0x2c] sm:$0xf]
      %v1265 = vld [vmem:[%s1 + $0x30] sm:$0xf]
      %v1266 = vld [vmem:[%s1 + $0x34] sm:$0xf]
      %v1267 = vld [vmem:[%s1 + $0x38] sm:$0xf]
      %v1268 = vld [vmem:[%s1 + $0x3c] sm:$0xf]
      %v1269 = vld [vmem:[%s1 + $0x40] sm:$0xf]
      %v1270 = vld [vmem:[%s1 + $0x44] sm:$0xf]
      %v1271 = vld [vmem:[%s1 + $0x48] sm:$0xf]
      %v1272 = vld [vmem:[%s1 + $0x4c] sm:$0xf]
      %v1273 = vld [vmem:[%s1 + $0x50] sm:$0xf]
      %v1274 = vld [vmem:[%s1 + $0x54] sm:$0xf]
      %v1275 = vld [vmem:[%s1 + $0x58] sm:$0xf]
      %v1276 = vld [vmem:[%s1 + $0x5c] sm:$0xf]
      %v1277 = vld [vmem:[%s1 + $0x60] sm:$0xf]
      %v1278 = vld [vmem:[%s1 + $0x64] sm:$0xf]
      %v1279 = vld [vmem:[%s1 + $0x68] sm:$0xf]
      %v1280 = vld [vmem:[%s1 + $0x6c] sm:$0xf]
      %v1281 = vld [vmem:[%s1 + $0x70] sm:$0xf]
      %v1282 = vld [vmem:[%s1 + $0x74] sm:$0xf]
      %v1283 = vld [vmem:[%s1 + $0x78] sm:$0xf]
      %v1284 = vld [vmem:[%s1 + $0x7c] sm:$0xf]
      %v1317 = vunpack.c.l.b16 %v1253
      %v1318 = vunpack.c.l.b16 %v1254
      %v1319 = vunpack.c.l.b16 %v1255
      %v1320 = vunpack.c.l.b16 %v1256
      %v1321 = vunpack.c.l.b16 %v1257
      %v1322 = vunpack.c.l.b16 %v1258
      %v1323 = vunpack.c.l.b16 %v1259
      %v1324 = vunpack.c.l.b16 %v1260
      %v1325 = vunpack.c.l.b16 %v1261
      %v1326 = vunpack.c.l.b16 %v1262
      %v1327 = vunpack.c.l.b16 %v1263
      %v1328 = vunpack.c.l.b16 %v1264
      %v1329 = vunpack.c.l.b16 %v1265
      %v1330 = vunpack.c.l.b16 %v1266
      %v1331 = vunpack.c.l.b16 %v1267
      %v1332 = vunpack.c.l.b16 %v1268
      %v1333 = vunpack.c.l.b16 %v1269
      %v1334 = vunpack.c.l.b16 %v1270
      %v1335 = vunpack.c.l.b16 %v1271
      %v1336 = vunpack.c.l.b16 %v1272
      %v1337 = vunpack.c.l.b16 %v1273
      %v1338 = vunpack.c.l.b16 %v1274
      %v1339 = vunpack.c.l.b16 %v1275
      %v1340 = vunpack.c.l.b16 %v1276
      %v1341 = vunpack.c.l.b16 %v1277
      %v1342 = vunpack.c.l.b16 %v1278
      %v1343 = vunpack.c.l.b16 %v1279
      %v1344 = vunpack.c.l.b16 %v1280
      %v1345 = vunpack.c.l.b16 %v1281
      %v1346 = vunpack.c.l.b16 %v1282
      %v1347 = vunpack.c.l.b16 %v1283
      %v1348 = vunpack.c.l.b16 %v1284
      %v1349 = vpack.c.b16 %v1318, %v1317
      %v1350 = vpack.c.b16 %v1320, %v1319
      %v1351 = vpack.c.b16 %v1322, %v1321
      %v1352 = vpack.c.b16 %v1324, %v1323
      %v1353 = vpack.c.b16 %v1326, %v1325
      %v1354 = vpack.c.b16 %v1328, %v1327
      %v1355 = vpack.c.b16 %v1330, %v1329
      %v1356 = vpack.c.b16 %v1332, %v1331
      %v1357 = vpack.c.b16 %v1334, %v1333
      %v1358 = vpack.c.b16 %v1336, %v1335
      %v1359 = vpack.c.b16 %v1338, %v1337
      %v1360 = vpack.c.b16 %v1340, %v1339
      %v1361 = vpack.c.b16 %v1342, %v1341
      %v1362 = vpack.c.b16 %v1344, %v1343
      %v1363 = vpack.c.b16 %v1346, %v1345
      %v1364 = vpack.c.b16 %v1348, %v1347
      %1381 = vmatprep.subr.bf16.mxu0 0
      %1382 = vmatpush1.bf16.msra.mxu0 %v1349
      %1383 = vmatprep.subr.bf16.mxu0 0
      %1384 = vmatpush1.bf16.msra.mxu0 %v1350
      %1385 = vmatprep.subr.bf16.mxu0 0
      %1386 = vmatpush1.bf16.msra.mxu0 %v1351
      %1387 = vmatprep.subr.bf16.mxu0 0
      %1388 = vmatpush1.bf16.msra.mxu0 %v1352
      %1389 = vmatprep.subr.bf16.mxu0 0
      %1390 = vmatpush1.bf16.msra.mxu0 %v1353
      %1391 = vmatprep.subr.bf16.mxu0 0
      %1392 = vmatpush1.bf16.msra.mxu0 %v1354
      %1393 = vmatprep.subr.bf16.mxu0 0
      %1394 = vmatpush1.bf16.msra.mxu0 %v1355
      %1395 = vmatprep.subr.bf16.mxu0 0
      %1396 = vmatpush1.bf16.msra.mxu0 %v1356
      %1397 = vmatprep.subr.bf16.mxu0 0
      %1398 = vmatpush1.bf16.msra.mxu0 %v1357
      %1399 = vmatprep.subr.bf16.mxu0 0
      %1400 = vmatpush1.bf16.msra.mxu0 %v1358
      %1401 = vmatprep.subr.bf16.mxu0 0
      %1402 = vmatpush1.bf16.msra.mxu0 %v1359
      %1403 = vmatprep.subr.bf16.mxu0 0
      %1404 = vmatpush1.bf16.msra.mxu0 %v1360
      %1405 = vmatprep.subr.bf16.mxu0 0
      %1406 = vmatpush1.bf16.msra.mxu0 %v1361
      %1407 = vmatprep.subr.bf16.mxu0 0
      %1408 = vmatpush1.bf16.msra.mxu0 %v1362
      %1409 = vmatprep.subr.bf16.mxu0 0
      %1410 = vmatpush1.bf16.msra.mxu0 %v1363
      %1411 = vmatprep.subr.bf16.mxu0 0
      %1412 = vmatpush1.bf16.msra.mxu0 %v1364
      %1413 = vmatprep.mubr.bf16.mxu0 %v1191
      %1414 = vmatmul.mubr.bf16.gmra.mrb[0].mxu0 %v1127
      %v1415 = vpop.f32.mrb[0].mxu0
      %v1416 = vadd.f32 0.0, %v1415
      %v1417 = vpop.f32.mrb[0].mxu0
      %v1418 = vpop.f32.mrb[0].mxu0
      %v1419 = vadd.f32 0.0, %v1418
      %v1420 = vpop.f32.mrb[0].mxu0
      %1421 = vmatprep.mubr.bf16.mxu0 %v1195
      %1422 = vmatmul.mubr.bf16.gmra.mrb[0].mxu0 %v1131
      %v1423 = vpop.f32.mrb[0].mxu0
      %v1424 = vadd.f32 0.0, %v1423
      %v1425 = vpop.f32.mrb[0].mxu0
      %v1426 = vpop.f32.mrb[0].mxu0
      %v1427 = vadd.f32 0.0, %v1426
      %v1428 = vpop.f32.mrb[0].mxu0
      %1429 = vmatprep.mubr.bf16.mxu0 %v1199
      %1430 = vmatmul.mubr.bf16.gmra.mrb[0].mxu0 %v1135
      %v1431 = vpop.f32.mrb[0].mxu0
      %v1432 = vadd.f32 0.0, %v1431
      %v1433 = vpop.f32.mrb[0].mxu0
      %v1434 = vpop.f32.mrb[0].mxu0
      %v1435 = vadd.f32 0.0, %v1434
      %v1436 = vpop.f32.mrb[0].mxu0
      %1437 = vmatprep.mubr.bf16.mxu0 %v1203
      %1438 = vmatmul.mubr.bf16.gmra.mrb[0].mxu0 %v1139
      %v1439 = vpop.f32.mrb[0].mxu0
      %v1440 = vadd.f32 0.0, %v1439
      %v1441 = vpop.f32.mrb[0].mxu0
      %v1442 = vpop.f32.mrb[0].mxu0
      %v1443 = vadd.f32 0.0, %v1442
      %v1444 = vpop.f32.mrb[0].mxu0
      %1445 = vmatprep.mubr.bf16.mxu0 %v1207
      %1446 = vmatmul.mubr.bf16.gmra.mrb[0].mxu0 %v1143
      %v1447 = vpop.f32.mrb[0].mxu0
      %v1448 = vadd.f32 0.0, %v1447
      %v1449 = vpop.f32.mrb[0].mxu0
      %v1450 = vpop.f32.mrb[0].mxu0
      %v1451 = vadd.f32 0.0, %v1450
      %v1452 = vpop.f32.mrb[0].mxu0
      %1453 = vmatprep.mubr.bf16.mxu0 %v1211
      %1454 = vmatmul.mubr.bf16.gmra.mrb[0].mxu0 %v1147
      %v1455 = vpop.f32.mrb[0].mxu0
      %v1456 = vadd.f32 0.0, %v1455
      %v1457 = vpop.f32.mrb[0].mxu0
      %v1458 = vpop.f32.mrb[0].mxu0
      %v1459 = vadd.f32 0.0, %v1458
      %v1460 = vpop.f32.mrb[0].mxu0
      %1461 = vmatprep.mubr.bf16.mxu0 %v1215
      %1462 = vmatmul.mubr.bf16.gmra.mrb[0].mxu0 %v1151
      %v1463 = vpop.f32.mrb[0].mxu0
      %v1464 = vadd.f32 0.0, %v1463
      %v1465 = vpop.f32.mrb[0].mxu0
      %v1466 = vpop.f32.mrb[0].mxu0
      %v1467 = vadd.f32 0.0, %v1466
      %v1468 = vpop.f32.mrb[0].mxu0
      %1469 = vmatprep.mubr.bf16.mxu0 %v1219
      %1470 = vmatmul.mubr.bf16.gmra.mrb[0].mxu0 %v1155
      %v1471 = vpop.f32.mrb[0].mxu0
      %v1472 = vadd.f32 0.0, %v1471
      %v1473 = vpop.f32.mrb[0].mxu0
      %v1474 = vpop.f32.mrb[0].mxu0
      %v1475 = vadd.f32 0.0, %v1474
      %v1476 = vpop.f32.mrb[0].mxu0
      %1477 = vmatprep.mubr.bf16.mxu0 %v1223
      %1478 = vmatmul.mubr.bf16.gmra.mrb[0].mxu0 %v1159
      %v1479 = vpop.f32.mrb[0].mxu0
      %v1480 = vadd.f32 0.0, %v1479
      %v1481 = vpop.f32.mrb[0].mxu0
      %v1482 = vpop.f32.mrb[0].mxu0
      %v1483 = vadd.f32 0.0, %v1482
      %v1484 = vpop.f32.mrb[0].mxu0
      %1485 = vmatprep.mubr.bf16.mxu0 %v1227
      %1486 = vmatmul.mubr.bf16.gmra.mrb[0].mxu0 %v1163
      %v1487 = vpop.f32.mrb[0].mxu0
      %v1488 = vadd.f32 0.0, %v1487
      %v1489 = vpop.f32.mrb[0].mxu0
      %v1490 = vpop.f32.mrb[0].mxu0
      %v1491 = vadd.f32 0.0, %v1490
      %v1492 = vpop.f32.mrb[0].mxu0
      %1493 = vmatprep.mubr.bf16.mxu0 %v1231
      %1494 = vmatmul.mubr.bf16.gmra.mrb[0].mxu0 %v1167
      %v1495 = vpop.f32.mrb[0].mxu0
      %v1496 = vadd.f32 0.0, %v1495
      %v1497 = vpop.f32.mrb[0].mxu0
      %v1498 = vpop.f32.mrb[0].mxu0
      %v1499 = vadd.f32 0.0, %v1498
      %v1500 = vpop.f32.mrb[0].mxu0
      %1501 = vmatprep.mubr.bf16.mxu0 %v1235
      %1502 = vmatmul.mubr.bf16.gmra.mrb[0].mxu0 %v1171
      %v1503 = vpop.f32.mrb[0].mxu0
      %v1504 = vadd.f32 0.0, %v1503
      %v1505 = vpop.f32.mrb[0].mxu0
      %v1506 = vpop.f32.mrb[0].mxu0
      %v1507 = vadd.f32 0.0, %v1506
      %v1508 = vpop.f32.mrb[0].mxu0
      %1509 = vmatprep.mubr.bf16.mxu0 %v1239
      %1510 = vmatmul.mubr.bf16.gmra.mrb[0].mxu0 %v1175
      %v1511 = vpop.f32.mrb[0].mxu0
      %v1512 = vadd.f32 0.0, %v1511
      %v1513 = vpop.f32.mrb[0].mxu0
      %v1514 = vpop.f32.mrb[0].mxu0
      %v1515 = vadd.f32 0.0, %v1514
      %v1516 = vpop.f32.mrb[0].mxu0
      %1517 = vmatprep.mubr.bf16.mxu0 %v1243
      %1518 = vmatmul.mubr.bf16.gmra.mrb[0].mxu0 %v1179
      %v1519 = vpop.f32.mrb[0].mxu0
      %v1520 = vadd.f32 0.0, %v1519
      %v1521 = vpop.f32.mrb[0].mxu0
      %v1522 = vpop.f32.mrb[0].mxu0
      %v1523 = vadd.f32 0.0, %v1522
      %v1524 = vpop.f32.mrb[0].mxu0
      %1525 = vmatprep.mubr.bf16.mxu0 %v1247
      %1526 = vmatmul.mubr.bf16.gmra.mrb[0].mxu0 %v1183
      %v1527 = vpop.f32.mrb[0].mxu0
      %v1528 = vadd.f32 0.0, %v1527
      %v1529 = vpop.f32.mrb[0].mxu0
      %v1530 = vpop.f32.mrb[0].mxu0
      %v1531 = vadd.f32 0.0, %v1530
      %v1532 = vpop.f32.mrb[0].mxu0
      %1533 = vmatprep.mubr.bf16.mxu0 %v1251
      %1534 = vmatmul.mubr.bf16.gmra.mrb[0].mxu0 %v1187
      %v1535 = vpop.f32.mrb[0].mxu0
      %v1536 = vadd.f32 0.0, %v1535
      %v1537 = vpop.f32.mrb[0].mxu0
      %v1538 = vpop.f32.mrb[0].mxu0
      %v1539 = vadd.f32 0.0, %v1538
      %v1540 = vpop.f32.mrb[0].mxu0
      %1541 = vdwg.mxu0
      %1542 = vst [vmem:[#allocation2] sm:$0xff] %v1416
      %1543 = vst [vmem:[#allocation2 + $0x8] sm:$0xff] %v1419
      %1544 = vst [vmem:[#allocation2 + $0x10] sm:$0xff] %v1424
      %1545 = vst [vmem:[#allocation2 + $0x18] sm:$0xff] %v1427
      %1546 = vst [vmem:[#allocation2 + $0x20] sm:$0xff] %v1432
      %1547 = vst [vmem:[#allocation2 + $0x28] sm:$0xff] %v1435
      %1548 = vst [vmem:[#allocation2 + $0x30] sm:$0xff] %v1440
      %1549 = vst [vmem:[#allocation2 + $0x38] sm:$0xff] %v1443
      %1550 = vst [vmem:[#allocation2 + $0x40] sm:$0xff] %v1448
      %1551 = vst [vmem:[#allocation2 + $0x48] sm:$0xff] %v1451
      %1552 = vst [vmem:[#allocation2 + $0x50] sm:$0xff] %v1456
      %1553 = vst [vmem:[#allocation2 + $0x58] sm:$0xff] %v1459
      %1554 = vst [vmem:[#allocation2 + $0x60] sm:$0xff] %v1464
      %1555 = vst [vmem:[#allocation2 + $0x68] sm:$0xff] %v1467
      %1556 = vst [vmem:[#allocation2 + $0x70] sm:$0xff] %v1472
      %1557 = vst [vmem:[#allocation2 + $0x78] sm:$0xff] %v1475
      %1558 = vst [vmem:[#allocation2 + $0x80] sm:$0xff] %v1480
      %1559 = vst [vmem:[#allocation2 + $0x88] sm:$0xff] %v1483
      %1560 = vst [vmem:[#allocation2 + $0x90] sm:$0xff] %v1488
      %1561 = vst [vmem:[#allocation2 + $0x98] sm:$0xff] %v1491
      %1562 = vst [vmem:[#allocation2 + $0xa0] sm:$0xff] %v1496
      %1563 = vst [vmem:[#allocation2 + $0xa8] sm:$0xff] %v1499
      %1564 = vst [vmem:[#allocation2 + $0xb0] sm:$0xff] %v1504
      %1565 = vst [vmem:[#allocation2 + $0xb8] sm:$0xff] %v1507
      %1566 = vst [vmem:[#allocation2 + $0xc0] sm:$0xff] %v1512
      %1567 = vst [vmem:[#allocation2 + $0xc8] sm:$0xff] %v1515
      %1568 = vst [vmem:[#allocation2 + $0xd0] sm:$0xff] %v1520
      %1569 = vst [vmem:[#allocation2 + $0xd8] sm:$0xff] %v1523
      %1570 = vst [vmem:[#allocation2 + $0xe0] sm:$0xff] %v1528
      %1571 = vst [vmem:[#allocation2 + $0xe8] sm:$0xff] %v1531
      %1572 = vst [vmem:[#allocation2 + $0xf0] sm:$0xff] %v1536
      %1573 = vst [vmem:[#allocation2 + $0xf8] sm:$0xff] %v1539
      %s1574 = scalar_lea.vmem %s258, 612
      %v1575 = vld [vmem:[%s1574] sm:$0xf]
      %v1576 = vld [vmem:[%s1574 + $0x4] sm:$0xf]
      %v1577 = vld [vmem:[%s1574 + $0xc] sm:$0xf]
      %v1578 = vld [vmem:[%s1574 + $0x10] sm:$0xf]
      %v1579 = vld [vmem:[%s1574 + $0x18] sm:$0xf]
      %v1580 = vld [vmem:[%s1574 + $0x1c] sm:$0xf]
      %v1581 = vld [vmem:[%s1574 + $0x24] sm:$0xf]
      %v1582 = vld [vmem:[%s1574 + $0x28] sm:$0xf]
      %v1583 = vld [vmem:[%s1574 + $0x30] sm:$0xf]
      %v1584 = vld [vmem:[%s1574 + $0x34] sm:$0xf]
      %v1585 = vld [vmem:[%s1574 + $0x3c] sm:$0xf]
      %v1586 = vld [vmem:[%s1574 + $0x40] sm:$0xf]
      %v1587 = vld [vmem:[%s1574 + $0x48] sm:$0xf]
      %v1588 = vld [vmem:[%s1574 + $0x4c] sm:$0xf]
      %v1589 = vld [vmem:[%s1574 + $0x54] sm:$0xf]
      %v1590 = vld [vmem:[%s1574 + $0x58] sm:$0xf]
      %v1591 = vld [vmem:[%s1574 + $0x60] sm:$0xf]
      %v1592 = vld [vmem:[%s1574 + $0x64] sm:$0xf]
      %v1593 = vld [vmem:[%s1574 + $0x6c] sm:$0xf]
      %v1594 = vld [vmem:[%s1574 + $0x70] sm:$0xf]
      %v1595 = vld [vmem:[%s1574 + $0x78] sm:$0xf]
      %v1596 = vld [vmem:[%s1574 + $0x7c] sm:$0xf]
      %v1597 = vld [vmem:[%s1574 + $0x84] sm:$0xf]
      %v1598 = vld [vmem:[%s1574 + $0x88] sm:$0xf]
      %v1599 = vld [vmem:[%s1574 + $0x90] sm:$0xf]
      %v1600 = vld [vmem:[%s1574 + $0x94] sm:$0xf]
      %v1601 = vld [vmem:[%s1574 + $0x9c] sm:$0xf]
      %v1602 = vld [vmem:[%s1574 + $0xa0] sm:$0xf]
      %v1603 = vld [vmem:[%s1574 + $0xa8] sm:$0xf]
      %v1604 = vld [vmem:[%s1574 + $0xac] sm:$0xf]
      %v1605 = vld [vmem:[%s1574 + $0xb4] sm:$0xf]
      %v1606 = vld [vmem:[%s1574 + $0xb8] sm:$0xf]
      %v1607 = vld [vmem:[%s739] sm:$0xf]
      %v1608 = vld [vmem:[%s739 + $0x4] sm:$0xf]
      %v1609 = vld [vmem:[%s739 + $0x8] sm:$0x1]
      %v1610 = vld [vmem:[%s739 + $0xc] sm:$0xf]
      %v1611 = vld [vmem:[%s739 + $0x10] sm:$0xf]
      %v1612 = vld [vmem:[%s739 + $0x14] sm:$0x1]
      %v1613 = vld [vmem:[%s739 + $0x18] sm:$0xf]
      %v1614 = vld [vmem:[%s739 + $0x1c] sm:$0xf]
      %v1615 = vld [vmem:[%s739 + $0x20] sm:$0x1]
      %v1616 = vld [vmem:[%s739 + $0x24] sm:$0xf]
      %v1617 = vld [vmem:[%s739 + $0x28] sm:$0xf]
      %v1618 = vld [vmem:[%s739 + $0x2c] sm:$0x1]
      %v1619 = vld [vmem:[%s739 + $0x30] sm:$0xf]
      %v1620 = vld [vmem:[%s739 + $0x34] sm:$0xf]
      %v1621 = vld [vmem:[%s739 + $0x38] sm:$0x1]
      %v1622 = vld [vmem:[%s739 + $0x3c] sm:$0xf]
      %v1623 = vld [vmem:[%s739 + $0x40] sm:$0xf]
      %v1624 = vld [vmem:[%s739 + $0x44] sm:$0x1]
      %v1625 = vld [vmem:[%s739 + $0x48] sm:$0xf]
      %v1626 = vld [vmem:[%s739 + $0x4c] sm:$0xf]
      %v1627 = vld [vmem:[%s739 + $0x50] sm:$0x1]
      %v1628 = vld [vmem:[%s739 + $0x54] sm:$0xf]
      %v1629 = vld [vmem:[%s739 + $0x58] sm:$0xf]
      %v1630 = vld [vmem:[%s739 + $0x5c] sm:$0x1]
      %v1631 = vld [vmem:[%s739 + $0x60] sm:$0xf]
      %v1632 = vld [vmem:[%s739 + $0x64] sm:$0xf]
      %v1633 = vld [vmem:[%s739 + $0x68] sm:$0x1]
      %v1634 = vld [vmem:[%s739 + $0x6c] sm:$0xf]
      %v1635 = vld [vmem:[%s739 + $0x70] sm:$0xf]
      %v1636 = vld [vmem:[%s739 + $0x74] sm:$0x1]
      %v1637 = vld [vmem:[%s739 + $0x78] sm:$0xf]
      %v1638 = vld [vmem:[%s739 + $0x7c] sm:$0xf]
      %v1639 = vld [vmem:[%s739 + $0x80] sm:$0x1]
      %v1640 = vld [vmem:[%s739 + $0x84] sm:$0xf]
      %v1641 = vld [vmem:[%s739 + $0x88] sm:$0xf]
      %v1642 = vld [vmem:[%s739 + $0x8c] sm:$0x1]
      %v1643 = vld [vmem:[%s739 + $0x90] sm:$0xf]
      %v1644 = vld [vmem:[%s739 + $0x94] sm:$0xf]
      %v1645 = vld [vmem:[%s739 + $0x98] sm:$0x1]
      %v1646 = vld [vmem:[%s739 + $0x9c] sm:$0xf]
      %v1647 = vld [vmem:[%s739 + $0xa0] sm:$0xf]
      %v1648 = vld [vmem:[%s739 + $0xa4] sm:$0x1]
      %v1649 = vld [vmem:[%s739 + $0xa8] sm:$0xf]
      %v1650 = vld [vmem:[%s739 + $0xac] sm:$0xf]
      %v1651 = vld [vmem:[%s739 + $0xb0] sm:$0x1]
      %v1652 = vld [vmem:[%s739 + $0xb4] sm:$0xf]
      %v1653 = vld [vmem:[%s739 + $0xb8] sm:$0xf]
      %v1654 = vld [vmem:[%s739 + $0xbc] sm:$0x1]
      %v1656 = vshrl.u32 %v1607, 16
      %v1658 = vrot.slane %v1656, 4
      %v1659 = vshll.u32 %v1607, 16
      %v1661 = vrot.slane %v1659, 5
      %v1662 = vor.u32 %v1658, %v1661
      %v1663 = vrot.slane %v1662, 4
      %v1665 = vshll.u32 %v1608, 16
      %v1667 = vrot.slane %v1665, 5
      %v1668 = vsel %vm354, %v1663, %v1667
      %v1669 = vshrl.u32 %v1608, 16
      %v1671 = vrot.slane %v1669, 4
      %v1672 = vor.u32 %v1671, %v1667
      %v1673 = vrot.slane %v1672, 4
      %v1675 = vshll.u32 %v1609, 16
      %v1677 = vrot.slane %v1675, 5
      %v1678 = vsel %vm354, %v1673, %v1677
      %v1680 = vshrl.u32 %v1610, 16
      %v1682 = vrot.slane %v1680, 4
      %v1683 = vshll.u32 %v1610, 16
      %v1685 = vrot.slane %v1683, 5
      %v1686 = vor.u32 %v1682, %v1685
      %v1687 = vrot.slane %v1686, 4
      %v1689 = vshll.u32 %v1611, 16
      %v1691 = vrot.slane %v1689, 5
      %v1692 = vsel %vm354, %v1687, %v1691
      %v1693 = vshrl.u32 %v1611, 16
      %v1695 = vrot.slane %v1693, 4
      %v1696 = vor.u32 %v1695, %v1691
      %v1697 = vrot.slane %v1696, 4
      %v1699 = vshll.u32 %v1612, 16
      %v1701 = vrot.slane %v1699, 5
      %v1702 = vsel %vm354, %v1697, %v1701
      %v1704 = vshrl.u32 %v1613, 16
      %v1706 = vrot.slane %v1704, 4
      %v1707 = vshll.u32 %v1613, 16
      %v1709 = vrot.slane %v1707, 5
      %v1710 = vor.u32 %v1706, %v1709
      %v1711 = vrot.slane %v1710, 4
      %v1713 = vshll.u32 %v1614, 16
      %v1715 = vrot.slane %v1713, 5
      %v1716 = vsel %vm354, %v1711, %v1715
      %v1717 = vshrl.u32 %v1614, 16
      %v1719 = vrot.slane %v1717, 4
      %v1720 = vor.u32 %v1719, %v1715
      %v1721 = vrot.slane %v1720, 4
      %v1723 = vshll.u32 %v1615, 16
      %v1725 = vrot.slane %v1723, 5
      %v1726 = vsel %vm354, %v1721, %v1725
      %v1728 = vshrl.u32 %v1616, 16
      %v1730 = vrot.slane %v1728, 4
      %v1731 = vshll.u32 %v1616, 16
      %v1733 = vrot.slane %v1731, 5
      %v1734 = vor.u32 %v1730, %v1733
      %v1735 = vrot.slane %v1734, 4
      %v1737 = vshll.u32 %v1617, 16
      %v1739 = vrot.slane %v1737, 5
      %v1740 = vsel %vm354, %v1735, %v1739
      %v1741 = vshrl.u32 %v1617, 16
      %v1743 = vrot.slane %v1741, 4
      %v1744 = vor.u32 %v1743, %v1739
      %v1745 = vrot.slane %v1744, 4
      %v1747 = vshll.u32 %v1618, 16
      %v1749 = vrot.slane %v1747, 5
      %v1750 = vsel %vm354, %v1745, %v1749
      %v1752 = vshrl.u32 %v1619, 16
      %v1754 = vrot.slane %v1752, 4
      %v1755 = vshll.u32 %v1619, 16
      %v1757 = vrot.slane %v1755, 5
      %v1758 = vor.u32 %v1754, %v1757
      %v1759 = vrot.slane %v1758, 4
      %v1761 = vshll.u32 %v1620, 16
      %v1763 = vrot.slane %v1761, 5
      %v1764 = vsel %vm354, %v1759, %v1763
      %v1765 = vshrl.u32 %v1620, 16
      %v1767 = vrot.slane %v1765, 4
      %v1768 = vor.u32 %v1767, %v1763
      %v1769 = vrot.slane %v1768, 4
      %v1771 = vshll.u32 %v1621, 16
      %v1773 = vrot.slane %v1771, 5
      %v1774 = vsel %vm354, %v1769, %v1773
      %v1776 = vshrl.u32 %v1622, 16
      %v1778 = vrot.slane %v1776, 4
      %v1779 = vshll.u32 %v1622, 16
      %v1781 = vrot.slane %v1779, 5
      %v1782 = vor.u32 %v1778, %v1781
      %v1783 = vrot.slane %v1782, 4
      %v1785 = vshll.u32 %v1623, 16
      %v1787 = vrot.slane %v1785, 5
      %v1788 = vsel %vm354, %v1783, %v1787
      %v1789 = vshrl.u32 %v1623, 16
      %v1791 = vrot.slane %v1789, 4
      %v1792 = vor.u32 %v1791, %v1787
      %v1793 = vrot.slane %v1792, 4
      %v1795 = vshll.u32 %v1624, 16
      %v1797 = vrot.slane %v1795, 5
      %v1798 = vsel %vm354, %v1793, %v1797
      %v1800 = vshrl.u32 %v1625, 16
      %v1802 = vrot.slane %v1800, 4
      %v1803 = vshll.u32 %v1625, 16
      %v1805 = vrot.slane %v1803, 5
      %v1806 = vor.u32 %v1802, %v1805
      %v1807 = vrot.slane %v1806, 4
      %v1809 = vshll.u32 %v1626, 16
      %v1811 = vrot.slane %v1809, 5
      %v1812 = vsel %vm354, %v1807, %v1811
      %v1813 = vshrl.u32 %v1626, 16
      %v1815 = vrot.slane %v1813, 4
      %v1816 = vor.u32 %v1815, %v1811
      %v1817 = vrot.slane %v1816, 4
      %v1819 = vshll.u32 %v1627, 16
      %v1821 = vrot.slane %v1819, 5
      %v1822 = vsel %vm354, %v1817, %v1821
      %v1824 = vshrl.u32 %v1628, 16
      %v1826 = vrot.slane %v1824, 4
      %v1827 = vshll.u32 %v1628, 16
      %v1829 = vrot.slane %v1827, 5
      %v1830 = vor.u32 %v1826, %v1829
      %v1831 = vrot.slane %v1830, 4
      %v1833 = vshll.u32 %v1629, 16
      %v1835 = vrot.slane %v1833, 5
      %v1836 = vsel %vm354, %v1831, %v1835
      %v1837 = vshrl.u32 %v1629, 16
      %v1839 = vrot.slane %v1837, 4
      %v1840 = vor.u32 %v1839, %v1835
      %v1841 = vrot.slane %v1840, 4
      %v1843 = vshll.u32 %v1630, 16
      %v1845 = vrot.slane %v1843, 5
      %v1846 = vsel %vm354, %v1841, %v1845
      %v1848 = vshrl.u32 %v1631, 16
      %v1850 = vrot.slane %v1848, 4
      %v1851 = vshll.u32 %v1631, 16
      %v1853 = vrot.slane %v1851, 5
      %v1854 = vor.u32 %v1850, %v1853
      %v1855 = vrot.slane %v1854, 4
      %v1857 = vshll.u32 %v1632, 16
      %v1859 = vrot.slane %v1857, 5
      %v1860 = vsel %vm354, %v1855, %v1859
      %v1861 = vshrl.u32 %v1632, 16
      %v1863 = vrot.slane %v1861, 4
      %v1864 = vor.u32 %v1863, %v1859
      %v1865 = vrot.slane %v1864, 4
      %v1867 = vshll.u32 %v1633, 16
      %v1869 = vrot.slane %v1867, 5
      %v1870 = vsel %vm354, %v1865, %v1869
      %v1872 = vshrl.u32 %v1634, 16
      %v1874 = vrot.slane %v1872, 4
      %v1875 = vshll.u32 %v1634, 16
      %v1877 = vrot.slane %v1875, 5
      %v1878 = vor.u32 %v1874, %v1877
      %v1879 = vrot.slane %v1878, 4
      %v1881 = vshll.u32 %v1635, 16
      %v1883 = vrot.slane %v1881, 5
      %v1884 = vsel %vm354, %v1879, %v1883
      %v1885 = vshrl.u32 %v1635, 16
      %v1887 = vrot.slane %v1885, 4
      %v1888 = vor.u32 %v1887, %v1883
      %v1889 = vrot.slane %v1888, 4
      %v1891 = vshll.u32 %v1636, 16
      %v1893 = vrot.slane %v1891, 5
      %v1894 = vsel %vm354, %v1889, %v1893
      %v1896 = vshrl.u32 %v1637, 16
      %v1898 = vrot.slane %v1896, 4
      %v1899 = vshll.u32 %v1637, 16
      %v1901 = vrot.slane %v1899, 5
      %v1902 = vor.u32 %v1898, %v1901
      %v1903 = vrot.slane %v1902, 4
      %v1905 = vshll.u32 %v1638, 16
      %v1907 = vrot.slane %v1905, 5
      %v1908 = vsel %vm354, %v1903, %v1907
      %v1909 = vshrl.u32 %v1638, 16
      %v1911 = vrot.slane %v1909, 4
      %v1912 = vor.u32 %v1911, %v1907
      %v1913 = vrot.slane %v1912, 4
      %v1915 = vshll.u32 %v1639, 16
      %v1917 = vrot.slane %v1915, 5
      %v1918 = vsel %vm354, %v1913, %v1917
      %v1920 = vshrl.u32 %v1640, 16
      %v1922 = vrot.slane %v1920, 4
      %v1923 = vshll.u32 %v1640, 16
      %v1925 = vrot.slane %v1923, 5
      %v1926 = vor.u32 %v1922, %v1925
      %v1927 = vrot.slane %v1926, 4
      %v1929 = vshll.u32 %v1641, 16
      %v1931 = vrot.slane %v1929, 5
      %v1932 = vsel %vm354, %v1927, %v1931
      %v1933 = vshrl.u32 %v1641, 16
      %v1935 = vrot.slane %v1933, 4
      %v1936 = vor.u32 %v1935, %v1931
      %v1937 = vrot.slane %v1936, 4
      %v1939 = vshll.u32 %v1642, 16
      %v1941 = vrot.slane %v1939, 5
      %v1942 = vsel %vm354, %v1937, %v1941
      %v1944 = vshrl.u32 %v1643, 16
      %v1946 = vrot.slane %v1944, 4
      %v1947 = vshll.u32 %v1643, 16
      %v1949 = vrot.slane %v1947, 5
      %v1950 = vor.u32 %v1946, %v1949
      %v1951 = vrot.slane %v1950, 4
      %v1953 = vshll.u32 %v1644, 16
      %v1955 = vrot.slane %v1953, 5
      %v1956 = vsel %vm354, %v1951, %v1955
      %v1957 = vshrl.u32 %v1644, 16
      %v1959 = vrot.slane %v1957, 4
      %v1960 = vor.u32 %v1959, %v1955
      %v1961 = vrot.slane %v1960, 4
      %v1963 = vshll.u32 %v1645, 16
      %v1965 = vrot.slane %v1963, 5
      %v1966 = vsel %vm354, %v1961, %v1965
      %v1968 = vshrl.u32 %v1646, 16
      %v1970 = vrot.slane %v1968, 4
      %v1971 = vshll.u32 %v1646, 16
      %v1973 = vrot.slane %v1971, 5
      %v1974 = vor.u32 %v1970, %v1973
      %v1975 = vrot.slane %v1974, 4
      %v1977 = vshll.u32 %v1647, 16
      %v1979 = vrot.slane %v1977, 5
      %v1980 = vsel %vm354, %v1975, %v1979
      %v1981 = vshrl.u32 %v1647, 16
      %v1983 = vrot.slane %v1981, 4
      %v1984 = vor.u32 %v1983, %v1979
      %v1985 = vrot.slane %v1984, 4
      %v1987 = vshll.u32 %v1648, 16
      %v1989 = vrot.slane %v1987, 5
      %v1990 = vsel %vm354, %v1985, %v1989
      %v1992 = vshrl.u32 %v1649, 16
      %v1994 = vrot.slane %v1992, 4
      %v1995 = vshll.u32 %v1649, 16
      %v1997 = vrot.slane %v1995, 5
      %v1998 = vor.u32 %v1994, %v1997
      %v1999 = vrot.slane %v1998, 4
      %v2001 = vshll.u32 %v1650, 16
      %v2003 = vrot.slane %v2001, 5
      %v2004 = vsel %vm354, %v1999, %v2003
      %v2005 = vshrl.u32 %v1650, 16
      %v2007 = vrot.slane %v2005, 4
      %v2008 = vor.u32 %v2007, %v2003
      %v2009 = vrot.slane %v2008, 4
      %v2011 = vshll.u32 %v1651, 16
      %v2013 = vrot.slane %v2011, 5
      %v2014 = vsel %vm354, %v2009, %v2013
      %v2016 = vshrl.u32 %v1652, 16
      %v2018 = vrot.slane %v2016, 4
      %v2019 = vshll.u32 %v1652, 16
      %v2021 = vrot.slane %v2019, 5
      %v2022 = vor.u32 %v2018, %v2021
      %v2023 = vrot.slane %v2022, 4
      %v2025 = vshll.u32 %v1653, 16
      %v2027 = vrot.slane %v2025, 5
      %v2028 = vsel %vm354, %v2023, %v2027
      %v2029 = vshrl.u32 %v1653, 16
      %v2031 = vrot.slane %v2029, 4
      %v2032 = vor.u32 %v2031, %v2027
      %v2033 = vrot.slane %v2032, 4
      %v2035 = vshll.u32 %v1654, 16
      %v2037 = vrot.slane %v2035, 5
      %v2038 = vsel %vm354, %v2033, %v2037
      %s2039 = scalar_lea.vmem %s258, 12
      %v2040 = vld [vmem:[%s2039] sm:$0xf]
      %v2041 = vld [vmem:[%s2039 + $0x4] sm:$0xf]
      %v2042 = vld [vmem:[%s2039 + $0xc] sm:$0xf]
      %v2043 = vld [vmem:[%s2039 + $0x10] sm:$0xf]
      %v2044 = vld [vmem:[%s2039 + $0x18] sm:$0xf]
      %v2045 = vld [vmem:[%s2039 + $0x1c] sm:$0xf]
      %v2046 = vld [vmem:[%s2039 + $0x24] sm:$0xf]
      %v2047 = vld [vmem:[%s2039 + $0x28] sm:$0xf]
      %v2048 = vld [vmem:[%s2039 + $0x30] sm:$0xf]
      %v2049 = vld [vmem:[%s2039 + $0x34] sm:$0xf]
      %v2050 = vld [vmem:[%s2039 + $0x3c] sm:$0xf]
      %v2051 = vld [vmem:[%s2039 + $0x40] sm:$0xf]
      %v2052 = vld [vmem:[%s2039 + $0x48] sm:$0xf]
      %v2053 = vld [vmem:[%s2039 + $0x4c] sm:$0xf]
      %v2054 = vld [vmem:[%s2039 + $0x54] sm:$0xf]
      %v2055 = vld [vmem:[%s2039 + $0x58] sm:$0xf]
      %v2056 = vld [vmem:[%s2039 + $0x60] sm:$0xf]
      %v2057 = vld [vmem:[%s2039 + $0x64] sm:$0xf]
      %v2058 = vld [vmem:[%s2039 + $0x6c] sm:$0xf]
      %v2059 = vld [vmem:[%s2039 + $0x70] sm:$0xf]
      %v2060 = vld [vmem:[%s2039 + $0x78] sm:$0xf]
      %v2061 = vld [vmem:[%s2039 + $0x7c] sm:$0xf]
      %v2062 = vld [vmem:[%s2039 + $0x84] sm:$0xf]
      %v2063 = vld [vmem:[%s2039 + $0x88] sm:$0xf]
      %v2064 = vld [vmem:[%s2039 + $0x90] sm:$0xf]
      %v2065 = vld [vmem:[%s2039 + $0x94] sm:$0xf]
      %v2066 = vld [vmem:[%s2039 + $0x9c] sm:$0xf]
      %v2067 = vld [vmem:[%s2039 + $0xa0] sm:$0xf]
      %v2068 = vld [vmem:[%s2039 + $0xa8] sm:$0xf]
      %v2069 = vld [vmem:[%s2039 + $0xac] sm:$0xf]
      %v2070 = vld [vmem:[%s2039 + $0xb4] sm:$0xf]
      %v2071 = vld [vmem:[%s2039 + $0xb8] sm:$0xf]
      %s2072 = scalar_lea.vmem %s258, 216
      %v2073 = vld [vmem:[%s2072] sm:$0xf]
      %v2074 = vld [vmem:[%s2072 + $0x4] sm:$0xf]
      %v2075 = vld [vmem:[%s2072 + $0xc] sm:$0xf]
      %v2076 = vld [vmem:[%s2072 + $0x10] sm:$0xf]
      %v2077 = vld [vmem:[%s2072 + $0x18] sm:$0xf]
      %v2078 = vld [vmem:[%s2072 + $0x1c] sm:$0xf]
      %v2079 = vld [vmem:[%s2072 + $0x24] sm:$0xf]
      %v2080 = vld [vmem:[%s2072 + $0x28] sm:$0xf]
      %v2081 = vld [vmem:[%s2072 + $0x30] sm:$0xf]
      %v2082 = vld [vmem:[%s2072 + $0x34] sm:$0xf]
      %v2083 = vld [vmem:[%s2072 + $0x3c] sm:$0xf]
      %v2084 = vld [vmem:[%s2072 + $0x40] sm:$0xf]
      %v2085 = vld [vmem:[%s2072 + $0x48] sm:$0xf]
      %v2086 = vld [vmem:[%s2072 + $0x4c] sm:$0xf]
      %v2087 = vld [vmem:[%s2072 + $0x54] sm:$0xf]
      %v2088 = vld [vmem:[%s2072 + $0x58] sm:$0xf]
      %v2089 = vld [vmem:[%s2072 + $0x60] sm:$0xf]
      %v2090 = vld [vmem:[%s2072 + $0x64] sm:$0xf]
      %v2091 = vld [vmem:[%s2072 + $0x6c] sm:$0xf]
      %v2092 = vld [vmem:[%s2072 + $0x70] sm:$0xf]
      %v2093 = vld [vmem:[%s2072 + $0x78] sm:$0xf]
      %v2094 = vld [vmem:[%s2072 + $0x7c] sm:$0xf]
      %v2095 = vld [vmem:[%s2072 + $0x84] sm:$0xf]
      %v2096 = vld [vmem:[%s2072 + $0x88] sm:$0xf]
      %v2097 = vld [vmem:[%s2072 + $0x90] sm:$0xf]
      %v2098 = vld [vmem:[%s2072 + $0x94] sm:$0xf]
      %v2099 = vld [vmem:[%s2072 + $0x9c] sm:$0xf]
      %v2100 = vld [vmem:[%s2072 + $0xa0] sm:$0xf]
      %v2101 = vld [vmem:[%s2072 + $0xa8] sm:$0xf]
      %v2102 = vld [vmem:[%s2072 + $0xac] sm:$0xf]
      %v2103 = vld [vmem:[%s2072 + $0xb4] sm:$0xf]
      %v2104 = vld [vmem:[%s2072 + $0xb8] sm:$0xf]
      %v2137 = vunpack.c.l.b16 %v1575
      %v2138 = vunpack.c.l.b16 %v1576
      %v2139 = vunpack.c.l.b16 %v1577
      %v2140 = vunpack.c.l.b16 %v1578
      %v2141 = vunpack.c.l.b16 %v1579
      %v2142 = vunpack.c.l.b16 %v1580
      %v2143 = vunpack.c.l.b16 %v1581
      %v2144 = vunpack.c.l.b16 %v1582
      %v2145 = vunpack.c.l.b16 %v1583
      %v2146 = vunpack.c.l.b16 %v1584
      %v2147 = vunpack.c.l.b16 %v1585
      %v2148 = vunpack.c.l.b16 %v1586
      %v2149 = vunpack.c.l.b16 %v1587
      %v2150 = vunpack.c.l.b16 %v1588
      %v2151 = vunpack.c.l.b16 %v1589
      %v2152 = vunpack.c.l.b16 %v1590
      %v2153 = vunpack.c.l.b16 %v1591
      %v2154 = vunpack.c.l.b16 %v1592
      %v2155 = vunpack.c.l.b16 %v1593
      %v2156 = vunpack.c.l.b16 %v1594
      %v2157 = vunpack.c.l.b16 %v1595
      %v2158 = vunpack.c.l.b16 %v1596
      %v2159 = vunpack.c.l.b16 %v1597
      %v2160 = vunpack.c.l.b16 %v1598
      %v2161 = vunpack.c.l.b16 %v1599
      %v2162 = vunpack.c.l.b16 %v1600
      %v2163 = vunpack.c.l.b16 %v1601
      %v2164 = vunpack.c.l.b16 %v1602
      %v2165 = vunpack.c.l.b16 %v1603
      %v2166 = vunpack.c.l.b16 %v1604
      %v2167 = vunpack.c.l.b16 %v1605
      %v2168 = vunpack.c.l.b16 %v1606
      %v2169 = vpack.c.b16 %v2138, %v2137
      %v2170 = vpack.c.b16 %v2140, %v2139
      %v2171 = vpack.c.b16 %v2142, %v2141
      %v2172 = vpack.c.b16 %v2144, %v2143
      %v2173 = vpack.c.b16 %v2146, %v2145
      %v2174 = vpack.c.b16 %v2148, %v2147
      %v2175 = vpack.c.b16 %v2150, %v2149
      %v2176 = vpack.c.b16 %v2152, %v2151
      %v2177 = vpack.c.b16 %v2154, %v2153
      %v2178 = vpack.c.b16 %v2156, %v2155
      %v2179 = vpack.c.b16 %v2158, %v2157
      %v2180 = vpack.c.b16 %v2160, %v2159
      %v2181 = vpack.c.b16 %v2162, %v2161
      %v2182 = vpack.c.b16 %v2164, %v2163
      %v2183 = vpack.c.b16 %v2166, %v2165
      %v2184 = vpack.c.b16 %v2168, %v2167
      %v2185 = vunpack.c.l.b16 %v1668
      %v2186 = vunpack.c.l.b16 %v1678
      %v2187 = vunpack.c.l.b16 %v1692
      %v2188 = vunpack.c.l.b16 %v1702
      %v2189 = vunpack.c.l.b16 %v1716
      %v2190 = vunpack.c.l.b16 %v1726
      %v2191 = vunpack.c.l.b16 %v1740
      %v2192 = vunpack.c.l.b16 %v1750
      %v2193 = vunpack.c.l.b16 %v1764
      %v2194 = vunpack.c.l.b16 %v1774
      %v2195 = vunpack.c.l.b16 %v1788
      %v2196 = vunpack.c.l.b16 %v1798
      %v2197 = vunpack.c.l.b16 %v1812
      %v2198 = vunpack.c.l.b16 %v1822
      %v2199 = vunpack.c.l.b16 %v1836
      %v2200 = vunpack.c.l.b16 %v1846
      %v2201 = vunpack.c.l.b16 %v1860
      %v2202 = vunpack.c.l.b16 %v1870
      %v2203 = vunpack.c.l.b16 %v1884
      %v2204 = vunpack.c.l.b16 %v1894
      %v2205 = vunpack.c.l.b16 %v1908
      %v2206 = vunpack.c.l.b16 %v1918
      %v2207 = vunpack.c.l.b16 %v1932
      %v2208 = vunpack.c.l.b16 %v1942
      %v2209 = vunpack.c.l.b16 %v1956
      %v2210 = vunpack.c.l.b16 %v1966
      %v2211 = vunpack.c.l.b16 %v1980
      %v2212 = vunpack.c.l.b16 %v1990
      %v2213 = vunpack.c.l.b16 %v2004
      %v2214 = vunpack.c.l.b16 %v2014
      %v2215 = vunpack.c.l.b16 %v2028
      %v2216 = vunpack.c.l.b16 %v2038
      %v2217 = vpack.c.b16 %v2186, %v2185
      %v2218 = vpack.c.b16 %v2188, %v2187
      %v2219 = vpack.c.b16 %v2190, %v2189
      %v2220 = vpack.c.b16 %v2192, %v2191
      %v2221 = vpack.c.b16 %v2194, %v2193
      %v2222 = vpack.c.b16 %v2196, %v2195
      %v2223 = vpack.c.b16 %v2198, %v2197
      %v2224 = vpack.c.b16 %v2200, %v2199
      %v2225 = vpack.c.b16 %v2202, %v2201
      %v2226 = vpack.c.b16 %v2204, %v2203
      %v2227 = vpack.c.b16 %v2206, %v2205
      %v2228 = vpack.c.b16 %v2208, %v2207
      %v2229 = vpack.c.b16 %v2210, %v2209
      %v2230 = vpack.c.b16 %v2212, %v2211
      %v2231 = vpack.c.b16 %v2214, %v2213
      %v2232 = vpack.c.b16 %v2216, %v2215
      %2233 = vrot.lane.b32.xlu0 %v2217, 64
      %v2234 = vpop.permute.xlu0 %2233
      %2235 = vrot.lane.b32.xlu0 %v2218, 64
      %v2236 = vpop.permute.xlu0 %2235
      %2237 = vrot.lane.b32.xlu0 %v2219, 64
      %v2238 = vpop.permute.xlu0 %2237
      %2239 = vrot.lane.b32.xlu0 %v2220, 64
      %v2240 = vpop.permute.xlu0 %2239
      %2241 = vrot.lane.b32.xlu0 %v2221, 64
      %v2242 = vpop.permute.xlu0 %2241
      %2243 = vrot.lane.b32.xlu0 %v2222, 64
      %v2244 = vpop.permute.xlu0 %2243
      %2245 = vrot.lane.b32.xlu0 %v2223, 64
      %v2246 = vpop.permute.xlu0 %2245
      %2247 = vrot.lane.b32.xlu0 %v2224, 64
      %v2248 = vpop.permute.xlu0 %2247
      %2249 = vrot.lane.b32.xlu0 %v2225, 64
      %v2250 = vpop.permute.xlu0 %2249
      %2251 = vrot.lane.b32.xlu0 %v2226, 64
      %v2252 = vpop.permute.xlu0 %2251
      %2253 = vrot.lane.b32.xlu0 %v2227, 64
      %v2254 = vpop.permute.xlu0 %2253
      %2255 = vrot.lane.b32.xlu0 %v2228, 64
      %v2256 = vpop.permute.xlu0 %2255
      %2257 = vrot.lane.b32.xlu0 %v2229, 64
      %v2258 = vpop.permute.xlu0 %2257
      %2259 = vrot.lane.b32.xlu0 %v2230, 64
      %v2260 = vpop.permute.xlu0 %2259
      %2261 = vrot.lane.b32.xlu0 %v2231, 64
      %v2262 = vpop.permute.xlu0 %2261
      %2263 = vrot.lane.b32.xlu0 %v2232, 64
      %v2264 = vpop.permute.xlu0 %2263
      %v2297 = vunpack.c.l.b16 %v2040
      %v2298 = vunpack.c.l.b16 %v2041
      %v2299 = vunpack.c.l.b16 %v2042
      %v2300 = vunpack.c.l.b16 %v2043
      %v2301 = vunpack.c.l.b16 %v2044
      %v2302 = vunpack.c.l.b16 %v2045
      %v2303 = vunpack.c.l.b16 %v2046
      %v2304 = vunpack.c.l.b16 %v2047
      %v2305 = vunpack.c.l.b16 %v2048
      %v2306 = vunpack.c.l.b16 %v2049
      %v2307 = vunpack.c.l.b16 %v2050
      %v2308 = vunpack.c.l.b16 %v2051
      %v2309 = vunpack.c.l.b16 %v2052
      %v2310 = vunpack.c.l.b16 %v2053
      %v2311 = vunpack.c.l.b16 %v2054
      %v2312 = vunpack.c.l.b16 %v2055
      %v2313 = vunpack.c.l.b16 %v2056
      %v2314 = vunpack.c.l.b16 %v2057
      %v2315 = vunpack.c.l.b16 %v2058
      %v2316 = vunpack.c.l.b16 %v2059
      %v2317 = vunpack.c.l.b16 %v2060
      %v2318 = vunpack.c.l.b16 %v2061
      %v2319 = vunpack.c.l.b16 %v2062
      %v2320 = vunpack.c.l.b16 %v2063
      %v2321 = vunpack.c.l.b16 %v2064
      %v2322 = vunpack.c.l.b16 %v2065
      %v2323 = vunpack.c.l.b16 %v2066
      %v2324 = vunpack.c.l.b16 %v2067
      %v2325 = vunpack.c.l.b16 %v2068
      %v2326 = vunpack.c.l.b16 %v2069
      %v2327 = vunpack.c.l.b16 %v2070
      %v2328 = vunpack.c.l.b16 %v2071
      %v2329 = vpack.c.b16 %v2298, %v2297
      %v2330 = vpack.c.b16 %v2300, %v2299
      %v2331 = vpack.c.b16 %v2302, %v2301
      %v2332 = vpack.c.b16 %v2304, %v2303
      %v2333 = vpack.c.b16 %v2306, %v2305
      %v2334 = vpack.c.b16 %v2308, %v2307
      %v2335 = vpack.c.b16 %v2310, %v2309
      %v2336 = vpack.c.b16 %v2312, %v2311
      %v2337 = vpack.c.b16 %v2314, %v2313
      %v2338 = vpack.c.b16 %v2316, %v2315
      %v2339 = vpack.c.b16 %v2318, %v2317
      %v2340 = vpack.c.b16 %v2320, %v2319
      %v2341 = vpack.c.b16 %v2322, %v2321
      %v2342 = vpack.c.b16 %v2324, %v2323
      %v2343 = vpack.c.b16 %v2326, %v2325
      %v2344 = vpack.c.b16 %v2328, %v2327
      %v2377 = vunpack.c.l.b16 %v2073
      %v2378 = vunpack.c.l.b16 %v2074
      %v2379 = vunpack.c.l.b16 %v2075
      %v2380 = vunpack.c.l.b16 %v2076
      %v2381 = vunpack.c.l.b16 %v2077
      %v2382 = vunpack.c.l.b16 %v2078
      %v2383 = vunpack.c.l.b16 %v2079
      %v2384 = vunpack.c.l.b16 %v2080
      %v2385 = vunpack.c.l.b16 %v2081
      %v2386 = vunpack.c.l.b16 %v2082
      %v2387 = vunpack.c.l.b16 %v2083
      %v2388 = vunpack.c.l.b16 %v2084
      %v2389 = vunpack.c.l.b16 %v2085
      %v2390 = vunpack.c.l.b16 %v2086
      %v2391 = vunpack.c.l.b16 %v2087
      %v2392 = vunpack.c.l.b16 %v2088
      %v2393 = vunpack.c.l.b16 %v2089
      %v2394 = vunpack.c.l.b16 %v2090
      %v2395 = vunpack.c.l.b16 %v2091
      %v2396 = vunpack.c.l.b16 %v2092
      %v2397 = vunpack.c.l.b16 %v2093
      %v2398 = vunpack.c.l.b16 %v2094
      %v2399 = vunpack.c.l.b16 %v2095
      %v2400 = vunpack.c.l.b16 %v2096
      %v2401 = vunpack.c.l.b16 %v2097
      %v2402 = vunpack.c.l.b16 %v2098
      %v2403 = vunpack.c.l.b16 %v2099
      %v2404 = vunpack.c.l.b16 %v2100
      %v2405 = vunpack.c.l.b16 %v2101
      %v2406 = vunpack.c.l.b16 %v2102
      %v2407 = vunpack.c.l.b16 %v2103
      %v2408 = vunpack.c.l.b16 %v2104
      %v2409 = vpack.c.b16 %v2378, %v2377
      %v2410 = vpack.c.b16 %v2380, %v2379
      %v2411 = vpack.c.b16 %v2382, %v2381
      %v2412 = vpack.c.b16 %v2384, %v2383
      %v2413 = vpack.c.b16 %v2386, %v2385
      %v2414 = vpack.c.b16 %v2388, %v2387
      %v2415 = vpack.c.b16 %v2390, %v2389
      %v2416 = vpack.c.b16 %v2392, %v2391
      %v2417 = vpack.c.b16 %v2394, %v2393
      %v2418 = vpack.c.b16 %v2396, %v2395
      %v2419 = vpack.c.b16 %v2398, %v2397
      %v2420 = vpack.c.b16 %v2400, %v2399
      %v2421 = vpack.c.b16 %v2402, %v2401
      %v2422 = vpack.c.b16 %v2404, %v2403
      %v2423 = vpack.c.b16 %v2406, %v2405
      %v2424 = vpack.c.b16 %v2408, %v2407
      %2425 = vrot.lane.b32.xlu0 %v2409, 64
      %v2426 = vpop.permute.xlu0 %2425
      %2427 = vrot.lane.b32.xlu0 %v2410, 64
      %v2428 = vpop.permute.xlu0 %2427
      %2429 = vrot.lane.b32.xlu0 %v2411, 64
      %v2430 = vpop.permute.xlu0 %2429
      %2431 = vrot.lane.b32.xlu0 %v2412, 64
      %v2432 = vpop.permute.xlu0 %2431
      %2433 = vrot.lane.b32.xlu0 %v2413, 64
      %v2434 = vpop.permute.xlu0 %2433
      %2435 = vrot.lane.b32.xlu0 %v2414, 64
      %v2436 = vpop.permute.xlu0 %2435
      %2437 = vrot.lane.b32.xlu0 %v2415, 64
      %v2438 = vpop.permute.xlu0 %2437
      %2439 = vrot.lane.b32.xlu0 %v2416, 64
      %v2440 = vpop.permute.xlu0 %2439
      %2441 = vrot.lane.b32.xlu0 %v2417, 64
      %v2442 = vpop.permute.xlu0 %2441
      %2443 = vrot.lane.b32.xlu0 %v2418, 64
      %v2444 = vpop.permute.xlu0 %2443
      %2445 = vrot.lane.b32.xlu0 %v2419, 64
      %v2446 = vpop.permute.xlu0 %2445
      %2447 = vrot.lane.b32.xlu0 %v2420, 64
      %v2448 = vpop.permute.xlu0 %2447
      %2449 = vrot.lane.b32.xlu0 %v2421, 64
      %v2450 = vpop.permute.xlu0 %2449
      %2451 = vrot.lane.b32.xlu0 %v2422, 64
      %v2452 = vpop.permute.xlu0 %2451
      %2453 = vrot.lane.b32.xlu0 %v2423, 64
      %v2454 = vpop.permute.xlu0 %2453
      %2455 = vrot.lane.b32.xlu0 %v2424, 64
      %v2456 = vpop.permute.xlu0 %2455
      %v2459 = vsel %vm1124, %v2169, %v2234
      %v2463 = vsel %vm1124, %v2170, %v2236
      %v2467 = vsel %vm1124, %v2171, %v2238
      %v2471 = vsel %vm1124, %v2172, %v2240
      %v2475 = vsel %vm1124, %v2173, %v2242
      %v2479 = vsel %vm1124, %v2174, %v2244
      %v2483 = vsel %vm1124, %v2175, %v2246
      %v2487 = vsel %vm1124, %v2176, %v2248
      %v2491 = vsel %vm1124, %v2177, %v2250
      %v2495 = vsel %vm1124, %v2178, %v2252
      %v2499 = vsel %vm1124, %v2179, %v2254
      %v2503 = vsel %vm1124, %v2180, %v2256
      %v2507 = vsel %vm1124, %v2181, %v2258
      %v2511 = vsel %vm1124, %v2182, %v2260
      %v2515 = vsel %vm1124, %v2183, %v2262
      %v2519 = vsel %vm1124, %v2184, %v2264
      %v2523 = vsel %vm1124, %v2329, %v2426
      %v2527 = vsel %vm1124, %v2330, %v2428
      %v2531 = vsel %vm1124, %v2331, %v2430
      %v2535 = vsel %vm1124, %v2332, %v2432
      %v2539 = vsel %vm1124, %v2333, %v2434
      %v2543 = vsel %vm1124, %v2334, %v2436
      %v2547 = vsel %vm1124, %v2335, %v2438
      %v2551 = vsel %vm1124, %v2336, %v2440
      %v2555 = vsel %vm1124, %v2337, %v2442
      %v2559 = vsel %vm1124, %v2338, %v2444
      %v2563 = vsel %vm1124, %v2339, %v2446
      %v2567 = vsel %vm1124, %v2340, %v2448
      %v2571 = vsel %vm1124, %v2341, %v2450
      %v2575 = vsel %vm1124, %v2342, %v2452
      %v2579 = vsel %vm1124, %v2343, %v2454
      %v2583 = vsel %vm1124, %v2344, %v2456
      %v2585 = vld [vmem:[%s1 + $0x80] sm:$0xf]
      %v2586 = vld [vmem:[%s1 + $0x84] sm:$0xf]
      %v2587 = vld [vmem:[%s1 + $0x88] sm:$0xf]
      %v2588 = vld [vmem:[%s1 + $0x8c] sm:$0xf]
      %v2589 = vld [vmem:[%s1 + $0x90] sm:$0xf]
      %v2590 = vld [vmem:[%s1 + $0x94] sm:$0xf]
      %v2591 = vld [vmem:[%s1 + $0x98] sm:$0xf]
      %v2592 = vld [vmem:[%s1 + $0x9c] sm:$0xf]
      %v2593 = vld [vmem:[%s1 + $0xa0] sm:$0xf]
      %v2594 = vld [vmem:[%s1 + $0xa4] sm:$0xf]
      %v2595 = vld [vmem:[%s1 + $0xa8] sm:$0xf]
      %v2596 = vld [vmem:[%s1 + $0xac] sm:$0xf]
      %v2597 = vld [vmem:[%s1 + $0xb0] sm:$0xf]
      %v2598 = vld [vmem:[%s1 + $0xb4] sm:$0xf]
      %v2599 = vld [vmem:[%s1 + $0xb8] sm:$0xf]
      %v2600 = vld [vmem:[%s1 + $0xbc] sm:$0xf]
      %v2601 = vld [vmem:[%s1 + $0xc0] sm:$0xf]
      %v2602 = vld [vmem:[%s1 + $0xc4] sm:$0xf]
      %v2603 = vld [vmem:[%s1 + $0xc8] sm:$0xf]
      %v2604 = vld [vmem:[%s1 + $0xcc] sm:$0xf]
      %v2605 = vld [vmem:[%s1 + $0xd0] sm:$0xf]
      %v2606 = vld [vmem:[%s1 + $0xd4] sm:$0xf]
      %v2607 = vld [vmem:[%s1 + $0xd8] sm:$0xf]
      %v2608 = vld [vmem:[%s1 + $0xdc] sm:$0xf]
      %v2609 = vld [vmem:[%s1 + $0xe0] sm:$0xf]
      %v2610 = vld [vmem:[%s1 + $0xe4] sm:$0xf]
      %v2611 = vld [vmem:[%s1 + $0xe8] sm:$0xf]
      %v2612 = vld [vmem:[%s1 + $0xec] sm:$0xf]
      %v2613 = vld [vmem:[%s1 + $0xf0] sm:$0xf]
      %v2614 = vld [vmem:[%s1 + $0xf4] sm:$0xf]
      %v2615 = vld [vmem:[%s1 + $0xf8] sm:$0xf]
      %v2616 = vld [vmem:[%s1 + $0xfc] sm:$0xf]
      %v2649 = vunpack.c.l.b16 %v2585
      %v2650 = vunpack.c.l.b16 %v2586
      %v2651 = vunpack.c.l.b16 %v2587
      %v2652 = vunpack.c.l.b16 %v2588
      %v2653 = vunpack.c.l.b16 %v2589
      %v2654 = vunpack.c.l.b16 %v2590
      %v2655 = vunpack.c.l.b16 %v2591
      %v2656 = vunpack.c.l.b16 %v2592
      %v2657 = vunpack.c.l.b16 %v2593
      %v2658 = vunpack.c.l.b16 %v2594
      %v2659 = vunpack.c.l.b16 %v2595
      %v2660 = vunpack.c.l.b16 %v2596
      %v2661 = vunpack.c.l.b16 %v2597
      %v2662 = vunpack.c.l.b16 %v2598
      %v2663 = vunpack.c.l.b16 %v2599
      %v2664 = vunpack.c.l.b16 %v2600
      %v2665 = vunpack.c.l.b16 %v2601
      %v2666 = vunpack.c.l.b16 %v2602
      %v2667 = vunpack.c.l.b16 %v2603
      %v2668 = vunpack.c.l.b16 %v2604
      %v2669 = vunpack.c.l.b16 %v2605
      %v2670 = vunpack.c.l.b16 %v2606
      %v2671 = vunpack.c.l.b16 %v2607
      %v2672 = vunpack.c.l.b16 %v2608
      %v2673 = vunpack.c.l.b16 %v2609
      %v2674 = vunpack.c.l.b16 %v2610
      %v2675 = vunpack.c.l.b16 %v2611
      %v2676 = vunpack.c.l.b16 %v2612
      %v2677 = vunpack.c.l.b16 %v2613
      %v2678 = vunpack.c.l.b16 %v2614
      %v2679 = vunpack.c.l.b16 %v2615
      %v2680 = vunpack.c.l.b16 %v2616
      %v2681 = vpack.c.b16 %v2650, %v2649
      %v2682 = vpack.c.b16 %v2652, %v2651
      %v2683 = vpack.c.b16 %v2654, %v2653
      %v2684 = vpack.c.b16 %v2656, %v2655
      %v2685 = vpack.c.b16 %v2658, %v2657
      %v2686 = vpack.c.b16 %v2660, %v2659
      %v2687 = vpack.c.b16 %v2662, %v2661
      %v2688 = vpack.c.b16 %v2664, %v2663
      %v2689 = vpack.c.b16 %v2666, %v2665
      %v2690 = vpack.c.b16 %v2668, %v2667
      %v2691 = vpack.c.b16 %v2670, %v2669
      %v2692 = vpack.c.b16 %v2672, %v2671
      %v2693 = vpack.c.b16 %v2674, %v2673
      %v2694 = vpack.c.b16 %v2676, %v2675
      %v2695 = vpack.c.b16 %v2678, %v2677
      %v2696 = vpack.c.b16 %v2680, %v2679
      %2713 = vmatprep.subr.bf16.mxu0 0
      %2714 = vmatpush1.bf16.msra.mxu0 %v2681
      %2715 = vmatprep.subr.bf16.mxu0 0
      %2716 = vmatpush1.bf16.msra.mxu0 %v2682
      %2717 = vmatprep.subr.bf16.mxu0 0
      %2718 = vmatpush1.bf16.msra.mxu0 %v2683
      %2719 = vmatprep.subr.bf16.mxu0 0
      %2720 = vmatpush1.bf16.msra.mxu0 %v2684
      %2721 = vmatprep.subr.bf16.mxu0 0
      %2722 = vmatpush1.bf16.msra.mxu0 %v2685
      %2723 = vmatprep.subr.bf16.mxu0 0
      %2724 = vmatpush1.bf16.msra.mxu0 %v2686
      %2725 = vmatprep.subr.bf16.mxu0 0
      %2726 = vmatpush1.bf16.msra.mxu0 %v2687
      %2727 = vmatprep.subr.bf16.mxu0 0
      %2728 = vmatpush1.bf16.msra.mxu0 %v2688
      %2729 = vmatprep.subr.bf16.mxu0 0
      %2730 = vmatpush1.bf16.msra.mxu0 %v2689
      %2731 = vmatprep.subr.bf16.mxu0 0
      %2732 = vmatpush1.bf16.msra.mxu0 %v2690
      %2733 = vmatprep.subr.bf16.mxu0 0
      %2734 = vmatpush1.bf16.msra.mxu0 %v2691
      %2735 = vmatprep.subr.bf16.mxu0 0
      %2736 = vmatpush1.bf16.msra.mxu0 %v2692
      %2737 = vmatprep.subr.bf16.mxu0 0
      %2738 = vmatpush1.bf16.msra.mxu0 %v2693
      %2739 = vmatprep.subr.bf16.mxu0 0
      %2740 = vmatpush1.bf16.msra.mxu0 %v2694
      %2741 = vmatprep.subr.bf16.mxu0 0
      %2742 = vmatpush1.bf16.msra.mxu0 %v2695
      %2743 = vmatprep.subr.bf16.mxu0 0
      %2744 = vmatpush1.bf16.msra.mxu0 %v2696
      %2745 = vmatprep.mubr.bf16.mxu0 %v2523
      %2746 = vmatmul.mubr.bf16.gmra.mrb[0].mxu0 %v2459
      %v2747 = vpop.f32.mrb[0].mxu0
      %v2748 = vadd.f32 0.0, %v2747
      %v2749 = vpop.f32.mrb[0].mxu0
      %v2750 = vpop.f32.mrb[0].mxu0
      %v2751 = vadd.f32 0.0, %v2750
      %v2752 = vpop.f32.mrb[0].mxu0
      %2753 = vmatprep.mubr.bf16.mxu0 %v2527
      %2754 = vmatmul.mubr.bf16.gmra.mrb[0].mxu0 %v2463
      %v2755 = vpop.f32.mrb[0].mxu0
      %v2756 = vadd.f32 0.0, %v2755
      %v2757 = vpop.f32.mrb[0].mxu0
      %v2758 = vpop.f32.mrb[0].mxu0
      %v2759 = vadd.f32 0.0, %v2758
      %v2760 = vpop.f32.mrb[0].mxu0
      %2761 = vmatprep.mubr.bf16.mxu0 %v2531
      %2762 = vmatmul.mubr.bf16.gmra.mrb[0].mxu0 %v2467
      %v2763 = vpop.f32.mrb[0].mxu0
      %v2764 = vadd.f32 0.0, %v2763
      %v2765 = vpop.f32.mrb[0].mxu0
      %v2766 = vpop.f32.mrb[0].mxu0
      %v2767 = vadd.f32 0.0, %v2766
      %v2768 = vpop.f32.mrb[0].mxu0
      %2769 = vmatprep.mubr.bf16.mxu0 %v2535
      %2770 = vmatmul.mubr.bf16.gmra.mrb[0].mxu0 %v2471
      %v2771 = vpop.f32.mrb[0].mxu0
      %v2772 = vadd.f32 0.0, %v2771
      %v2773 = vpop.f32.mrb[0].mxu0
      %v2774 = vpop.f32.mrb[0].mxu0
      %v2775 = vadd.f32 0.0, %v2774
      %v2776 = vpop.f32.mrb[0].mxu0
      %2777 = vmatprep.mubr.bf16.mxu0 %v2539
      %2778 = vmatmul.mubr.bf16.gmra.mrb[0].mxu0 %v2475
      %v2779 = vpop.f32.mrb[0].mxu0
      %v2780 = vadd.f32 0.0, %v2779
      %v2781 = vpop.f32.mrb[0].mxu0
      %v2782 = vpop.f32.mrb[0].mxu0
      %v2783 = vadd.f32 0.0, %v2782
      %v2784 = vpop.f32.mrb[0].mxu0
      %2785 = vmatprep.mubr.bf16.mxu0 %v2543
      %2786 = vmatmul.mubr.bf16.gmra.mrb[0].mxu0 %v2479
      %v2787 = vpop.f32.mrb[0].mxu0
      %v2788 = vadd.f32 0.0, %v2787
      %v2789 = vpop.f32.mrb[0].mxu0
      %v2790 = vpop.f32.mrb[0].mxu0
      %v2791 = vadd.f32 0.0, %v2790
      %v2792 = vpop.f32.mrb[0].mxu0
      %2793 = vmatprep.mubr.bf16.mxu0 %v2547
      %2794 = vmatmul.mubr.bf16.gmra.mrb[0].mxu0 %v2483
      %v2795 = vpop.f32.mrb[0].mxu0
      %v2796 = vadd.f32 0.0, %v2795
      %v2797 = vpop.f32.mrb[0].mxu0
      %v2798 = vpop.f32.mrb[0].mxu0
      %v2799 = vadd.f32 0.0, %v2798
      %v2800 = vpop.f32.mrb[0].mxu0
      %2801 = vmatprep.mubr.bf16.mxu0 %v2551
      %2802 = vmatmul.mubr.bf16.gmra.mrb[0].mxu0 %v2487
      %v2803 = vpop.f32.mrb[0].mxu0
      %v2804 = vadd.f32 0.0, %v2803
      %v2805 = vpop.f32.mrb[0].mxu0
      %v2806 = vpop.f32.mrb[0].mxu0
      %v2807 = vadd.f32 0.0, %v2806
      %v2808 = vpop.f32.mrb[0].mxu0
      %2809 = vmatprep.mubr.bf16.mxu0 %v2555
      %2810 = vmatmul.mubr.bf16.gmra.mrb[0].mxu0 %v2491
      %v2811 = vpop.f32.mrb[0].mxu0
      %v2812 = vadd.f32 0.0, %v2811
      %v2813 = vpop.f32.mrb[0].mxu0
      %v2814 = vpop.f32.mrb[0].mxu0
      %v2815 = vadd.f32 0.0, %v2814
      %v2816 = vpop.f32.mrb[0].mxu0
      %2817 = vmatprep.mubr.bf16.mxu0 %v2559
      %2818 = vmatmul.mubr.bf16.gmra.mrb[0].mxu0 %v2495
      %v2819 = vpop.f32.mrb[0].mxu0
      %v2820 = vadd.f32 0.0, %v2819
      %v2821 = vpop.f32.mrb[0].mxu0
      %v2822 = vpop.f32.mrb[0].mxu0
      %v2823 = vadd.f32 0.0, %v2822
      %v2824 = vpop.f32.mrb[0].mxu0
      %2825 = vmatprep.mubr.bf16.mxu0 %v2563
      %2826 = vmatmul.mubr.bf16.gmra.mrb[0].mxu0 %v2499
      %v2827 = vpop.f32.mrb[0].mxu0
      %v2828 = vadd.f32 0.0, %v2827
      %v2829 = vpop.f32.mrb[0].mxu0
      %v2830 = vpop.f32.mrb[0].mxu0
      %v2831 = vadd.f32 0.0, %v2830
      %v2832 = vpop.f32.mrb[0].mxu0
      %2833 = vmatprep.mubr.bf16.mxu0 %v2567
      %2834 = vmatmul.mubr.bf16.gmra.mrb[0].mxu0 %v2503
      %v2835 = vpop.f32.mrb[0].mxu0
      %v2836 = vadd.f32 0.0, %v2835
      %v2837 = vpop.f32.mrb[0].mxu0
      %v2838 = vpop.f32.mrb[0].mxu0
      %v2839 = vadd.f32 0.0, %v2838
      %v2840 = vpop.f32.mrb[0].mxu0
      %2841 = vmatprep.mubr.bf16.mxu0 %v2571
      %2842 = vmatmul.mubr.bf16.gmra.mrb[0].mxu0 %v2507
      %v2843 = vpop.f32.mrb[0].mxu0
      %v2844 = vadd.f32 0.0, %v2843
      %v2845 = vpop.f32.mrb[0].mxu0
      %v2846 = vpop.f32.mrb[0].mxu0
      %v2847 = vadd.f32 0.0, %v2846
      %v2848 = vpop.f32.mrb[0].mxu0
      %2849 = vmatprep.mubr.bf16.mxu0 %v2575
      %2850 = vmatmul.mubr.bf16.gmra.mrb[0].mxu0 %v2511
      %v2851 = vpop.f32.mrb[0].mxu0
      %v2852 = vadd.f32 0.0, %v2851
      %v2853 = vpop.f32.mrb[0].mxu0
      %v2854 = vpop.f32.mrb[0].mxu0
      %v2855 = vadd.f32 0.0, %v2854
      %v2856 = vpop.f32.mrb[0].mxu0
      %2857 = vmatprep.mubr.bf16.mxu0 %v2579
      %2858 = vmatmul.mubr.bf16.gmra.mrb[0].mxu0 %v2515
      %v2859 = vpop.f32.mrb[0].mxu0
      %v2860 = vadd.f32 0.0, %v2859
      %v2861 = vpop.f32.mrb[0].mxu0
      %v2862 = vpop.f32.mrb[0].mxu0
      %v2863 = vadd.f32 0.0, %v2862
      %v2864 = vpop.f32.mrb[0].mxu0
      %2865 = vmatprep.mubr.bf16.mxu0 %v2583
      %2866 = vmatmul.mubr.bf16.gmra.mrb[0].mxu0 %v2519
      %v2867 = vpop.f32.mrb[0].mxu0
      %v2868 = vadd.f32 0.0, %v2867
      %v2869 = vpop.f32.mrb[0].mxu0
      %v2870 = vpop.f32.mrb[0].mxu0
      %v2871 = vadd.f32 0.0, %v2870
      %v2872 = vpop.f32.mrb[0].mxu0
      %2873 = vdwg.mxu0
      %v2874 = vld [vmem:[#allocation2] sm:$0xff]
      %v2875 = vld [vmem:[#allocation2 + $0x8] sm:$0xff]
      %v2876 = vld [vmem:[#allocation2 + $0x10] sm:$0xff]
      %v2877 = vld [vmem:[#allocation2 + $0x18] sm:$0xff]
      %v2878 = vld [vmem:[#allocation2 + $0x20] sm:$0xff]
      %v2879 = vld [vmem:[#allocation2 + $0x28] sm:$0xff]
      %v2880 = vld [vmem:[#allocation2 + $0x30] sm:$0xff]
      %v2881 = vld [vmem:[#allocation2 + $0x38] sm:$0xff]
      %v2882 = vld [vmem:[#allocation2 + $0x40] sm:$0xff]
      %v2883 = vld [vmem:[#allocation2 + $0x48] sm:$0xff]
      %v2884 = vld [vmem:[#allocation2 + $0x50] sm:$0xff]
      %v2885 = vld [vmem:[#allocation2 + $0x58] sm:$0xff]
      %v2886 = vld [vmem:[#allocation2 + $0x60] sm:$0xff]
      %v2887 = vld [vmem:[#allocation2 + $0x68] sm:$0xff]
      %v2888 = vld [vmem:[#allocation2 + $0x70] sm:$0xff]
      %v2889 = vld [vmem:[#allocation2 + $0x78] sm:$0xff]
      %v2890 = vld [vmem:[#allocation2 + $0x80] sm:$0xff]
      %v2891 = vld [vmem:[#allocation2 + $0x88] sm:$0xff]
      %v2892 = vld [vmem:[#allocation2 + $0x90] sm:$0xff]
      %v2893 = vld [vmem:[#allocation2 + $0x98] sm:$0xff]
      %v2894 = vld [vmem:[#allocation2 + $0xa0] sm:$0xff]
      %v2895 = vld [vmem:[#allocation2 + $0xa8] sm:$0xff]
      %v2896 = vld [vmem:[#allocation2 + $0xb0] sm:$0xff]
      %v2897 = vld [vmem:[#allocation2 + $0xb8] sm:$0xff]
      %v2898 = vld [vmem:[#allocation2 + $0xc0] sm:$0xff]
      %v2899 = vld [vmem:[#allocation2 + $0xc8] sm:$0xff]
      %v2900 = vld [vmem:[#allocation2 + $0xd0] sm:$0xff]
      %v2901 = vld [vmem:[#allocation2 + $0xd8] sm:$0xff]
      %v2902 = vld [vmem:[#allocation2 + $0xe0] sm:$0xff]
      %v2903 = vld [vmem:[#allocation2 + $0xe8] sm:$0xff]
      %v2904 = vld [vmem:[#allocation2 + $0xf0] sm:$0xff]
      %v2905 = vld [vmem:[#allocation2 + $0xf8] sm:$0xff]
      %v2906 = vadd.f32 %v2874, %v2748
      %v2907 = vadd.f32 %v2875, %v2751
      %v2908 = vadd.f32 %v2876, %v2756
      %v2909 = vadd.f32 %v2877, %v2759
      %v2910 = vadd.f32 %v2878, %v2764
      %v2911 = vadd.f32 %v2879, %v2767
      %v2912 = vadd.f32 %v2880, %v2772
      %v2913 = vadd.f32 %v2881, %v2775
      %v2914 = vadd.f32 %v2882, %v2780
      %v2915 = vadd.f32 %v2883, %v2783
      %v2916 = vadd.f32 %v2884, %v2788
      %v2917 = vadd.f32 %v2885, %v2791
      %v2918 = vadd.f32 %v2886, %v2796
      %v2919 = vadd.f32 %v2887, %v2799
      %v2920 = vadd.f32 %v2888, %v2804
      %v2921 = vadd.f32 %v2889, %v2807
      %v2922 = vadd.f32 %v2890, %v2812
      %v2923 = vadd.f32 %v2891, %v2815
      %v2924 = vadd.f32 %v2892, %v2820
      %v2925 = vadd.f32 %v2893, %v2823
      %v2926 = vadd.f32 %v2894, %v2828
      %v2927 = vadd.f32 %v2895, %v2831
      %v2928 = vadd.f32 %v2896, %v2836
      %v2929 = vadd.f32 %v2897, %v2839
      %v2930 = vadd.f32 %v2898, %v2844
      %v2931 = vadd.f32 %v2899, %v2847
      %v2932 = vadd.f32 %v2900, %v2852
      %v2933 = vadd.f32 %v2901, %v2855
      %v2934 = vadd.f32 %v2902, %v2860
      %v2935 = vadd.f32 %v2903, %v2863
      %v2936 = vadd.f32 %v2904, %v2868
      %v2937 = vadd.f32 %v2905, %v2871
      %2938 = vst [vmem:[#allocation2] sm:$0xff] %v2906
      %2939 = vst [vmem:[#allocation2 + $0x8] sm:$0xff] %v2907
      %2940 = vst [vmem:[#allocation2 + $0x10] sm:$0xff] %v2908
      %2941 = vst [vmem:[#allocation2 + $0x18] sm:$0xff] %v2909
      %2942 = vst [vmem:[#allocation2 + $0x20] sm:$0xff] %v2910
      %2943 = vst [vmem:[#allocation2 + $0x28] sm:$0xff] %v2911
      %2944 = vst [vmem:[#allocation2 + $0x30] sm:$0xff] %v2912
      %2945 = vst [vmem:[#allocation2 + $0x38] sm:$0xff] %v2913
      %2946 = vst [vmem:[#allocation2 + $0x40] sm:$0xff] %v2914
      %2947 = vst [vmem:[#allocation2 + $0x48] sm:$0xff] %v2915
      %2948 = vst [vmem:[#allocation2 + $0x50] sm:$0xff] %v2916
      %2949 = vst [vmem:[#allocation2 + $0x58] sm:$0xff] %v2917
      %2950 = vst [vmem:[#allocation2 + $0x60] sm:$0xff] %v2918
      %2951 = vst [vmem:[#allocation2 + $0x68] sm:$0xff] %v2919
      %2952 = vst [vmem:[#allocation2 + $0x70] sm:$0xff] %v2920
      %2953 = vst [vmem:[#allocation2 + $0x78] sm:$0xff] %v2921
      %2954 = vst [vmem:[#allocation2 + $0x80] sm:$0xff] %v2922
      %2955 = vst [vmem:[#allocation2 + $0x88] sm:$0xff] %v2923
      %2956 = vst [vmem:[#allocation2 + $0x90] sm:$0xff] %v2924
      %2957 = vst [vmem:[#allocation2 + $0x98] sm:$0xff] %v2925
      %2958 = vst [vmem:[#allocation2 + $0xa0] sm:$0xff] %v2926
      %2959 = vst [vmem:[#allocation2 + $0xa8] sm:$0xff] %v2927
      %2960 = vst [vmem:[#allocation2 + $0xb0] sm:$0xff] %v2928
      %2961 = vst [vmem:[#allocation2 + $0xb8] sm:$0xff] %v2929
      %2962 = vst [vmem:[#allocation2 + $0xc0] sm:$0xff] %v2930
      %2963 = vst [vmem:[#allocation2 + $0xc8] sm:$0xff] %v2931
      %2964 = vst [vmem:[#allocation2 + $0xd0] sm:$0xff] %v2932
      %2965 = vst [vmem:[#allocation2 + $0xd8] sm:$0xff] %v2933
      %2966 = vst [vmem:[#allocation2 + $0xe0] sm:$0xff] %v2934
      %2967 = vst [vmem:[#allocation2 + $0xe8] sm:$0xff] %v2935
      %2968 = vst [vmem:[#allocation2 + $0xf0] sm:$0xff] %v2936
      %2969 = vst [vmem:[#allocation2 + $0xf8] sm:$0xff] %v2937
      %v2970 = vld [vmem:[%s2039] sm:$0xf]
      %v2971 = vld [vmem:[%s2039 + $0x4] sm:$0xf]
      %v2972 = vld [vmem:[%s2039 + $0x8] sm:$0x1]
      %v2973 = vld [vmem:[%s2039 + $0xc] sm:$0xf]
      %v2974 = vld [vmem:[%s2039 + $0x10] sm:$0xf]
      %v2975 = vld [vmem:[%s2039 + $0x14] sm:$0x1]
      %v2976 = vld [vmem:[%s2039 + $0x18] sm:$0xf]
      %v2977 = vld [vmem:[%s2039 + $0x1c] sm:$0xf]
      %v2978 = vld [vmem:[%s2039 + $0x20] sm:$0x1]
      %v2979 = vld [vmem:[%s2039 + $0x24] sm:$0xf]
      %v2980 = vld [vmem:[%s2039 + $0x28] sm:$0xf]
      %v2981 = vld [vmem:[%s2039 + $0x2c] sm:$0x1]
      %v2982 = vld [vmem:[%s2039 + $0x30] sm:$0xf]
      %v2983 = vld [vmem:[%s2039 + $0x34] sm:$0xf]
      %v2984 = vld [vmem:[%s2039 + $0x38] sm:$0x1]
      %v2985 = vld [vmem:[%s2039 + $0x3c] sm:$0xf]
      %v2986 = vld [vmem:[%s2039 + $0x40] sm:$0xf]
      %v2987 = vld [vmem:[%s2039 + $0x44] sm:$0x1]
      %v2988 = vld [vmem:[%s2039 + $0x48] sm:$0xf]
      %v2989 = vld [vmem:[%s2039 + $0x4c] sm:$0xf]
      %v2990 = vld [vmem:[%s2039 + $0x50] sm:$0x1]
      %v2991 = vld [vmem:[%s2039 + $0x54] sm:$0xf]
      %v2992 = vld [vmem:[%s2039 + $0x58] sm:$0xf]
      %v2993 = vld [vmem:[%s2039 + $0x5c] sm:$0x1]
      %v2994 = vld [vmem:[%s2039 + $0x60] sm:$0xf]
      %v2995 = vld [vmem:[%s2039 + $0x64] sm:$0xf]
      %v2996 = vld [vmem:[%s2039 + $0x68] sm:$0x1]
      %v2997 = vld [vmem:[%s2039 + $0x6c] sm:$0xf]
      %v2998 = vld [vmem:[%s2039 + $0x70] sm:$0xf]
      %v2999 = vld [vmem:[%s2039 + $0x74] sm:$0x1]
      %v3000 = vld [vmem:[%s2039 + $0x78] sm:$0xf]
      %v3001 = vld [vmem:[%s2039 + $0x7c] sm:$0xf]
      %v3002 = vld [vmem:[%s2039 + $0x80] sm:$0x1]
      %v3003 = vld [vmem:[%s2039 + $0x84] sm:$0xf]
      %v3004 = vld [vmem:[%s2039 + $0x88] sm:$0xf]
      %v3005 = vld [vmem:[%s2039 + $0x8c] sm:$0x1]
      %v3006 = vld [vmem:[%s2039 + $0x90] sm:$0xf]
      %v3007 = vld [vmem:[%s2039 + $0x94] sm:$0xf]
      %v3008 = vld [vmem:[%s2039 + $0x98] sm:$0x1]
      %v3009 = vld [vmem:[%s2039 + $0x9c] sm:$0xf]
      %v3010 = vld [vmem:[%s2039 + $0xa0] sm:$0xf]
      %v3011 = vld [vmem:[%s2039 + $0xa4] sm:$0x1]
      %v3012 = vld [vmem:[%s2039 + $0xa8] sm:$0xf]
      %v3013 = vld [vmem:[%s2039 + $0xac] sm:$0xf]
      %v3014 = vld [vmem:[%s2039 + $0xb0] sm:$0x1]
      %v3015 = vld [vmem:[%s2039 + $0xb4] sm:$0xf]
      %v3016 = vld [vmem:[%s2039 + $0xb8] sm:$0xf]
      %v3017 = vld [vmem:[%s2039 + $0xbc] sm:$0x1]
      %v3019 = vshrl.u32 %v2970, 16
      %v3021 = vrot.slane %v3019, 4
      %v3022 = vshll.u32 %v2970, 16
      %v3024 = vrot.slane %v3022, 5
      %v3025 = vor.u32 %v3021, %v3024
      %v3026 = vrot.slane %v3025, 4
      %v3028 = vshll.u32 %v2971, 16
      %v3030 = vrot.slane %v3028, 5
      %v3031 = vsel %vm354, %v3026, %v3030
      %v3032 = vshrl.u32 %v2971, 16
      %v3034 = vrot.slane %v3032, 4
      %v3035 = vor.u32 %v3034, %v3030
      %v3036 = vrot.slane %v3035, 4
      %v3038 = vshll.u32 %v2972, 16
      %v3040 = vrot.slane %v3038, 5
      %v3041 = vsel %vm354, %v3036, %v3040
      %v3043 = vshrl.u32 %v2973, 16
      %v3045 = vrot.slane %v3043, 4
      %v3046 = vshll.u32 %v2973, 16
      %v3048 = vrot.slane %v3046, 5
      %v3049 = vor.u32 %v3045, %v3048
      %v3050 = vrot.slane %v3049, 4
      %v3052 = vshll.u32 %v2974, 16
      %v3054 = vrot.slane %v3052, 5
      %v3055 = vsel %vm354, %v3050, %v3054
      %v3056 = vshrl.u32 %v2974, 16
      %v3058 = vrot.slane %v3056, 4
      %v3059 = vor.u32 %v3058, %v3054
      %v3060 = vrot.slane %v3059, 4
      %v3062 = vshll.u32 %v2975, 16
      %v3064 = vrot.slane %v3062, 5
      %v3065 = vsel %vm354, %v3060, %v3064
      %v3067 = vshrl.u32 %v2976, 16
      %v3069 = vrot.slane %v3067, 4
      %v3070 = vshll.u32 %v2976, 16
      %v3072 = vrot.slane %v3070, 5
      %v3073 = vor.u32 %v3069, %v3072
      %v3074 = vrot.slane %v3073, 4
      %v3076 = vshll.u32 %v2977, 16
      %v3078 = vrot.slane %v3076, 5
      %v3079 = vsel %vm354, %v3074, %v3078
      %v3080 = vshrl.u32 %v2977, 16
      %v3082 = vrot.slane %v3080, 4
      %v3083 = vor.u32 %v3082, %v3078
      %v3084 = vrot.slane %v3083, 4
      %v3086 = vshll.u32 %v2978, 16
      %v3088 = vrot.slane %v3086, 5
      %v3089 = vsel %vm354, %v3084, %v3088
      %v3091 = vshrl.u32 %v2979, 16
      %v3093 = vrot.slane %v3091, 4
      %v3094 = vshll.u32 %v2979, 16
      %v3096 = vrot.slane %v3094, 5
      %v3097 = vor.u32 %v3093, %v3096
      %v3098 = vrot.slane %v3097, 4
      %v3100 = vshll.u32 %v2980, 16
      %v3102 = vrot.slane %v3100, 5
      %v3103 = vsel %vm354, %v3098, %v3102
      %v3104 = vshrl.u32 %v2980, 16
      %v3106 = vrot.slane %v3104, 4
      %v3107 = vor.u32 %v3106, %v3102
      %v3108 = vrot.slane %v3107, 4
      %v3110 = vshll.u32 %v2981, 16
      %v3112 = vrot.slane %v3110, 5
      %v3113 = vsel %vm354, %v3108, %v3112
      %v3115 = vshrl.u32 %v2982, 16
      %v3117 = vrot.slane %v3115, 4
      %v3118 = vshll.u32 %v2982, 16
      %v3120 = vrot.slane %v3118, 5
      %v3121 = vor.u32 %v3117, %v3120
      %v3122 = vrot.slane %v3121, 4
      %v3124 = vshll.u32 %v2983, 16
      %v3126 = vrot.slane %v3124, 5
      %v3127 = vsel %vm354, %v3122, %v3126
      %v3128 = vshrl.u32 %v2983, 16
      %v3130 = vrot.slane %v3128, 4
      %v3131 = vor.u32 %v3130, %v3126
      %v3132 = vrot.slane %v3131, 4
      %v3134 = vshll.u32 %v2984, 16
      %v3136 = vrot.slane %v3134, 5
      %v3137 = vsel %vm354, %v3132, %v3136
      %v3139 = vshrl.u32 %v2985, 16
      %v3141 = vrot.slane %v3139, 4
      %v3142 = vshll.u32 %v2985, 16
      %v3144 = vrot.slane %v3142, 5
      %v3145 = vor.u32 %v3141, %v3144
      %v3146 = vrot.slane %v3145, 4
      %v3148 = vshll.u32 %v2986, 16
      %v3150 = vrot.slane %v3148, 5
      %v3151 = vsel %vm354, %v3146, %v3150
      %v3152 = vshrl.u32 %v2986, 16
      %v3154 = vrot.slane %v3152, 4
      %v3155 = vor.u32 %v3154, %v3150
      %v3156 = vrot.slane %v3155, 4
      %v3158 = vshll.u32 %v2987, 16
      %v3160 = vrot.slane %v3158, 5
      %v3161 = vsel %vm354, %v3156, %v3160
      %v3163 = vshrl.u32 %v2988, 16
      %v3165 = vrot.slane %v3163, 4
      %v3166 = vshll.u32 %v2988, 16
      %v3168 = vrot.slane %v3166, 5
      %v3169 = vor.u32 %v3165, %v3168
      %v3170 = vrot.slane %v3169, 4
      %v3172 = vshll.u32 %v2989, 16
      %v3174 = vrot.slane %v3172, 5
      %v3175 = vsel %vm354, %v3170, %v3174
      %v3176 = vshrl.u32 %v2989, 16
      %v3178 = vrot.slane %v3176, 4
      %v3179 = vor.u32 %v3178, %v3174
      %v3180 = vrot.slane %v3179, 4
      %v3182 = vshll.u32 %v2990, 16
      %v3184 = vrot.slane %v3182, 5
      %v3185 = vsel %vm354, %v3180, %v3184
      %v3187 = vshrl.u32 %v2991, 16
      %v3189 = vrot.slane %v3187, 4
      %v3190 = vshll.u32 %v2991, 16
      %v3192 = vrot.slane %v3190, 5
      %v3193 = vor.u32 %v3189, %v3192
      %v3194 = vrot.slane %v3193, 4
      %v3196 = vshll.u32 %v2992, 16
      %v3198 = vrot.slane %v3196, 5
      %v3199 = vsel %vm354, %v3194, %v3198
      %v3200 = vshrl.u32 %v2992, 16
      %v3202 = vrot.slane %v3200, 4
      %v3203 = vor.u32 %v3202, %v3198
      %v3204 = vrot.slane %v3203, 4
      %v3206 = vshll.u32 %v2993, 16
      %v3208 = vrot.slane %v3206, 5
      %v3209 = vsel %vm354, %v3204, %v3208
      %v3211 = vshrl.u32 %v2994, 16
      %v3213 = vrot.slane %v3211, 4
      %v3214 = vshll.u32 %v2994, 16
      %v3216 = vrot.slane %v3214, 5
      %v3217 = vor.u32 %v3213, %v3216
      %v3218 = vrot.slane %v3217, 4
      %v3220 = vshll.u32 %v2995, 16
      %v3222 = vrot.slane %v3220, 5
      %v3223 = vsel %vm354, %v3218, %v3222
      %v3224 = vshrl.u32 %v2995, 16
      %v3226 = vrot.slane %v3224, 4
      %v3227 = vor.u32 %v3226, %v3222
      %v3228 = vrot.slane %v3227, 4
      %v3230 = vshll.u32 %v2996, 16
      %v3232 = vrot.slane %v3230, 5
      %v3233 = vsel %vm354, %v3228, %v3232
      %v3235 = vshrl.u32 %v2997, 16
      %v3237 = vrot.slane %v3235, 4
      %v3238 = vshll.u32 %v2997, 16
      %v3240 = vrot.slane %v3238, 5
      %v3241 = vor.u32 %v3237, %v3240
      %v3242 = vrot.slane %v3241, 4
      %v3244 = vshll.u32 %v2998, 16
      %v3246 = vrot.slane %v3244, 5
      %v3247 = vsel %vm354, %v3242, %v3246
      %v3248 = vshrl.u32 %v2998, 16
      %v3250 = vrot.slane %v3248, 4
      %v3251 = vor.u32 %v3250, %v3246
      %v3252 = vrot.slane %v3251, 4
      %v3254 = vshll.u32 %v2999, 16
      %v3256 = vrot.slane %v3254, 5
      %v3257 = vsel %vm354, %v3252, %v3256
      %v3259 = vshrl.u32 %v3000, 16
      %v3261 = vrot.slane %v3259, 4
      %v3262 = vshll.u32 %v3000, 16
      %v3264 = vrot.slane %v3262, 5
      %v3265 = vor.u32 %v3261, %v3264
      %v3266 = vrot.slane %v3265, 4
      %v3268 = vshll.u32 %v3001, 16
      %v3270 = vrot.slane %v3268, 5
      %v3271 = vsel %vm354, %v3266, %v3270
      %v3272 = vshrl.u32 %v3001, 16
      %v3274 = vrot.slane %v3272, 4
      %v3275 = vor.u32 %v3274, %v3270
      %v3276 = vrot.slane %v3275, 4
      %v3278 = vshll.u32 %v3002, 16
      %v3280 = vrot.slane %v3278, 5
      %v3281 = vsel %vm354, %v3276, %v3280
      %v3283 = vshrl.u32 %v3003, 16
      %v3285 = vrot.slane %v3283, 4
      %v3286 = vshll.u32 %v3003, 16
      %v3288 = vrot.slane %v3286, 5
      %v3289 = vor.u32 %v3285, %v3288
      %v3290 = vrot.slane %v3289, 4
      %v3292 = vshll.u32 %v3004, 16
      %v3294 = vrot.slane %v3292, 5
      %v3295 = vsel %vm354, %v3290, %v3294
      %v3296 = vshrl.u32 %v3004, 16
      %v3298 = vrot.slane %v3296, 4
      %v3299 = vor.u32 %v3298, %v3294
      %v3300 = vrot.slane %v3299, 4
      %v3302 = vshll.u32 %v3005, 16
      %v3304 = vrot.slane %v3302, 5
      %v3305 = vsel %vm354, %v3300, %v3304
      %v3307 = vshrl.u32 %v3006, 16
      %v3309 = vrot.slane %v3307, 4
      %v3310 = vshll.u32 %v3006, 16
      %v3312 = vrot.slane %v3310, 5
      %v3313 = vor.u32 %v3309, %v3312
      %v3314 = vrot.slane %v3313, 4
      %v3316 = vshll.u32 %v3007, 16
      %v3318 = vrot.slane %v3316, 5
      %v3319 = vsel %vm354, %v3314, %v3318
      %v3320 = vshrl.u32 %v3007, 16
      %v3322 = vrot.slane %v3320, 4
      %v3323 = vor.u32 %v3322, %v3318
      %v3324 = vrot.slane %v3323, 4
      %v3326 = vshll.u32 %v3008, 16
      %v3328 = vrot.slane %v3326, 5
      %v3329 = vsel %vm354, %v3324, %v3328
      %v3331 = vshrl.u32 %v3009, 16
      %v3333 = vrot.slane %v3331, 4
      %v3334 = vshll.u32 %v3009, 16
      %v3336 = vrot.slane %v3334, 5
      %v3337 = vor.u32 %v3333, %v3336
      %v3338 = vrot.slane %v3337, 4
      %v3340 = vshll.u32 %v3010, 16
      %v3342 = vrot.slane %v3340, 5
      %v3343 = vsel %vm354, %v3338, %v3342
      %v3344 = vshrl.u32 %v3010, 16
      %v3346 = vrot.slane %v3344, 4
      %v3347 = vor.u32 %v3346, %v3342
      %v3348 = vrot.slane %v3347, 4
      %v3350 = vshll.u32 %v3011, 16
      %v3352 = vrot.slane %v3350, 5
      %v3353 = vsel %vm354, %v3348, %v3352
      %v3355 = vshrl.u32 %v3012, 16
      %v3357 = vrot.slane %v3355, 4
      %v3358 = vshll.u32 %v3012, 16
      %v3360 = vrot.slane %v3358, 5
      %v3361 = vor.u32 %v3357, %v3360
      %v3362 = vrot.slane %v3361, 4
      %v3364 = vshll.u32 %v3013, 16
      %v3366 = vrot.slane %v3364, 5
      %v3367 = vsel %vm354, %v3362, %v3366
      %v3368 = vshrl.u32 %v3013, 16
      %v3370 = vrot.slane %v3368, 4
      %v3371 = vor.u32 %v3370, %v3366
      %v3372 = vrot.slane %v3371, 4
      %v3374 = vshll.u32 %v3014, 16
      %v3376 = vrot.slane %v3374, 5
      %v3377 = vsel %vm354, %v3372, %v3376
      %v3379 = vshrl.u32 %v3015, 16
      %v3381 = vrot.slane %v3379, 4
      %v3382 = vshll.u32 %v3015, 16
      %v3384 = vrot.slane %v3382, 5
      %v3385 = vor.u32 %v3381, %v3384
      %v3386 = vrot.slane %v3385, 4
      %v3388 = vshll.u32 %v3016, 16
      %v3390 = vrot.slane %v3388, 5
      %v3391 = vsel %vm354, %v3386, %v3390
      %v3392 = vshrl.u32 %v3016, 16
      %v3394 = vrot.slane %v3392, 4
      %v3395 = vor.u32 %v3394, %v3390
      %v3396 = vrot.slane %v3395, 4
      %v3398 = vshll.u32 %v3017, 16
      %v3400 = vrot.slane %v3398, 5
      %v3401 = vsel %vm354, %v3396, %v3400
      %v3402 = vld [vmem:[%s1 + $0x100] sm:$0xf]
      %v3403 = vld [vmem:[%s1 + $0x104] sm:$0xf]
      %v3404 = vld [vmem:[%s1 + $0x108] sm:$0xf]
      %v3405 = vld [vmem:[%s1 + $0x10c] sm:$0xf]
      %v3406 = vld [vmem:[%s1 + $0x110] sm:$0xf]
      %v3407 = vld [vmem:[%s1 + $0x114] sm:$0xf]
      %v3408 = vld [vmem:[%s1 + $0x118] sm:$0xf]
      %v3409 = vld [vmem:[%s1 + $0x11c] sm:$0xf]
      %v3410 = vunpack.c.l.b16 %v3031
      %v3411 = vunpack.c.l.b16 %v3041
      %v3412 = vunpack.c.l.b16 %v3055
      %v3413 = vunpack.c.l.b16 %v3065
      %v3414 = vunpack.c.l.b16 %v3079
      %v3415 = vunpack.c.l.b16 %v3089
      %v3416 = vunpack.c.l.b16 %v3103
      %v3417 = vunpack.c.l.b16 %v3113
      %v3418 = vunpack.c.l.b16 %v3127
      %v3419 = vunpack.c.l.b16 %v3137
      %v3420 = vunpack.c.l.b16 %v3151
      %v3421 = vunpack.c.l.b16 %v3161
      %v3422 = vunpack.c.l.b16 %v3175
      %v3423 = vunpack.c.l.b16 %v3185
      %v3424 = vunpack.c.l.b16 %v3199
      %v3425 = vunpack.c.l.b16 %v3209
      %v3426 = vunpack.c.l.b16 %v3223
      %v3427 = vunpack.c.l.b16 %v3233
      %v3428 = vunpack.c.l.b16 %v3247
      %v3429 = vunpack.c.l.b16 %v3257
      %v3430 = vunpack.c.l.b16 %v3271
      %v3431 = vunpack.c.l.b16 %v3281
      %v3432 = vunpack.c.l.b16 %v3295
      %v3433 = vunpack.c.l.b16 %v3305
      %v3434 = vunpack.c.l.b16 %v3319
      %v3435 = vunpack.c.l.b16 %v3329
      %v3436 = vunpack.c.l.b16 %v3343
      %v3437 = vunpack.c.l.b16 %v3353
      %v3438 = vunpack.c.l.b16 %v3367
      %v3439 = vunpack.c.l.b16 %v3377
      %v3440 = vunpack.c.l.b16 %v3391
      %v3441 = vunpack.c.l.b16 %v3401
      %v3442 = vpack.c.b16 %v3411, %v3410
      %v3443 = vpack.c.b16 %v3413, %v3412
      %v3444 = vpack.c.b16 %v3415, %v3414
      %v3445 = vpack.c.b16 %v3417, %v3416
      %v3446 = vpack.c.b16 %v3419, %v3418
      %v3447 = vpack.c.b16 %v3421, %v3420
      %v3448 = vpack.c.b16 %v3423, %v3422
      %v3449 = vpack.c.b16 %v3425, %v3424
      %v3450 = vpack.c.b16 %v3427, %v3426
      %v3451 = vpack.c.b16 %v3429, %v3428
      %v3452 = vpack.c.b16 %v3431, %v3430
      %v3453 = vpack.c.b16 %v3433, %v3432
      %v3454 = vpack.c.b16 %v3435, %v3434
      %v3455 = vpack.c.b16 %v3437, %v3436
      %v3456 = vpack.c.b16 %v3439, %v3438
      %v3457 = vpack.c.b16 %v3441, %v3440
      %v3466 = vunpack.c.l.b16 %v3402
      %v3467 = vunpack.c.l.b16 %v3403
      %v3468 = vunpack.c.l.b16 %v3404
      %v3469 = vunpack.c.l.b16 %v3405
      %v3470 = vunpack.c.l.b16 %v3406
      %v3471 = vunpack.c.l.b16 %v3407
      %v3472 = vunpack.c.l.b16 %v3408
      %v3473 = vunpack.c.l.b16 %v3409
      %v3474 = vpack.c.b16 %v3467, %v3466
      %v3475 = vpack.c.b16 %v3469, %v3468
      %v3476 = vpack.c.b16 %v3471, %v3470
      %v3477 = vpack.c.b16 %v3473, %v3472
      %v3483 = vsel %vm1124, %v3442, 0
      %v3486 = vsel %vm1124, %v3443, 0
      %v3489 = vsel %vm1124, %v3444, 0
      %v3492 = vsel %vm1124, %v3445, 0
      %v3495 = vsel %vm1124, %v3446, 0
      %v3498 = vsel %vm1124, %v3447, 0
      %v3501 = vsel %vm1124, %v3448, 0
      %v3504 = vsel %vm1124, %v3449, 0
      %v3507 = vsel %vm1124, %v3450, 0
      %v3510 = vsel %vm1124, %v3451, 0
      %v3513 = vsel %vm1124, %v3452, 0
      %v3516 = vsel %vm1124, %v3453, 0
      %v3519 = vsel %vm1124, %v3454, 0
      %v3522 = vsel %vm1124, %v3455, 0
      %v3525 = vsel %vm1124, %v3456, 0
      %v3528 = vsel %vm1124, %v3457, 0
      %3530 = vmatprep.subr.bf16.mxu0 0
      %3531 = vmatpush1.bf16.msra.mxu0 %v3474
      %3532 = vmatprep.subr.bf16.mxu0 0
      %3533 = vmatpush1.bf16.msra.mxu0 %v3475
      %3534 = vmatprep.subr.bf16.mxu0 0
      %3535 = vmatpush1.bf16.msra.mxu0 %v3476
      %3536 = vmatprep.subr.bf16.mxu0 0
      %3537 = vmatpush1.bf16.msra.mxu0 %v3477
      %3538 = vmatprep.subr.bf16.mxu0 0
      %3539 = vmatpush1.bf16.msra.mxu0 0
      %3540 = vmatprep.subr.bf16.mxu0 0
      %3541 = vmatpush1.bf16.msra.mxu0 0
      %3542 = vmatprep.subr.bf16.mxu0 0
      %3543 = vmatpush1.bf16.msra.mxu0 0
      %3544 = vmatprep.subr.bf16.mxu0 0
      %3545 = vmatpush1.bf16.msra.mxu0 0
      %3546 = vmatprep.subr.bf16.mxu0 0
      %3547 = vmatpush1.bf16.msra.mxu0 0
      %3548 = vmatprep.subr.bf16.mxu0 0
      %3549 = vmatpush1.bf16.msra.mxu0 0
      %3550 = vmatprep.subr.bf16.mxu0 0
      %3551 = vmatpush1.bf16.msra.mxu0 0
      %3552 = vmatprep.subr.bf16.mxu0 0
      %3553 = vmatpush1.bf16.msra.mxu0 0
      %3554 = vmatprep.subr.bf16.mxu0 0
      %3555 = vmatpush1.bf16.msra.mxu0 0
      %3556 = vmatprep.subr.bf16.mxu0 0
      %3557 = vmatpush1.bf16.msra.mxu0 0
      %3558 = vmatprep.subr.bf16.mxu0 0
      %3559 = vmatpush1.bf16.msra.mxu0 0
      %3560 = vmatprep.subr.bf16.mxu0 0
      %3561 = vmatpush1.bf16.msra.mxu0 0
      %3562 = vmatprep.mubr.bf16.mxu0 0
      %3563 = vmatmul.mubr.bf16.gmra.mrb[0].mxu0 %v3483
      %v3564 = vpop.f32.mrb[0].mxu0
      %v3565 = vadd.f32 0.0, %v3564
      %v3566 = vpop.f32.mrb[0].mxu0
      %v3567 = vpop.f32.mrb[0].mxu0
      %v3568 = vadd.f32 0.0, %v3567
      %v3569 = vpop.f32.mrb[0].mxu0
      %3570 = vmatprep.mubr.bf16.mxu0 0
      %3571 = vmatmul.mubr.bf16.gmra.mrb[0].mxu0 %v3486
      %v3572 = vpop.f32.mrb[0].mxu0
      %v3573 = vadd.f32 0.0, %v3572
      %v3574 = vpop.f32.mrb[0].mxu0
      %v3575 = vpop.f32.mrb[0].mxu0
      %v3576 = vadd.f32 0.0, %v3575
      %v3577 = vpop.f32.mrb[0].mxu0
      %3578 = vmatprep.mubr.bf16.mxu0 0
      %3579 = vmatmul.mubr.bf16.gmra.mrb[0].mxu0 %v3489
      %v3580 = vpop.f32.mrb[0].mxu0
      %v3581 = vadd.f32 0.0, %v3580
      %v3582 = vpop.f32.mrb[0].mxu0
      %v3583 = vpop.f32.mrb[0].mxu0
      %v3584 = vadd.f32 0.0, %v3583
      %v3585 = vpop.f32.mrb[0].mxu0
      %3586 = vmatprep.mubr.bf16.mxu0 0
      %3587 = vmatmul.mubr.bf16.gmra.mrb[0].mxu0 %v3492
      %v3588 = vpop.f32.mrb[0].mxu0
      %v3589 = vadd.f32 0.0, %v3588
      %v3590 = vpop.f32.mrb[0].mxu0
      %v3591 = vpop.f32.mrb[0].mxu0
      %v3592 = vadd.f32 0.0, %v3591
      %v3593 = vpop.f32.mrb[0].mxu0
      %3594 = vmatprep.mubr.bf16.mxu0 0
      %3595 = vmatmul.mubr.bf16.gmra.mrb[0].mxu0 %v3495
      %v3596 = vpop.f32.mrb[0].mxu0
      %v3597 = vadd.f32 0.0, %v3596
      %v3598 = vpop.f32.mrb[0].mxu0
      %v3599 = vpop.f32.mrb[0].mxu0
      %v3600 = vadd.f32 0.0, %v3599
      %v3601 = vpop.f32.mrb[0].mxu0
      %3602 = vmatprep.mubr.bf16.mxu0 0
      %3603 = vmatmul.mubr.bf16.gmra.mrb[0].mxu0 %v3498
      %v3604 = vpop.f32.mrb[0].mxu0
      %v3605 = vadd.f32 0.0, %v3604
      %v3606 = vpop.f32.mrb[0].mxu0
      %v3607 = vpop.f32.mrb[0].mxu0
      %v3608 = vadd.f32 0.0, %v3607
      %v3609 = vpop.f32.mrb[0].mxu0
      %3610 = vmatprep.mubr.bf16.mxu0 0
      %3611 = vmatmul.mubr.bf16.gmra.mrb[0].mxu0 %v3501
      %v3612 = vpop.f32.mrb[0].mxu0
      %v3613 = vadd.f32 0.0, %v3612
      %v3614 = vpop.f32.mrb[0].mxu0
      %v3615 = vpop.f32.mrb[0].mxu0
      %v3616 = vadd.f32 0.0, %v3615
      %v3617 = vpop.f32.mrb[0].mxu0
      %3618 = vmatprep.mubr.bf16.mxu0 0
      %3619 = vmatmul.mubr.bf16.gmra.mrb[0].mxu0 %v3504
      %v3620 = vpop.f32.mrb[0].mxu0
      %v3621 = vadd.f32 0.0, %v3620
      %v3622 = vpop.f32.mrb[0].mxu0
      %v3623 = vpop.f32.mrb[0].mxu0
      %v3624 = vadd.f32 0.0, %v3623
      %v3625 = vpop.f32.mrb[0].mxu0
      %3626 = vmatprep.mubr.bf16.mxu0 0
      %3627 = vmatmul.mubr.bf16.gmra.mrb[0].mxu0 %v3507
      %v3628 = vpop.f32.mrb[0].mxu0
      %v3629 = vadd.f32 0.0, %v3628
      %v3630 = vpop.f32.mrb[0].mxu0
      %v3631 = vpop.f32.mrb[0].mxu0
      %v3632 = vadd.f32 0.0, %v3631
      %v3633 = vpop.f32.mrb[0].mxu0
      %3634 = vmatprep.mubr.bf16.mxu0 0
      %3635 = vmatmul.mubr.bf16.gmra.mrb[0].mxu0 %v3510
      %v3636 = vpop.f32.mrb[0].mxu0
      %v3637 = vadd.f32 0.0, %v3636
      %v3638 = vpop.f32.mrb[0].mxu0
      %v3639 = vpop.f32.mrb[0].mxu0
      %v3640 = vadd.f32 0.0, %v3639
      %v3641 = vpop.f32.mrb[0].mxu0
      %3642 = vmatprep.mubr.bf16.mxu0 0
      %3643 = vmatmul.mubr.bf16.gmra.mrb[0].mxu0 %v3513
      %v3644 = vpop.f32.mrb[0].mxu0
      %v3645 = vadd.f32 0.0, %v3644
      %v3646 = vpop.f32.mrb[0].mxu0
      %v3647 = vpop.f32.mrb[0].mxu0
      %v3648 = vadd.f32 0.0, %v3647
      %v3649 = vpop.f32.mrb[0].mxu0
      %3650 = vmatprep.mubr.bf16.mxu0 0
      %3651 = vmatmul.mubr.bf16.gmra.mrb[0].mxu0 %v3516
      %v3652 = vpop.f32.mrb[0].mxu0
      %v3653 = vadd.f32 0.0, %v3652
      %v3654 = vpop.f32.mrb[0].mxu0
      %v3655 = vpop.f32.mrb[0].mxu0
      %v3656 = vadd.f32 0.0, %v3655
      %v3657 = vpop.f32.mrb[0].mxu0
      %3658 = vmatprep.mubr.bf16.mxu0 0
      %3659 = vmatmul.mubr.bf16.gmra.mrb[0].mxu0 %v3519
      %v3660 = vpop.f32.mrb[0].mxu0
      %v3661 = vadd.f32 0.0, %v3660
      %v3662 = vpop.f32.mrb[0].mxu0
      %v3663 = vpop.f32.mrb[0].mxu0
      %v3664 = vadd.f32 0.0, %v3663
      %v3665 = vpop.f32.mrb[0].mxu0
      %3666 = vmatprep.mubr.bf16.mxu0 0
      %3667 = vmatmul.mubr.bf16.gmra.mrb[0].mxu0 %v3522
      %v3668 = vpop.f32.mrb[0].mxu0
      %v3669 = vadd.f32 0.0, %v3668
      %v3670 = vpop.f32.mrb[0].mxu0
      %v3671 = vpop.f32.mrb[0].mxu0
      %v3672 = vadd.f32 0.0, %v3671
      %v3673 = vpop.f32.mrb[0].mxu0
      %3674 = vmatprep.mubr.bf16.mxu0 0
      %3675 = vmatmul.mubr.bf16.gmra.mrb[0].mxu0 %v3525
      %v3676 = vpop.f32.mrb[0].mxu0
      %v3677 = vadd.f32 0.0, %v3676
      %v3678 = vpop.f32.mrb[0].mxu0
      %v3679 = vpop.f32.mrb[0].mxu0
      %v3680 = vadd.f32 0.0, %v3679
      %v3681 = vpop.f32.mrb[0].mxu0
      %3682 = vmatprep.mubr.bf16.mxu0 0
      %3683 = vmatmul.mubr.bf16.gmra.mrb[0].mxu0 %v3528
      %v3684 = vpop.f32.mrb[0].mxu0
      %v3685 = vadd.f32 0.0, %v3684
      %v3686 = vpop.f32.mrb[0].mxu0
      %v3687 = vpop.f32.mrb[0].mxu0
      %v3688 = vadd.f32 0.0, %v3687
      %v3689 = vpop.f32.mrb[0].mxu0
      %3690 = vdwg.mxu0
      %v3691 = vld [vmem:[#allocation2] sm:$0xff]
      %v3692 = vld [vmem:[#allocation2 + $0x8] sm:$0xff]
      %v3693 = vld [vmem:[#allocation2 + $0x10] sm:$0xff]
      %v3694 = vld [vmem:[#allocation2 + $0x18] sm:$0xff]
      %v3695 = vld [vmem:[#allocation2 + $0x20] sm:$0xff]
      %v3696 = vld [vmem:[#allocation2 + $0x28] sm:$0xff]
      %v3697 = vld [vmem:[#allocation2 + $0x30] sm:$0xff]
      %v3698 = vld [vmem:[#allocation2 + $0x38] sm:$0xff]
      %v3699 = vld [vmem:[#allocation2 + $0x40] sm:$0xff]
      %v3700 = vld [vmem:[#allocation2 + $0x48] sm:$0xff]
      %v3701 = vld [vmem:[#allocation2 + $0x50] sm:$0xff]
      %v3702 = vld [vmem:[#allocation2 + $0x58] sm:$0xff]
      %v3703 = vld [vmem:[#allocation2 + $0x60] sm:$0xff]
      %v3704 = vld [vmem:[#allocation2 + $0x68] sm:$0xff]
      %v3705 = vld [vmem:[#allocation2 + $0x70] sm:$0xff]
      %v3706 = vld [vmem:[#allocation2 + $0x78] sm:$0xff]
      %v3707 = vld [vmem:[#allocation2 + $0x80] sm:$0xff]
      %v3708 = vld [vmem:[#allocation2 + $0x88] sm:$0xff]
      %v3709 = vld [vmem:[#allocation2 + $0x90] sm:$0xff]
      %v3710 = vld [vmem:[#allocation2 + $0x98] sm:$0xff]
      %v3711 = vld [vmem:[#allocation2 + $0xa0] sm:$0xff]
      %v3712 = vld [vmem:[#allocation2 + $0xa8] sm:$0xff]
      %v3713 = vld [vmem:[#allocation2 + $0xb0] sm:$0xff]
      %v3714 = vld [vmem:[#allocation2 + $0xb8] sm:$0xff]
      %v3715 = vld [vmem:[#allocation2 + $0xc0] sm:$0xff]
      %v3716 = vld [vmem:[#allocation2 + $0xc8] sm:$0xff]
      %v3717 = vld [vmem:[#allocation2 + $0xd0] sm:$0xff]
      %v3718 = vld [vmem:[#allocation2 + $0xd8] sm:$0xff]
      %v3719 = vld [vmem:[#allocation2 + $0xe0] sm:$0xff]
      %v3720 = vld [vmem:[#allocation2 + $0xe8] sm:$0xff]
      %v3721 = vld [vmem:[#allocation2 + $0xf0] sm:$0xff]
      %v3722 = vld [vmem:[#allocation2 + $0xf8] sm:$0xff]
      %v3723 = vadd.f32 %v3691, %v3565
      %v3724 = vadd.f32 %v3692, %v3568
      %v3725 = vadd.f32 %v3693, %v3573
      %v3726 = vadd.f32 %v3694, %v3576
      %v3727 = vadd.f32 %v3695, %v3581
      %v3728 = vadd.f32 %v3696, %v3584
      %v3729 = vadd.f32 %v3697, %v3589
      %v3730 = vadd.f32 %v3698, %v3592
      %v3731 = vadd.f32 %v3699, %v3597
      %v3732 = vadd.f32 %v3700, %v3600
      %v3733 = vadd.f32 %v3701, %v3605
      %v3734 = vadd.f32 %v3702, %v3608
      %v3735 = vadd.f32 %v3703, %v3613
      %v3736 = vadd.f32 %v3704, %v3616
      %v3737 = vadd.f32 %v3705, %v3621
      %v3738 = vadd.f32 %v3706, %v3624
      %v3739 = vadd.f32 %v3707, %v3629
      %v3740 = vadd.f32 %v3708, %v3632
      %v3741 = vadd.f32 %v3709, %v3637
      %v3742 = vadd.f32 %v3710, %v3640
      %v3743 = vadd.f32 %v3711, %v3645
      %v3744 = vadd.f32 %v3712, %v3648
      %v3745 = vadd.f32 %v3713, %v3653
      %v3746 = vadd.f32 %v3714, %v3656
      %v3747 = vadd.f32 %v3715, %v3661
      %v3748 = vadd.f32 %v3716, %v3664
      %v3749 = vadd.f32 %v3717, %v3669
      %v3750 = vadd.f32 %v3718, %v3672
      %v3751 = vadd.f32 %v3719, %v3677
      %v3752 = vadd.f32 %v3720, %v3680
      %v3753 = vadd.f32 %v3721, %v3685
      %v3754 = vadd.f32 %v3722, %v3688
      %3755 = vst [vmem:[#allocation2] sm:$0xff] %v3723
      %3756 = vst [vmem:[#allocation2 + $0x8] sm:$0xff] %v3724
      %3757 = vst [vmem:[#allocation2 + $0x10] sm:$0xff] %v3725
      %3758 = vst [vmem:[#allocation2 + $0x18] sm:$0xff] %v3726
      %3759 = vst [vmem:[#allocation2 + $0x20] sm:$0xff] %v3727
      %3760 = vst [vmem:[#allocation2 + $0x28] sm:$0xff] %v3728
      %3761 = vst [vmem:[#allocation2 + $0x30] sm:$0xff] %v3729
      %3762 = vst [vmem:[#allocation2 + $0x38] sm:$0xff] %v3730
      %3763 = vst [vmem:[#allocation2 + $0x40] sm:$0xff] %v3731
      %3764 = vst [vmem:[#allocation2 + $0x48] sm:$0xff] %v3732
      %3765 = vst [vmem:[#allocation2 + $0x50] sm:$0xff] %v3733
      %3766 = vst [vmem:[#allocation2 + $0x58] sm:$0xff] %v3734
      %3767 = vst [vmem:[#allocation2 + $0x60] sm:$0xff] %v3735
      %3768 = vst [vmem:[#allocation2 + $0x68] sm:$0xff] %v3736
      %3769 = vst [vmem:[#allocation2 + $0x70] sm:$0xff] %v3737
      %3770 = vst [vmem:[#allocation2 + $0x78] sm:$0xff] %v3738
      %3771 = vst [vmem:[#allocation2 + $0x80] sm:$0xff] %v3739
      %3772 = vst [vmem:[#allocation2 + $0x88] sm:$0xff] %v3740
      %3773 = vst [vmem:[#allocation2 + $0x90] sm:$0xff] %v3741
      %3774 = vst [vmem:[#allocation2 + $0x98] sm:$0xff] %v3742
      %3775 = vst [vmem:[#allocation2 + $0xa0] sm:$0xff] %v3743
      %3776 = vst [vmem:[#allocation2 + $0xa8] sm:$0xff] %v3744
      %3777 = vst [vmem:[#allocation2 + $0xb0] sm:$0xff] %v3745
      %3778 = vst [vmem:[#allocation2 + $0xb8] sm:$0xff] %v3746
      %3779 = vst [vmem:[#allocation2 + $0xc0] sm:$0xff] %v3747
      %3780 = vst [vmem:[#allocation2 + $0xc8] sm:$0xff] %v3748
      %3781 = vst [vmem:[#allocation2 + $0xd0] sm:$0xff] %v3749
      %3782 = vst [vmem:[#allocation2 + $0xd8] sm:$0xff] %v3750
      %3783 = vst [vmem:[#allocation2 + $0xe0] sm:$0xff] %v3751
      %3784 = vst [vmem:[#allocation2 + $0xe8] sm:$0xff] %v3752
      %3785 = vst [vmem:[#allocation2 + $0xf0] sm:$0xff] %v3753
      %3786 = vst [vmem:[#allocation2 + $0xf8] sm:$0xff] %v3754
      %v3787 = vld [vmem:[#allocation2] sm:$0xff]
      %v3788 = vld [vmem:[#allocation2 + $0x8] sm:$0xff]
      %v3789 = vld [vmem:[#allocation2 + $0x10] sm:$0xff]
      %v3790 = vld [vmem:[#allocation2 + $0x18] sm:$0xff]
      %v3791 = vld [vmem:[#allocation2 + $0x20] sm:$0xff]
      %v3792 = vld [vmem:[#allocation2 + $0x28] sm:$0xff]
      %v3793 = vld [vmem:[#allocation2 + $0x30] sm:$0xff]
      %v3794 = vld [vmem:[#allocation2 + $0x38] sm:$0xff]
      %v3795 = vld [vmem:[#allocation2 + $0x40] sm:$0xff]
      %v3796 = vld [vmem:[#allocation2 + $0x48] sm:$0xff]
      %v3797 = vld [vmem:[#allocation2 + $0x50] sm:$0xff]
      %v3798 = vld [vmem:[#allocation2 + $0x58] sm:$0xff]
      %v3799 = vld [vmem:[#allocation2 + $0x60] sm:$0xff]
      %v3800 = vld [vmem:[#allocation2 + $0x68] sm:$0xff]
      %v3801 = vld [vmem:[#allocation2 + $0x70] sm:$0xff]
      %v3802 = vld [vmem:[#allocation2 + $0x78] sm:$0xff]
      %v3803 = vld [vmem:[#allocation2 + $0x80] sm:$0xff]
      %v3804 = vld [vmem:[#allocation2 + $0x88] sm:$0xff]
      %v3805 = vld [vmem:[#allocation2 + $0x90] sm:$0xff]
      %v3806 = vld [vmem:[#allocation2 + $0x98] sm:$0xff]
      %v3807 = vld [vmem:[#allocation2 + $0xa0] sm:$0xff]
      %v3808 = vld [vmem:[#allocation2 + $0xa8] sm:$0xff]
      %v3809 = vld [vmem:[#allocation2 + $0xb0] sm:$0xff]
      %v3810 = vld [vmem:[#allocation2 + $0xb8] sm:$0xff]
      %v3811 = vld [vmem:[#allocation2 + $0xc0] sm:$0xff]
      %v3812 = vld [vmem:[#allocation2 + $0xc8] sm:$0xff]
      %v3813 = vld [vmem:[#allocation2 + $0xd0] sm:$0xff]
      %v3814 = vld [vmem:[#allocation2 + $0xd8] sm:$0xff]
      %v3815 = vld [vmem:[#allocation2 + $0xe0] sm:$0xff]
      %v3816 = vld [vmem:[#allocation2 + $0xe8] sm:$0xff]
      %v3817 = vld [vmem:[#allocation2 + $0xf0] sm:$0xff]
      %v3818 = vld [vmem:[#allocation2 + $0xf8] sm:$0xff]
      %v3819 = vld [vmem:[%s2] sm:$0x1]
      %v3821 = vlaneseq
      %v3822 = vshrl.u32 %v3821, 7
      %v3823 = vsub.s32 0, %v3822
      %v3824 = vrot.slane %v3819, %v3823
      %v3826 = vadd.f32 %v3787, %v3824
      %v3827 = vadd.f32 %v3788, %v3824
      %v3828 = vadd.f32 %v3789, %v3824
      %v3829 = vadd.f32 %v3790, %v3824
      %v3830 = vadd.f32 %v3791, %v3824
      %v3831 = vadd.f32 %v3792, %v3824
      %v3832 = vadd.f32 %v3793, %v3824
      %v3833 = vadd.f32 %v3794, %v3824
      %v3834 = vadd.f32 %v3795, %v3824
      %v3835 = vadd.f32 %v3796, %v3824
      %v3836 = vadd.f32 %v3797, %v3824
      %v3837 = vadd.f32 %v3798, %v3824
      %v3838 = vadd.f32 %v3799, %v3824
      %v3839 = vadd.f32 %v3800, %v3824
      %v3840 = vadd.f32 %v3801, %v3824
      %v3841 = vadd.f32 %v3802, %v3824
      %v3842 = vadd.f32 %v3803, %v3824
      %v3843 = vadd.f32 %v3804, %v3824
      %v3844 = vadd.f32 %v3805, %v3824
      %v3845 = vadd.f32 %v3806, %v3824
      %v3846 = vadd.f32 %v3807, %v3824
      %v3847 = vadd.f32 %v3808, %v3824
      %v3848 = vadd.f32 %v3809, %v3824
      %v3849 = vadd.f32 %v3810, %v3824
      %v3850 = vadd.f32 %v3811, %v3824
      %v3851 = vadd.f32 %v3812, %v3824
      %v3852 = vadd.f32 %v3813, %v3824
      %v3853 = vadd.f32 %v3814, %v3824
      %v3854 = vadd.f32 %v3815, %v3824
      %v3855 = vadd.f32 %v3816, %v3824
      %v3856 = vadd.f32 %v3817, %v3824
      %v3857 = vadd.f32 %v3818, %v3824
      %v3858 = vmax.f32 %v3826, 0.0
      %v3859 = vmax.f32 %v3827, 0.0
      %v3860 = vmax.f32 %v3828, 0.0
      %v3861 = vmax.f32 %v3829, 0.0
      %v3862 = vmax.f32 %v3830, 0.0
      %v3863 = vmax.f32 %v3831, 0.0
      %v3864 = vmax.f32 %v3832, 0.0
      %v3865 = vmax.f32 %v3833, 0.0
      %v3866 = vmax.f32 %v3834, 0.0
      %v3867 = vmax.f32 %v3835, 0.0
      %v3868 = vmax.f32 %v3836, 0.0
      %v3869 = vmax.f32 %v3837, 0.0
      %v3870 = vmax.f32 %v3838, 0.0
      %v3871 = vmax.f32 %v3839, 0.0
      %v3872 = vmax.f32 %v3840, 0.0
      %v3873 = vmax.f32 %v3841, 0.0
      %v3874 = vmax.f32 %v3842, 0.0
      %v3875 = vmax.f32 %v3843, 0.0
      %v3876 = vmax.f32 %v3844, 0.0
      %v3877 = vmax.f32 %v3845, 0.0
      %v3878 = vmax.f32 %v3846, 0.0
      %v3879 = vmax.f32 %v3847, 0.0
      %v3880 = vmax.f32 %v3848, 0.0
      %v3881 = vmax.f32 %v3849, 0.0
      %v3882 = vmax.f32 %v3850, 0.0
      %v3883 = vmax.f32 %v3851, 0.0
      %v3884 = vmax.f32 %v3852, 0.0
      %v3885 = vmax.f32 %v3853, 0.0
      %v3886 = vmax.f32 %v3854, 0.0
      %v3887 = vmax.f32 %v3855, 0.0
      %v3888 = vmax.f32 %v3856, 0.0
      %v3889 = vmax.f32 %v3857, 0.0
      %v3890 = vpack.c.bf16 %v3859, %v3858
      %v3891 = vpack.c.bf16 %v3861, %v3860
      %v3892 = vpack.c.bf16 %v3863, %v3862
      %v3893 = vpack.c.bf16 %v3865, %v3864
      %v3894 = vpack.c.bf16 %v3867, %v3866
      %v3895 = vpack.c.bf16 %v3869, %v3868
      %v3896 = vpack.c.bf16 %v3871, %v3870
      %v3897 = vpack.c.bf16 %v3873, %v3872
      %v3898 = vpack.c.bf16 %v3875, %v3874
      %v3899 = vpack.c.bf16 %v3877, %v3876
      %v3900 = vpack.c.bf16 %v3879, %v3878
      %v3901 = vpack.c.bf16 %v3881, %v3880
      %v3902 = vpack.c.bf16 %v3883, %v3882
      %v3903 = vpack.c.bf16 %v3885, %v3884
      %v3904 = vpack.c.bf16 %v3887, %v3886
      %v3905 = vpack.c.bf16 %v3889, %v3888
      %v3922 = vunpack.c.l.b16 %v3890
      %v3923 = vunpack.c.h.b16 %v3890
      %v3924 = vunpack.c.l.b16 %v3891
      %v3925 = vunpack.c.h.b16 %v3891
      %v3926 = vunpack.c.l.b16 %v3892
      %v3927 = vunpack.c.h.b16 %v3892
      %v3928 = vunpack.c.l.b16 %v3893
      %v3929 = vunpack.c.h.b16 %v3893
      %v3930 = vunpack.c.l.b16 %v3894
      %v3931 = vunpack.c.h.b16 %v3894
      %v3932 = vunpack.c.l.b16 %v3895
      %v3933 = vunpack.c.h.b16 %v3895
      %v3934 = vunpack.c.l.b16 %v3896
      %v3935 = vunpack.c.h.b16 %v3896
      %v3936 = vunpack.c.l.b16 %v3897
      %v3937 = vunpack.c.h.b16 %v3897
      %v3938 = vunpack.c.l.b16 %v3898
      %v3939 = vunpack.c.h.b16 %v3898
      %v3940 = vunpack.c.l.b16 %v3899
      %v3941 = vunpack.c.h.b16 %v3899
      %v3942 = vunpack.c.l.b16 %v3900
      %v3943 = vunpack.c.h.b16 %v3900
      %v3944 = vunpack.c.l.b16 %v3901
      %v3945 = vunpack.c.h.b16 %v3901
      %v3946 = vunpack.c.l.b16 %v3902
      %v3947 = vunpack.c.h.b16 %v3902
      %v3948 = vunpack.c.l.b16 %v3903
      %v3949 = vunpack.c.h.b16 %v3903
      %v3950 = vunpack.c.l.b16 %v3904
      %v3951 = vunpack.c.h.b16 %v3904
      %v3952 = vunpack.c.l.b16 %v3905
      %v3953 = vunpack.c.h.b16 %v3905
      %v3954 = vpack.c.b16 %v3922, %v3922
      %v3955 = vpack.c.b16 %v3923, %v3923
      %v3956 = vpack.c.b16 %v3924, %v3924
      %v3957 = vpack.c.b16 %v3925, %v3925
      %v3958 = vpack.c.b16 %v3926, %v3926
      %v3959 = vpack.c.b16 %v3927, %v3927
      %v3960 = vpack.c.b16 %v3928, %v3928
      %v3961 = vpack.c.b16 %v3929, %v3929
      %v3962 = vpack.c.b16 %v3930, %v3930
      %v3963 = vpack.c.b16 %v3931, %v3931
      %v3964 = vpack.c.b16 %v3932, %v3932
      %v3965 = vpack.c.b16 %v3933, %v3933
      %v3966 = vpack.c.b16 %v3934, %v3934
      %v3967 = vpack.c.b16 %v3935, %v3935
      %v3968 = vpack.c.b16 %v3936, %v3936
      %v3969 = vpack.c.b16 %v3937, %v3937
      %v3970 = vpack.c.b16 %v3938, %v3938
      %v3971 = vpack.c.b16 %v3939, %v3939
      %v3972 = vpack.c.b16 %v3940, %v3940
      %v3973 = vpack.c.b16 %v3941, %v3941
      %v3974 = vpack.c.b16 %v3942, %v3942
      %v3975 = vpack.c.b16 %v3943, %v3943
      %v3976 = vpack.c.b16 %v3944, %v3944
      %v3977 = vpack.c.b16 %v3945, %v3945
      %v3978 = vpack.c.b16 %v3946, %v3946
      %v3979 = vpack.c.b16 %v3947, %v3947
      %v3980 = vpack.c.b16 %v3948, %v3948
      %v3981 = vpack.c.b16 %v3949, %v3949
      %v3982 = vpack.c.b16 %v3950, %v3950
      %v3983 = vpack.c.b16 %v3951, %v3951
      %v3984 = vpack.c.b16 %v3952, %v3952
      %v3985 = vpack.c.b16 %v3953, %v3953
      %4018 = vst [vmem:[%s264] sm:$0xf] %v3954
      %4019 = vst [vmem:[%s264 + $0x4] sm:$0xf] %v3955
      %4020 = vst [vmem:[%s264 + $0x8] sm:$0xf] %v3956
      %4021 = vst [vmem:[%s264 + $0xc] sm:$0xf] %v3957
      %4022 = vst [vmem:[%s264 + $0x10] sm:$0xf] %v3958
      %4023 = vst [vmem:[%s264 + $0x14] sm:$0xf] %v3959
      %4024 = vst [vmem:[%s264 + $0x18] sm:$0xf] %v3960
      %4025 = vst [vmem:[%s264 + $0x1c] sm:$0xf] %v3961
      %4026 = vst [vmem:[%s264 + $0x20] sm:$0xf] %v3962
      %4027 = vst [vmem:[%s264 + $0x24] sm:$0xf] %v3963
      %4028 = vst [vmem:[%s264 + $0x28] sm:$0xf] %v3964
      %4029 = vst [vmem:[%s264 + $0x2c] sm:$0xf] %v3965
      %4030 = vst [vmem:[%s264 + $0x30] sm:$0xf] %v3966
      %4031 = vst [vmem:[%s264 + $0x34] sm:$0xf] %v3967
      %4032 = vst [vmem:[%s264 + $0x38] sm:$0xf] %v3968
      %4033 = vst [vmem:[%s264 + $0x3c] sm:$0xf] %v3969
      %4034 = vst [vmem:[%s264 + $0x40] sm:$0xf] %v3970
      %4035 = vst [vmem:[%s264 + $0x44] sm:$0xf] %v3971
      %4036 = vst [vmem:[%s264 + $0x48] sm:$0xf] %v3972
      %4037 = vst [vmem:[%s264 + $0x4c] sm:$0xf] %v3973
      %4038 = vst [vmem:[%s264 + $0x50] sm:$0xf] %v3974
      %4039 = vst [vmem:[%s264 + $0x54] sm:$0xf] %v3975
      %4040 = vst [vmem:[%s264 + $0x58] sm:$0xf] %v3976
      %4041 = vst [vmem:[%s264 + $0x5c] sm:$0xf] %v3977
      %4042 = vst [vmem:[%s264 + $0x60] sm:$0xf] %v3978
      %4043 = vst [vmem:[%s264 + $0x64] sm:$0xf] %v3979
      %4044 = vst [vmem:[%s264 + $0x68] sm:$0xf] %v3980
      %4045 = vst [vmem:[%s264 + $0x6c] sm:$0xf] %v3981
      %4046 = vst [vmem:[%s264 + $0x70] sm:$0xf] %v3982
      %4047 = vst [vmem:[%s264 + $0x74] sm:$0xf] %v3983
      %4048 = vst [vmem:[%s264 + $0x78] sm:$0xf] %v3984
      %4049 = vst [vmem:[%s264 + $0x7c] sm:$0xf] %v3985
      %v4050 = vld [vmem:[%s3] sm:$0xf]
      %v4051 = vld [vmem:[%s3 + $0x4] sm:$0xf]
      %v4052 = vld [vmem:[%s3 + $0x8] sm:$0xf]
      %v4053 = vld [vmem:[%s3 + $0xc] sm:$0xf]
      %v4054 = vld [vmem:[%s3 + $0x10] sm:$0xf]
      %v4055 = vld [vmem:[%s3 + $0x14] sm:$0xf]
      %v4056 = vld [vmem:[%s3 + $0x18] sm:$0xf]
      %v4057 = vld [vmem:[%s3 + $0x1c] sm:$0xf]
      %v4058 = vld [vmem:[%s4] sm:$0x1]
      %v4060 = vlaneseq
      %v4061 = vshrl.u32 %v4060, 7
      %v4062 = vsub.s32 0, %v4061
      %v4063 = vrot.slane %v4058, %v4062
      %v4073 = vunpack.c.l.b16 %v4050
      %v4074 = vunpack.c.l.b16 %v4051
      %v4075 = vunpack.c.l.b16 %v4052
      %v4076 = vunpack.c.l.b16 %v4053
      %v4077 = vunpack.c.l.b16 %v4054
      %v4078 = vunpack.c.l.b16 %v4055
      %v4079 = vunpack.c.l.b16 %v4056
      %v4080 = vunpack.c.l.b16 %v4057
      %v4081 = vpack.c.b16 %v4074, %v4073
      %v4082 = vpack.c.b16 %v4076, %v4075
      %v4083 = vpack.c.b16 %v4078, %v4077
      %v4084 = vpack.c.b16 %v4080, %v4079
      %v4089 = vsel %vm1124, %v2169, 0
      %v4091 = vsel %vm1124, %v2170, 0
      %v4093 = vsel %vm1124, %v2171, 0
      %v4095 = vsel %vm1124, %v2172, 0
      %v4097 = vsel %vm1124, %v2173, 0
      %v4099 = vsel %vm1124, %v2174, 0
      %v4101 = vsel %vm1124, %v2175, 0
      %v4103 = vsel %vm1124, %v2176, 0
      %v4105 = vsel %vm1124, %v2177, 0
      %v4107 = vsel %vm1124, %v2178, 0
      %v4109 = vsel %vm1124, %v2179, 0
      %v4111 = vsel %vm1124, %v2180, 0
      %v4113 = vsel %vm1124, %v2181, 0
      %v4115 = vsel %vm1124, %v2182, 0
      %v4117 = vsel %vm1124, %v2183, 0
      %v4119 = vsel %vm1124, %v2184, 0
      %4121 = vmatprep.subr.bf16.mxu0 0
      %4122 = vmatpush1.bf16.msra.mxu0 %v4081
      %4123 = vmatprep.subr.bf16.mxu0 0
      %4124 = vmatpush1.bf16.msra.mxu0 %v4082
      %4125 = vmatprep.subr.bf16.mxu0 0
      %4126 = vmatpush1.bf16.msra.mxu0 %v4083
      %4127 = vmatprep.subr.bf16.mxu0 0
      %4128 = vmatpush1.bf16.msra.mxu0 %v4084
      %4129 = vmatprep.subr.bf16.mxu0 0
      %4130 = vmatpush1.bf16.msra.mxu0 0
      %4131 = vmatprep.subr.bf16.mxu0 0
      %4132 = vmatpush1.bf16.msra.mxu0 0
      %4133 = vmatprep.subr.bf16.mxu0 0
      %4134 = vmatpush1.bf16.msra.mxu0 0
      %4135 = vmatprep.subr.bf16.mxu0 0
      %4136 = vmatpush1.bf16.msra.mxu0 0
      %4137 = vmatprep.subr.bf16.mxu0 0
      %4138 = vmatpush1.bf16.msra.mxu0 0
      %4139 = vmatprep.subr.bf16.mxu0 0
      %4140 = vmatpush1.bf16.msra.mxu0 0
      %4141 = vmatprep.subr.bf16.mxu0 0
      %4142 = vmatpush1.bf16.msra.mxu0 0
      %4143 = vmatprep.subr.bf16.mxu0 0
      %4144 = vmatpush1.bf16.msra.mxu0 0
      %4145 = vmatprep.subr.bf16.mxu0 0
      %4146 = vmatpush1.bf16.msra.mxu0 0
      %4147 = vmatprep.subr.bf16.mxu0 0
      %4148 = vmatpush1.bf16.msra.mxu0 0
      %4149 = vmatprep.subr.bf16.mxu0 0
      %4150 = vmatpush1.bf16.msra.mxu0 0
      %4151 = vmatprep.subr.bf16.mxu0 0
      %4152 = vmatpush1.bf16.msra.mxu0 0
      %4153 = vmatprep.mubr.bf16.mxu0 0
      %4154 = vmatmul.mubr.bf16.gmra.mrb[0].mxu0 %v4089
      %v4155 = vpop.f32.mrb[0].mxu0
      %v4156 = vadd.f32 %v4063, %v4155
      %v4157 = vpop.f32.mrb[0].mxu0
      %v4158 = vpop.f32.mrb[0].mxu0
      %v4159 = vadd.f32 %v4063, %v4158
      %v4160 = vpop.f32.mrb[0].mxu0
      %4161 = vmatprep.mubr.bf16.mxu0 0
      %4162 = vmatmul.mubr.bf16.gmra.mrb[0].mxu0 %v4091
      %v4163 = vpop.f32.mrb[0].mxu0
      %v4164 = vadd.f32 %v4063, %v4163
      %v4165 = vpop.f32.mrb[0].mxu0
      %v4166 = vpop.f32.mrb[0].mxu0
      %v4167 = vadd.f32 %v4063, %v4166
      %v4168 = vpop.f32.mrb[0].mxu0
      %4169 = vmatprep.mubr.bf16.mxu0 0
      %4170 = vmatmul.mubr.bf16.gmra.mrb[0].mxu0 %v4093
      %v4171 = vpop.f32.mrb[0].mxu0
      %v4172 = vadd.f32 %v4063, %v4171
      %v4173 = vpop.f32.mrb[0].mxu0
      %v4174 = vpop.f32.mrb[0].mxu0
      %v4175 = vadd.f32 %v4063, %v4174
      %v4176 = vpop.f32.mrb[0].mxu0
      %4177 = vmatprep.mubr.bf16.mxu0 0
      %4178 = vmatmul.mubr.bf16.gmra.mrb[0].mxu0 %v4095
      %v4179 = vpop.f32.mrb[0].mxu0
      %v4180 = vadd.f32 %v4063, %v4179
      %v4181 = vpop.f32.mrb[0].mxu0
      %v4182 = vpop.f32.mrb[0].mxu0
      %v4183 = vadd.f32 %v4063, %v4182
      %v4184 = vpop.f32.mrb[0].mxu0
      %4185 = vmatprep.mubr.bf16.mxu0 0
      %4186 = vmatmul.mubr.bf16.gmra.mrb[0].mxu0 %v4097
      %v4187 = vpop.f32.mrb[0].mxu0
      %v4188 = vadd.f32 %v4063, %v4187
      %v4189 = vpop.f32.mrb[0].mxu0
      %v4190 = vpop.f32.mrb[0].mxu0
      %v4191 = vadd.f32 %v4063, %v4190
      %v4192 = vpop.f32.mrb[0].mxu0
      %4193 = vmatprep.mubr.bf16.mxu0 0
      %4194 = vmatmul.mubr.bf16.gmra.mrb[0].mxu0 %v4099
      %v4195 = vpop.f32.mrb[0].mxu0
      %v4196 = vadd.f32 %v4063, %v4195
      %v4197 = vpop.f32.mrb[0].mxu0
      %v4198 = vpop.f32.mrb[0].mxu0
      %v4199 = vadd.f32 %v4063, %v4198
      %v4200 = vpop.f32.mrb[0].mxu0
      %4201 = vmatprep.mubr.bf16.mxu0 0
      %4202 = vmatmul.mubr.bf16.gmra.mrb[0].mxu0 %v4101
      %v4203 = vpop.f32.mrb[0].mxu0
      %v4204 = vadd.f32 %v4063, %v4203
      %v4205 = vpop.f32.mrb[0].mxu0
      %v4206 = vpop.f32.mrb[0].mxu0
      %v4207 = vadd.f32 %v4063, %v4206
      %v4208 = vpop.f32.mrb[0].mxu0
      %4209 = vmatprep.mubr.bf16.mxu0 0
      %4210 = vmatmul.mubr.bf16.gmra.mrb[0].mxu0 %v4103
      %v4211 = vpop.f32.mrb[0].mxu0
      %v4212 = vadd.f32 %v4063, %v4211
      %v4213 = vpop.f32.mrb[0].mxu0
      %v4214 = vpop.f32.mrb[0].mxu0
      %v4215 = vadd.f32 %v4063, %v4214
      %v4216 = vpop.f32.mrb[0].mxu0
      %4217 = vmatprep.mubr.bf16.mxu0 0
      %4218 = vmatmul.mubr.bf16.gmra.mrb[0].mxu0 %v4105
      %v4219 = vpop.f32.mrb[0].mxu0
      %v4220 = vadd.f32 %v4063, %v4219
      %v4221 = vpop.f32.mrb[0].mxu0
      %v4222 = vpop.f32.mrb[0].mxu0
      %v4223 = vadd.f32 %v4063, %v4222
      %v4224 = vpop.f32.mrb[0].mxu0
      %4225 = vmatprep.mubr.bf16.mxu0 0
      %4226 = vmatmul.mubr.bf16.gmra.mrb[0].mxu0 %v4107
      %v4227 = vpop.f32.mrb[0].mxu0
      %v4228 = vadd.f32 %v4063, %v4227
      %v4229 = vpop.f32.mrb[0].mxu0
      %v4230 = vpop.f32.mrb[0].mxu0
      %v4231 = vadd.f32 %v4063, %v4230
      %v4232 = vpop.f32.mrb[0].mxu0
      %4233 = vmatprep.mubr.bf16.mxu0 0
      %4234 = vmatmul.mubr.bf16.gmra.mrb[0].mxu0 %v4109
      %v4235 = vpop.f32.mrb[0].mxu0
      %v4236 = vadd.f32 %v4063, %v4235
      %v4237 = vpop.f32.mrb[0].mxu0
      %v4238 = vpop.f32.mrb[0].mxu0
      %v4239 = vadd.f32 %v4063, %v4238
      %v4240 = vpop.f32.mrb[0].mxu0
      %4241 = vmatprep.mubr.bf16.mxu0 0
      %4242 = vmatmul.mubr.bf16.gmra.mrb[0].mxu0 %v4111
      %v4243 = vpop.f32.mrb[0].mxu0
      %v4244 = vadd.f32 %v4063, %v4243
      %v4245 = vpop.f32.mrb[0].mxu0
      %v4246 = vpop.f32.mrb[0].mxu0
      %v4247 = vadd.f32 %v4063, %v4246
      %v4248 = vpop.f32.mrb[0].mxu0
      %4249 = vmatprep.mubr.bf16.mxu0 0
      %4250 = vmatmul.mubr.bf16.gmra.mrb[0].mxu0 %v4113
      %v4251 = vpop.f32.mrb[0].mxu0
      %v4252 = vadd.f32 %v4063, %v4251
      %v4253 = vpop.f32.mrb[0].mxu0
      %v4254 = vpop.f32.mrb[0].mxu0
      %v4255 = vadd.f32 %v4063, %v4254
      %v4256 = vpop.f32.mrb[0].mxu0
      %4257 = vmatprep.mubr.bf16.mxu0 0
      %4258 = vmatmul.mubr.bf16.gmra.mrb[0].mxu0 %v4115
      %v4259 = vpop.f32.mrb[0].mxu0
      %v4260 = vadd.f32 %v4063, %v4259
      %v4261 = vpop.f32.mrb[0].mxu0
      %v4262 = vpop.f32.mrb[0].mxu0
      %v4263 = vadd.f32 %v4063, %v4262
      %v4264 = vpop.f32.mrb[0].mxu0
      %4265 = vmatprep.mubr.bf16.mxu0 0
      %4266 = vmatmul.mubr.bf16.gmra.mrb[0].mxu0 %v4117
      %v4267 = vpop.f32.mrb[0].mxu0
      %v4268 = vadd.f32 %v4063, %v4267
      %v4269 = vpop.f32.mrb[0].mxu0
      %v4270 = vpop.f32.mrb[0].mxu0
      %v4271 = vadd.f32 %v4063, %v4270
      %v4272 = vpop.f32.mrb[0].mxu0
      %4273 = vmatprep.mubr.bf16.mxu0 0
      %4274 = vmatmul.mubr.bf16.gmra.mrb[0].mxu0 %v4119
      %v4275 = vpop.f32.mrb[0].mxu0
      %v4276 = vadd.f32 %v4063, %v4275
      %v4277 = vpop.f32.mrb[0].mxu0
      %v4278 = vpop.f32.mrb[0].mxu0
      %v4279 = vadd.f32 %v4063, %v4278
      %v4280 = vpop.f32.mrb[0].mxu0
      %4281 = vdwg.mxu0
      %v4282 = vpack.c.bf16 %v4159, %v4156
      %v4283 = vpack.c.bf16 %v4167, %v4164
      %v4284 = vpack.c.bf16 %v4175, %v4172
      %v4285 = vpack.c.bf16 %v4183, %v4180
      %v4286 = vpack.c.bf16 %v4191, %v4188
      %v4287 = vpack.c.bf16 %v4199, %v4196
      %v4288 = vpack.c.bf16 %v4207, %v4204
      %v4289 = vpack.c.bf16 %v4215, %v4212
      %v4290 = vpack.c.bf16 %v4223, %v4220
      %v4291 = vpack.c.bf16 %v4231, %v4228
      %v4292 = vpack.c.bf16 %v4239, %v4236
      %v4293 = vpack.c.bf16 %v4247, %v4244
      %v4294 = vpack.c.bf16 %v4255, %v4252
      %v4295 = vpack.c.bf16 %v4263, %v4260
      %v4296 = vpack.c.bf16 %v4271, %v4268
      %v4297 = vpack.c.bf16 %v4279, %v4276
      %v4314 = vunpack.c.l.b16 %v4282
      %v4315 = vunpack.c.h.b16 %v4282
      %v4316 = vunpack.c.l.b16 %v4283
      %v4317 = vunpack.c.h.b16 %v4283
      %v4318 = vunpack.c.l.b16 %v4284
      %v4319 = vunpack.c.h.b16 %v4284
      %v4320 = vunpack.c.l.b16 %v4285
      %v4321 = vunpack.c.h.b16 %v4285
      %v4322 = vunpack.c.l.b16 %v4286
      %v4323 = vunpack.c.h.b16 %v4286
      %v4324 = vunpack.c.l.b16 %v4287
      %v4325 = vunpack.c.h.b16 %v4287
      %v4326 = vunpack.c.l.b16 %v4288
      %v4327 = vunpack.c.h.b16 %v4288
      %v4328 = vunpack.c.l.b16 %v4289
      %v4329 = vunpack.c.h.b16 %v4289
      %v4330 = vunpack.c.l.b16 %v4290
      %v4331 = vunpack.c.h.b16 %v4290
      %v4332 = vunpack.c.l.b16 %v4291
      %v4333 = vunpack.c.h.b16 %v4291
      %v4334 = vunpack.c.l.b16 %v4292
      %v4335 = vunpack.c.h.b16 %v4292
      %v4336 = vunpack.c.l.b16 %v4293
      %v4337 = vunpack.c.h.b16 %v4293
      %v4338 = vunpack.c.l.b16 %v4294
      %v4339 = vunpack.c.h.b16 %v4294
      %v4340 = vunpack.c.l.b16 %v4295
      %v4341 = vunpack.c.h.b16 %v4295
      %v4342 = vunpack.c.l.b16 %v4296
      %v4343 = vunpack.c.h.b16 %v4296
      %v4344 = vunpack.c.l.b16 %v4297
      %v4345 = vunpack.c.h.b16 %v4297
      %v4346 = vpack.c.b16 %v4314, %v4314
      %v4347 = vpack.c.b16 %v4315, %v4315
      %v4348 = vpack.c.b16 %v4316, %v4316
      %v4349 = vpack.c.b16 %v4317, %v4317
      %v4350 = vpack.c.b16 %v4318, %v4318
      %v4351 = vpack.c.b16 %v4319, %v4319
      %v4352 = vpack.c.b16 %v4320, %v4320
      %v4353 = vpack.c.b16 %v4321, %v4321
      %v4354 = vpack.c.b16 %v4322, %v4322
      %v4355 = vpack.c.b16 %v4323, %v4323
      %v4356 = vpack.c.b16 %v4324, %v4324
      %v4357 = vpack.c.b16 %v4325, %v4325
      %v4358 = vpack.c.b16 %v4326, %v4326
      %v4359 = vpack.c.b16 %v4327, %v4327
      %v4360 = vpack.c.b16 %v4328, %v4328
      %v4361 = vpack.c.b16 %v4329, %v4329
      %v4362 = vpack.c.b16 %v4330, %v4330
      %v4363 = vpack.c.b16 %v4331, %v4331
      %v4364 = vpack.c.b16 %v4332, %v4332
      %v4365 = vpack.c.b16 %v4333, %v4333
      %v4366 = vpack.c.b16 %v4334, %v4334
      %v4367 = vpack.c.b16 %v4335, %v4335
      %v4368 = vpack.c.b16 %v4336, %v4336
      %v4369 = vpack.c.b16 %v4337, %v4337
      %v4370 = vpack.c.b16 %v4338, %v4338
      %v4371 = vpack.c.b16 %v4339, %v4339
      %v4372 = vpack.c.b16 %v4340, %v4340
      %v4373 = vpack.c.b16 %v4341, %v4341
      %v4374 = vpack.c.b16 %v4342, %v4342
      %v4375 = vpack.c.b16 %v4343, %v4343
      %v4376 = vpack.c.b16 %v4344, %v4344
      %v4377 = vpack.c.b16 %v4345, %v4345
      %4410 = vst [vmem:[%s269] sm:$0xf] %v4346
      %4411 = vst [vmem:[%s269 + $0x4] sm:$0xf] %v4347
      %4412 = vst [vmem:[%s269 + $0x8] sm:$0xf] %v4348
      %4413 = vst [vmem:[%s269 + $0xc] sm:$0xf] %v4349
      %4414 = vst [vmem:[%s269 + $0x10] sm:$0xf] %v4350
      %4415 = vst [vmem:[%s269 + $0x14] sm:$0xf] %v4351
      %4416 = vst [vmem:[%s269 + $0x18] sm:$0xf] %v4352
      %4417 = vst [vmem:[%s269 + $0x1c] sm:$0xf] %v4353
      %4418 = vst [vmem:[%s269 + $0x20] sm:$0xf] %v4354
      %4419 = vst [vmem:[%s269 + $0x24] sm:$0xf] %v4355
      %4420 = vst [vmem:[%s269 + $0x28] sm:$0xf] %v4356
      %4421 = vst [vmem:[%s269 + $0x2c] sm:$0xf] %v4357
      %4422 = vst [vmem:[%s269 + $0x30] sm:$0xf] %v4358
      %4423 = vst [vmem:[%s269 + $0x34] sm:$0xf] %v4359
      %4424 = vst [vmem:[%s269 + $0x38] sm:$0xf] %v4360
      %4425 = vst [vmem:[%s269 + $0x3c] sm:$0xf] %v4361
      %4426 = vst [vmem:[%s269 + $0x40] sm:$0xf] %v4362
      %4427 = vst [vmem:[%s269 + $0x44] sm:$0xf] %v4363
      %4428 = vst [vmem:[%s269 + $0x48] sm:$0xf] %v4364
      %4429 = vst [vmem:[%s269 + $0x4c] sm:$0xf] %v4365
      %4430 = vst [vmem:[%s269 + $0x50] sm:$0xf] %v4366
      %4431 = vst [vmem:[%s269 + $0x54] sm:$0xf] %v4367
      %4432 = vst [vmem:[%s269 + $0x58] sm:$0xf] %v4368
      %4433 = vst [vmem:[%s269 + $0x5c] sm:$0xf] %v4369
      %4434 = vst [vmem:[%s269 + $0x60] sm:$0xf] %v4370
      %4435 = vst [vmem:[%s269 + $0x64] sm:$0xf] %v4371
      %4436 = vst [vmem:[%s269 + $0x68] sm:$0xf] %v4372
      %4437 = vst [vmem:[%s269 + $0x6c] sm:$0xf] %v4373
      %4438 = vst [vmem:[%s269 + $0x70] sm:$0xf] %v4374
      %4439 = vst [vmem:[%s269 + $0x74] sm:$0xf] %v4375
      %4440 = vst [vmem:[%s269 + $0x78] sm:$0xf] %v4376
      %4441 = vst [vmem:[%s269 + $0x7c] sm:$0xf] %v4377
      %p4442 = scmp.lt.s32.totalorder %s18, 1
      %s4443 = scalar_select %p4442, %s18, 1
      %s4444 = smul.addr %s4443, 32
      %s4445 = smul.addr %s4444, 4
      %s4446 = scalar_lea.vmem %s5, %s4445
      %p4447 = scmp.lt.s32.totalorder %s18, 1
      %s4448 = scalar_select %p4447, %s18, 1
      %s4449 = smul.addr %s4448, 32
      %s4450 = smul.addr %s4449, 4
      %s4451 = scalar_lea.vmem %s6, %s4450
      // Predicated region
      $region41: #{basic_block_forward.2} parent=39 // pred_check
        %p4452 = pneg %p146
      $region42: #{basic_block_forward.2} parent=39 // pred_check_branch
        %4454 = sbr.rel (%p4452) target = $region44
      $region43: #{basic_block_forward.2} parent=39 // pred_region
        _
      $region44: #{basic_block_forward.2} parent=39 // pred_fallthru
        _
      // Predicated region
      $region45: #{basic_block_forward.2} parent=39 // pred_check
        %p4455 = pneg %p172
      $region46: #{basic_block_forward.2} parent=39 // pred_check_branch
        %4457 = sbr.rel (%p4455) target = $region48
      $region47: #{basic_block_forward.2} parent=39 // pred_region
        _
      $region48: #{basic_block_forward.2} parent=39 // pred_fallthru
        _
    $region40: #{basic_block_forward.2} parent=5 // pred_fallthru
      _
    %p4458 = scmp.le.s32.totalorder 2, %s13
    // Predicated region
    $region49: #{basic_block_forward.2} parent=5 // pred_check
      %p4459 = pneg %p4458
    $region50: #{basic_block_forward.2} parent=5 // pred_check_branch
      %4461 = sbr.rel (%p4459) target = $region52
    $region51: #{basic_block_forward.2} parent=5 // pred_region
      %s4462 = ssub.s32 %s13, 2
      // Predicated region
      $region53: #{basic_block_forward.2} parent=51 // pred_check
        %p4463 = pneg %p152
      $region54: #{basic_block_forward.2} parent=51 // pred_check_branch
        %4465 = sbr.rel (%p4463) target = $region56
      $region55: #{basic_block_forward.2} parent=51 // pred_region
        %p4466 = scmp.lt.s32.totalorder %s19, 1
        %s4467 = scalar_select %p4466, %s19, 1
        %s4468 = smul.addr %s4467, 32
        %s4469 = smul.addr %s4468, 4
        %s4470 = scalar_lea.vmem %s5, %s4469
      $region56: #{basic_block_forward.2} parent=51 // pred_fallthru
        _
      // Predicated region
      $region57: #{basic_block_forward.2} parent=51 // pred_check
        %p4471 = pneg %p178
      $region58: #{basic_block_forward.2} parent=51 // pred_check_branch
        %4473 = sbr.rel (%p4471) target = $region60
      $region59: #{basic_block_forward.2} parent=51 // pred_region
        %p4474 = scmp.lt.s32.totalorder %s19, 1
        %s4475 = scalar_select %p4474, %s19, 1
        %s4476 = smul.addr %s4475, 32
        %s4477 = smul.addr %s4476, 4
        %s4478 = scalar_lea.vmem %s6, %s4477
      $region60: #{basic_block_forward.2} parent=51 // pred_fallthru
        _
    $region52: #{basic_block_forward.2} parent=5 // pred_fallthru
      _
  $region6: #{basic_block_forward.2} parent=0 // loop_footer
    %s17 = sadd.s32 1, %s13
  $region7: #{basic_block_forward.2} parent=0 // loop_footer_branch
    %12 = sbr.rel target = $region3
  $region8: #{basic_block_forward.2} parent=0 // loop_exit
    _

// kernel: basic_block_forward.3
$region0: #{basic_block_forward.3}
  #allocation0 [shape = 'u32[]', space=smem, size = 0x4, offset = 0x4, fixed_abs, tag = 'smem constant byte address 0x4 - core index']
  #allocation1 [shape = 'u32[144,128]{1,0:T(1,128)}', space=vmem, size = 0x12000, scoped, tag = 'internal scratch']
  #allocation2 [shape = 'f32[256,128]{1,0:T(8,128)}', space=vmem, size = 0x20000, scoped, tag = 'scratch operand']
  %s0 = inlined_call_operand.vmem [shape: bf16[2,18,18,128], index: 0, kind: input, shape index: {}]
  %s1 = inlined_call_operand.vmem [shape: bf16[1152,128], index: 1, kind: input, shape index: {}]
  %s2 = inlined_call_operand.vmem [shape: f32[1,128], index: 2, kind: input, shape index: {}]
  %s3 = inlined_call_operand.vmem [shape: bf16[2,256,128], index: 3, kind: input, shape index: {}]
  %s4 = inlined_call_operand.vmem [shape: bf16[128,8], index: 4, kind: input, shape index: {}]
  %s5 = inlined_call_operand.vmem [shape: f32[1,8], index: 5, kind: input, shape index: {}]
  %s6 = inlined_call_operand.vmem [shape: bf16[8,128], index: 6, kind: input, shape index: {}]
  %s7 = inlined_call_operand.vmem [shape: f32[1,128], index: 7, kind: input, shape index: {}]
  %s8 = inlined_call_operand.hbm [shape: f32[2,256,128], index: 8, kind: output, shape index: {}]
  %s9 = sld [smem:[#allocation0]]
  $region65: #{basic_block_forward.3} parent=0
    _
  %s11 = ssub.s32 1, %s9
  %s12 = scalar_select 0, %s11, %s9
  $region1: #{basic_block_forward.3} parent=0
    #allocation3 [shape = 'u8[262144]{0}', space=vmem, size = 0x40000, scoped, tag = 'output window, operand 0']
    #allocation4 [shape = 's32[2]{0}', space=sflag, size = 0x8, scoped, tag = 'scoped memory for basic_block_forward.3']
    %13 = vsyncpa [#allocation4], 0
    %s14 = scalar_lea.sflag [#allocation4], 1
    %15 = vsyncpa %s14, 0
    loop: start=0, step=1, limit=4
    $region2: #{basic_block_forward.3} parent=1 // loop_pre_header
      _
    $region3: #{basic_block_forward.3} parent=1 // loop_header
      %s17 = sphi 0, %s21
      %p18 = scmp.ge.s32.totalorder %s17, 4
      %s27 = sphi 0, %s29
      %s30 = sphi 0, %s27
      %s31 = sphi 0, %s30
      %s47 = sphi 0, %s31
      %s51 = sphi 0, %s51
      %s53 = sphi 0, %s51
      %s54 = sphi 0, %s53
      %s68 = sphi 0, %s54
      %s72 = sphi 0, %s72
      %s74 = sphi 0, %s72
      %s75 = sphi 0, %s74
      %s89 = sphi 0, %s75
      %s95 = sphi 0, %s97
      %s98 = sphi 0, %s95
      %s99 = sphi 0, %s98
      %s115 = sphi 0, %s99
      %s119 = sphi 0, %s119
      %s121 = sphi 0, %s119
      %s122 = sphi 0, %s121
      %s136 = sphi 0, %s122
      %s140 = sphi 0, %s140
      %s142 = sphi 0, %s140
      %s143 = sphi 0, %s142
      %s157 = sphi 0, %s143
      %s161 = sphi 0, %s161
      %s163 = sphi 0, %s161
      %s164 = sphi 0, %s163
      %s178 = sphi 0, %s164
      %s182 = sphi 0, %s182
      %s184 = sphi 0, %s182
      %s185 = sphi 0, %s184
      %s199 = sphi 0, %s185
      %s205 = sphi 0, %s207
      %s208 = sphi 0, %s205
      %s209 = sphi 0, %s208
      %s225 = sphi 0, %s209
    $region4: #{basic_block_forward.3} parent=1 // loop_header_branch
      %20 = sbr.rel (%p18) target = $region8
    $region5: #{basic_block_forward.3} parent=1 // loop_body
      %s22 = ssub.s32 %s17, 1
      %s23 = ssub.s32 %s17, 2
      %s24 = sadd.s32 %s17, 1
      %s25 = ssub.s32 %s17, %s24
      %p26 = scmp.eq.s32.totalorder %s25, 0
      %s28 = sadd.s32 %s27, 1
      %s29 = scalar_select %p26, %s27, %s28
      %p32 = pneg %p26
      %p33 = scmp.eq.s32.totalorder %s17, 1
      %p34 = por %p32, %p33
      %p35 = scmp.ne.s32.totalorder %s27, %s30
      %p36 = scmp.eq.s32.totalorder %s17, 0
      %p37 = por %p35, %p36
      %p38 = scmp.ne.s32.totalorder %s27, %s30
      %p39 = scmp.eq.s32.totalorder %s22, 1
      %p40 = por %p38, %p39
      %p41 = scmp.ne.s32.totalorder %s30, %s31
      %p42 = scmp.eq.s32.totalorder %s22, 0
      %p43 = por %p41, %p42
      %p44 = scmp.ne.s32.totalorder %s30, %s31
      %p45 = scmp.eq.s32.totalorder %s23, 1
      %p46 = por %p44, %p45
      %p48 = scmp.ne.s32.totalorder %s31, %s47
      %p49 = scmp.eq.s32.totalorder %s23, 0
      %p50 = por %p48, %p49
      %s52 = sadd.s32 %s51, 1
      %p55 = scmp.eq.s32.totalorder %s17, 1
      %p56 = scmp.ne.s32.totalorder %s51, %s53
      %p57 = scmp.eq.s32.totalorder %s17, 0
      %p58 = por %p56, %p57
      %p59 = scmp.ne.s32.totalorder %s51, %s53
      %p60 = scmp.eq.s32.totalorder %s22, 1
      %p61 = por %p59, %p60
      %p62 = scmp.ne.s32.totalorder %s53, %s54
      %p63 = scmp.eq.s32.totalorder %s22, 0
      %p64 = por %p62, %p63
      %p65 = scmp.ne.s32.totalorder %s53, %s54
      %p66 = scmp.eq.s32.totalorder %s23, 1
      %p67 = por %p65, %p66
      %p69 = scmp.ne.s32.totalorder %s54, %s68
      %p70 = scmp.eq.s32.totalorder %s23, 0
      %p71 = por %p69, %p70
      %s73 = sadd.s32 %s72, 1
      %p76 = scmp.eq.s32.totalorder %s17, 1
      %p77 = scmp.ne.s32.totalorder %s72, %s74
      %p78 = scmp.eq.s32.totalorder %s17, 0
      %p79 = por %p77, %p78
      %p80 = scmp.ne.s32.totalorder %s72, %s74
      %p81 = scmp.eq.s32.totalorder %s22, 1
      %p82 = por %p80, %p81
      %p83 = scmp.ne.s32.totalorder %s74, %s75
      %p84 = scmp.eq.s32.totalorder %s22, 0
      %p85 = por %p83, %p84
      %p86 = scmp.ne.s32.totalorder %s74, %s75
      %p87 = scmp.eq.s32.totalorder %s23, 1
      %p88 = por %p86, %p87
      %p90 = scmp.ne.s32.totalorder %s75, %s89
      %p91 = scmp.eq.s32.totalorder %s23, 0
      %p92 = por %p90, %p91
      %s93 = ssub.s32 %s17, %s24
      %p94 = scmp.eq.s32.totalorder %s93, 0
      %s96 = sadd.s32 %s95, 1
      %s97 = scalar_select %p94, %s95, %s96
      %p100 = pneg %p94
      %p101 = scmp.eq.s32.totalorder %s17, 1
      %p102 = por %p100, %p101
      %p103 = scmp.ne.s32.totalorder %s95, %s98
      %p104 = scmp.eq.s32.totalorder %s17, 0
      %p105 = por %p103, %p104
      %p106 = scmp.ne.s32.totalorder %s95, %s98
      %p107 = scmp.eq.s32.totalorder %s22, 1
      %p108 = por %p106, %p107
      %p109 = scmp.ne.s32.totalorder %s98, %s99
      %p110 = scmp.eq.s32.totalorder %s22, 0
      %p111 = por %p109, %p110
      %p112 = scmp.ne.s32.totalorder %s98, %s99
      %p113 = scmp.eq.s32.totalorder %s23, 1
      %p114 = por %p112, %p113
      %p116 = scmp.ne.s32.totalorder %s99, %s115
      %p117 = scmp.eq.s32.totalorder %s23, 0
      %p118 = por %p116, %p117
      %s120 = sadd.s32 %s119, 1
      %p123 = scmp.eq.s32.totalorder %s17, 1
      %p124 = scmp.ne.s32.totalorder %s119, %s121
      %p125 = scmp.eq.s32.totalorder %s17, 0
      %p126 = por %p124, %p125
      %p127 = scmp.ne.s32.totalorder %s119, %s121
      %p128 = scmp.eq.s32.totalorder %s22, 1
      %p129 = por %p127, %p128
      %p130 = scmp.ne.s32.totalorder %s121, %s122
      %p131 = scmp.eq.s32.totalorder %s22, 0
      %p132 = por %p130, %p131
      %p133 = scmp.ne.s32.totalorder %s121, %s122
      %p134 = scmp.eq.s32.totalorder %s23, 1
      %p135 = por %p133, %p134
      %p137 = scmp.ne.s32.totalorder %s122, %s136
      %p138 = scmp.eq.s32.totalorder %s23, 0
      %p139 = por %p137, %p138
      %s141 = sadd.s32 %s140, 1
      %p144 = scmp.eq.s32.totalorder %s17, 1
      %p145 = scmp.ne.s32.totalorder %s140, %s142
      %p146 = scmp.eq.s32.totalorder %s17, 0
      %p147 = por %p145, %p146
      %p148 = scmp.ne.s32.totalorder %s140, %s142
      %p149 = scmp.eq.s32.totalorder %s22, 1
      %p150 = por %p148, %p149
      %p151 = scmp.ne.s32.totalorder %s142, %s143
      %p152 = scmp.eq.s32.totalorder %s22, 0
      %p153 = por %p151, %p152
      %p154 = scmp.ne.s32.totalorder %s142, %s143
      %p155 = scmp.eq.s32.totalorder %s23, 1
      %p156 = por %p154, %p155
      %p158 = scmp.ne.s32.totalorder %s143, %s157
      %p159 = scmp.eq.s32.totalorder %s23, 0
      %p160 = por %p158, %p159
      %s162 = sadd.s32 %s161, 1
      %p165 = scmp.eq.s32.totalorder %s17, 1
      %p166 = scmp.ne.s32.totalorder %s161, %s163
      %p167 = scmp.eq.s32.totalorder %s17, 0
      %p168 = por %p166, %p167
      %p169 = scmp.ne.s32.totalorder %s161, %s163
      %p170 = scmp.eq.s32.totalorder %s22, 1
      %p171 = por %p169, %p170
      %p172 = scmp.ne.s32.totalorder %s163, %s164
      %p173 = scmp.eq.s32.totalorder %s22, 0
      %p174 = por %p172, %p173
      %p175 = scmp.ne.s32.totalorder %s163, %s164
      %p176 = scmp.eq.s32.totalorder %s23, 1
      %p177 = por %p175, %p176
      %p179 = scmp.ne.s32.totalorder %s164, %s178
      %p180 = scmp.eq.s32.totalorder %s23, 0
      %p181 = por %p179, %p180
      %s183 = sadd.s32 %s182, 1
      %p186 = scmp.eq.s32.totalorder %s17, 1
      %p187 = scmp.ne.s32.totalorder %s182, %s184
      %p188 = scmp.eq.s32.totalorder %s17, 0
      %p189 = por %p187, %p188
      %p190 = scmp.ne.s32.totalorder %s182, %s184
      %p191 = scmp.eq.s32.totalorder %s22, 1
      %p192 = por %p190, %p191
      %p193 = scmp.ne.s32.totalorder %s184, %s185
      %p194 = scmp.eq.s32.totalorder %s22, 0
      %p195 = por %p193, %p194
      %p196 = scmp.ne.s32.totalorder %s184, %s185
      %p197 = scmp.eq.s32.totalorder %s23, 1
      %p198 = por %p196, %p197
      %p200 = scmp.ne.s32.totalorder %s185, %s199
      %p201 = scmp.eq.s32.totalorder %s23, 0
      %p202 = por %p200, %p201
      %s203 = ssub.s32 %s17, %s24
      %p204 = scmp.eq.s32.totalorder %s203, 0
      %s206 = sadd.s32 %s205, 1
      %s207 = scalar_select %p204, %s205, %s206
      %p210 = pneg %p204
      %p211 = scmp.eq.s32.totalorder %s17, 1
      %p212 = por %p210, %p211
      %p213 = scmp.ne.s32.totalorder %s205, %s208
      %p214 = scmp.eq.s32.totalorder %s17, 0
      %p215 = por %p213, %p214
      %p216 = scmp.ne.s32.totalorder %s205, %s208
      %p217 = scmp.eq.s32.totalorder %s22, 1
      %p218 = por %p216, %p217
      %p219 = scmp.ne.s32.totalorder %s208, %s209
      %p220 = scmp.eq.s32.totalorder %s22, 0
      %p221 = por %p219, %p220
      %p222 = scmp.ne.s32.totalorder %s208, %s209
      %p223 = scmp.eq.s32.totalorder %s23, 1
      %p224 = por %p222, %p223
      %p226 = scmp.ne.s32.totalorder %s209, %s225
      %p227 = scmp.eq.s32.totalorder %s23, 0
      %p228 = por %p226, %p227
      %p229 = scmp.le.s32.totalorder 1, %s17
      %p230 = scmp.lt.s32.totalorder %s17, 3
      %p231 = pnand %p229, %p230
      %p232 = pneg %p231
      // Predicated region
      $region9: #{basic_block_forward.3} parent=5 // pred_check
        _
      $region10: #{basic_block_forward.3} parent=5 // pred_check_branch
        %234 = sbr.rel (%p231) target = $region12
      $region11: #{basic_block_forward.3} parent=5 // pred_region
        %s235 = ssub.s32 %s17, 1
        // Predicated region
        $region13: #{basic_block_forward.3} parent=11 // pred_check
          %p236 = pneg %p64
        $region14: #{basic_block_forward.3} parent=11 // pred_check_branch
          %238 = sbr.rel (%p236) target = $region16
        $region15: #{basic_block_forward.3} parent=11 // pred_region
          _
        $region16: #{basic_block_forward.3} parent=11 // pred_fallthru
          _
        // Predicated region
        $region17: #{basic_block_forward.3} parent=11 // pred_check
          %p239 = pneg %p85
        $region18: #{basic_block_forward.3} parent=11 // pred_check_branch
          %241 = sbr.rel (%p239) target = $region20
        $region19: #{basic_block_forward.3} parent=11 // pred_region
          _
        $region20: #{basic_block_forward.3} parent=11 // pred_fallthru
          _
        // Predicated region
        $region21: #{basic_block_forward.3} parent=11 // pred_check
          %p242 = pneg %p132
        $region22: #{basic_block_forward.3} parent=11 // pred_check_branch
          %244 = sbr.rel (%p242) target = $region24
        $region23: #{basic_block_forward.3} parent=11 // pred_region
          _
        $region24: #{basic_block_forward.3} parent=11 // pred_fallthru
          _
        // Predicated region
        $region25: #{basic_block_forward.3} parent=11 // pred_check
          %p245 = pneg %p153
        $region26: #{basic_block_forward.3} parent=11 // pred_check_branch
          %247 = sbr.rel (%p245) target = $region28
        $region27: #{basic_block_forward.3} parent=11 // pred_region
          _
        $region28: #{basic_block_forward.3} parent=11 // pred_fallthru
          _
        // Predicated region
        $region29: #{basic_block_forward.3} parent=11 // pred_check
          %p248 = pneg %p174
        $region30: #{basic_block_forward.3} parent=11 // pred_check_branch
          %250 = sbr.rel (%p248) target = $region32
        $region31: #{basic_block_forward.3} parent=11 // pred_region
          _
        $region32: #{basic_block_forward.3} parent=11 // pred_fallthru
          _
        // Predicated region
        $region33: #{basic_block_forward.3} parent=11 // pred_check
          %p251 = pneg %p195
        $region34: #{basic_block_forward.3} parent=11 // pred_check_branch
          %253 = sbr.rel (%p251) target = $region36
        $region35: #{basic_block_forward.3} parent=11 // pred_region
          _
        $region36: #{basic_block_forward.3} parent=11 // pred_fallthru
          _
      $region12: #{basic_block_forward.3} parent=5 // pred_fallthru
        _
      %p254 = scmp.lt.s32.totalorder %s17, 2
      // Predicated region
      $region37: #{basic_block_forward.3} parent=5 // pred_check
        %p255 = pneg %p254
      $region38: #{basic_block_forward.3} parent=5 // pred_check_branch
        %257 = sbr.rel (%p255) target = $region40
      $region39: #{basic_block_forward.3} parent=5 // pred_region
        // Predicated region
        $region41: #{basic_block_forward.3} parent=39 // pred_check
          %p258 = pneg %p37
        $region42: #{basic_block_forward.3} parent=39 // pred_check_branch
          %260 = sbr.rel (%p258) target = $region44
        $region43: #{basic_block_forward.3} parent=39 // pred_region
          %p261 = scmp.lt.s32.totalorder %s17, 1
          %s262 = scalar_select %p261, %s17, 1
          %s263 = smul.addr %s262, 54
          %s264 = smul.addr %s263, 4
          %s265 = scalar_lea.vmem %s0, %s264
        $region44: #{basic_block_forward.3} parent=39 // pred_fallthru
          _
        // Predicated region
        $region45: #{basic_block_forward.3} parent=39 // pred_check
          %p266 = pneg %p105
        $region46: #{basic_block_forward.3} parent=39 // pred_check_branch
          %268 = sbr.rel (%p266) target = $region48
        $region47: #{basic_block_forward.3} parent=39 // pred_region
          %p269 = scmp.lt.s32.totalorder %s17, 1
          %s270 = scalar_select %p269, %s17, 1
          %s271 = smul.addr %s270, 32
          %s272 = smul.addr %s271, 4
          %s273 = scalar_lea.vmem %s3, %s272
        $region48: #{basic_block_forward.3} parent=39 // pred_fallthru
          _
      $region40: #{basic_block_forward.3} parent=5 // pred_fallthru
        _
      %p274 = scmp.le.s32.totalorder 1, %s17
      %p275 = scmp.lt.s32.totalorder %s17, 3
      %p276 = pnand %p274, %p275
      %p277 = pneg %p276
      // Predicated region
      $region49: #{basic_block_forward.3} parent=5 // pred_check
        _
      $region50: #{basic_block_forward.3} parent=5 // pred_check_branch
        %279 = sbr.rel (%p276) target = $region52
      $region51: #{basic_block_forward.3} parent=5 // pred_region
        %s280 = ssub.s32 %s17, 1
        %p281 = scmp.lt.s32.totalorder %s22, 1
        %s282 = scalar_select %p281, %s22, 1
        %s283 = smul.addr %s282, 54
        %s284 = smul.addr %s283, 4
        %s285 = scalar_lea.vmem %s0, %s284
        %p286 = pneg %p43
        %p287 = pneg %p40
        %p288 = pneg %p64
        %p289 = pneg %p61
        %p290 = pneg %p85
        %p291 = pneg %p82
        %p292 = scmp.lt.s32.totalorder %s22, 1
        %s293 = scalar_select %p292, %s22, 1
        %s294 = smul.addr %s293, 32
        %s295 = smul.addr %s294, 4
        %s296 = scalar_lea.vmem %s3, %s295
        %p297 = pneg %p111
        %p298 = pneg %p108
        %p299 = pneg %p132
        %p300 = pneg %p129
        %p301 = pneg %p153
        %p302 = pneg %p150
        %p303 = pneg %p174
        %p304 = pneg %p171
        %p305 = pneg %p195
        %p306 = pneg %p192
        %p307 = pneg %p221
        %p308 = pneg %p218
        %s309 = sand.u32 %s208, 1
        %s310 = scalar_lea.sflag [#allocation4], %s309
        %s311 = sand.u32 %s208, 1
        %s312 = smul.addr %s311, 256
        %s313 = scalar_lea.vmem [#allocation3], %s312
        %p314 = scmp.lt.s32.totalorder %s22, 1
        %s315 = scalar_select %p314, %s22, 1
        %s316 = smul.addr %s315, 54
        %s317 = smul.addr %s316, 4
        %s318 = scalar_lea.vmem %s0, %s317
        %p319 = scmp.lt.s32.totalorder %s22, 1
        %s320 = scalar_select %p319, %s22, 1
        %s321 = smul.addr %s320, 32
        %s322 = smul.addr %s321, 4
        %s323 = scalar_lea.vmem %s3, %s322
        %v325 = vld [vmem:[%s318] sm:$0xf]
        %v326 = vld [vmem:[%s318 + $0x4] sm:$0xf]
        %v327 = vld [vmem:[%s318 + $0xc] sm:$0xf]
        %v328 = vld [vmem:[%s318 + $0x10] sm:$0xf]
        %v329 = vld [vmem:[%s318 + $0x18] sm:$0xf]
        %v330 = vld [vmem:[%s318 + $0x1c] sm:$0xf]
        %v331 = vld [vmem:[%s318 + $0x24] sm:$0xf]
        %v332 = vld [vmem:[%s318 + $0x28] sm:$0xf]
        %v333 = vld [vmem:[%s318 + $0x30] sm:$0xf]
        %v334 = vld [vmem:[%s318 + $0x34] sm:$0xf]
        %v335 = vld [vmem:[%s318 + $0x3c] sm:$0xf]
        %v336 = vld [vmem:[%s318 + $0x40] sm:$0xf]
        %v337 = vld [vmem:[%s318 + $0x48] sm:$0xf]
        %v338 = vld [vmem:[%s318 + $0x4c] sm:$0xf]
        %v339 = vld [vmem:[%s318 + $0x54] sm:$0xf]
        %v340 = vld [vmem:[%s318 + $0x58] sm:$0xf]
        %v341 = vld [vmem:[%s318 + $0x60] sm:$0xf]
        %v342 = vld [vmem:[%s318 + $0x64] sm:$0xf]
        %v343 = vld [vmem:[%s318 + $0x6c] sm:$0xf]
        %v344 = vld [vmem:[%s318 + $0x70] sm:$0xf]
        %v345 = vld [vmem:[%s318 + $0x78] sm:$0xf]
        %v346 = vld [vmem:[%s318 + $0x7c] sm:$0xf]
        %v347 = vld [vmem:[%s318 + $0x84] sm:$0xf]
        %v348 = vld [vmem:[%s318 + $0x88] sm:$0xf]
        %v349 = vld [vmem:[%s318 + $0x90] sm:$0xf]
        %v350 = vld [vmem:[%s318 + $0x94] sm:$0xf]
        %v351 = vld [vmem:[%s318 + $0x9c] sm:$0xf]
        %v352 = vld [vmem:[%s318 + $0xa0] sm:$0xf]
        %v353 = vld [vmem:[%s318 + $0xa8] sm:$0xf]
        %v354 = vld [vmem:[%s318 + $0xac] sm:$0xf]
        %v355 = vld [vmem:[%s318 + $0xb4] sm:$0xf]
        %v356 = vld [vmem:[%s318 + $0xb8] sm:$0xf]
        %v357 = vld [vmem:[%s318 + $0x8] sm:$0x1]
        %v358 = vld [vmem:[%s318 + $0x14] sm:$0x1]
        %v359 = vld [vmem:[%s318 + $0x20] sm:$0x1]
        %v360 = vld [vmem:[%s318 + $0x2c] sm:$0x1]
        %v361 = vld [vmem:[%s318 + $0x38] sm:$0x1]
        %v362 = vld [vmem:[%s318 + $0x44] sm:$0x1]
        %v363 = vld [vmem:[%s318 + $0x50] sm:$0x1]
        %v364 = vld [vmem:[%s318 + $0x5c] sm:$0x1]
        %v365 = vld [vmem:[%s318 + $0x68] sm:$0x1]
        %v366 = vld [vmem:[%s318 + $0x74] sm:$0x1]
        %v367 = vld [vmem:[%s318 + $0x80] sm:$0x1]
        %v368 = vld [vmem:[%s318 + $0x8c] sm:$0x1]
        %v369 = vld [vmem:[%s318 + $0x98] sm:$0x1]
        %v370 = vld [vmem:[%s318 + $0xa4] sm:$0x1]
        %v371 = vld [vmem:[%s318 + $0xb0] sm:$0x1]
        %v372 = vld [vmem:[%s318 + $0xbc] sm:$0x1]
        %vm373 = vsmask.f32 3328
        %vm374 = vsmask.f32 7440
        %vm375 = vmor %vm373, %vm374
        %v377 = vshrl.u32 %v325, 16
        %v379 = vrot.slane %v377, 4
        %v380 = vshll.u32 %v325, 16
        %v382 = vrot.slane %v380, 5
        %v383 = vor.u32 %v379, %v382
        %v384 = vrot.slane %v383, 4
        %v386 = vshll.u32 %v326, 16
        %v388 = vrot.slane %v386, 5
        %v389 = vsel %vm375, %v384, %v388
        %v390 = vshrl.u32 %v326, 16
        %v392 = vrot.slane %v390, 4
        %v393 = vor.u32 %v392, %v388
        %v394 = vrot.slane %v393, 4
        %v396 = vshll.u32 %v357, 16
        %v398 = vrot.slane %v396, 5
        %v399 = vsel %vm375, %v394, %v398
        %v401 = vshrl.u32 %v327, 16
        %v403 = vrot.slane %v401, 4
        %v404 = vshll.u32 %v327, 16
        %v406 = vrot.slane %v404, 5
        %v407 = vor.u32 %v403, %v406
        %v408 = vrot.slane %v407, 4
        %v410 = vshll.u32 %v328, 16
        %v412 = vrot.slane %v410, 5
        %v413 = vsel %vm375, %v408, %v412
        %v414 = vshrl.u32 %v328, 16
        %v416 = vrot.slane %v414, 4
        %v417 = vor.u32 %v416, %v412
        %v418 = vrot.slane %v417, 4
        %v420 = vshll.u32 %v358, 16
        %v422 = vrot.slane %v420, 5
        %v423 = vsel %vm375, %v418, %v422
        %v425 = vshrl.u32 %v329, 16
        %v427 = vrot.slane %v425, 4
        %v428 = vshll.u32 %v329, 16
        %v430 = vrot.slane %v428, 5
        %v431 = vor.u32 %v427, %v430
        %v432 = vrot.slane %v431, 4
        %v434 = vshll.u32 %v330, 16
        %v436 = vrot.slane %v434, 5
        %v437 = vsel %vm375, %v432, %v436
        %v438 = vshrl.u32 %v330, 16
        %v440 = vrot.slane %v438, 4
        %v441 = vor.u32 %v440, %v436
        %v442 = vrot.slane %v441, 4
        %v444 = vshll.u32 %v359, 16
        %v446 = vrot.slane %v444, 5
        %v447 = vsel %vm375, %v442, %v446
        %v449 = vshrl.u32 %v331, 16
        %v451 = vrot.slane %v449, 4
        %v452 = vshll.u32 %v331, 16
        %v454 = vrot.slane %v452, 5
        %v455 = vor.u32 %v451, %v454
        %v456 = vrot.slane %v455, 4
        %v458 = vshll.u32 %v332, 16
        %v460 = vrot.slane %v458, 5
        %v461 = vsel %vm375, %v456, %v460
        %v462 = vshrl.u32 %v332, 16
        %v464 = vrot.slane %v462, 4
        %v465 = vor.u32 %v464, %v460
        %v466 = vrot.slane %v465, 4
        %v468 = vshll.u32 %v360, 16
        %v470 = vrot.slane %v468, 5
        %v471 = vsel %vm375, %v466, %v470
        %v473 = vshrl.u32 %v333, 16
        %v475 = vrot.slane %v473, 4
        %v476 = vshll.u32 %v333, 16
        %v478 = vrot.slane %v476, 5
        %v479 = vor.u32 %v475, %v478
        %v480 = vrot.slane %v479, 4
        %v482 = vshll.u32 %v334, 16
        %v484 = vrot.slane %v482, 5
        %v485 = vsel %vm375, %v480, %v484
        %v486 = vshrl.u32 %v334, 16
        %v488 = vrot.slane %v486, 4
        %v489 = vor.u32 %v488, %v484
        %v490 = vrot.slane %v489, 4
        %v492 = vshll.u32 %v361, 16
        %v494 = vrot.slane %v492, 5
        %v495 = vsel %vm375, %v490, %v494
        %v497 = vshrl.u32 %v335, 16
        %v499 = vrot.slane %v497, 4
        %v500 = vshll.u32 %v335, 16
        %v502 = vrot.slane %v500, 5
        %v503 = vor.u32 %v499, %v502
        %v504 = vrot.slane %v503, 4
        %v506 = vshll.u32 %v336, 16
        %v508 = vrot.slane %v506, 5
        %v509 = vsel %vm375, %v504, %v508
        %v510 = vshrl.u32 %v336, 16
        %v512 = vrot.slane %v510, 4
        %v513 = vor.u32 %v512, %v508
        %v514 = vrot.slane %v513, 4
        %v516 = vshll.u32 %v362, 16
        %v518 = vrot.slane %v516, 5
        %v519 = vsel %vm375, %v514, %v518
        %v521 = vshrl.u32 %v337, 16
        %v523 = vrot.slane %v521, 4
        %v524 = vshll.u32 %v337, 16
        %v526 = vrot.slane %v524, 5
        %v527 = vor.u32 %v523, %v526
        %v528 = vrot.slane %v527, 4
        %v530 = vshll.u32 %v338, 16
        %v532 = vrot.slane %v530, 5
        %v533 = vsel %vm375, %v528, %v532
        %v534 = vshrl.u32 %v338, 16
        %v536 = vrot.slane %v534, 4
        %v537 = vor.u32 %v536, %v532
        %v538 = vrot.slane %v537, 4
        %v540 = vshll.u32 %v363, 16
        %v542 = vrot.slane %v540, 5
        %v543 = vsel %vm375, %v538, %v542
        %v545 = vshrl.u32 %v339, 16
        %v547 = vrot.slane %v545, 4
        %v548 = vshll.u32 %v339, 16
        %v550 = vrot.slane %v548, 5
        %v551 = vor.u32 %v547, %v550
        %v552 = vrot.slane %v551, 4
        %v554 = vshll.u32 %v340, 16
        %v556 = vrot.slane %v554, 5
        %v557 = vsel %vm375, %v552, %v556
        %v558 = vshrl.u32 %v340, 16
        %v560 = vrot.slane %v558, 4
        %v561 = vor.u32 %v560, %v556
        %v562 = vrot.slane %v561, 4
        %v564 = vshll.u32 %v364, 16
        %v566 = vrot.slane %v564, 5
        %v567 = vsel %vm375, %v562, %v566
        %v569 = vshrl.u32 %v341, 16
        %v571 = vrot.slane %v569, 4
        %v572 = vshll.u32 %v341, 16
        %v574 = vrot.slane %v572, 5
        %v575 = vor.u32 %v571, %v574
        %v576 = vrot.slane %v575, 4
        %v578 = vshll.u32 %v342, 16
        %v580 = vrot.slane %v578, 5
        %v581 = vsel %vm375, %v576, %v580
        %v582 = vshrl.u32 %v342, 16
        %v584 = vrot.slane %v582, 4
        %v585 = vor.u32 %v584, %v580
        %v586 = vrot.slane %v585, 4
        %v588 = vshll.u32 %v365, 16
        %v590 = vrot.slane %v588, 5
        %v591 = vsel %vm375, %v586, %v590
        %v593 = vshrl.u32 %v343, 16
        %v595 = vrot.slane %v593, 4
        %v596 = vshll.u32 %v343, 16
        %v598 = vrot.slane %v596, 5
        %v599 = vor.u32 %v595, %v598
        %v600 = vrot.slane %v599, 4
        %v602 = vshll.u32 %v344, 16
        %v604 = vrot.slane %v602, 5
        %v605 = vsel %vm375, %v600, %v604
        %v606 = vshrl.u32 %v344, 16
        %v608 = vrot.slane %v606, 4
        %v609 = vor.u32 %v608, %v604
        %v610 = vrot.slane %v609, 4
        %v612 = vshll.u32 %v366, 16
        %v614 = vrot.slane %v612, 5
        %v615 = vsel %vm375, %v610, %v614
        %v617 = vshrl.u32 %v345, 16
        %v619 = vrot.slane %v617, 4
        %v620 = vshll.u32 %v345, 16
        %v622 = vrot.slane %v620, 5
        %v623 = vor.u32 %v619, %v622
        %v624 = vrot.slane %v623, 4
        %v626 = vshll.u32 %v346, 16
        %v628 = vrot.slane %v626, 5
        %v629 = vsel %vm375, %v624, %v628
        %v630 = vshrl.u32 %v346, 16
        %v632 = vrot.slane %v630, 4
        %v633 = vor.u32 %v632, %v628
        %v634 = vrot.slane %v633, 4
        %v636 = vshll.u32 %v367, 16
        %v638 = vrot.slane %v636, 5
        %v639 = vsel %vm375, %v634, %v638
        %v641 = vshrl.u32 %v347, 16
        %v643 = vrot.slane %v641, 4
        %v644 = vshll.u32 %v347, 16
        %v646 = vrot.slane %v644, 5
        %v647 = vor.u32 %v643, %v646
        %v648 = vrot.slane %v647, 4
        %v650 = vshll.u32 %v348, 16
        %v652 = vrot.slane %v650, 5
        %v653 = vsel %vm375, %v648, %v652
        %v654 = vshrl.u32 %v348, 16
        %v656 = vrot.slane %v654, 4
        %v657 = vor.u32 %v656, %v652
        %v658 = vrot.slane %v657, 4
        %v660 = vshll.u32 %v368, 16
        %v662 = vrot.slane %v660, 5
        %v663 = vsel %vm375, %v658, %v662
        %v665 = vshrl.u32 %v349, 16
        %v667 = vrot.slane %v665, 4
        %v668 = vshll.u32 %v349, 16
        %v670 = vrot.slane %v668, 5
        %v671 = vor.u32 %v667, %v670
        %v672 = vrot.slane %v671, 4
        %v674 = vshll.u32 %v350, 16
        %v676 = vrot.slane %v674, 5
        %v677 = vsel %vm375, %v672, %v676
        %v678 = vshrl.u32 %v350, 16
        %v680 = vrot.slane %v678, 4
        %v681 = vor.u32 %v680, %v676
        %v682 = vrot.slane %v681, 4
        %v684 = vshll.u32 %v369, 16
        %v686 = vrot.slane %v684, 5
        %v687 = vsel %vm375, %v682, %v686
        %v689 = vshrl.u32 %v351, 16
        %v691 = vrot.slane %v689, 4
        %v692 = vshll.u32 %v351, 16
        %v694 = vrot.slane %v692, 5
        %v695 = vor.u32 %v691, %v694
        %v696 = vrot.slane %v695, 4
        %v698 = vshll.u32 %v352, 16
        %v700 = vrot.slane %v698, 5
        %v701 = vsel %vm375, %v696, %v700
        %v702 = vshrl.u32 %v352, 16
        %v704 = vrot.slane %v702, 4
        %v705 = vor.u32 %v704, %v700
        %v706 = vrot.slane %v705, 4
        %v708 = vshll.u32 %v370, 16
        %v710 = vrot.slane %v708, 5
        %v711 = vsel %vm375, %v706, %v710
        %v713 = vshrl.u32 %v353, 16
        %v715 = vrot.slane %v713, 4
        %v716 = vshll.u32 %v353, 16
        %v718 = vrot.slane %v716, 5
        %v719 = vor.u32 %v715, %v718
        %v720 = vrot.slane %v719, 4
        %v722 = vshll.u32 %v354, 16
        %v724 = vrot.slane %v722, 5
        %v725 = vsel %vm375, %v720, %v724
        %v726 = vshrl.u32 %v354, 16
        %v728 = vrot.slane %v726, 4
        %v729 = vor.u32 %v728, %v724
        %v730 = vrot.slane %v729, 4
        %v732 = vshll.u32 %v371, 16
        %v734 = vrot.slane %v732, 5
        %v735 = vsel %vm375, %v730, %v734
        %v737 = vshrl.u32 %v355, 16
        %v739 = vrot.slane %v737, 4
        %v740 = vshll.u32 %v355, 16
        %v742 = vrot.slane %v740, 5
        %v743 = vor.u32 %v739, %v742
        %v744 = vrot.slane %v743, 4
        %v746 = vshll.u32 %v356, 16
        %v748 = vrot.slane %v746, 5
        %v749 = vsel %vm375, %v744, %v748
        %v750 = vshrl.u32 %v356, 16
        %v752 = vrot.slane %v750, 4
        %v753 = vor.u32 %v752, %v748
        %v754 = vrot.slane %v753, 4
        %v756 = vshll.u32 %v372, 16
        %v758 = vrot.slane %v756, 5
        %v759 = vsel %vm375, %v754, %v758
        %v792 = vunpack.c.l.b16 %v325
        %v793 = vunpack.c.l.b16 %v326
        %v794 = vunpack.c.l.b16 %v327
        %v795 = vunpack.c.l.b16 %v328
        %v796 = vunpack.c.l.b16 %v329
        %v797 = vunpack.c.l.b16 %v330
        %v798 = vunpack.c.l.b16 %v331
        %v799 = vunpack.c.l.b16 %v332
        %v800 = vunpack.c.l.b16 %v333
        %v801 = vunpack.c.l.b16 %v334
        %v802 = vunpack.c.l.b16 %v335
        %v803 = vunpack.c.l.b16 %v336
        %v804 = vunpack.c.l.b16 %v337
        %v805 = vunpack.c.l.b16 %v338
        %v806 = vunpack.c.l.b16 %v339
        %v807 = vunpack.c.l.b16 %v340
        %v808 = vunpack.c.l.b16 %v341
        %v809 = vunpack.c.l.b16 %v342
        %v810 = vunpack.c.l.b16 %v343
        %v811 = vunpack.c.l.b16 %v344
        %v812 = vunpack.c.l.b16 %v345
        %v813 = vunpack.c.l.b16 %v346
        %v814 = vunpack.c.l.b16 %v347
        %v815 = vunpack.c.l.b16 %v348
        %v816 = vunpack.c.l.b16 %v349
        %v817 = vunpack.c.l.b16 %v350
        %v818 = vunpack.c.l.b16 %v351
        %v819 = vunpack.c.l.b16 %v352
        %v820 = vunpack.c.l.b16 %v353
        %v821 = vunpack.c.l.b16 %v354
        %v822 = vunpack.c.l.b16 %v355
        %v823 = vunpack.c.l.b16 %v356
        %v824 = vpack.c.b16 %v793, %v792
        %v825 = vpack.c.b16 %v795, %v794
        %v826 = vpack.c.b16 %v797, %v796
        %v827 = vpack.c.b16 %v799, %v798
        %v828 = vpack.c.b16 %v801, %v800
        %v829 = vpack.c.b16 %v803, %v802
        %v830 = vpack.c.b16 %v805, %v804
        %v831 = vpack.c.b16 %v807, %v806
        %v832 = vpack.c.b16 %v809, %v808
        %v833 = vpack.c.b16 %v811, %v810
        %v834 = vpack.c.b16 %v813, %v812
        %v835 = vpack.c.b16 %v815, %v814
        %v836 = vpack.c.b16 %v817, %v816
        %v837 = vpack.c.b16 %v819, %v818
        %v838 = vpack.c.b16 %v821, %v820
        %v839 = vpack.c.b16 %v823, %v822
        %v856 = vunpack.c.l.b16 %v389
        %v857 = vunpack.c.l.b16 %v399
        %v858 = vunpack.c.l.b16 %v413
        %v859 = vunpack.c.l.b16 %v423
        %v860 = vunpack.c.l.b16 %v437
        %v861 = vunpack.c.l.b16 %v447
        %v862 = vunpack.c.l.b16 %v461
        %v863 = vunpack.c.l.b16 %v471
        %v864 = vunpack.c.l.b16 %v485
        %v865 = vunpack.c.l.b16 %v495
        %v866 = vunpack.c.l.b16 %v509
        %v867 = vunpack.c.l.b16 %v519
        %v868 = vunpack.c.l.b16 %v533
        %v869 = vunpack.c.l.b16 %v543
        %v870 = vunpack.c.l.b16 %v557
        %v871 = vunpack.c.l.b16 %v567
        %v872 = vunpack.c.l.b16 %v581
        %v873 = vunpack.c.l.b16 %v591
        %v874 = vunpack.c.l.b16 %v605
        %v875 = vunpack.c.l.b16 %v615
        %v876 = vunpack.c.l.b16 %v629
        %v877 = vunpack.c.l.b16 %v639
        %v878 = vunpack.c.l.b16 %v653
        %v879 = vunpack.c.l.b16 %v663
        %v880 = vunpack.c.l.b16 %v677
        %v881 = vunpack.c.l.b16 %v687
        %v882 = vunpack.c.l.b16 %v701
        %v883 = vunpack.c.l.b16 %v711
        %v884 = vunpack.c.l.b16 %v725
        %v885 = vunpack.c.l.b16 %v735
        %v886 = vunpack.c.l.b16 %v749
        %v887 = vunpack.c.l.b16 %v759
        %v888 = vpack.c.b16 %v857, %v856
        %v889 = vpack.c.b16 %v859, %v858
        %v890 = vpack.c.b16 %v861, %v860
        %v891 = vpack.c.b16 %v863, %v862
        %v892 = vpack.c.b16 %v865, %v864
        %v893 = vpack.c.b16 %v867, %v866
        %v894 = vpack.c.b16 %v869, %v868
        %v895 = vpack.c.b16 %v871, %v870
        %v896 = vpack.c.b16 %v873, %v872
        %v897 = vpack.c.b16 %v875, %v874
        %v898 = vpack.c.b16 %v877, %v876
        %v899 = vpack.c.b16 %v879, %v878
        %v900 = vpack.c.b16 %v881, %v880
        %v901 = vpack.c.b16 %v883, %v882
        %v902 = vpack.c.b16 %v885, %v884
        %v903 = vpack.c.b16 %v887, %v886
        %v920 = vld [vmem:[%s1] sm:$0xf]
        %v921 = vld [vmem:[%s1 + $0x4] sm:$0xf]
        %v922 = vld [vmem:[%s1 + $0x8] sm:$0xf]
        %v923 = vld [vmem:[%s1 + $0xc] sm:$0xf]
        %v924 = vld [vmem:[%s1 + $0x10] sm:$0xf]
        %v925 = vld [vmem:[%s1 + $0x14] sm:$0xf]
        %v926 = vld [vmem:[%s1 + $0x18] sm:$0xf]
        %v927 = vld [vmem:[%s1 + $0x1c] sm:$0xf]
        %v928 = vld [vmem:[%s1 + $0x20] sm:$0xf]
        %v929 = vld [vmem:[%s1 + $0x24] sm:$0xf]
        %v930 = vld [vmem:[%s1 + $0x28] sm:$0xf]
        %v931 = vld [vmem:[%s1 + $0x2c] sm:$0xf]
        %v932 = vld [vmem:[%s1 + $0x30] sm:$0xf]
        %v933 = vld [vmem:[%s1 + $0x34] sm:$0xf]
        %v934 = vld [vmem:[%s1 + $0x38] sm:$0xf]
        %v935 = vld [vmem:[%s1 + $0x3c] sm:$0xf]
        %v936 = vld [vmem:[%s1 + $0x40] sm:$0xf]
        %v937 = vld [vmem:[%s1 + $0x44] sm:$0xf]
        %v938 = vld [vmem:[%s1 + $0x48] sm:$0xf]
        %v939 = vld [vmem:[%s1 + $0x4c] sm:$0xf]
        %v940 = vld [vmem:[%s1 + $0x50] sm:$0xf]
        %v941 = vld [vmem:[%s1 + $0x54] sm:$0xf]
        %v942 = vld [vmem:[%s1 + $0x58] sm:$0xf]
        %v943 = vld [vmem:[%s1 + $0x5c] sm:$0xf]
        %v944 = vld [vmem:[%s1 + $0x60] sm:$0xf]
        %v945 = vld [vmem:[%s1 + $0x64] sm:$0xf]
        %v946 = vld [vmem:[%s1 + $0x68] sm:$0xf]
        %v947 = vld [vmem:[%s1 + $0x6c] sm:$0xf]
        %v948 = vld [vmem:[%s1 + $0x70] sm:$0xf]
        %v949 = vld [vmem:[%s1 + $0x74] sm:$0xf]
        %v950 = vld [vmem:[%s1 + $0x78] sm:$0xf]
        %v951 = vld [vmem:[%s1 + $0x7c] sm:$0xf]
        %v984 = vunpack.c.l.b16 %v920
        %v985 = vunpack.c.l.b16 %v921
        %v986 = vunpack.c.l.b16 %v922
        %v987 = vunpack.c.l.b16 %v923
        %v988 = vunpack.c.l.b16 %v924
        %v989 = vunpack.c.l.b16 %v925
        %v990 = vunpack.c.l.b16 %v926
        %v991 = vunpack.c.l.b16 %v927
        %v992 = vunpack.c.l.b16 %v928
        %v993 = vunpack.c.l.b16 %v929
        %v994 = vunpack.c.l.b16 %v930
        %v995 = vunpack.c.l.b16 %v931
        %v996 = vunpack.c.l.b16 %v932
        %v997 = vunpack.c.l.b16 %v933
        %v998 = vunpack.c.l.b16 %v934
        %v999 = vunpack.c.l.b16 %v935
        %v1000 = vunpack.c.l.b16 %v936
        %v1001 = vunpack.c.l.b16 %v937
        %v1002 = vunpack.c.l.b16 %v938
        %v1003 = vunpack.c.l.b16 %v939
        %v1004 = vunpack.c.l.b16 %v940
        %v1005 = vunpack.c.l.b16 %v941
        %v1006 = vunpack.c.l.b16 %v942
        %v1007 = vunpack.c.l.b16 %v943
        %v1008 = vunpack.c.l.b16 %v944
        %v1009 = vunpack.c.l.b16 %v945
        %v1010 = vunpack.c.l.b16 %v946
        %v1011 = vunpack.c.l.b16 %v947
        %v1012 = vunpack.c.l.b16 %v948
        %v1013 = vunpack.c.l.b16 %v949
        %v1014 = vunpack.c.l.b16 %v950
        %v1015 = vunpack.c.l.b16 %v951
        %v1016 = vpack.c.b16 %v985, %v984
        %v1017 = vpack.c.b16 %v987, %v986
        %v1018 = vpack.c.b16 %v989, %v988
        %v1019 = vpack.c.b16 %v991, %v990
        %v1020 = vpack.c.b16 %v993, %v992
        %v1021 = vpack.c.b16 %v995, %v994
        %v1022 = vpack.c.b16 %v997, %v996
        %v1023 = vpack.c.b16 %v999, %v998
        %v1024 = vpack.c.b16 %v1001, %v1000
        %v1025 = vpack.c.b16 %v1003, %v1002
        %v1026 = vpack.c.b16 %v1005, %v1004
        %v1027 = vpack.c.b16 %v1007, %v1006
        %v1028 = vpack.c.b16 %v1009, %v1008
        %v1029 = vpack.c.b16 %v1011, %v1010
        %v1030 = vpack.c.b16 %v1013, %v1012
        %v1031 = vpack.c.b16 %v1015, %v1014
        %1048 = vmatprep.subr.bf16.mxu0 0
        %1049 = vmatpush1.bf16.msra.mxu0 %v1016
        %1050 = vmatprep.subr.bf16.mxu0 0
        %1051 = vmatpush1.bf16.msra.mxu0 %v1017
        %1052 = vmatprep.subr.bf16.mxu0 0
        %1053 = vmatpush1.bf16.msra.mxu0 %v1018
        %1054 = vmatprep.subr.bf16.mxu0 0
        %1055 = vmatpush1.bf16.msra.mxu0 %v1019
        %1056 = vmatprep.subr.bf16.mxu0 0
        %1057 = vmatpush1.bf16.msra.mxu0 %v1020
        %1058 = vmatprep.subr.bf16.mxu0 0
        %1059 = vmatpush1.bf16.msra.mxu0 %v1021
        %1060 = vmatprep.subr.bf16.mxu0 0
        %1061 = vmatpush1.bf16.msra.mxu0 %v1022
        %1062 = vmatprep.subr.bf16.mxu0 0
        %1063 = vmatpush1.bf16.msra.mxu0 %v1023
        %1064 = vmatprep.subr.bf16.mxu0 0
        %1065 = vmatpush1.bf16.msra.mxu0 %v1024
        %1066 = vmatprep.subr.bf16.mxu0 0
        %1067 = vmatpush1.bf16.msra.mxu0 %v1025
        %1068 = vmatprep.subr.bf16.mxu0 0
        %1069 = vmatpush1.bf16.msra.mxu0 %v1026
        %1070 = vmatprep.subr.bf16.mxu0 0
        %1071 = vmatpush1.bf16.msra.mxu0 %v1027
        %1072 = vmatprep.subr.bf16.mxu0 0
        %1073 = vmatpush1.bf16.msra.mxu0 %v1028
        %1074 = vmatprep.subr.bf16.mxu0 0
        %1075 = vmatpush1.bf16.msra.mxu0 %v1029
        %1076 = vmatprep.subr.bf16.mxu0 0
        %1077 = vmatpush1.bf16.msra.mxu0 %v1030
        %1078 = vmatprep.subr.bf16.mxu0 0
        %1079 = vmatpush1.bf16.msra.mxu0 %v1031
        %1080 = vmatprep.mubr.bf16.mxu0 %v888
        %1081 = vmatmul.mubr.bf16.gmra.mrb[0].mxu0 %v824
        %v1082 = vpop.f32.mrb[0].mxu0
        %v1083 = vadd.f32 0.0, %v1082
        %v1084 = vpop.f32.mrb[0].mxu0
        %v1085 = vpop.f32.mrb[0].mxu0
        %v1086 = vadd.f32 0.0, %v1085
        %v1087 = vpop.f32.mrb[0].mxu0
        %1088 = vmatprep.mubr.bf16.mxu0 %v889
        %1089 = vmatmul.mubr.bf16.gmra.mrb[0].mxu0 %v825
        %v1090 = vpop.f32.mrb[0].mxu0
        %v1091 = vadd.f32 0.0, %v1090
        %v1092 = vpop.f32.mrb[0].mxu0
        %v1093 = vpop.f32.mrb[0].mxu0
        %v1094 = vadd.f32 0.0, %v1093
        %v1095 = vpop.f32.mrb[0].mxu0
        %1096 = vmatprep.mubr.bf16.mxu0 %v890
        %1097 = vmatmul.mubr.bf16.gmra.mrb[0].mxu0 %v826
        %v1098 = vpop.f32.mrb[0].mxu0
        %v1099 = vadd.f32 0.0, %v1098
        %v1100 = vpop.f32.mrb[0].mxu0
        %v1101 = vpop.f32.mrb[0].mxu0
        %v1102 = vadd.f32 0.0, %v1101
        %v1103 = vpop.f32.mrb[0].mxu0
        %1104 = vmatprep.mubr.bf16.mxu0 %v891
        %1105 = vmatmul.mubr.bf16.gmra.mrb[0].mxu0 %v827
        %v1106 = vpop.f32.mrb[0].mxu0
        %v1107 = vadd.f32 0.0, %v1106
        %v1108 = vpop.f32.mrb[0].mxu0
        %v1109 = vpop.f32.mrb[0].mxu0
        %v1110 = vadd.f32 0.0, %v1109
        %v1111 = vpop.f32.mrb[0].mxu0
        %1112 = vmatprep.mubr.bf16.mxu0 %v892
        %1113 = vmatmul.mubr.bf16.gmra.mrb[0].mxu0 %v828
        %v1114 = vpop.f32.mrb[0].mxu0
        %v1115 = vadd.f32 0.0, %v1114
        %v1116 = vpop.f32.mrb[0].mxu0
        %v1117 = vpop.f32.mrb[0].mxu0
        %v1118 = vadd.f32 0.0, %v1117
        %v1119 = vpop.f32.mrb[0].mxu0
        %1120 = vmatprep.mubr.bf16.mxu0 %v893
        %1121 = vmatmul.mubr.bf16.gmra.mrb[0].mxu0 %v829
        %v1122 = vpop.f32.mrb[0].mxu0
        %v1123 = vadd.f32 0.0, %v1122
        %v1124 = vpop.f32.mrb[0].mxu0
        %v1125 = vpop.f32.mrb[0].mxu0
        %v1126 = vadd.f32 0.0, %v1125
        %v1127 = vpop.f32.mrb[0].mxu0
        %1128 = vmatprep.mubr.bf16.mxu0 %v894
        %1129 = vmatmul.mubr.bf16.gmra.mrb[0].mxu0 %v830
        %v1130 = vpop.f32.mrb[0].mxu0
        %v1131 = vadd.f32 0.0, %v1130
        %v1132 = vpop.f32.mrb[0].mxu0
        %v1133 = vpop.f32.mrb[0].mxu0
        %v1134 = vadd.f32 0.0, %v1133
        %v1135 = vpop.f32.mrb[0].mxu0
        %1136 = vmatprep.mubr.bf16.mxu0 %v895
        %1137 = vmatmul.mubr.bf16.gmra.mrb[0].mxu0 %v831
        %v1138 = vpop.f32.mrb[0].mxu0
        %v1139 = vadd.f32 0.0, %v1138
        %v1140 = vpop.f32.mrb[0].mxu0
        %v1141 = vpop.f32.mrb[0].mxu0
        %v1142 = vadd.f32 0.0, %v1141
        %v1143 = vpop.f32.mrb[0].mxu0
        %1144 = vmatprep.mubr.bf16.mxu0 %v896
        %1145 = vmatmul.mubr.bf16.gmra.mrb[0].mxu0 %v832
        %v1146 = vpop.f32.mrb[0].mxu0
        %v1147 = vadd.f32 0.0, %v1146
        %v1148 = vpop.f32.mrb[0].mxu0
        %v1149 = vpop.f32.mrb[0].mxu0
        %v1150 = vadd.f32 0.0, %v1149
        %v1151 = vpop.f32.mrb[0].mxu0
        %1152 = vmatprep.mubr.bf16.mxu0 %v897
        %1153 = vmatmul.mubr.bf16.gmra.mrb[0].mxu0 %v833
        %v1154 = vpop.f32.mrb[0].mxu0
        %v1155 = vadd.f32 0.0, %v1154
        %v1156 = vpop.f32.mrb[0].mxu0
        %v1157 = vpop.f32.mrb[0].mxu0
        %v1158 = vadd.f32 0.0, %v1157
        %v1159 = vpop.f32.mrb[0].mxu0
        %1160 = vmatprep.mubr.bf16.mxu0 %v898
        %1161 = vmatmul.mubr.bf16.gmra.mrb[0].mxu0 %v834
        %v1162 = vpop.f32.mrb[0].mxu0
        %v1163 = vadd.f32 0.0, %v1162
        %v1164 = vpop.f32.mrb[0].mxu0
        %v1165 = vpop.f32.mrb[0].mxu0
        %v1166 = vadd.f32 0.0, %v1165
        %v1167 = vpop.f32.mrb[0].mxu0
        %1168 = vmatprep.mubr.bf16.mxu0 %v899
        %1169 = vmatmul.mubr.bf16.gmra.mrb[0].mxu0 %v835
        %v1170 = vpop.f32.mrb[0].mxu0
        %v1171 = vadd.f32 0.0, %v1170
        %v1172 = vpop.f32.mrb[0].mxu0
        %v1173 = vpop.f32.mrb[0].mxu0
        %v1174 = vadd.f32 0.0, %v1173
        %v1175 = vpop.f32.mrb[0].mxu0
        %1176 = vmatprep.mubr.bf16.mxu0 %v900
        %1177 = vmatmul.mubr.bf16.gmra.mrb[0].mxu0 %v836
        %v1178 = vpop.f32.mrb[0].mxu0
        %v1179 = vadd.f32 0.0, %v1178
        %v1180 = vpop.f32.mrb[0].mxu0
        %v1181 = vpop.f32.mrb[0].mxu0
        %v1182 = vadd.f32 0.0, %v1181
        %v1183 = vpop.f32.mrb[0].mxu0
        %1184 = vmatprep.mubr.bf16.mxu0 %v901
        %1185 = vmatmul.mubr.bf16.gmra.mrb[0].mxu0 %v837
        %v1186 = vpop.f32.mrb[0].mxu0
        %v1187 = vadd.f32 0.0, %v1186
        %v1188 = vpop.f32.mrb[0].mxu0
        %v1189 = vpop.f32.mrb[0].mxu0
        %v1190 = vadd.f32 0.0, %v1189
        %v1191 = vpop.f32.mrb[0].mxu0
        %1192 = vmatprep.mubr.bf16.mxu0 %v902
        %1193 = vmatmul.mubr.bf16.gmra.mrb[0].mxu0 %v838
        %v1194 = vpop.f32.mrb[0].mxu0
        %v1195 = vadd.f32 0.0, %v1194
        %v1196 = vpop.f32.mrb[0].mxu0
        %v1197 = vpop.f32.mrb[0].mxu0
        %v1198 = vadd.f32 0.0, %v1197
        %v1199 = vpop.f32.mrb[0].mxu0
        %1200 = vmatprep.mubr.bf16.mxu0 %v903
        %1201 = vmatmul.mubr.bf16.gmra.mrb[0].mxu0 %v839
        %v1202 = vpop.f32.mrb[0].mxu0
        %v1203 = vadd.f32 0.0, %v1202
        %v1204 = vpop.f32.mrb[0].mxu0
        %v1205 = vpop.f32.mrb[0].mxu0
        %v1206 = vadd.f32 0.0, %v1205
        %v1207 = vpop.f32.mrb[0].mxu0
        %1208 = vdwg.mxu0
        %1209 = vst [vmem:[#allocation2] sm:$0xff] %v1083
        %1210 = vst [vmem:[#allocation2 + $0x8] sm:$0xff] %v1086
        %1211 = vst [vmem:[#allocation2 + $0x10] sm:$0xff] %v1091
        %1212 = vst [vmem:[#allocation2 + $0x18] sm:$0xff] %v1094
        %1213 = vst [vmem:[#allocation2 + $0x20] sm:$0xff] %v1099
        %1214 = vst [vmem:[#allocation2 + $0x28] sm:$0xff] %v1102
        %1215 = vst [vmem:[#allocation2 + $0x30] sm:$0xff] %v1107
        %1216 = vst [vmem:[#allocation2 + $0x38] sm:$0xff] %v1110
        %1217 = vst [vmem:[#allocation2 + $0x40] sm:$0xff] %v1115
        %1218 = vst [vmem:[#allocation2 + $0x48] sm:$0xff] %v1118
        %1219 = vst [vmem:[#allocation2 + $0x50] sm:$0xff] %v1123
        %1220 = vst [vmem:[#allocation2 + $0x58] sm:$0xff] %v1126
        %1221 = vst [vmem:[#allocation2 + $0x60] sm:$0xff] %v1131
        %1222 = vst [vmem:[#allocation2 + $0x68] sm:$0xff] %v1134
        %1223 = vst [vmem:[#allocation2 + $0x70] sm:$0xff] %v1139
        %1224 = vst [vmem:[#allocation2 + $0x78] sm:$0xff] %v1142
        %1225 = vst [vmem:[#allocation2 + $0x80] sm:$0xff] %v1147
        %1226 = vst [vmem:[#allocation2 + $0x88] sm:$0xff] %v1150
        %1227 = vst [vmem:[#allocation2 + $0x90] sm:$0xff] %v1155
        %1228 = vst [vmem:[#allocation2 + $0x98] sm:$0xff] %v1158
        %1229 = vst [vmem:[#allocation2 + $0xa0] sm:$0xff] %v1163
        %1230 = vst [vmem:[#allocation2 + $0xa8] sm:$0xff] %v1166
        %1231 = vst [vmem:[#allocation2 + $0xb0] sm:$0xff] %v1171
        %1232 = vst [vmem:[#allocation2 + $0xb8] sm:$0xff] %v1174
        %1233 = vst [vmem:[#allocation2 + $0xc0] sm:$0xff] %v1179
        %1234 = vst [vmem:[#allocation2 + $0xc8] sm:$0xff] %v1182
        %1235 = vst [vmem:[#allocation2 + $0xd0] sm:$0xff] %v1187
        %1236 = vst [vmem:[#allocation2 + $0xd8] sm:$0xff] %v1190
        %1237 = vst [vmem:[#allocation2 + $0xe0] sm:$0xff] %v1195
        %1238 = vst [vmem:[#allocation2 + $0xe8] sm:$0xff] %v1198
        %1239 = vst [vmem:[#allocation2 + $0xf0] sm:$0xff] %v1203
        %1240 = vst [vmem:[#allocation2 + $0xf8] sm:$0xff] %v1206
        %v1241 = vld [vmem:[%s318] sm:$0xe]
        %v1242 = vld [vmem:[%s318 + $0x4] sm:$0xf]
        %v1243 = vld [vmem:[%s318 + $0x8] sm:$0x1]
        %v1244 = vld [vmem:[%s318 + $0xc] sm:$0xe]
        %v1245 = vld [vmem:[%s318 + $0x10] sm:$0xf]
        %v1246 = vld [vmem:[%s318 + $0x14] sm:$0x1]
        %v1247 = vld [vmem:[%s318 + $0x18] sm:$0xe]
        %v1248 = vld [vmem:[%s318 + $0x1c] sm:$0xf]
        %v1249 = vld [vmem:[%s318 + $0x20] sm:$0x1]
        %v1250 = vld [vmem:[%s318 + $0x24] sm:$0xe]
        %v1251 = vld [vmem:[%s318 + $0x28] sm:$0xf]
        %v1252 = vld [vmem:[%s318 + $0x2c] sm:$0x1]
        %v1253 = vld [vmem:[%s318 + $0x30] sm:$0xe]
        %v1254 = vld [vmem:[%s318 + $0x34] sm:$0xf]
        %v1255 = vld [vmem:[%s318 + $0x38] sm:$0x1]
        %v1256 = vld [vmem:[%s318 + $0x3c] sm:$0xe]
        %v1257 = vld [vmem:[%s318 + $0x40] sm:$0xf]
        %v1258 = vld [vmem:[%s318 + $0x44] sm:$0x1]
        %v1259 = vld [vmem:[%s318 + $0x48] sm:$0xe]
        %v1260 = vld [vmem:[%s318 + $0x4c] sm:$0xf]
        %v1261 = vld [vmem:[%s318 + $0x50] sm:$0x1]
        %v1262 = vld [vmem:[%s318 + $0x54] sm:$0xe]
        %v1263 = vld [vmem:[%s318 + $0x58] sm:$0xf]
        %v1264 = vld [vmem:[%s318 + $0x5c] sm:$0x1]
        %v1265 = vld [vmem:[%s318 + $0x60] sm:$0xe]
        %v1266 = vld [vmem:[%s318 + $0x64] sm:$0xf]
        %v1267 = vld [vmem:[%s318 + $0x68] sm:$0x1]
        %v1268 = vld [vmem:[%s318 + $0x6c] sm:$0xe]
        %v1269 = vld [vmem:[%s318 + $0x70] sm:$0xf]
        %v1270 = vld [vmem:[%s318 + $0x74] sm:$0x1]
        %v1271 = vld [vmem:[%s318 + $0x78] sm:$0xe]
        %v1272 = vld [vmem:[%s318 + $0x7c] sm:$0xf]
        %v1273 = vld [vmem:[%s318 + $0x80] sm:$0x1]
        %v1274 = vld [vmem:[%s318 + $0x84] sm:$0xe]
        %v1275 = vld [vmem:[%s318 + $0x88] sm:$0xf]
        %v1276 = vld [vmem:[%s318 + $0x8c] sm:$0x1]
        %v1277 = vld [vmem:[%s318 + $0x90] sm:$0xe]
        %v1278 = vld [vmem:[%s318 + $0x94] sm:$0xf]
        %v1279 = vld [vmem:[%s318 + $0x98] sm:$0x1]
        %v1280 = vld [vmem:[%s318 + $0x9c] sm:$0xe]
        %v1281 = vld [vmem:[%s318 + $0xa0] sm:$0xf]
        %v1282 = vld [vmem:[%s318 + $0xa4] sm:$0x1]
        %v1283 = vld [vmem:[%s318 + $0xa8] sm:$0xe]
        %v1284 = vld [vmem:[%s318 + $0xac] sm:$0xf]
        %v1285 = vld [vmem:[%s318 + $0xb0] sm:$0x1]
        %v1286 = vld [vmem:[%s318 + $0xb4] sm:$0xe]
        %v1287 = vld [vmem:[%s318 + $0xb8] sm:$0xf]
        %v1288 = vld [vmem:[%s318 + $0xbc] sm:$0x1]
        %vm1337 = vcmask 1042432
        %vm1338 = vcmask 1046532
        %vm1339 = vmor %vm1337, %vm1338
        %v1340 = vrot.slane %v1241, 5
        %v1341 = vrot.slane %v1340, 4
        %v1342 = vrot.slane %v1242, 5
        %v1343 = vsel %vm1339, %v1341, %v1342
        %v1344 = vrot.slane %v1342, 4
        %v1345 = vrot.slane %v1243, 5
        %v1346 = vsel %vm1339, %v1344, %v1345
        %v1347 = vrot.slane %v1244, 5
        %v1348 = vrot.slane %v1347, 4
        %v1349 = vrot.slane %v1245, 5
        %v1350 = vsel %vm1339, %v1348, %v1349
        %v1351 = vrot.slane %v1349, 4
        %v1352 = vrot.slane %v1246, 5
        %v1353 = vsel %vm1339, %v1351, %v1352
        %v1354 = vrot.slane %v1247, 5
        %v1355 = vrot.slane %v1354, 4
        %v1356 = vrot.slane %v1248, 5
        %v1357 = vsel %vm1339, %v1355, %v1356
        %v1358 = vrot.slane %v1356, 4
        %v1359 = vrot.slane %v1249, 5
        %v1360 = vsel %vm1339, %v1358, %v1359
        %v1361 = vrot.slane %v1250, 5
        %v1362 = vrot.slane %v1361, 4
        %v1363 = vrot.slane %v1251, 5
        %v1364 = vsel %vm1339, %v1362, %v1363
        %v1365 = vrot.slane %v1363, 4
        %v1366 = vrot.slane %v1252, 5
        %v1367 = vsel %vm1339, %v1365, %v1366
        %v1368 = vrot.slane %v1253, 5
        %v1369 = vrot.slane %v1368, 4
        %v1370 = vrot.slane %v1254, 5
        %v1371 = vsel %vm1339, %v1369, %v1370
        %v1372 = vrot.slane %v1370, 4
        %v1373 = vrot.slane %v1255, 5
        %v1374 = vsel %vm1339, %v1372, %v1373
        %v1375 = vrot.slane %v1256, 5
        %v1376 = vrot.slane %v1375, 4
        %v1377 = vrot.slane %v1257, 5
        %v1378 = vsel %vm1339, %v1376, %v1377
        %v1379 = vrot.slane %v1377, 4
        %v1380 = vrot.slane %v1258, 5
        %v1381 = vsel %vm1339, %v1379, %v1380
        %v1382 = vrot.slane %v1259, 5
        %v1383 = vrot.slane %v1382, 4
        %v1384 = vrot.slane %v1260, 5
        %v1385 = vsel %vm1339, %v1383, %v1384
        %v1386 = vrot.slane %v1384, 4
        %v1387 = vrot.slane %v1261, 5
        %v1388 = vsel %vm1339, %v1386, %v1387
        %v1389 = vrot.slane %v1262, 5
        %v1390 = vrot.slane %v1389, 4
        %v1391 = vrot.slane %v1263, 5
        %v1392 = vsel %vm1339, %v1390, %v1391
        %v1393 = vrot.slane %v1391, 4
        %v1394 = vrot.slane %v1264, 5
        %v1395 = vsel %vm1339, %v1393, %v1394
        %v1396 = vrot.slane %v1265, 5
        %v1397 = vrot.slane %v1396, 4
        %v1398 = vrot.slane %v1266, 5
        %v1399 = vsel %vm1339, %v1397, %v1398
        %v1400 = vrot.slane %v1398, 4
        %v1401 = vrot.slane %v1267, 5
        %v1402 = vsel %vm1339, %v1400, %v1401
        %v1403 = vrot.slane %v1268, 5
        %v1404 = vrot.slane %v1403, 4
        %v1405 = vrot.slane %v1269, 5
        %v1406 = vsel %vm1339, %v1404, %v1405
        %v1407 = vrot.slane %v1405, 4
        %v1408 = vrot.slane %v1270, 5
        %v1409 = vsel %vm1339, %v1407, %v1408
        %v1410 = vrot.slane %v1271, 5
        %v1411 = vrot.slane %v1410, 4
        %v1412 = vrot.slane %v1272, 5
        %v1413 = vsel %vm1339, %v1411, %v1412
        %v1414 = vrot.slane %v1412, 4
        %v1415 = vrot.slane %v1273, 5
        %v1416 = vsel %vm1339, %v1414, %v1415
        %v1417 = vrot.slane %v1274, 5
        %v1418 = vrot.slane %v1417, 4
        %v1419 = vrot.slane %v1275, 5
        %v1420 = vsel %vm1339, %v1418, %v1419
        %v1421 = vrot.slane %v1419, 4
        %v1422 = vrot.slane %v1276, 5
        %v1423 = vsel %vm1339, %v1421, %v1422
        %v1424 = vrot.slane %v1277, 5
        %v1425 = vrot.slane %v1424, 4
        %v1426 = vrot.slane %v1278, 5
        %v1427 = vsel %vm1339, %v1425, %v1426
        %v1428 = vrot.slane %v1426, 4
        %v1429 = vrot.slane %v1279, 5
        %v1430 = vsel %vm1339, %v1428, %v1429
        %v1431 = vrot.slane %v1280, 5
        %v1432 = vrot.slane %v1431, 4
        %v1433 = vrot.slane %v1281, 5
        %v1434 = vsel %vm1339, %v1432, %v1433
        %v1435 = vrot.slane %v1433, 4
        %v1436 = vrot.slane %v1282, 5
        %v1437 = vsel %vm1339, %v1435, %v1436
        %v1438 = vrot.slane %v1283, 5
        %v1439 = vrot.slane %v1438, 4
        %v1440 = vrot.slane %v1284, 5
        %v1441 = vsel %vm1339, %v1439, %v1440
        %v1442 = vrot.slane %v1440, 4
        %v1443 = vrot.slane %v1285, 5
        %v1444 = vsel %vm1339, %v1442, %v1443
        %v1445 = vrot.slane %v1286, 5
        %v1446 = vrot.slane %v1445, 4
        %v1447 = vrot.slane %v1287, 5
        %v1448 = vsel %vm1339, %v1446, %v1447
        %v1449 = vrot.slane %v1447, 4
        %v1450 = vrot.slane %v1288, 5
        %v1451 = vsel %vm1339, %v1449, %v1450
        %s1452 = scalar_lea.vmem %s318, 12
        %v1453 = vld [vmem:[%s1452] sm:$0xf]
        %v1454 = vld [vmem:[%s1452 + $0x4] sm:$0xf]
        %v1455 = vld [vmem:[%s1452 + $0xc] sm:$0xf]
        %v1456 = vld [vmem:[%s1452 + $0x10] sm:$0xf]
        %v1457 = vld [vmem:[%s1452 + $0x18] sm:$0xf]
        %v1458 = vld [vmem:[%s1452 + $0x1c] sm:$0xf]
        %v1459 = vld [vmem:[%s1452 + $0x24] sm:$0xf]
        %v1460 = vld [vmem:[%s1452 + $0x28] sm:$0xf]
        %v1461 = vld [vmem:[%s1452 + $0x30] sm:$0xf]
        %v1462 = vld [vmem:[%s1452 + $0x34] sm:$0xf]
        %v1463 = vld [vmem:[%s1452 + $0x3c] sm:$0xf]
        %v1464 = vld [vmem:[%s1452 + $0x40] sm:$0xf]
        %v1465 = vld [vmem:[%s1452 + $0x48] sm:$0xf]
        %v1466 = vld [vmem:[%s1452 + $0x4c] sm:$0xf]
        %v1467 = vld [vmem:[%s1452 + $0x54] sm:$0xf]
        %v1468 = vld [vmem:[%s1452 + $0x58] sm:$0xf]
        %v1469 = vld [vmem:[%s1452 + $0x60] sm:$0xf]
        %v1470 = vld [vmem:[%s1452 + $0x64] sm:$0xf]
        %v1471 = vld [vmem:[%s1452 + $0x6c] sm:$0xf]
        %v1472 = vld [vmem:[%s1452 + $0x70] sm:$0xf]
        %v1473 = vld [vmem:[%s1452 + $0x78] sm:$0xf]
        %v1474 = vld [vmem:[%s1452 + $0x7c] sm:$0xf]
        %v1475 = vld [vmem:[%s1452 + $0x84] sm:$0xf]
        %v1476 = vld [vmem:[%s1452 + $0x88] sm:$0xf]
        %v1477 = vld [vmem:[%s1452 + $0x90] sm:$0xf]
        %v1478 = vld [vmem:[%s1452 + $0x94] sm:$0xf]
        %v1479 = vld [vmem:[%s1452 + $0x9c] sm:$0xf]
        %v1480 = vld [vmem:[%s1452 + $0xa0] sm:$0xf]
        %v1481 = vld [vmem:[%s1452 + $0xa8] sm:$0xf]
        %v1482 = vld [vmem:[%s1452 + $0xac] sm:$0xf]
        %v1483 = vld [vmem:[%s1452 + $0xb4] sm:$0xf]
        %v1484 = vld [vmem:[%s1452 + $0xb8] sm:$0xf]
        %v1485 = vunpack.c.l.b16 %v1343
        %v1486 = vunpack.c.l.b16 %v1346
        %v1487 = vunpack.c.l.b16 %v1350
        %v1488 = vunpack.c.l.b16 %v1353
        %v1489 = vunpack.c.l.b16 %v1357
        %v1490 = vunpack.c.l.b16 %v1360
        %v1491 = vunpack.c.l.b16 %v1364
        %v1492 = vunpack.c.l.b16 %v1367
        %v1493 = vunpack.c.l.b16 %v1371
        %v1494 = vunpack.c.l.b16 %v1374
        %v1495 = vunpack.c.l.b16 %v1378
        %v1496 = vunpack.c.l.b16 %v1381
        %v1497 = vunpack.c.l.b16 %v1385
        %v1498 = vunpack.c.l.b16 %v1388
        %v1499 = vunpack.c.l.b16 %v1392
        %v1500 = vunpack.c.l.b16 %v1395
        %v1501 = vunpack.c.l.b16 %v1399
        %v1502 = vunpack.c.l.b16 %v1402
        %v1503 = vunpack.c.l.b16 %v1406
        %v1504 = vunpack.c.l.b16 %v1409
        %v1505 = vunpack.c.l.b16 %v1413
        %v1506 = vunpack.c.l.b16 %v1416
        %v1507 = vunpack.c.l.b16 %v1420
        %v1508 = vunpack.c.l.b16 %v1423
        %v1509 = vunpack.c.l.b16 %v1427
        %v1510 = vunpack.c.l.b16 %v1430
        %v1511 = vunpack.c.l.b16 %v1434
        %v1512 = vunpack.c.l.b16 %v1437
        %v1513 = vunpack.c.l.b16 %v1441
        %v1514 = vunpack.c.l.b16 %v1444
        %v1515 = vunpack.c.l.b16 %v1448
        %v1516 = vunpack.c.l.b16 %v1451
        %v1517 = vpack.c.b16 %v1486, %v1485
        %v1518 = vpack.c.b16 %v1488, %v1487
        %v1519 = vpack.c.b16 %v1490, %v1489
        %v1520 = vpack.c.b16 %v1492, %v1491
        %v1521 = vpack.c.b16 %v1494, %v1493
        %v1522 = vpack.c.b16 %v1496, %v1495
        %v1523 = vpack.c.b16 %v1498, %v1497
        %v1524 = vpack.c.b16 %v1500, %v1499
        %v1525 = vpack.c.b16 %v1502, %v1501
        %v1526 = vpack.c.b16 %v1504, %v1503
        %v1527 = vpack.c.b16 %v1506, %v1505
        %v1528 = vpack.c.b16 %v1508, %v1507
        %v1529 = vpack.c.b16 %v1510, %v1509
        %v1530 = vpack.c.b16 %v1512, %v1511
        %v1531 = vpack.c.b16 %v1514, %v1513
        %v1532 = vpack.c.b16 %v1516, %v1515
        %v1581 = vunpack.c.l.b16 %v1453
        %v1582 = vunpack.c.l.b16 %v1454
        %v1583 = vunpack.c.l.b16 %v1455
        %v1584 = vunpack.c.l.b16 %v1456
        %v1585 = vunpack.c.l.b16 %v1457
        %v1586 = vunpack.c.l.b16 %v1458
        %v1587 = vunpack.c.l.b16 %v1459
        %v1588 = vunpack.c.l.b16 %v1460
        %v1589 = vunpack.c.l.b16 %v1461
        %v1590 = vunpack.c.l.b16 %v1462
        %v1591 = vunpack.c.l.b16 %v1463
        %v1592 = vunpack.c.l.b16 %v1464
        %v1593 = vunpack.c.l.b16 %v1465
        %v1594 = vunpack.c.l.b16 %v1466
        %v1595 = vunpack.c.l.b16 %v1467
        %v1596 = vunpack.c.l.b16 %v1468
        %v1597 = vunpack.c.l.b16 %v1469
        %v1598 = vunpack.c.l.b16 %v1470
        %v1599 = vunpack.c.l.b16 %v1471
        %v1600 = vunpack.c.l.b16 %v1472
        %v1601 = vunpack.c.l.b16 %v1473
        %v1602 = vunpack.c.l.b16 %v1474
        %v1603 = vunpack.c.l.b16 %v1475
        %v1604 = vunpack.c.l.b16 %v1476
        %v1605 = vunpack.c.l.b16 %v1477
        %v1606 = vunpack.c.l.b16 %v1478
        %v1607 = vunpack.c.l.b16 %v1479
        %v1608 = vunpack.c.l.b16 %v1480
        %v1609 = vunpack.c.l.b16 %v1481
        %v1610 = vunpack.c.l.b16 %v1482
        %v1611 = vunpack.c.l.b16 %v1483
        %v1612 = vunpack.c.l.b16 %v1484
        %v1613 = vpack.c.b16 %v1582, %v1581
        %v1614 = vpack.c.b16 %v1584, %v1583
        %v1615 = vpack.c.b16 %v1586, %v1585
        %v1616 = vpack.c.b16 %v1588, %v1587
        %v1617 = vpack.c.b16 %v1590, %v1589
        %v1618 = vpack.c.b16 %v1592, %v1591
        %v1619 = vpack.c.b16 %v1594, %v1593
        %v1620 = vpack.c.b16 %v1596, %v1595
        %v1621 = vpack.c.b16 %v1598, %v1597
        %v1622 = vpack.c.b16 %v1600, %v1599
        %v1623 = vpack.c.b16 %v1602, %v1601
        %v1624 = vpack.c.b16 %v1604, %v1603
        %v1625 = vpack.c.b16 %v1606, %v1605
        %v1626 = vpack.c.b16 %v1608, %v1607
        %v1627 = vpack.c.b16 %v1610, %v1609
        %v1628 = vpack.c.b16 %v1612, %v1611
        %v1645 = vld [vmem:[%s1 + $0x80] sm:$0xf]
        %v1646 = vld [vmem:[%s1 + $0x84] sm:$0xf]
        %v1647 = vld [vmem:[%s1 + $0x88] sm:$0xf]
        %v1648 = vld [vmem:[%s1 + $0x8c] sm:$0xf]
        %v1649 = vld [vmem:[%s1 + $0x90] sm:$0xf]
        %v1650 = vld [vmem:[%s1 + $0x94] sm:$0xf]
        %v1651 = vld [vmem:[%s1 + $0x98] sm:$0xf]
        %v1652 = vld [vmem:[%s1 + $0x9c] sm:$0xf]
        %v1653 = vld [vmem:[%s1 + $0xa0] sm:$0xf]
        %v1654 = vld [vmem:[%s1 + $0xa4] sm:$0xf]
        %v1655 = vld [vmem:[%s1 + $0xa8] sm:$0xf]
        %v1656 = vld [vmem:[%s1 + $0xac] sm:$0xf]
        %v1657 = vld [vmem:[%s1 + $0xb0] sm:$0xf]
        %v1658 = vld [vmem:[%s1 + $0xb4] sm:$0xf]
        %v1659 = vld [vmem:[%s1 + $0xb8] sm:$0xf]
        %v1660 = vld [vmem:[%s1 + $0xbc] sm:$0xf]
        %v1661 = vld [vmem:[%s1 + $0xc0] sm:$0xf]
        %v1662 = vld [vmem:[%s1 + $0xc4] sm:$0xf]
        %v1663 = vld [vmem:[%s1 + $0xc8] sm:$0xf]
        %v1664 = vld [vmem:[%s1 + $0xcc] sm:$0xf]
        %v1665 = vld [vmem:[%s1 + $0xd0] sm:$0xf]
        %v1666 = vld [vmem:[%s1 + $0xd4] sm:$0xf]
        %v1667 = vld [vmem:[%s1 + $0xd8] sm:$0xf]
        %v1668 = vld [vmem:[%s1 + $0xdc] sm:$0xf]
        %v1669 = vld [vmem:[%s1 + $0xe0] sm:$0xf]
        %v1670 = vld [vmem:[%s1 + $0xe4] sm:$0xf]
        %v1671 = vld [vmem:[%s1 + $0xe8] sm:$0xf]
        %v1672 = vld [vmem:[%s1 + $0xec] sm:$0xf]
        %v1673 = vld [vmem:[%s1 + $0xf0] sm:$0xf]
        %v1674 = vld [vmem:[%s1 + $0xf4] sm:$0xf]
        %v1675 = vld [vmem:[%s1 + $0xf8] sm:$0xf]
        %v1676 = vld [vmem:[%s1 + $0xfc] sm:$0xf]
        %v1709 = vunpack.c.l.b16 %v1645
        %v1710 = vunpack.c.l.b16 %v1646
        %v1711 = vunpack.c.l.b16 %v1647
        %v1712 = vunpack.c.l.b16 %v1648
        %v1713 = vunpack.c.l.b16 %v1649
        %v1714 = vunpack.c.l.b16 %v1650
        %v1715 = vunpack.c.l.b16 %v1651
        %v1716 = vunpack.c.l.b16 %v1652
        %v1717 = vunpack.c.l.b16 %v1653
        %v1718 = vunpack.c.l.b16 %v1654
        %v1719 = vunpack.c.l.b16 %v1655
        %v1720 = vunpack.c.l.b16 %v1656
        %v1721 = vunpack.c.l.b16 %v1657
        %v1722 = vunpack.c.l.b16 %v1658
        %v1723 = vunpack.c.l.b16 %v1659
        %v1724 = vunpack.c.l.b16 %v1660
        %v1725 = vunpack.c.l.b16 %v1661
        %v1726 = vunpack.c.l.b16 %v1662
        %v1727 = vunpack.c.l.b16 %v1663
        %v1728 = vunpack.c.l.b16 %v1664
        %v1729 = vunpack.c.l.b16 %v1665
        %v1730 = vunpack.c.l.b16 %v1666
        %v1731 = vunpack.c.l.b16 %v1667
        %v1732 = vunpack.c.l.b16 %v1668
        %v1733 = vunpack.c.l.b16 %v1669
        %v1734 = vunpack.c.l.b16 %v1670
        %v1735 = vunpack.c.l.b16 %v1671
        %v1736 = vunpack.c.l.b16 %v1672
        %v1737 = vunpack.c.l.b16 %v1673
        %v1738 = vunpack.c.l.b16 %v1674
        %v1739 = vunpack.c.l.b16 %v1675
        %v1740 = vunpack.c.l.b16 %v1676
        %v1741 = vpack.c.b16 %v1710, %v1709
        %v1742 = vpack.c.b16 %v1712, %v1711
        %v1743 = vpack.c.b16 %v1714, %v1713
        %v1744 = vpack.c.b16 %v1716, %v1715
        %v1745 = vpack.c.b16 %v1718, %v1717
        %v1746 = vpack.c.b16 %v1720, %v1719
        %v1747 = vpack.c.b16 %v1722, %v1721
        %v1748 = vpack.c.b16 %v1724, %v1723
        %v1749 = vpack.c.b16 %v1726, %v1725
        %v1750 = vpack.c.b16 %v1728, %v1727
        %v1751 = vpack.c.b16 %v1730, %v1729
        %v1752 = vpack.c.b16 %v1732, %v1731
        %v1753 = vpack.c.b16 %v1734, %v1733
        %v1754 = vpack.c.b16 %v1736, %v1735
        %v1755 = vpack.c.b16 %v1738, %v1737
        %v1756 = vpack.c.b16 %v1740, %v1739
        %1773 = vmatprep.subr.bf16.mxu0 0
        %1774 = vmatpush1.bf16.msra.mxu0 %v1741
        %1775 = vmatprep.subr.bf16.mxu0 0
        %1776 = vmatpush1.bf16.msra.mxu0 %v1742
        %1777 = vmatprep.subr.bf16.mxu0 0
        %1778 = vmatpush1.bf16.msra.mxu0 %v1743
        %1779 = vmatprep.subr.bf16.mxu0 0
        %1780 = vmatpush1.bf16.msra.mxu0 %v1744
        %1781 = vmatprep.subr.bf16.mxu0 0
        %1782 = vmatpush1.bf16.msra.mxu0 %v1745
        %1783 = vmatprep.subr.bf16.mxu0 0
        %1784 = vmatpush1.bf16.msra.mxu0 %v1746
        %1785 = vmatprep.subr.bf16.mxu0 0
        %1786 = vmatpush1.bf16.msra.mxu0 %v1747
        %1787 = vmatprep.subr.bf16.mxu0 0
        %1788 = vmatpush1.bf16.msra.mxu0 %v1748
        %1789 = vmatprep.subr.bf16.mxu0 0
        %1790 = vmatpush1.bf16.msra.mxu0 %v1749
        %1791 = vmatprep.subr.bf16.mxu0 0
        %1792 = vmatpush1.bf16.msra.mxu0 %v1750
        %1793 = vmatprep.subr.bf16.mxu0 0
        %1794 = vmatpush1.bf16.msra.mxu0 %v1751
        %1795 = vmatprep.subr.bf16.mxu0 0
        %1796 = vmatpush1.bf16.msra.mxu0 %v1752
        %1797 = vmatprep.subr.bf16.mxu0 0
        %1798 = vmatpush1.bf16.msra.mxu0 %v1753
        %1799 = vmatprep.subr.bf16.mxu0 0
        %1800 = vmatpush1.bf16.msra.mxu0 %v1754
        %1801 = vmatprep.subr.bf16.mxu0 0
        %1802 = vmatpush1.bf16.msra.mxu0 %v1755
        %1803 = vmatprep.subr.bf16.mxu0 0
        %1804 = vmatpush1.bf16.msra.mxu0 %v1756
        %1805 = vmatprep.mubr.bf16.mxu0 %v1613
        %1806 = vmatmul.mubr.bf16.gmra.mrb[0].mxu0 %v1517
        %v1807 = vpop.f32.mrb[0].mxu0
        %v1808 = vadd.f32 0.0, %v1807
        %v1809 = vpop.f32.mrb[0].mxu0
        %v1810 = vpop.f32.mrb[0].mxu0
        %v1811 = vadd.f32 0.0, %v1810
        %v1812 = vpop.f32.mrb[0].mxu0
        %1813 = vmatprep.mubr.bf16.mxu0 %v1614
        %1814 = vmatmul.mubr.bf16.gmra.mrb[0].mxu0 %v1518
        %v1815 = vpop.f32.mrb[0].mxu0
        %v1816 = vadd.f32 0.0, %v1815
        %v1817 = vpop.f32.mrb[0].mxu0
        %v1818 = vpop.f32.mrb[0].mxu0
        %v1819 = vadd.f32 0.0, %v1818
        %v1820 = vpop.f32.mrb[0].mxu0
        %1821 = vmatprep.mubr.bf16.mxu0 %v1615
        %1822 = vmatmul.mubr.bf16.gmra.mrb[0].mxu0 %v1519
        %v1823 = vpop.f32.mrb[0].mxu0
        %v1824 = vadd.f32 0.0, %v1823
        %v1825 = vpop.f32.mrb[0].mxu0
        %v1826 = vpop.f32.mrb[0].mxu0
        %v1827 = vadd.f32 0.0, %v1826
        %v1828 = vpop.f32.mrb[0].mxu0
        %1829 = vmatprep.mubr.bf16.mxu0 %v1616
        %1830 = vmatmul.mubr.bf16.gmra.mrb[0].mxu0 %v1520
        %v1831 = vpop.f32.mrb[0].mxu0
        %v1832 = vadd.f32 0.0, %v1831
        %v1833 = vpop.f32.mrb[0].mxu0
        %v1834 = vpop.f32.mrb[0].mxu0
        %v1835 = vadd.f32 0.0, %v1834
        %v1836 = vpop.f32.mrb[0].mxu0
        %1837 = vmatprep.mubr.bf16.mxu0 %v1617
        %1838 = vmatmul.mubr.bf16.gmra.mrb[0].mxu0 %v1521
        %v1839 = vpop.f32.mrb[0].mxu0
        %v1840 = vadd.f32 0.0, %v1839
        %v1841 = vpop.f32.mrb[0].mxu0
        %v1842 = vpop.f32.mrb[0].mxu0
        %v1843 = vadd.f32 0.0, %v1842
        %v1844 = vpop.f32.mrb[0].mxu0
        %1845 = vmatprep.mubr.bf16.mxu0 %v1618
        %1846 = vmatmul.mubr.bf16.gmra.mrb[0].mxu0 %v1522
        %v1847 = vpop.f32.mrb[0].mxu0
        %v1848 = vadd.f32 0.0, %v1847
        %v1849 = vpop.f32.mrb[0].mxu0
        %v1850 = vpop.f32.mrb[0].mxu0
        %v1851 = vadd.f32 0.0, %v1850
        %v1852 = vpop.f32.mrb[0].mxu0
        %1853 = vmatprep.mubr.bf16.mxu0 %v1619
        %1854 = vmatmul.mubr.bf16.gmra.mrb[0].mxu0 %v1523
        %v1855 = vpop.f32.mrb[0].mxu0
        %v1856 = vadd.f32 0.0, %v1855
        %v1857 = vpop.f32.mrb[0].mxu0
        %v1858 = vpop.f32.mrb[0].mxu0
        %v1859 = vadd.f32 0.0, %v1858
        %v1860 = vpop.f32.mrb[0].mxu0
        %1861 = vmatprep.mubr.bf16.mxu0 %v1620
        %1862 = vmatmul.mubr.bf16.gmra.mrb[0].mxu0 %v1524
        %v1863 = vpop.f32.mrb[0].mxu0
        %v1864 = vadd.f32 0.0, %v1863
        %v1865 = vpop.f32.mrb[0].mxu0
        %v1866 = vpop.f32.mrb[0].mxu0
        %v1867 = vadd.f32 0.0, %v1866
        %v1868 = vpop.f32.mrb[0].mxu0
        %1869 = vmatprep.mubr.bf16.mxu0 %v1621
        %1870 = vmatmul.mubr.bf16.gmra.mrb[0].mxu0 %v1525
        %v1871 = vpop.f32.mrb[0].mxu0
        %v1872 = vadd.f32 0.0, %v1871
        %v1873 = vpop.f32.mrb[0].mxu0
        %v1874 = vpop.f32.mrb[0].mxu0
        %v1875 = vadd.f32 0.0, %v1874
        %v1876 = vpop.f32.mrb[0].mxu0
        %1877 = vmatprep.mubr.bf16.mxu0 %v1622
        %1878 = vmatmul.mubr.bf16.gmra.mrb[0].mxu0 %v1526
        %v1879 = vpop.f32.mrb[0].mxu0
        %v1880 = vadd.f32 0.0, %v1879
        %v1881 = vpop.f32.mrb[0].mxu0
        %v1882 = vpop.f32.mrb[0].mxu0
        %v1883 = vadd.f32 0.0, %v1882
        %v1884 = vpop.f32.mrb[0].mxu0
        %1885 = vmatprep.mubr.bf16.mxu0 %v1623
        %1886 = vmatmul.mubr.bf16.gmra.mrb[0].mxu0 %v1527
        %v1887 = vpop.f32.mrb[0].mxu0
        %v1888 = vadd.f32 0.0, %v1887
        %v1889 = vpop.f32.mrb[0].mxu0
        %v1890 = vpop.f32.mrb[0].mxu0
        %v1891 = vadd.f32 0.0, %v1890
        %v1892 = vpop.f32.mrb[0].mxu0
        %1893 = vmatprep.mubr.bf16.mxu0 %v1624
        %1894 = vmatmul.mubr.bf16.gmra.mrb[0].mxu0 %v1528
        %v1895 = vpop.f32.mrb[0].mxu0
        %v1896 = vadd.f32 0.0, %v1895
        %v1897 = vpop.f32.mrb[0].mxu0
        %v1898 = vpop.f32.mrb[0].mxu0
        %v1899 = vadd.f32 0.0, %v1898
        %v1900 = vpop.f32.mrb[0].mxu0
        %1901 = vmatprep.mubr.bf16.mxu0 %v1625
        %1902 = vmatmul.mubr.bf16.gmra.mrb[0].mxu0 %v1529
        %v1903 = vpop.f32.mrb[0].mxu0
        %v1904 = vadd.f32 0.0, %v1903
        %v1905 = vpop.f32.mrb[0].mxu0
        %v1906 = vpop.f32.mrb[0].mxu0
        %v1907 = vadd.f32 0.0, %v1906
        %v1908 = vpop.f32.mrb[0].mxu0
        %1909 = vmatprep.mubr.bf16.mxu0 %v1626
        %1910 = vmatmul.mubr.bf16.gmra.mrb[0].mxu0 %v1530
        %v1911 = vpop.f32.mrb[0].mxu0
        %v1912 = vadd.f32 0.0, %v1911
        %v1913 = vpop.f32.mrb[0].mxu0
        %v1914 = vpop.f32.mrb[0].mxu0
        %v1915 = vadd.f32 0.0, %v1914
        %v1916 = vpop.f32.mrb[0].mxu0
        %1917 = vmatprep.mubr.bf16.mxu0 %v1627
        %1918 = vmatmul.mubr.bf16.gmra.mrb[0].mxu0 %v1531
        %v1919 = vpop.f32.mrb[0].mxu0
        %v1920 = vadd.f32 0.0, %v1919
        %v1921 = vpop.f32.mrb[0].mxu0
        %v1922 = vpop.f32.mrb[0].mxu0
        %v1923 = vadd.f32 0.0, %v1922
        %v1924 = vpop.f32.mrb[0].mxu0
        %1925 = vmatprep.mubr.bf16.mxu0 %v1628
        %1926 = vmatmul.mubr.bf16.gmra.mrb[0].mxu0 %v1532
        %v1927 = vpop.f32.mrb[0].mxu0
        %v1928 = vadd.f32 0.0, %v1927
        %v1929 = vpop.f32.mrb[0].mxu0
        %v1930 = vpop.f32.mrb[0].mxu0
        %v1931 = vadd.f32 0.0, %v1930
        %v1932 = vpop.f32.mrb[0].mxu0
        %1933 = vdwg.mxu0
        %v1934 = vld [vmem:[#allocation2] sm:$0xff]
        %v1935 = vld [vmem:[#allocation2 + $0x8] sm:$0xff]
        %v1936 = vld [vmem:[#allocation2 + $0x10] sm:$0xff]
        %v1937 = vld [vmem:[#allocation2 + $0x18] sm:$0xff]
        %v1938 = vld [vmem:[#allocation2 + $0x20] sm:$0xff]
        %v1939 = vld [vmem:[#allocation2 + $0x28] sm:$0xff]
        %v1940 = vld [vmem:[#allocation2 + $0x30] sm:$0xff]
        %v1941 = vld [vmem:[#allocation2 + $0x38] sm:$0xff]
        %v1942 = vld [vmem:[#allocation2 + $0x40] sm:$0xff]
        %v1943 = vld [vmem:[#allocation2 + $0x48] sm:$0xff]
        %v1944 = vld [vmem:[#allocation2 + $0x50] sm:$0xff]
        %v1945 = vld [vmem:[#allocation2 + $0x58] sm:$0xff]
        %v1946 = vld [vmem:[#allocation2 + $0x60] sm:$0xff]
        %v1947 = vld [vmem:[#allocation2 + $0x68] sm:$0xff]
        %v1948 = vld [vmem:[#allocation2 + $0x70] sm:$0xff]
        %v1949 = vld [vmem:[#allocation2 + $0x78] sm:$0xff]
        %v1950 = vld [vmem:[#allocation2 + $0x80] sm:$0xff]
        %v1951 = vld [vmem:[#allocation2 + $0x88] sm:$0xff]
        %v1952 = vld [vmem:[#allocation2 + $0x90] sm:$0xff]
        %v1953 = vld [vmem:[#allocation2 + $0x98] sm:$0xff]
        %v1954 = vld [vmem:[#allocation2 + $0xa0] sm:$0xff]
        %v1955 = vld [vmem:[#allocation2 + $0xa8] sm:$0xff]
        %v1956 = vld [vmem:[#allocation2 + $0xb0] sm:$0xff]
        %v1957 = vld [vmem:[#allocation2 + $0xb8] sm:$0xff]
        %v1958 = vld [vmem:[#allocation2 + $0xc0] sm:$0xff]
        %v1959 = vld [vmem:[#allocation2 + $0xc8] sm:$0xff]
        %v1960 = vld [vmem:[#allocation2 + $0xd0] sm:$0xff]
        %v1961 = vld [vmem:[#allocation2 + $0xd8] sm:$0xff]
        %v1962 = vld [vmem:[#allocation2 + $0xe0] sm:$0xff]
        %v1963 = vld [vmem:[#allocation2 + $0xe8] sm:$0xff]
        %v1964 = vld [vmem:[#allocation2 + $0xf0] sm:$0xff]
        %v1965 = vld [vmem:[#allocation2 + $0xf8] sm:$0xff]
        %v1966 = vadd.f32 %v1934, %v1808
        %v1967 = vadd.f32 %v1935, %v1811
        %v1968 = vadd.f32 %v1936, %v1816
        %v1969 = vadd.f32 %v1937, %v1819
        %v1970 = vadd.f32 %v1938, %v1824
        %v1971 = vadd.f32 %v1939, %v1827
        %v1972 = vadd.f32 %v1940, %v1832
        %v1973 = vadd.f32 %v1941, %v1835
        %v1974 = vadd.f32 %v1942, %v1840
        %v1975 = vadd.f32 %v1943, %v1843
        %v1976 = vadd.f32 %v1944, %v1848
        %v1977 = vadd.f32 %v1945, %v1851
        %v1978 = vadd.f32 %v1946, %v1856
        %v1979 = vadd.f32 %v1947, %v1859
        %v1980 = vadd.f32 %v1948, %v1864
        %v1981 = vadd.f32 %v1949, %v1867
        %v1982 = vadd.f32 %v1950, %v1872
        %v1983 = vadd.f32 %v1951, %v1875
        %v1984 = vadd.f32 %v1952, %v1880
        %v1985 = vadd.f32 %v1953, %v1883
        %v1986 = vadd.f32 %v1954, %v1888
        %v1987 = vadd.f32 %v1955, %v1891
        %v1988 = vadd.f32 %v1956, %v1896
        %v1989 = vadd.f32 %v1957, %v1899
        %v1990 = vadd.f32 %v1958, %v1904
        %v1991 = vadd.f32 %v1959, %v1907
        %v1992 = vadd.f32 %v1960, %v1912
        %v1993 = vadd.f32 %v1961, %v1915
        %v1994 = vadd.f32 %v1962, %v1920
        %v1995 = vadd.f32 %v1963, %v1923
        %v1996 = vadd.f32 %v1964, %v1928
        %v1997 = vadd.f32 %v1965, %v1931
        %1998 = vst [vmem:[#allocation2] sm:$0xff] %v1966
        %1999 = vst [vmem:[#allocation2 + $0x8] sm:$0xff] %v1967
        %2000 = vst [vmem:[#allocation2 + $0x10] sm:$0xff] %v1968
        %2001 = vst [vmem:[#allocation2 + $0x18] sm:$0xff] %v1969
        %2002 = vst [vmem:[#allocation2 + $0x20] sm:$0xff] %v1970
        %2003 = vst [vmem:[#allocation2 + $0x28] sm:$0xff] %v1971
        %2004 = vst [vmem:[#allocation2 + $0x30] sm:$0xff] %v1972
        %2005 = vst [vmem:[#allocation2 + $0x38] sm:$0xff] %v1973
        %2006 = vst [vmem:[#allocation2 + $0x40] sm:$0xff] %v1974
        %2007 = vst [vmem:[#allocation2 + $0x48] sm:$0xff] %v1975
        %2008 = vst [vmem:[#allocation2 + $0x50] sm:$0xff] %v1976
        %2009 = vst [vmem:[#allocation2 + $0x58] sm:$0xff] %v1977
        %2010 = vst [vmem:[#allocation2 + $0x60] sm:$0xff] %v1978
        %2011 = vst [vmem:[#allocation2 + $0x68] sm:$0xff] %v1979
        %2012 = vst [vmem:[#allocation2 + $0x70] sm:$0xff] %v1980
        %2013 = vst [vmem:[#allocation2 + $0x78] sm:$0xff] %v1981
        %2014 = vst [vmem:[#allocation2 + $0x80] sm:$0xff] %v1982
        %2015 = vst [vmem:[#allocation2 + $0x88] sm:$0xff] %v1983
        %2016 = vst [vmem:[#allocation2 + $0x90] sm:$0xff] %v1984
        %2017 = vst [vmem:[#allocation2 + $0x98] sm:$0xff] %v1985
        %2018 = vst [vmem:[#allocation2 + $0xa0] sm:$0xff] %v1986
        %2019 = vst [vmem:[#allocation2 + $0xa8] sm:$0xff] %v1987
        %2020 = vst [vmem:[#allocation2 + $0xb0] sm:$0xff] %v1988
        %2021 = vst [vmem:[#allocation2 + $0xb8] sm:$0xff] %v1989
        %2022 = vst [vmem:[#allocation2 + $0xc0] sm:$0xff] %v1990
        %2023 = vst [vmem:[#allocation2 + $0xc8] sm:$0xff] %v1991
        %2024 = vst [vmem:[#allocation2 + $0xd0] sm:$0xff] %v1992
        %2025 = vst [vmem:[#allocation2 + $0xd8] sm:$0xff] %v1993
        %2026 = vst [vmem:[#allocation2 + $0xe0] sm:$0xff] %v1994
        %2027 = vst [vmem:[#allocation2 + $0xe8] sm:$0xff] %v1995
        %2028 = vst [vmem:[#allocation2 + $0xf0] sm:$0xff] %v1996
        %2029 = vst [vmem:[#allocation2 + $0xf8] sm:$0xff] %v1997
        %v2030 = vld [vmem:[%s1452] sm:$0xf]
        %v2031 = vld [vmem:[%s1452 + $0x4] sm:$0xf]
        %v2032 = vld [vmem:[%s1452 + $0x8] sm:$0x1]
        %v2033 = vld [vmem:[%s1452 + $0xc] sm:$0xf]
        %v2034 = vld [vmem:[%s1452 + $0x10] sm:$0xf]
        %v2035 = vld [vmem:[%s1452 + $0x14] sm:$0x1]
        %v2036 = vld [vmem:[%s1452 + $0x18] sm:$0xf]
        %v2037 = vld [vmem:[%s1452 + $0x1c] sm:$0xf]
        %v2038 = vld [vmem:[%s1452 + $0x20] sm:$0x1]
        %v2039 = vld [vmem:[%s1452 + $0x24] sm:$0xf]
        %v2040 = vld [vmem:[%s1452 + $0x28] sm:$0xf]
        %v2041 = vld [vmem:[%s1452 + $0x2c] sm:$0x1]
        %v2042 = vld [vmem:[%s1452 + $0x30] sm:$0xf]
        %v2043 = vld [vmem:[%s1452 + $0x34] sm:$0xf]
        %v2044 = vld [vmem:[%s1452 + $0x38] sm:$0x1]
        %v2045 = vld [vmem:[%s1452 + $0x3c] sm:$0xf]
        %v2046 = vld [vmem:[%s1452 + $0x40] sm:$0xf]
        %v2047 = vld [vmem:[%s1452 + $0x44] sm:$0x1]
        %v2048 = vld [vmem:[%s1452 + $0x48] sm:$0xf]
        %v2049 = vld [vmem:[%s1452 + $0x4c] sm:$0xf]
        %v2050 = vld [vmem:[%s1452 + $0x50] sm:$0x1]
        %v2051 = vld [vmem:[%s1452 + $0x54] sm:$0xf]
        %v2052 = vld [vmem:[%s1452 + $0x58] sm:$0xf]
        %v2053 = vld [vmem:[%s1452 + $0x5c] sm:$0x1]
        %v2054 = vld [vmem:[%s1452 + $0x60] sm:$0xf]
        %v2055 = vld [vmem:[%s1452 + $0x64] sm:$0xf]
        %v2056 = vld [vmem:[%s1452 + $0x68] sm:$0x1]
        %v2057 = vld [vmem:[%s1452 + $0x6c] sm:$0xf]
        %v2058 = vld [vmem:[%s1452 + $0x70] sm:$0xf]
        %v2059 = vld [vmem:[%s1452 + $0x74] sm:$0x1]
        %v2060 = vld [vmem:[%s1452 + $0x78] sm:$0xf]
        %v2061 = vld [vmem:[%s1452 + $0x7c] sm:$0xf]
        %v2062 = vld [vmem:[%s1452 + $0x80] sm:$0x1]
        %v2063 = vld [vmem:[%s1452 + $0x84] sm:$0xf]
        %v2064 = vld [vmem:[%s1452 + $0x88] sm:$0xf]
        %v2065 = vld [vmem:[%s1452 + $0x8c] sm:$0x1]
        %v2066 = vld [vmem:[%s1452 + $0x90] sm:$0xf]
        %v2067 = vld [vmem:[%s1452 + $0x94] sm:$0xf]
        %v2068 = vld [vmem:[%s1452 + $0x98] sm:$0x1]
        %v2069 = vld [vmem:[%s1452 + $0x9c] sm:$0xf]
        %v2070 = vld [vmem:[%s1452 + $0xa0] sm:$0xf]
        %v2071 = vld [vmem:[%s1452 + $0xa4] sm:$0x1]
        %v2072 = vld [vmem:[%s1452 + $0xa8] sm:$0xf]
        %v2073 = vld [vmem:[%s1452 + $0xac] sm:$0xf]
        %v2074 = vld [vmem:[%s1452 + $0xb0] sm:$0x1]
        %v2075 = vld [vmem:[%s1452 + $0xb4] sm:$0xf]
        %v2076 = vld [vmem:[%s1452 + $0xb8] sm:$0xf]
        %v2077 = vld [vmem:[%s1452 + $0xbc] sm:$0x1]
        %v2079 = vshrl.u32 %v2030, 16
        %v2081 = vrot.slane %v2079, 4
        %v2082 = vshll.u32 %v2030, 16
        %v2084 = vrot.slane %v2082, 5
        %v2085 = vor.u32 %v2081, %v2084
        %v2086 = vrot.slane %v2085, 4
        %v2088 = vshll.u32 %v2031, 16
        %v2090 = vrot.slane %v2088, 5
        %v2091 = vsel %vm375, %v2086, %v2090
        %v2092 = vshrl.u32 %v2031, 16
        %v2094 = vrot.slane %v2092, 4
        %v2095 = vor.u32 %v2094, %v2090
        %v2096 = vrot.slane %v2095, 4
        %v2098 = vshll.u32 %v2032, 16
        %v2100 = vrot.slane %v2098, 5
        %v2101 = vsel %vm375, %v2096, %v2100
        %v2103 = vshrl.u32 %v2033, 16
        %v2105 = vrot.slane %v2103, 4
        %v2106 = vshll.u32 %v2033, 16
        %v2108 = vrot.slane %v2106, 5
        %v2109 = vor.u32 %v2105, %v2108
        %v2110 = vrot.slane %v2109, 4
        %v2112 = vshll.u32 %v2034, 16
        %v2114 = vrot.slane %v2112, 5
        %v2115 = vsel %vm375, %v2110, %v2114
        %v2116 = vshrl.u32 %v2034, 16
        %v2118 = vrot.slane %v2116, 4
        %v2119 = vor.u32 %v2118, %v2114
        %v2120 = vrot.slane %v2119, 4
        %v2122 = vshll.u32 %v2035, 16
        %v2124 = vrot.slane %v2122, 5
        %v2125 = vsel %vm375, %v2120, %v2124
        %v2127 = vshrl.u32 %v2036, 16
        %v2129 = vrot.slane %v2127, 4
        %v2130 = vshll.u32 %v2036, 16
        %v2132 = vrot.slane %v2130, 5
        %v2133 = vor.u32 %v2129, %v2132
        %v2134 = vrot.slane %v2133, 4
        %v2136 = vshll.u32 %v2037, 16
        %v2138 = vrot.slane %v2136, 5
        %v2139 = vsel %vm375, %v2134, %v2138
        %v2140 = vshrl.u32 %v2037, 16
        %v2142 = vrot.slane %v2140, 4
        %v2143 = vor.u32 %v2142, %v2138
        %v2144 = vrot.slane %v2143, 4
        %v2146 = vshll.u32 %v2038, 16
        %v2148 = vrot.slane %v2146, 5
        %v2149 = vsel %vm375, %v2144, %v2148
        %v2151 = vshrl.u32 %v2039, 16
        %v2153 = vrot.slane %v2151, 4
        %v2154 = vshll.u32 %v2039, 16
        %v2156 = vrot.slane %v2154, 5
        %v2157 = vor.u32 %v2153, %v2156
        %v2158 = vrot.slane %v2157, 4
        %v2160 = vshll.u32 %v2040, 16
        %v2162 = vrot.slane %v2160, 5
        %v2163 = vsel %vm375, %v2158, %v2162
        %v2164 = vshrl.u32 %v2040, 16
        %v2166 = vrot.slane %v2164, 4
        %v2167 = vor.u32 %v2166, %v2162
        %v2168 = vrot.slane %v2167, 4
        %v2170 = vshll.u32 %v2041, 16
        %v2172 = vrot.slane %v2170, 5
        %v2173 = vsel %vm375, %v2168, %v2172
        %v2175 = vshrl.u32 %v2042, 16
        %v2177 = vrot.slane %v2175, 4
        %v2178 = vshll.u32 %v2042, 16
        %v2180 = vrot.slane %v2178, 5
        %v2181 = vor.u32 %v2177, %v2180
        %v2182 = vrot.slane %v2181, 4
        %v2184 = vshll.u32 %v2043, 16
        %v2186 = vrot.slane %v2184, 5
        %v2187 = vsel %vm375, %v2182, %v2186
        %v2188 = vshrl.u32 %v2043, 16
        %v2190 = vrot.slane %v2188, 4
        %v2191 = vor.u32 %v2190, %v2186
        %v2192 = vrot.slane %v2191, 4
        %v2194 = vshll.u32 %v2044, 16
        %v2196 = vrot.slane %v2194, 5
        %v2197 = vsel %vm375, %v2192, %v2196
        %v2199 = vshrl.u32 %v2045, 16
        %v2201 = vrot.slane %v2199, 4
        %v2202 = vshll.u32 %v2045, 16
        %v2204 = vrot.slane %v2202, 5
        %v2205 = vor.u32 %v2201, %v2204
        %v2206 = vrot.slane %v2205, 4
        %v2208 = vshll.u32 %v2046, 16
        %v2210 = vrot.slane %v2208, 5
        %v2211 = vsel %vm375, %v2206, %v2210
        %v2212 = vshrl.u32 %v2046, 16
        %v2214 = vrot.slane %v2212, 4
        %v2215 = vor.u32 %v2214, %v2210
        %v2216 = vrot.slane %v2215, 4
        %v2218 = vshll.u32 %v2047, 16
        %v2220 = vrot.slane %v2218, 5
        %v2221 = vsel %vm375, %v2216, %v2220
        %v2223 = vshrl.u32 %v2048, 16
        %v2225 = vrot.slane %v2223, 4
        %v2226 = vshll.u32 %v2048, 16
        %v2228 = vrot.slane %v2226, 5
        %v2229 = vor.u32 %v2225, %v2228
        %v2230 = vrot.slane %v2229, 4
        %v2232 = vshll.u32 %v2049, 16
        %v2234 = vrot.slane %v2232, 5
        %v2235 = vsel %vm375, %v2230, %v2234
        %v2236 = vshrl.u32 %v2049, 16
        %v2238 = vrot.slane %v2236, 4
        %v2239 = vor.u32 %v2238, %v2234
        %v2240 = vrot.slane %v2239, 4
        %v2242 = vshll.u32 %v2050, 16
        %v2244 = vrot.slane %v2242, 5
        %v2245 = vsel %vm375, %v2240, %v2244
        %v2247 = vshrl.u32 %v2051, 16
        %v2249 = vrot.slane %v2247, 4
        %v2250 = vshll.u32 %v2051, 16
        %v2252 = vrot.slane %v2250, 5
        %v2253 = vor.u32 %v2249, %v2252
        %v2254 = vrot.slane %v2253, 4
        %v2256 = vshll.u32 %v2052, 16
        %v2258 = vrot.slane %v2256, 5
        %v2259 = vsel %vm375, %v2254, %v2258
        %v2260 = vshrl.u32 %v2052, 16
        %v2262 = vrot.slane %v2260, 4
        %v2263 = vor.u32 %v2262, %v2258
        %v2264 = vrot.slane %v2263, 4
        %v2266 = vshll.u32 %v2053, 16
        %v2268 = vrot.slane %v2266, 5
        %v2269 = vsel %vm375, %v2264, %v2268
        %v2271 = vshrl.u32 %v2054, 16
        %v2273 = vrot.slane %v2271, 4
        %v2274 = vshll.u32 %v2054, 16
        %v2276 = vrot.slane %v2274, 5
        %v2277 = vor.u32 %v2273, %v2276
        %v2278 = vrot.slane %v2277, 4
        %v2280 = vshll.u32 %v2055, 16
        %v2282 = vrot.slane %v2280, 5
        %v2283 = vsel %vm375, %v2278, %v2282
        %v2284 = vshrl.u32 %v2055, 16
        %v2286 = vrot.slane %v2284, 4
        %v2287 = vor.u32 %v2286, %v2282
        %v2288 = vrot.slane %v2287, 4
        %v2290 = vshll.u32 %v2056, 16
        %v2292 = vrot.slane %v2290, 5
        %v2293 = vsel %vm375, %v2288, %v2292
        %v2295 = vshrl.u32 %v2057, 16
        %v2297 = vrot.slane %v2295, 4
        %v2298 = vshll.u32 %v2057, 16
        %v2300 = vrot.slane %v2298, 5
        %v2301 = vor.u32 %v2297, %v2300
        %v2302 = vrot.slane %v2301, 4
        %v2304 = vshll.u32 %v2058, 16
        %v2306 = vrot.slane %v2304, 5
        %v2307 = vsel %vm375, %v2302, %v2306
        %v2308 = vshrl.u32 %v2058, 16
        %v2310 = vrot.slane %v2308, 4
        %v2311 = vor.u32 %v2310, %v2306
        %v2312 = vrot.slane %v2311, 4
        %v2314 = vshll.u32 %v2059, 16
        %v2316 = vrot.slane %v2314, 5
        %v2317 = vsel %vm375, %v2312, %v2316
        %v2319 = vshrl.u32 %v2060, 16
        %v2321 = vrot.slane %v2319, 4
        %v2322 = vshll.u32 %v2060, 16
        %v2324 = vrot.slane %v2322, 5
        %v2325 = vor.u32 %v2321, %v2324
        %v2326 = vrot.slane %v2325, 4
        %v2328 = vshll.u32 %v2061, 16
        %v2330 = vrot.slane %v2328, 5
        %v2331 = vsel %vm375, %v2326, %v2330
        %v2332 = vshrl.u32 %v2061, 16
        %v2334 = vrot.slane %v2332, 4
        %v2335 = vor.u32 %v2334, %v2330
        %v2336 = vrot.slane %v2335, 4
        %v2338 = vshll.u32 %v2062, 16
        %v2340 = vrot.slane %v2338, 5
        %v2341 = vsel %vm375, %v2336, %v2340
        %v2343 = vshrl.u32 %v2063, 16
        %v2345 = vrot.slane %v2343, 4
        %v2346 = vshll.u32 %v2063, 16
        %v2348 = vrot.slane %v2346, 5
        %v2349 = vor.u32 %v2345, %v2348
        %v2350 = vrot.slane %v2349, 4
        %v2352 = vshll.u32 %v2064, 16
        %v2354 = vrot.slane %v2352, 5
        %v2355 = vsel %vm375, %v2350, %v2354
        %v2356 = vshrl.u32 %v2064, 16
        %v2358 = vrot.slane %v2356, 4
        %v2359 = vor.u32 %v2358, %v2354
        %v2360 = vrot.slane %v2359, 4
        %v2362 = vshll.u32 %v2065, 16
        %v2364 = vrot.slane %v2362, 5
        %v2365 = vsel %vm375, %v2360, %v2364
        %v2367 = vshrl.u32 %v2066, 16
        %v2369 = vrot.slane %v2367, 4
        %v2370 = vshll.u32 %v2066, 16
        %v2372 = vrot.slane %v2370, 5
        %v2373 = vor.u32 %v2369, %v2372
        %v2374 = vrot.slane %v2373, 4
        %v2376 = vshll.u32 %v2067, 16
        %v2378 = vrot.slane %v2376, 5
        %v2379 = vsel %vm375, %v2374, %v2378
        %v2380 = vshrl.u32 %v2067, 16
        %v2382 = vrot.slane %v2380, 4
        %v2383 = vor.u32 %v2382, %v2378
        %v2384 = vrot.slane %v2383, 4
        %v2386 = vshll.u32 %v2068, 16
        %v2388 = vrot.slane %v2386, 5
        %v2389 = vsel %vm375, %v2384, %v2388
        %v2391 = vshrl.u32 %v2069, 16
        %v2393 = vrot.slane %v2391, 4
        %v2394 = vshll.u32 %v2069, 16
        %v2396 = vrot.slane %v2394, 5
        %v2397 = vor.u32 %v2393, %v2396
        %v2398 = vrot.slane %v2397, 4
        %v2400 = vshll.u32 %v2070, 16
        %v2402 = vrot.slane %v2400, 5
        %v2403 = vsel %vm375, %v2398, %v2402
        %v2404 = vshrl.u32 %v2070, 16
        %v2406 = vrot.slane %v2404, 4
        %v2407 = vor.u32 %v2406, %v2402
        %v2408 = vrot.slane %v2407, 4
        %v2410 = vshll.u32 %v2071, 16
        %v2412 = vrot.slane %v2410, 5
        %v2413 = vsel %vm375, %v2408, %v2412
        %v2415 = vshrl.u32 %v2072, 16
        %v2417 = vrot.slane %v2415, 4
        %v2418 = vshll.u32 %v2072, 16
        %v2420 = vrot.slane %v2418, 5
        %v2421 = vor.u32 %v2417, %v2420
        %v2422 = vrot.slane %v2421, 4
        %v2424 = vshll.u32 %v2073, 16
        %v2426 = vrot.slane %v2424, 5
        %v2427 = vsel %vm375, %v2422, %v2426
        %v2428 = vshrl.u32 %v2073, 16
        %v2430 = vrot.slane %v2428, 4
        %v2431 = vor.u32 %v2430, %v2426
        %v2432 = vrot.slane %v2431, 4
        %v2434 = vshll.u32 %v2074, 16
        %v2436 = vrot.slane %v2434, 5
        %v2437 = vsel %vm375, %v2432, %v2436
        %v2439 = vshrl.u32 %v2075, 16
        %v2441 = vrot.slane %v2439, 4
        %v2442 = vshll.u32 %v2075, 16
        %v2444 = vrot.slane %v2442, 5
        %v2445 = vor.u32 %v2441, %v2444
        %v2446 = vrot.slane %v2445, 4
        %v2448 = vshll.u32 %v2076, 16
        %v2450 = vrot.slane %v2448, 5
        %v2451 = vsel %vm375, %v2446, %v2450
        %v2452 = vshrl.u32 %v2076, 16
        %v2454 = vrot.slane %v2452, 4
        %v2455 = vor.u32 %v2454, %v2450
        %v2456 = vrot.slane %v2455, 4
        %v2458 = vshll.u32 %v2077, 16
        %v2460 = vrot.slane %v2458, 5
        %v2461 = vsel %vm375, %v2456, %v2460
        %v2462 = vld [vmem:[%s1452] sm:$0xe]
        %v2463 = vld [vmem:[%s1452 + $0xc] sm:$0xe]
        %v2464 = vld [vmem:[%s1452 + $0x18] sm:$0xe]
        %v2465 = vld [vmem:[%s1452 + $0x24] sm:$0xe]
        %v2466 = vld [vmem:[%s1452 + $0x30] sm:$0xe]
        %v2467 = vld [vmem:[%s1452 + $0x3c] sm:$0xe]
        %v2468 = vld [vmem:[%s1452 + $0x48] sm:$0xe]
        %v2469 = vld [vmem:[%s1452 + $0x54] sm:$0xe]
        %v2470 = vld [vmem:[%s1452 + $0x60] sm:$0xe]
        %v2471 = vld [vmem:[%s1452 + $0x6c] sm:$0xe]
        %v2472 = vld [vmem:[%s1452 + $0x78] sm:$0xe]
        %v2473 = vld [vmem:[%s1452 + $0x84] sm:$0xe]
        %v2474 = vld [vmem:[%s1452 + $0x90] sm:$0xe]
        %v2475 = vld [vmem:[%s1452 + $0x9c] sm:$0xe]
        %v2476 = vld [vmem:[%s1452 + $0xa8] sm:$0xe]
        %v2477 = vld [vmem:[%s1452 + $0xb4] sm:$0xe]
        %v2526 = vrot.slane %v2462, 5
        %v2527 = vrot.slane %v2526, 4
        %v2528 = vrot.slane %v2031, 5
        %v2529 = vsel %vm1339, %v2527, %v2528
        %v2530 = vrot.slane %v2528, 4
        %v2531 = vrot.slane %v2032, 5
        %v2532 = vsel %vm1339, %v2530, %v2531
        %v2533 = vrot.slane %v2463, 5
        %v2534 = vrot.slane %v2533, 4
        %v2535 = vrot.slane %v2034, 5
        %v2536 = vsel %vm1339, %v2534, %v2535
        %v2537 = vrot.slane %v2535, 4
        %v2538 = vrot.slane %v2035, 5
        %v2539 = vsel %vm1339, %v2537, %v2538
        %v2540 = vrot.slane %v2464, 5
        %v2541 = vrot.slane %v2540, 4
        %v2542 = vrot.slane %v2037, 5
        %v2543 = vsel %vm1339, %v2541, %v2542
        %v2544 = vrot.slane %v2542, 4
        %v2545 = vrot.slane %v2038, 5
        %v2546 = vsel %vm1339, %v2544, %v2545
        %v2547 = vrot.slane %v2465, 5
        %v2548 = vrot.slane %v2547, 4
        %v2549 = vrot.slane %v2040, 5
        %v2550 = vsel %vm1339, %v2548, %v2549
        %v2551 = vrot.slane %v2549, 4
        %v2552 = vrot.slane %v2041, 5
        %v2553 = vsel %vm1339, %v2551, %v2552
        %v2554 = vrot.slane %v2466, 5
        %v2555 = vrot.slane %v2554, 4
        %v2556 = vrot.slane %v2043, 5
        %v2557 = vsel %vm1339, %v2555, %v2556
        %v2558 = vrot.slane %v2556, 4
        %v2559 = vrot.slane %v2044, 5
        %v2560 = vsel %vm1339, %v2558, %v2559
        %v2561 = vrot.slane %v2467, 5
        %v2562 = vrot.slane %v2561, 4
        %v2563 = vrot.slane %v2046, 5
        %v2564 = vsel %vm1339, %v2562, %v2563
        %v2565 = vrot.slane %v2563, 4
        %v2566 = vrot.slane %v2047, 5
        %v2567 = vsel %vm1339, %v2565, %v2566
        %v2568 = vrot.slane %v2468, 5
        %v2569 = vrot.slane %v2568, 4
        %v2570 = vrot.slane %v2049, 5
        %v2571 = vsel %vm1339, %v2569, %v2570
        %v2572 = vrot.slane %v2570, 4
        %v2573 = vrot.slane %v2050, 5
        %v2574 = vsel %vm1339, %v2572, %v2573
        %v2575 = vrot.slane %v2469, 5
        %v2576 = vrot.slane %v2575, 4
        %v2577 = vrot.slane %v2052, 5
        %v2578 = vsel %vm1339, %v2576, %v2577
        %v2579 = vrot.slane %v2577, 4
        %v2580 = vrot.slane %v2053, 5
        %v2581 = vsel %vm1339, %v2579, %v2580
        %v2582 = vrot.slane %v2470, 5
        %v2583 = vrot.slane %v2582, 4
        %v2584 = vrot.slane %v2055, 5
        %v2585 = vsel %vm1339, %v2583, %v2584
        %v2586 = vrot.slane %v2584, 4
        %v2587 = vrot.slane %v2056, 5
        %v2588 = vsel %vm1339, %v2586, %v2587
        %v2589 = vrot.slane %v2471, 5
        %v2590 = vrot.slane %v2589, 4
        %v2591 = vrot.slane %v2058, 5
        %v2592 = vsel %vm1339, %v2590, %v2591
        %v2593 = vrot.slane %v2591, 4
        %v2594 = vrot.slane %v2059, 5
        %v2595 = vsel %vm1339, %v2593, %v2594
        %v2596 = vrot.slane %v2472, 5
        %v2597 = vrot.slane %v2596, 4
        %v2598 = vrot.slane %v2061, 5
        %v2599 = vsel %vm1339, %v2597, %v2598
        %v2600 = vrot.slane %v2598, 4
        %v2601 = vrot.slane %v2062, 5
        %v2602 = vsel %vm1339, %v2600, %v2601
        %v2603 = vrot.slane %v2473, 5
        %v2604 = vrot.slane %v2603, 4
        %v2605 = vrot.slane %v2064, 5
        %v2606 = vsel %vm1339, %v2604, %v2605
        %v2607 = vrot.slane %v2605, 4
        %v2608 = vrot.slane %v2065, 5
        %v2609 = vsel %vm1339, %v2607, %v2608
        %v2610 = vrot.slane %v2474, 5
        %v2611 = vrot.slane %v2610, 4
        %v2612 = vrot.slane %v2067, 5
        %v2613 = vsel %vm1339, %v2611, %v2612
        %v2614 = vrot.slane %v2612, 4
        %v2615 = vrot.slane %v2068, 5
        %v2616 = vsel %vm1339, %v2614, %v2615
        %v2617 = vrot.slane %v2475, 5
        %v2618 = vrot.slane %v2617, 4
        %v2619 = vrot.slane %v2070, 5
        %v2620 = vsel %vm1339, %v2618, %v2619
        %v2621 = vrot.slane %v2619, 4
        %v2622 = vrot.slane %v2071, 5
        %v2623 = vsel %vm1339, %v2621, %v2622
        %v2624 = vrot.slane %v2476, 5
        %v2625 = vrot.slane %v2624, 4
        %v2626 = vrot.slane %v2073, 5
        %v2627 = vsel %vm1339, %v2625, %v2626
        %v2628 = vrot.slane %v2626, 4
        %v2629 = vrot.slane %v2074, 5
        %v2630 = vsel %vm1339, %v2628, %v2629
        %v2631 = vrot.slane %v2477, 5
        %v2632 = vrot.slane %v2631, 4
        %v2633 = vrot.slane %v2076, 5
        %v2634 = vsel %vm1339, %v2632, %v2633
        %v2635 = vrot.slane %v2633, 4
        %v2636 = vrot.slane %v2077, 5
        %v2637 = vsel %vm1339, %v2635, %v2636
        %v2638 = vunpack.c.l.b16 %v2091
        %v2639 = vunpack.c.l.b16 %v2101
        %v2640 = vunpack.c.l.b16 %v2115
        %v2641 = vunpack.c.l.b16 %v2125
        %v2642 = vunpack.c.l.b16 %v2139
        %v2643 = vunpack.c.l.b16 %v2149
        %v2644 = vunpack.c.l.b16 %v2163
        %v2645 = vunpack.c.l.b16 %v2173
        %v2646 = vunpack.c.l.b16 %v2187
        %v2647 = vunpack.c.l.b16 %v2197
        %v2648 = vunpack.c.l.b16 %v2211
        %v2649 = vunpack.c.l.b16 %v2221
        %v2650 = vunpack.c.l.b16 %v2235
        %v2651 = vunpack.c.l.b16 %v2245
        %v2652 = vunpack.c.l.b16 %v2259
        %v2653 = vunpack.c.l.b16 %v2269
        %v2654 = vunpack.c.l.b16 %v2283
        %v2655 = vunpack.c.l.b16 %v2293
        %v2656 = vunpack.c.l.b16 %v2307
        %v2657 = vunpack.c.l.b16 %v2317
        %v2658 = vunpack.c.l.b16 %v2331
        %v2659 = vunpack.c.l.b16 %v2341
        %v2660 = vunpack.c.l.b16 %v2355
        %v2661 = vunpack.c.l.b16 %v2365
        %v2662 = vunpack.c.l.b16 %v2379
        %v2663 = vunpack.c.l.b16 %v2389
        %v2664 = vunpack.c.l.b16 %v2403
        %v2665 = vunpack.c.l.b16 %v2413
        %v2666 = vunpack.c.l.b16 %v2427
        %v2667 = vunpack.c.l.b16 %v2437
        %v2668 = vunpack.c.l.b16 %v2451
        %v2669 = vunpack.c.l.b16 %v2461
        %v2670 = vpack.c.b16 %v2639, %v2638
        %v2671 = vpack.c.b16 %v2641, %v2640
        %v2672 = vpack.c.b16 %v2643, %v2642
        %v2673 = vpack.c.b16 %v2645, %v2644
        %v2674 = vpack.c.b16 %v2647, %v2646
        %v2675 = vpack.c.b16 %v2649, %v2648
        %v2676 = vpack.c.b16 %v2651, %v2650
        %v2677 = vpack.c.b16 %v2653, %v2652
        %v2678 = vpack.c.b16 %v2655, %v2654
        %v2679 = vpack.c.b16 %v2657, %v2656
        %v2680 = vpack.c.b16 %v2659, %v2658
        %v2681 = vpack.c.b16 %v2661, %v2660
        %v2682 = vpack.c.b16 %v2663, %v2662
        %v2683 = vpack.c.b16 %v2665, %v2664
        %v2684 = vpack.c.b16 %v2667, %v2666
        %v2685 = vpack.c.b16 %v2669, %v2668
        %v2702 = vunpack.c.l.b16 %v2529
        %v2703 = vunpack.c.l.b16 %v2532
        %v2704 = vunpack.c.l.b16 %v2536
        %v2705 = vunpack.c.l.b16 %v2539
        %v2706 = vunpack.c.l.b16 %v2543
        %v2707 = vunpack.c.l.b16 %v2546
        %v2708 = vunpack.c.l.b16 %v2550
        %v2709 = vunpack.c.l.b16 %v2553
        %v2710 = vunpack.c.l.b16 %v2557
        %v2711 = vunpack.c.l.b16 %v2560
        %v2712 = vunpack.c.l.b16 %v2564
        %v2713 = vunpack.c.l.b16 %v2567
        %v2714 = vunpack.c.l.b16 %v2571
        %v2715 = vunpack.c.l.b16 %v2574
        %v2716 = vunpack.c.l.b16 %v2578
        %v2717 = vunpack.c.l.b16 %v2581
        %v2718 = vunpack.c.l.b16 %v2585
        %v2719 = vunpack.c.l.b16 %v2588
        %v2720 = vunpack.c.l.b16 %v2592
        %v2721 = vunpack.c.l.b16 %v2595
        %v2722 = vunpack.c.l.b16 %v2599
        %v2723 = vunpack.c.l.b16 %v2602
        %v2724 = vunpack.c.l.b16 %v2606
        %v2725 = vunpack.c.l.b16 %v2609
        %v2726 = vunpack.c.l.b16 %v2613
        %v2727 = vunpack.c.l.b16 %v2616
        %v2728 = vunpack.c.l.b16 %v2620
        %v2729 = vunpack.c.l.b16 %v2623
        %v2730 = vunpack.c.l.b16 %v2627
        %v2731 = vunpack.c.l.b16 %v2630
        %v2732 = vunpack.c.l.b16 %v2634
        %v2733 = vunpack.c.l.b16 %v2637
        %v2734 = vpack.c.b16 %v2703, %v2702
        %v2735 = vpack.c.b16 %v2705, %v2704
        %v2736 = vpack.c.b16 %v2707, %v2706
        %v2737 = vpack.c.b16 %v2709, %v2708
        %v2738 = vpack.c.b16 %v2711, %v2710
        %v2739 = vpack.c.b16 %v2713, %v2712
        %v2740 = vpack.c.b16 %v2715, %v2714
        %v2741 = vpack.c.b16 %v2717, %v2716
        %v2742 = vpack.c.b16 %v2719, %v2718
        %v2743 = vpack.c.b16 %v2721, %v2720
        %v2744 = vpack.c.b16 %v2723, %v2722
        %v2745 = vpack.c.b16 %v2725, %v2724
        %v2746 = vpack.c.b16 %v2727, %v2726
        %v2747 = vpack.c.b16 %v2729, %v2728
        %v2748 = vpack.c.b16 %v2731, %v2730
        %v2749 = vpack.c.b16 %v2733, %v2732
        %v2766 = vld [vmem:[%s1 + $0x100] sm:$0xf]
        %v2767 = vld [vmem:[%s1 + $0x104] sm:$0xf]
        %v2768 = vld [vmem:[%s1 + $0x108] sm:$0xf]
        %v2769 = vld [vmem:[%s1 + $0x10c] sm:$0xf]
        %v2770 = vld [vmem:[%s1 + $0x110] sm:$0xf]
        %v2771 = vld [vmem:[%s1 + $0x114] sm:$0xf]
        %v2772 = vld [vmem:[%s1 + $0x118] sm:$0xf]
        %v2773 = vld [vmem:[%s1 + $0x11c] sm:$0xf]
        %v2774 = vld [vmem:[%s1 + $0x120] sm:$0xf]
        %v2775 = vld [vmem:[%s1 + $0x124] sm:$0xf]
        %v2776 = vld [vmem:[%s1 + $0x128] sm:$0xf]
        %v2777 = vld [vmem:[%s1 + $0x12c] sm:$0xf]
        %v2778 = vld [vmem:[%s1 + $0x130] sm:$0xf]
        %v2779 = vld [vmem:[%s1 + $0x134] sm:$0xf]
        %v2780 = vld [vmem:[%s1 + $0x138] sm:$0xf]
        %v2781 = vld [vmem:[%s1 + $0x13c] sm:$0xf]
        %v2782 = vld [vmem:[%s1 + $0x140] sm:$0xf]
        %v2783 = vld [vmem:[%s1 + $0x144] sm:$0xf]
        %v2784 = vld [vmem:[%s1 + $0x148] sm:$0xf]
        %v2785 = vld [vmem:[%s1 + $0x14c] sm:$0xf]
        %v2786 = vld [vmem:[%s1 + $0x150] sm:$0xf]
        %v2787 = vld [vmem:[%s1 + $0x154] sm:$0xf]
        %v2788 = vld [vmem:[%s1 + $0x158] sm:$0xf]
        %v2789 = vld [vmem:[%s1 + $0x15c] sm:$0xf]
        %v2790 = vld [vmem:[%s1 + $0x160] sm:$0xf]
        %v2791 = vld [vmem:[%s1 + $0x164] sm:$0xf]
        %v2792 = vld [vmem:[%s1 + $0x168] sm:$0xf]
        %v2793 = vld [vmem:[%s1 + $0x16c] sm:$0xf]
        %v2794 = vld [vmem:[%s1 + $0x170] sm:$0xf]
        %v2795 = vld [vmem:[%s1 + $0x174] sm:$0xf]
        %v2796 = vld [vmem:[%s1 + $0x178] sm:$0xf]
        %v2797 = vld [vmem:[%s1 + $0x17c] sm:$0xf]
        %v2830 = vunpack.c.l.b16 %v2766
        %v2831 = vunpack.c.l.b16 %v2767
        %v2832 = vunpack.c.l.b16 %v2768
        %v2833 = vunpack.c.l.b16 %v2769
        %v2834 = vunpack.c.l.b16 %v2770
        %v2835 = vunpack.c.l.b16 %v2771
        %v2836 = vunpack.c.l.b16 %v2772
        %v2837 = vunpack.c.l.b16 %v2773
        %v2838 = vunpack.c.l.b16 %v2774
        %v2839 = vunpack.c.l.b16 %v2775
        %v2840 = vunpack.c.l.b16 %v2776
        %v2841 = vunpack.c.l.b16 %v2777
        %v2842 = vunpack.c.l.b16 %v2778
        %v2843 = vunpack.c.l.b16 %v2779
        %v2844 = vunpack.c.l.b16 %v2780
        %v2845 = vunpack.c.l.b16 %v2781
        %v2846 = vunpack.c.l.b16 %v2782
        %v2847 = vunpack.c.l.b16 %v2783
        %v2848 = vunpack.c.l.b16 %v2784
        %v2849 = vunpack.c.l.b16 %v2785
        %v2850 = vunpack.c.l.b16 %v2786
        %v2851 = vunpack.c.l.b16 %v2787
        %v2852 = vunpack.c.l.b16 %v2788
        %v2853 = vunpack.c.l.b16 %v2789
        %v2854 = vunpack.c.l.b16 %v2790
        %v2855 = vunpack.c.l.b16 %v2791
        %v2856 = vunpack.c.l.b16 %v2792
        %v2857 = vunpack.c.l.b16 %v2793
        %v2858 = vunpack.c.l.b16 %v2794
        %v2859 = vunpack.c.l.b16 %v2795
        %v2860 = vunpack.c.l.b16 %v2796
        %v2861 = vunpack.c.l.b16 %v2797
        %v2862 = vpack.c.b16 %v2831, %v2830
        %v2863 = vpack.c.b16 %v2833, %v2832
        %v2864 = vpack.c.b16 %v2835, %v2834
        %v2865 = vpack.c.b16 %v2837, %v2836
        %v2866 = vpack.c.b16 %v2839, %v2838
        %v2867 = vpack.c.b16 %v2841, %v2840
        %v2868 = vpack.c.b16 %v2843, %v2842
        %v2869 = vpack.c.b16 %v2845, %v2844
        %v2870 = vpack.c.b16 %v2847, %v2846
        %v2871 = vpack.c.b16 %v2849, %v2848
        %v2872 = vpack.c.b16 %v2851, %v2850
        %v2873 = vpack.c.b16 %v2853, %v2852
        %v2874 = vpack.c.b16 %v2855, %v2854
        %v2875 = vpack.c.b16 %v2857, %v2856
        %v2876 = vpack.c.b16 %v2859, %v2858
        %v2877 = vpack.c.b16 %v2861, %v2860
        %2894 = vmatprep.subr.bf16.mxu0 0
        %2895 = vmatpush1.bf16.msra.mxu0 %v2862
        %2896 = vmatprep.subr.bf16.mxu0 0
        %2897 = vmatpush1.bf16.msra.mxu0 %v2863
        %2898 = vmatprep.subr.bf16.mxu0 0
        %2899 = vmatpush1.bf16.msra.mxu0 %v2864
        %2900 = vmatprep.subr.bf16.mxu0 0
        %2901 = vmatpush1.bf16.msra.mxu0 %v2865
        %2902 = vmatprep.subr.bf16.mxu0 0
        %2903 = vmatpush1.bf16.msra.mxu0 %v2866
        %2904 = vmatprep.subr.bf16.mxu0 0
        %2905 = vmatpush1.bf16.msra.mxu0 %v2867
        %2906 = vmatprep.subr.bf16.mxu0 0
        %2907 = vmatpush1.bf16.msra.mxu0 %v2868
        %2908 = vmatprep.subr.bf16.mxu0 0
        %2909 = vmatpush1.bf16.msra.mxu0 %v2869
        %2910 = vmatprep.subr.bf16.mxu0 0
        %2911 = vmatpush1.bf16.msra.mxu0 %v2870
        %2912 = vmatprep.subr.bf16.mxu0 0
        %2913 = vmatpush1.bf16.msra.mxu0 %v2871
        %2914 = vmatprep.subr.bf16.mxu0 0
        %2915 = vmatpush1.bf16.msra.mxu0 %v2872
        %2916 = vmatprep.subr.bf16.mxu0 0
        %2917 = vmatpush1.bf16.msra.mxu0 %v2873
        %2918 = vmatprep.subr.bf16.mxu0 0
        %2919 = vmatpush1.bf16.msra.mxu0 %v2874
        %2920 = vmatprep.subr.bf16.mxu0 0
        %2921 = vmatpush1.bf16.msra.mxu0 %v2875
        %2922 = vmatprep.subr.bf16.mxu0 0
        %2923 = vmatpush1.bf16.msra.mxu0 %v2876
        %2924 = vmatprep.subr.bf16.mxu0 0
        %2925 = vmatpush1.bf16.msra.mxu0 %v2877
        %2926 = vmatprep.mubr.bf16.mxu0 %v2734
        %2927 = vmatmul.mubr.bf16.gmra.mrb[0].mxu0 %v2670
        %v2928 = vpop.f32.mrb[0].mxu0
        %v2929 = vadd.f32 0.0, %v2928
        %v2930 = vpop.f32.mrb[0].mxu0
        %v2931 = vpop.f32.mrb[0].mxu0
        %v2932 = vadd.f32 0.0, %v2931
        %v2933 = vpop.f32.mrb[0].mxu0
        %2934 = vmatprep.mubr.bf16.mxu0 %v2735
        %2935 = vmatmul.mubr.bf16.gmra.mrb[0].mxu0 %v2671
        %v2936 = vpop.f32.mrb[0].mxu0
        %v2937 = vadd.f32 0.0, %v2936
        %v2938 = vpop.f32.mrb[0].mxu0
        %v2939 = vpop.f32.mrb[0].mxu0
        %v2940 = vadd.f32 0.0, %v2939
        %v2941 = vpop.f32.mrb[0].mxu0
        %2942 = vmatprep.mubr.bf16.mxu0 %v2736
        %2943 = vmatmul.mubr.bf16.gmra.mrb[0].mxu0 %v2672
        %v2944 = vpop.f32.mrb[0].mxu0
        %v2945 = vadd.f32 0.0, %v2944
        %v2946 = vpop.f32.mrb[0].mxu0
        %v2947 = vpop.f32.mrb[0].mxu0
        %v2948 = vadd.f32 0.0, %v2947
        %v2949 = vpop.f32.mrb[0].mxu0
        %2950 = vmatprep.mubr.bf16.mxu0 %v2737
        %2951 = vmatmul.mubr.bf16.gmra.mrb[0].mxu0 %v2673
        %v2952 = vpop.f32.mrb[0].mxu0
        %v2953 = vadd.f32 0.0, %v2952
        %v2954 = vpop.f32.mrb[0].mxu0
        %v2955 = vpop.f32.mrb[0].mxu0
        %v2956 = vadd.f32 0.0, %v2955
        %v2957 = vpop.f32.mrb[0].mxu0
        %2958 = vmatprep.mubr.bf16.mxu0 %v2738
        %2959 = vmatmul.mubr.bf16.gmra.mrb[0].mxu0 %v2674
        %v2960 = vpop.f32.mrb[0].mxu0
        %v2961 = vadd.f32 0.0, %v2960
        %v2962 = vpop.f32.mrb[0].mxu0
        %v2963 = vpop.f32.mrb[0].mxu0
        %v2964 = vadd.f32 0.0, %v2963
        %v2965 = vpop.f32.mrb[0].mxu0
        %2966 = vmatprep.mubr.bf16.mxu0 %v2739
        %2967 = vmatmul.mubr.bf16.gmra.mrb[0].mxu0 %v2675
        %v2968 = vpop.f32.mrb[0].mxu0
        %v2969 = vadd.f32 0.0, %v2968
        %v2970 = vpop.f32.mrb[0].mxu0
        %v2971 = vpop.f32.mrb[0].mxu0
        %v2972 = vadd.f32 0.0, %v2971
        %v2973 = vpop.f32.mrb[0].mxu0
        %2974 = vmatprep.mubr.bf16.mxu0 %v2740
        %2975 = vmatmul.mubr.bf16.gmra.mrb[0].mxu0 %v2676
        %v2976 = vpop.f32.mrb[0].mxu0
        %v2977 = vadd.f32 0.0, %v2976
        %v2978 = vpop.f32.mrb[0].mxu0
        %v2979 = vpop.f32.mrb[0].mxu0
        %v2980 = vadd.f32 0.0, %v2979
        %v2981 = vpop.f32.mrb[0].mxu0
        %2982 = vmatprep.mubr.bf16.mxu0 %v2741
        %2983 = vmatmul.mubr.bf16.gmra.mrb[0].mxu0 %v2677
        %v2984 = vpop.f32.mrb[0].mxu0
        %v2985 = vadd.f32 0.0, %v2984
        %v2986 = vpop.f32.mrb[0].mxu0
        %v2987 = vpop.f32.mrb[0].mxu0
        %v2988 = vadd.f32 0.0, %v2987
        %v2989 = vpop.f32.mrb[0].mxu0
        %2990 = vmatprep.mubr.bf16.mxu0 %v2742
        %2991 = vmatmul.mubr.bf16.gmra.mrb[0].mxu0 %v2678
        %v2992 = vpop.f32.mrb[0].mxu0
        %v2993 = vadd.f32 0.0, %v2992
        %v2994 = vpop.f32.mrb[0].mxu0
        %v2995 = vpop.f32.mrb[0].mxu0
        %v2996 = vadd.f32 0.0, %v2995
        %v2997 = vpop.f32.mrb[0].mxu0
        %2998 = vmatprep.mubr.bf16.mxu0 %v2743
        %2999 = vmatmul.mubr.bf16.gmra.mrb[0].mxu0 %v2679
        %v3000 = vpop.f32.mrb[0].mxu0
        %v3001 = vadd.f32 0.0, %v3000
        %v3002 = vpop.f32.mrb[0].mxu0
        %v3003 = vpop.f32.mrb[0].mxu0
        %v3004 = vadd.f32 0.0, %v3003
        %v3005 = vpop.f32.mrb[0].mxu0
        %3006 = vmatprep.mubr.bf16.mxu0 %v2744
        %3007 = vmatmul.mubr.bf16.gmra.mrb[0].mxu0 %v2680
        %v3008 = vpop.f32.mrb[0].mxu0
        %v3009 = vadd.f32 0.0, %v3008
        %v3010 = vpop.f32.mrb[0].mxu0
        %v3011 = vpop.f32.mrb[0].mxu0
        %v3012 = vadd.f32 0.0, %v3011
        %v3013 = vpop.f32.mrb[0].mxu0
        %3014 = vmatprep.mubr.bf16.mxu0 %v2745
        %3015 = vmatmul.mubr.bf16.gmra.mrb[0].mxu0 %v2681
        %v3016 = vpop.f32.mrb[0].mxu0
        %v3017 = vadd.f32 0.0, %v3016
        %v3018 = vpop.f32.mrb[0].mxu0
        %v3019 = vpop.f32.mrb[0].mxu0
        %v3020 = vadd.f32 0.0, %v3019
        %v3021 = vpop.f32.mrb[0].mxu0
        %3022 = vmatprep.mubr.bf16.mxu0 %v2746
        %3023 = vmatmul.mubr.bf16.gmra.mrb[0].mxu0 %v2682
        %v3024 = vpop.f32.mrb[0].mxu0
        %v3025 = vadd.f32 0.0, %v3024
        %v3026 = vpop.f32.mrb[0].mxu0
        %v3027 = vpop.f32.mrb[0].mxu0
        %v3028 = vadd.f32 0.0, %v3027
        %v3029 = vpop.f32.mrb[0].mxu0
        %3030 = vmatprep.mubr.bf16.mxu0 %v2747
        %3031 = vmatmul.mubr.bf16.gmra.mrb[0].mxu0 %v2683
        %v3032 = vpop.f32.mrb[0].mxu0
        %v3033 = vadd.f32 0.0, %v3032
        %v3034 = vpop.f32.mrb[0].mxu0
        %v3035 = vpop.f32.mrb[0].mxu0
        %v3036 = vadd.f32 0.0, %v3035
        %v3037 = vpop.f32.mrb[0].mxu0
        %3038 = vmatprep.mubr.bf16.mxu0 %v2748
        %3039 = vmatmul.mubr.bf16.gmra.mrb[0].mxu0 %v2684
        %v3040 = vpop.f32.mrb[0].mxu0
        %v3041 = vadd.f32 0.0, %v3040
        %v3042 = vpop.f32.mrb[0].mxu0
        %v3043 = vpop.f32.mrb[0].mxu0
        %v3044 = vadd.f32 0.0, %v3043
        %v3045 = vpop.f32.mrb[0].mxu0
        %3046 = vmatprep.mubr.bf16.mxu0 %v2749
        %3047 = vmatmul.mubr.bf16.gmra.mrb[0].mxu0 %v2685
        %v3048 = vpop.f32.mrb[0].mxu0
        %v3049 = vadd.f32 0.0, %v3048
        %v3050 = vpop.f32.mrb[0].mxu0
        %v3051 = vpop.f32.mrb[0].mxu0
        %v3052 = vadd.f32 0.0, %v3051
        %v3053 = vpop.f32.mrb[0].mxu0
        %3054 = vdwg.mxu0
        %v3055 = vld [vmem:[#allocation2] sm:$0xff]
        %v3056 = vld [vmem:[#allocation2 + $0x8] sm:$0xff]
        %v3057 = vld [vmem:[#allocation2 + $0x10] sm:$0xff]
        %v3058 = vld [vmem:[#allocation2 + $0x18] sm:$0xff]
        %v3059 = vld [vmem:[#allocation2 + $0x20] sm:$0xff]
        %v3060 = vld [vmem:[#allocation2 + $0x28] sm:$0xff]
        %v3061 = vld [vmem:[#allocation2 + $0x30] sm:$0xff]
        %v3062 = vld [vmem:[#allocation2 + $0x38] sm:$0xff]
        %v3063 = vld [vmem:[#allocation2 + $0x40] sm:$0xff]
        %v3064 = vld [vmem:[#allocation2 + $0x48] sm:$0xff]
        %v3065 = vld [vmem:[#allocation2 + $0x50] sm:$0xff]
        %v3066 = vld [vmem:[#allocation2 + $0x58] sm:$0xff]
        %v3067 = vld [vmem:[#allocation2 + $0x60] sm:$0xff]
        %v3068 = vld [vmem:[#allocation2 + $0x68] sm:$0xff]
        %v3069 = vld [vmem:[#allocation2 + $0x70] sm:$0xff]
        %v3070 = vld [vmem:[#allocation2 + $0x78] sm:$0xff]
        %v3071 = vld [vmem:[#allocation2 + $0x80] sm:$0xff]
        %v3072 = vld [vmem:[#allocation2 + $0x88] sm:$0xff]
        %v3073 = vld [vmem:[#allocation2 + $0x90] sm:$0xff]
        %v3074 = vld [vmem:[#allocation2 + $0x98] sm:$0xff]
        %v3075 = vld [vmem:[#allocation2 + $0xa0] sm:$0xff]
        %v3076 = vld [vmem:[#allocation2 + $0xa8] sm:$0xff]
        %v3077 = vld [vmem:[#allocation2 + $0xb0] sm:$0xff]
        %v3078 = vld [vmem:[#allocation2 + $0xb8] sm:$0xff]
        %v3079 = vld [vmem:[#allocation2 + $0xc0] sm:$0xff]
        %v3080 = vld [vmem:[#allocation2 + $0xc8] sm:$0xff]
        %v3081 = vld [vmem:[#allocation2 + $0xd0] sm:$0xff]
        %v3082 = vld [vmem:[#allocation2 + $0xd8] sm:$0xff]
        %v3083 = vld [vmem:[#allocation2 + $0xe0] sm:$0xff]
        %v3084 = vld [vmem:[#allocation2 + $0xe8] sm:$0xff]
        %v3085 = vld [vmem:[#allocation2 + $0xf0] sm:$0xff]
        %v3086 = vld [vmem:[#allocation2 + $0xf8] sm:$0xff]
        %v3087 = vadd.f32 %v3055, %v2929
        %v3088 = vadd.f32 %v3056, %v2932
        %v3089 = vadd.f32 %v3057, %v2937
        %v3090 = vadd.f32 %v3058, %v2940
        %v3091 = vadd.f32 %v3059, %v2945
        %v3092 = vadd.f32 %v3060, %v2948
        %v3093 = vadd.f32 %v3061, %v2953
        %v3094 = vadd.f32 %v3062, %v2956
        %v3095 = vadd.f32 %v3063, %v2961
        %v3096 = vadd.f32 %v3064, %v2964
        %v3097 = vadd.f32 %v3065, %v2969
        %v3098 = vadd.f32 %v3066, %v2972
        %v3099 = vadd.f32 %v3067, %v2977
        %v3100 = vadd.f32 %v3068, %v2980
        %v3101 = vadd.f32 %v3069, %v2985
        %v3102 = vadd.f32 %v3070, %v2988
        %v3103 = vadd.f32 %v3071, %v2993
        %v3104 = vadd.f32 %v3072, %v2996
        %v3105 = vadd.f32 %v3073, %v3001
        %v3106 = vadd.f32 %v3074, %v3004
        %v3107 = vadd.f32 %v3075, %v3009
        %v3108 = vadd.f32 %v3076, %v3012
        %v3109 = vadd.f32 %v3077, %v3017
        %v3110 = vadd.f32 %v3078, %v3020
        %v3111 = vadd.f32 %v3079, %v3025
        %v3112 = vadd.f32 %v3080, %v3028
        %v3113 = vadd.f32 %v3081, %v3033
        %v3114 = vadd.f32 %v3082, %v3036
        %v3115 = vadd.f32 %v3083, %v3041
        %v3116 = vadd.f32 %v3084, %v3044
        %v3117 = vadd.f32 %v3085, %v3049
        %v3118 = vadd.f32 %v3086, %v3052
        %3119 = vst [vmem:[#allocation2] sm:$0xff] %v3087
        %3120 = vst [vmem:[#allocation2 + $0x8] sm:$0xff] %v3088
        %3121 = vst [vmem:[#allocation2 + $0x10] sm:$0xff] %v3089
        %3122 = vst [vmem:[#allocation2 + $0x18] sm:$0xff] %v3090
        %3123 = vst [vmem:[#allocation2 + $0x20] sm:$0xff] %v3091
        %3124 = vst [vmem:[#allocation2 + $0x28] sm:$0xff] %v3092
        %3125 = vst [vmem:[#allocation2 + $0x30] sm:$0xff] %v3093
        %3126 = vst [vmem:[#allocation2 + $0x38] sm:$0xff] %v3094
        %3127 = vst [vmem:[#allocation2 + $0x40] sm:$0xff] %v3095
        %3128 = vst [vmem:[#allocation2 + $0x48] sm:$0xff] %v3096
        %3129 = vst [vmem:[#allocation2 + $0x50] sm:$0xff] %v3097
        %3130 = vst [vmem:[#allocation2 + $0x58] sm:$0xff] %v3098
        %3131 = vst [vmem:[#allocation2 + $0x60] sm:$0xff] %v3099
        %3132 = vst [vmem:[#allocation2 + $0x68] sm:$0xff] %v3100
        %3133 = vst [vmem:[#allocation2 + $0x70] sm:$0xff] %v3101
        %3134 = vst [vmem:[#allocation2 + $0x78] sm:$0xff] %v3102
        %3135 = vst [vmem:[#allocation2 + $0x80] sm:$0xff] %v3103
        %3136 = vst [vmem:[#allocation2 + $0x88] sm:$0xff] %v3104
        %3137 = vst [vmem:[#allocation2 + $0x90] sm:$0xff] %v3105
        %3138 = vst [vmem:[#allocation2 + $0x98] sm:$0xff] %v3106
        %3139 = vst [vmem:[#allocation2 + $0xa0] sm:$0xff] %v3107
        %3140 = vst [vmem:[#allocation2 + $0xa8] sm:$0xff] %v3108
        %3141 = vst [vmem:[#allocation2 + $0xb0] sm:$0xff] %v3109
        %3142 = vst [vmem:[#allocation2 + $0xb8] sm:$0xff] %v3110
        %3143 = vst [vmem:[#allocation2 + $0xc0] sm:$0xff] %v3111
        %3144 = vst [vmem:[#allocation2 + $0xc8] sm:$0xff] %v3112
        %3145 = vst [vmem:[#allocation2 + $0xd0] sm:$0xff] %v3113
        %3146 = vst [vmem:[#allocation2 + $0xd8] sm:$0xff] %v3114
        %3147 = vst [vmem:[#allocation2 + $0xe0] sm:$0xff] %v3115
        %3148 = vst [vmem:[#allocation2 + $0xe8] sm:$0xff] %v3116
        %3149 = vst [vmem:[#allocation2 + $0xf0] sm:$0xff] %v3117
        %3150 = vst [vmem:[#allocation2 + $0xf8] sm:$0xff] %v3118
        %s3151 = scalar_lea.vmem %s318, 24
        %v3152 = vld [vmem:[%s3151] sm:$0xf]
        %v3153 = vld [vmem:[%s3151 + $0x4] sm:$0xf]
        %v3154 = vld [vmem:[%s3151 + $0xc] sm:$0xf]
        %v3155 = vld [vmem:[%s3151 + $0x10] sm:$0xf]
        %v3156 = vld [vmem:[%s3151 + $0x18] sm:$0xf]
        %v3157 = vld [vmem:[%s3151 + $0x1c] sm:$0xf]
        %v3158 = vld [vmem:[%s3151 + $0x24] sm:$0xf]
        %v3159 = vld [vmem:[%s3151 + $0x28] sm:$0xf]
        %v3160 = vld [vmem:[%s3151 + $0x30] sm:$0xf]
        %v3161 = vld [vmem:[%s3151 + $0x34] sm:$0xf]
        %v3162 = vld [vmem:[%s3151 + $0x3c] sm:$0xf]
        %v3163 = vld [vmem:[%s3151 + $0x40] sm:$0xf]
        %v3164 = vld [vmem:[%s3151 + $0x48] sm:$0xf]
        %v3165 = vld [vmem:[%s3151 + $0x4c] sm:$0xf]
        %v3166 = vld [vmem:[%s3151 + $0x54] sm:$0xf]
        %v3167 = vld [vmem:[%s3151 + $0x58] sm:$0xf]
        %v3168 = vld [vmem:[%s3151 + $0x60] sm:$0xf]
        %v3169 = vld [vmem:[%s3151 + $0x64] sm:$0xf]
        %v3170 = vld [vmem:[%s3151 + $0x6c] sm:$0xf]
        %v3171 = vld [vmem:[%s3151 + $0x70] sm:$0xf]
        %v3172 = vld [vmem:[%s3151 + $0x78] sm:$0xf]
        %v3173 = vld [vmem:[%s3151 + $0x7c] sm:$0xf]
        %v3174 = vld [vmem:[%s3151 + $0x84] sm:$0xf]
        %v3175 = vld [vmem:[%s3151 + $0x88] sm:$0xf]
        %v3176 = vld [vmem:[%s3151 + $0x90] sm:$0xf]
        %v3177 = vld [vmem:[%s3151 + $0x94] sm:$0xf]
        %v3178 = vld [vmem:[%s3151 + $0x9c] sm:$0xf]
        %v3179 = vld [vmem:[%s3151 + $0xa0] sm:$0xf]
        %v3180 = vld [vmem:[%s3151 + $0xa8] sm:$0xf]
        %v3181 = vld [vmem:[%s3151 + $0xac] sm:$0xf]
        %v3182 = vld [vmem:[%s3151 + $0xb4] sm:$0xf]
        %v3183 = vld [vmem:[%s3151 + $0xb8] sm:$0xf]
        %v3184 = vld [vmem:[%s3151 + $0x8] sm:$0x1]
        %v3185 = vld [vmem:[%s3151 + $0x14] sm:$0x1]
        %v3186 = vld [vmem:[%s3151 + $0x20] sm:$0x1]
        %v3187 = vld [vmem:[%s3151 + $0x2c] sm:$0x1]
        %v3188 = vld [vmem:[%s3151 + $0x38] sm:$0x1]
        %v3189 = vld [vmem:[%s3151 + $0x44] sm:$0x1]
        %v3190 = vld [vmem:[%s3151 + $0x50] sm:$0x1]
        %v3191 = vld [vmem:[%s3151 + $0x5c] sm:$0x1]
        %v3192 = vld [vmem:[%s3151 + $0x68] sm:$0x1]
        %v3193 = vld [vmem:[%s3151 + $0x74] sm:$0x1]
        %v3194 = vld [vmem:[%s3151 + $0x80] sm:$0x1]
        %v3195 = vld [vmem:[%s3151 + $0x8c] sm:$0x1]
        %v3196 = vld [vmem:[%s3151 + $0x98] sm:$0x1]
        %v3197 = vld [vmem:[%s3151 + $0xa4] sm:$0x1]
        %v3198 = vld [vmem:[%s3151 + $0xb0] sm:$0x1]
        %v3199 = vld [vmem:[%s3151 + $0xbc] sm:$0x1]
        %v3201 = vshrl.u32 %v3152, 16
        %v3203 = vrot.slane %v3201, 4
        %v3204 = vshll.u32 %v3152, 16
        %v3206 = vrot.slane %v3204, 5
        %v3207 = vor.u32 %v3203, %v3206
        %v3208 = vrot.slane %v3207, 4
        %v3210 = vshll.u32 %v3153, 16
        %v3212 = vrot.slane %v3210, 5
        %v3213 = vsel %vm375, %v3208, %v3212
        %v3214 = vshrl.u32 %v3153, 16
        %v3216 = vrot.slane %v3214, 4
        %v3217 = vor.u32 %v3216, %v3212
        %v3218 = vrot.slane %v3217, 4
        %v3220 = vshll.u32 %v3184, 16
        %v3222 = vrot.slane %v3220, 5
        %v3223 = vsel %vm375, %v3218, %v3222
        %v3225 = vshrl.u32 %v3154, 16
        %v3227 = vrot.slane %v3225, 4
        %v3228 = vshll.u32 %v3154, 16
        %v3230 = vrot.slane %v3228, 5
        %v3231 = vor.u32 %v3227, %v3230
        %v3232 = vrot.slane %v3231, 4
        %v3234 = vshll.u32 %v3155, 16
        %v3236 = vrot.slane %v3234, 5
        %v3237 = vsel %vm375, %v3232, %v3236
        %v3238 = vshrl.u32 %v3155, 16
        %v3240 = vrot.slane %v3238, 4
        %v3241 = vor.u32 %v3240, %v3236
        %v3242 = vrot.slane %v3241, 4
        %v3244 = vshll.u32 %v3185, 16
        %v3246 = vrot.slane %v3244, 5
        %v3247 = vsel %vm375, %v3242, %v3246
        %v3249 = vshrl.u32 %v3156, 16
        %v3251 = vrot.slane %v3249, 4
        %v3252 = vshll.u32 %v3156, 16
        %v3254 = vrot.slane %v3252, 5
        %v3255 = vor.u32 %v3251, %v3254
        %v3256 = vrot.slane %v3255, 4
        %v3258 = vshll.u32 %v3157, 16
        %v3260 = vrot.slane %v3258, 5
        %v3261 = vsel %vm375, %v3256, %v3260
        %v3262 = vshrl.u32 %v3157, 16
        %v3264 = vrot.slane %v3262, 4
        %v3265 = vor.u32 %v3264, %v3260
        %v3266 = vrot.slane %v3265, 4
        %v3268 = vshll.u32 %v3186, 16
        %v3270 = vrot.slane %v3268, 5
        %v3271 = vsel %vm375, %v3266, %v3270
        %v3273 = vshrl.u32 %v3158, 16
        %v3275 = vrot.slane %v3273, 4
        %v3276 = vshll.u32 %v3158, 16
        %v3278 = vrot.slane %v3276, 5
        %v3279 = vor.u32 %v3275, %v3278
        %v3280 = vrot.slane %v3279, 4
        %v3282 = vshll.u32 %v3159, 16
        %v3284 = vrot.slane %v3282, 5
        %v3285 = vsel %vm375, %v3280, %v3284
        %v3286 = vshrl.u32 %v3159, 16
        %v3288 = vrot.slane %v3286, 4
        %v3289 = vor.u32 %v3288, %v3284
        %v3290 = vrot.slane %v3289, 4
        %v3292 = vshll.u32 %v3187, 16
        %v3294 = vrot.slane %v3292, 5
        %v3295 = vsel %vm375, %v3290, %v3294
        %v3297 = vshrl.u32 %v3160, 16
        %v3299 = vrot.slane %v3297, 4
        %v3300 = vshll.u32 %v3160, 16
        %v3302 = vrot.slane %v3300, 5
        %v3303 = vor.u32 %v3299, %v3302
        %v3304 = vrot.slane %v3303, 4
        %v3306 = vshll.u32 %v3161, 16
        %v3308 = vrot.slane %v3306, 5
        %v3309 = vsel %vm375, %v3304, %v3308
        %v3310 = vshrl.u32 %v3161, 16
        %v3312 = vrot.slane %v3310, 4
        %v3313 = vor.u32 %v3312, %v3308
        %v3314 = vrot.slane %v3313, 4
        %v3316 = vshll.u32 %v3188, 16
        %v3318 = vrot.slane %v3316, 5
        %v3319 = vsel %vm375, %v3314, %v3318
        %v3321 = vshrl.u32 %v3162, 16
        %v3323 = vrot.slane %v3321, 4
        %v3324 = vshll.u32 %v3162, 16
        %v3326 = vrot.slane %v3324, 5
        %v3327 = vor.u32 %v3323, %v3326
        %v3328 = vrot.slane %v3327, 4
        %v3330 = vshll.u32 %v3163, 16
        %v3332 = vrot.slane %v3330, 5
        %v3333 = vsel %vm375, %v3328, %v3332
        %v3334 = vshrl.u32 %v3163, 16
        %v3336 = vrot.slane %v3334, 4
        %v3337 = vor.u32 %v3336, %v3332
        %v3338 = vrot.slane %v3337, 4
        %v3340 = vshll.u32 %v3189, 16
        %v3342 = vrot.slane %v3340, 5
        %v3343 = vsel %vm375, %v3338, %v3342
        %v3345 = vshrl.u32 %v3164, 16
        %v3347 = vrot.slane %v3345, 4
        %v3348 = vshll.u32 %v3164, 16
        %v3350 = vrot.slane %v3348, 5
        %v3351 = vor.u32 %v3347, %v3350
        %v3352 = vrot.slane %v3351, 4
        %v3354 = vshll.u32 %v3165, 16
        %v3356 = vrot.slane %v3354, 5
        %v3357 = vsel %vm375, %v3352, %v3356
        %v3358 = vshrl.u32 %v3165, 16
        %v3360 = vrot.slane %v3358, 4
        %v3361 = vor.u32 %v3360, %v3356
        %v3362 = vrot.slane %v3361, 4
        %v3364 = vshll.u32 %v3190, 16
        %v3366 = vrot.slane %v3364, 5
        %v3367 = vsel %vm375, %v3362, %v3366
        %v3369 = vshrl.u32 %v3166, 16
        %v3371 = vrot.slane %v3369, 4
        %v3372 = vshll.u32 %v3166, 16
        %v3374 = vrot.slane %v3372, 5
        %v3375 = vor.u32 %v3371, %v3374
        %v3376 = vrot.slane %v3375, 4
        %v3378 = vshll.u32 %v3167, 16
        %v3380 = vrot.slane %v3378, 5
        %v3381 = vsel %vm375, %v3376, %v3380
        %v3382 = vshrl.u32 %v3167, 16
        %v3384 = vrot.slane %v3382, 4
        %v3385 = vor.u32 %v3384, %v3380
        %v3386 = vrot.slane %v3385, 4
        %v3388 = vshll.u32 %v3191, 16
        %v3390 = vrot.slane %v3388, 5
        %v3391 = vsel %vm375, %v3386, %v3390
        %v3393 = vshrl.u32 %v3168, 16
        %v3395 = vrot.slane %v3393, 4
        %v3396 = vshll.u32 %v3168, 16
        %v3398 = vrot.slane %v3396, 5
        %v3399 = vor.u32 %v3395, %v3398
        %v3400 = vrot.slane %v3399, 4
        %v3402 = vshll.u32 %v3169, 16
        %v3404 = vrot.slane %v3402, 5
        %v3405 = vsel %vm375, %v3400, %v3404
        %v3406 = vshrl.u32 %v3169, 16
        %v3408 = vrot.slane %v3406, 4
        %v3409 = vor.u32 %v3408, %v3404
        %v3410 = vrot.slane %v3409, 4
        %v3412 = vshll.u32 %v3192, 16
        %v3414 = vrot.slane %v3412, 5
        %v3415 = vsel %vm375, %v3410, %v3414
        %v3417 = vshrl.u32 %v3170, 16
        %v3419 = vrot.slane %v3417, 4
        %v3420 = vshll.u32 %v3170, 16
        %v3422 = vrot.slane %v3420, 5
        %v3423 = vor.u32 %v3419, %v3422
        %v3424 = vrot.slane %v3423, 4
        %v3426 = vshll.u32 %v3171, 16
        %v3428 = vrot.slane %v3426, 5
        %v3429 = vsel %vm375, %v3424, %v3428
        %v3430 = vshrl.u32 %v3171, 16
        %v3432 = vrot.slane %v3430, 4
        %v3433 = vor.u32 %v3432, %v3428
        %v3434 = vrot.slane %v3433, 4
        %v3436 = vshll.u32 %v3193, 16
        %v3438 = vrot.slane %v3436, 5
        %v3439 = vsel %vm375, %v3434, %v3438
        %v3441 = vshrl.u32 %v3172, 16
        %v3443 = vrot.slane %v3441, 4
        %v3444 = vshll.u32 %v3172, 16
        %v3446 = vrot.slane %v3444, 5
        %v3447 = vor.u32 %v3443, %v3446
        %v3448 = vrot.slane %v3447, 4
        %v3450 = vshll.u32 %v3173, 16
        %v3452 = vrot.slane %v3450, 5
        %v3453 = vsel %vm375, %v3448, %v3452
        %v3454 = vshrl.u32 %v3173, 16
        %v3456 = vrot.slane %v3454, 4
        %v3457 = vor.u32 %v3456, %v3452
        %v3458 = vrot.slane %v3457, 4
        %v3460 = vshll.u32 %v3194, 16
        %v3462 = vrot.slane %v3460, 5
        %v3463 = vsel %vm375, %v3458, %v3462
        %v3465 = vshrl.u32 %v3174, 16
        %v3467 = vrot.slane %v3465, 4
        %v3468 = vshll.u32 %v3174, 16
        %v3470 = vrot.slane %v3468, 5
        %v3471 = vor.u32 %v3467, %v3470
        %v3472 = vrot.slane %v3471, 4
        %v3474 = vshll.u32 %v3175, 16
        %v3476 = vrot.slane %v3474, 5
        %v3477 = vsel %vm375, %v3472, %v3476
        %v3478 = vshrl.u32 %v3175, 16
        %v3480 = vrot.slane %v3478, 4
        %v3481 = vor.u32 %v3480, %v3476
        %v3482 = vrot.slane %v3481, 4
        %v3484 = vshll.u32 %v3195, 16
        %v3486 = vrot.slane %v3484, 5
        %v3487 = vsel %vm375, %v3482, %v3486
        %v3489 = vshrl.u32 %v3176, 16
        %v3491 = vrot.slane %v3489, 4
        %v3492 = vshll.u32 %v3176, 16
        %v3494 = vrot.slane %v3492, 5
        %v3495 = vor.u32 %v3491, %v3494
        %v3496 = vrot.slane %v3495, 4
        %v3498 = vshll.u32 %v3177, 16
        %v3500 = vrot.slane %v3498, 5
        %v3501 = vsel %vm375, %v3496, %v3500
        %v3502 = vshrl.u32 %v3177, 16
        %v3504 = vrot.slane %v3502, 4
        %v3505 = vor.u32 %v3504, %v3500
        %v3506 = vrot.slane %v3505, 4
        %v3508 = vshll.u32 %v3196, 16
        %v3510 = vrot.slane %v3508, 5
        %v3511 = vsel %vm375, %v3506, %v3510
        %v3513 = vshrl.u32 %v3178, 16
        %v3515 = vrot.slane %v3513, 4
        %v3516 = vshll.u32 %v3178, 16
        %v3518 = vrot.slane %v3516, 5
        %v3519 = vor.u32 %v3515, %v3518
        %v3520 = vrot.slane %v3519, 4
        %v3522 = vshll.u32 %v3179, 16
        %v3524 = vrot.slane %v3522, 5
        %v3525 = vsel %vm375, %v3520, %v3524
        %v3526 = vshrl.u32 %v3179, 16
        %v3528 = vrot.slane %v3526, 4
        %v3529 = vor.u32 %v3528, %v3524
        %v3530 = vrot.slane %v3529, 4
        %v3532 = vshll.u32 %v3197, 16
        %v3534 = vrot.slane %v3532, 5
        %v3535 = vsel %vm375, %v3530, %v3534
        %v3537 = vshrl.u32 %v3180, 16
        %v3539 = vrot.slane %v3537, 4
        %v3540 = vshll.u32 %v3180, 16
        %v3542 = vrot.slane %v3540, 5
        %v3543 = vor.u32 %v3539, %v3542
        %v3544 = vrot.slane %v3543, 4
        %v3546 = vshll.u32 %v3181, 16
        %v3548 = vrot.slane %v3546, 5
        %v3549 = vsel %vm375, %v3544, %v3548
        %v3550 = vshrl.u32 %v3181, 16
        %v3552 = vrot.slane %v3550, 4
        %v3553 = vor.u32 %v3552, %v3548
        %v3554 = vrot.slane %v3553, 4
        %v3556 = vshll.u32 %v3198, 16
        %v3558 = vrot.slane %v3556, 5
        %v3559 = vsel %vm375, %v3554, %v3558
        %v3561 = vshrl.u32 %v3182, 16
        %v3563 = vrot.slane %v3561, 4
        %v3564 = vshll.u32 %v3182, 16
        %v3566 = vrot.slane %v3564, 5
        %v3567 = vor.u32 %v3563, %v3566
        %v3568 = vrot.slane %v3567, 4
        %v3570 = vshll.u32 %v3183, 16
        %v3572 = vrot.slane %v3570, 5
        %v3573 = vsel %vm375, %v3568, %v3572
        %v3574 = vshrl.u32 %v3183, 16
        %v3576 = vrot.slane %v3574, 4
        %v3577 = vor.u32 %v3576, %v3572
        %v3578 = vrot.slane %v3577, 4
        %v3580 = vshll.u32 %v3199, 16
        %v3582 = vrot.slane %v3580, 5
        %v3583 = vsel %vm375, %v3578, %v3582
        %v3616 = vunpack.c.l.b16 %v3152
        %v3617 = vunpack.c.l.b16 %v3153
        %v3618 = vunpack.c.l.b16 %v3154
        %v3619 = vunpack.c.l.b16 %v3155
        %v3620 = vunpack.c.l.b16 %v3156
        %v3621 = vunpack.c.l.b16 %v3157
        %v3622 = vunpack.c.l.b16 %v3158
        %v3623 = vunpack.c.l.b16 %v3159
        %v3624 = vunpack.c.l.b16 %v3160
        %v3625 = vunpack.c.l.b16 %v3161
        %v3626 = vunpack.c.l.b16 %v3162
        %v3627 = vunpack.c.l.b16 %v3163
        %v3628 = vunpack.c.l.b16 %v3164
        %v3629 = vunpack.c.l.b16 %v3165
        %v3630 = vunpack.c.l.b16 %v3166
        %v3631 = vunpack.c.l.b16 %v3167
        %v3632 = vunpack.c.l.b16 %v3168
        %v3633 = vunpack.c.l.b16 %v3169
        %v3634 = vunpack.c.l.b16 %v3170
        %v3635 = vunpack.c.l.b16 %v3171
        %v3636 = vunpack.c.l.b16 %v3172
        %v3637 = vunpack.c.l.b16 %v3173
        %v3638 = vunpack.c.l.b16 %v3174
        %v3639 = vunpack.c.l.b16 %v3175
        %v3640 = vunpack.c.l.b16 %v3176
        %v3641 = vunpack.c.l.b16 %v3177
        %v3642 = vunpack.c.l.b16 %v3178
        %v3643 = vunpack.c.l.b16 %v3179
        %v3644 = vunpack.c.l.b16 %v3180
        %v3645 = vunpack.c.l.b16 %v3181
        %v3646 = vunpack.c.l.b16 %v3182
        %v3647 = vunpack.c.l.b16 %v3183
        %v3648 = vpack.c.b16 %v3617, %v3616
        %v3649 = vpack.c.b16 %v3619, %v3618
        %v3650 = vpack.c.b16 %v3621, %v3620
        %v3651 = vpack.c.b16 %v3623, %v3622
        %v3652 = vpack.c.b16 %v3625, %v3624
        %v3653 = vpack.c.b16 %v3627, %v3626
        %v3654 = vpack.c.b16 %v3629, %v3628
        %v3655 = vpack.c.b16 %v3631, %v3630
        %v3656 = vpack.c.b16 %v3633, %v3632
        %v3657 = vpack.c.b16 %v3635, %v3634
        %v3658 = vpack.c.b16 %v3637, %v3636
        %v3659 = vpack.c.b16 %v3639, %v3638
        %v3660 = vpack.c.b16 %v3641, %v3640
        %v3661 = vpack.c.b16 %v3643, %v3642
        %v3662 = vpack.c.b16 %v3645, %v3644
        %v3663 = vpack.c.b16 %v3647, %v3646
        %v3680 = vunpack.c.l.b16 %v3213
        %v3681 = vunpack.c.l.b16 %v3223
        %v3682 = vunpack.c.l.b16 %v3237
        %v3683 = vunpack.c.l.b16 %v3247
        %v3684 = vunpack.c.l.b16 %v3261
        %v3685 = vunpack.c.l.b16 %v3271
        %v3686 = vunpack.c.l.b16 %v3285
        %v3687 = vunpack.c.l.b16 %v3295
        %v3688 = vunpack.c.l.b16 %v3309
        %v3689 = vunpack.c.l.b16 %v3319
        %v3690 = vunpack.c.l.b16 %v3333
        %v3691 = vunpack.c.l.b16 %v3343
        %v3692 = vunpack.c.l.b16 %v3357
        %v3693 = vunpack.c.l.b16 %v3367
        %v3694 = vunpack.c.l.b16 %v3381
        %v3695 = vunpack.c.l.b16 %v3391
        %v3696 = vunpack.c.l.b16 %v3405
        %v3697 = vunpack.c.l.b16 %v3415
        %v3698 = vunpack.c.l.b16 %v3429
        %v3699 = vunpack.c.l.b16 %v3439
        %v3700 = vunpack.c.l.b16 %v3453
        %v3701 = vunpack.c.l.b16 %v3463
        %v3702 = vunpack.c.l.b16 %v3477
        %v3703 = vunpack.c.l.b16 %v3487
        %v3704 = vunpack.c.l.b16 %v3501
        %v3705 = vunpack.c.l.b16 %v3511
        %v3706 = vunpack.c.l.b16 %v3525
        %v3707 = vunpack.c.l.b16 %v3535
        %v3708 = vunpack.c.l.b16 %v3549
        %v3709 = vunpack.c.l.b16 %v3559
        %v3710 = vunpack.c.l.b16 %v3573
        %v3711 = vunpack.c.l.b16 %v3583
        %v3712 = vpack.c.b16 %v3681, %v3680
        %v3713 = vpack.c.b16 %v3683, %v3682
        %v3714 = vpack.c.b16 %v3685, %v3684
        %v3715 = vpack.c.b16 %v3687, %v3686
        %v3716 = vpack.c.b16 %v3689, %v3688
        %v3717 = vpack.c.b16 %v3691, %v3690
        %v3718 = vpack.c.b16 %v3693, %v3692
        %v3719 = vpack.c.b16 %v3695, %v3694
        %v3720 = vpack.c.b16 %v3697, %v3696
        %v3721 = vpack.c.b16 %v3699, %v3698
        %v3722 = vpack.c.b16 %v3701, %v3700
        %v3723 = vpack.c.b16 %v3703, %v3702
        %v3724 = vpack.c.b16 %v3705, %v3704
        %v3725 = vpack.c.b16 %v3707, %v3706
        %v3726 = vpack.c.b16 %v3709, %v3708
        %v3727 = vpack.c.b16 %v3711, %v3710
        %v3744 = vld [vmem:[%s1 + $0x180] sm:$0xf]
        %v3745 = vld [vmem:[%s1 + $0x184] sm:$0xf]
        %v3746 = vld [vmem:[%s1 + $0x188] sm:$0xf]
        %v3747 = vld [vmem:[%s1 + $0x18c] sm:$0xf]
        %v3748 = vld [vmem:[%s1 + $0x190] sm:$0xf]
        %v3749 = vld [vmem:[%s1 + $0x194] sm:$0xf]
        %v3750 = vld [vmem:[%s1 + $0x198] sm:$0xf]
        %v3751 = vld [vmem:[%s1 + $0x19c] sm:$0xf]
        %v3752 = vld [vmem:[%s1 + $0x1a0] sm:$0xf]
        %v3753 = vld [vmem:[%s1 + $0x1a4] sm:$0xf]
        %v3754 = vld [vmem:[%s1 + $0x1a8] sm:$0xf]
        %v3755 = vld [vmem:[%s1 + $0x1ac] sm:$0xf]
        %v3756 = vld [vmem:[%s1 + $0x1b0] sm:$0xf]
        %v3757 = vld [vmem:[%s1 + $0x1b4] sm:$0xf]
        %v3758 = vld [vmem:[%s1 + $0x1b8] sm:$0xf]
        %v3759 = vld [vmem:[%s1 + $0x1bc] sm:$0xf]
        %v3760 = vld [vmem:[%s1 + $0x1c0] sm:$0xf]
        %v3761 = vld [vmem:[%s1 + $0x1c4] sm:$0xf]
        %v3762 = vld [vmem:[%s1 + $0x1c8] sm:$0xf]
        %v3763 = vld [vmem:[%s1 + $0x1cc] sm:$0xf]
        %v3764 = vld [vmem:[%s1 + $0x1d0] sm:$0xf]
        %v3765 = vld [vmem:[%s1 + $0x1d4] sm:$0xf]
        %v3766 = vld [vmem:[%s1 + $0x1d8] sm:$0xf]
        %v3767 = vld [vmem:[%s1 + $0x1dc] sm:$0xf]
        %v3768 = vld [vmem:[%s1 + $0x1e0] sm:$0xf]
        %v3769 = vld [vmem:[%s1 + $0x1e4] sm:$0xf]
        %v3770 = vld [vmem:[%s1 + $0x1e8] sm:$0xf]
        %v3771 = vld [vmem:[%s1 + $0x1ec] sm:$0xf]
        %v3772 = vld [vmem:[%s1 + $0x1f0] sm:$0xf]
        %v3773 = vld [vmem:[%s1 + $0x1f4] sm:$0xf]
        %v3774 = vld [vmem:[%s1 + $0x1f8] sm:$0xf]
        %v3775 = vld [vmem:[%s1 + $0x1fc] sm:$0xf]
        %v3808 = vunpack.c.l.b16 %v3744
        %v3809 = vunpack.c.l.b16 %v3745
        %v3810 = vunpack.c.l.b16 %v3746
        %v3811 = vunpack.c.l.b16 %v3747
        %v3812 = vunpack.c.l.b16 %v3748
        %v3813 = vunpack.c.l.b16 %v3749
        %v3814 = vunpack.c.l.b16 %v3750
        %v3815 = vunpack.c.l.b16 %v3751
        %v3816 = vunpack.c.l.b16 %v3752
        %v3817 = vunpack.c.l.b16 %v3753
        %v3818 = vunpack.c.l.b16 %v3754
        %v3819 = vunpack.c.l.b16 %v3755
        %v3820 = vunpack.c.l.b16 %v3756
        %v3821 = vunpack.c.l.b16 %v3757
        %v3822 = vunpack.c.l.b16 %v3758
        %v3823 = vunpack.c.l.b16 %v3759
        %v3824 = vunpack.c.l.b16 %v3760
        %v3825 = vunpack.c.l.b16 %v3761
        %v3826 = vunpack.c.l.b16 %v3762
        %v3827 = vunpack.c.l.b16 %v3763
        %v3828 = vunpack.c.l.b16 %v3764
        %v3829 = vunpack.c.l.b16 %v3765
        %v3830 = vunpack.c.l.b16 %v3766
        %v3831 = vunpack.c.l.b16 %v3767
        %v3832 = vunpack.c.l.b16 %v3768
        %v3833 = vunpack.c.l.b16 %v3769
        %v3834 = vunpack.c.l.b16 %v3770
        %v3835 = vunpack.c.l.b16 %v3771
        %v3836 = vunpack.c.l.b16 %v3772
        %v3837 = vunpack.c.l.b16 %v3773
        %v3838 = vunpack.c.l.b16 %v3774
        %v3839 = vunpack.c.l.b16 %v3775
        %v3840 = vpack.c.b16 %v3809, %v3808
        %v3841 = vpack.c.b16 %v3811, %v3810
        %v3842 = vpack.c.b16 %v3813, %v3812
        %v3843 = vpack.c.b16 %v3815, %v3814
        %v3844 = vpack.c.b16 %v3817, %v3816
        %v3845 = vpack.c.b16 %v3819, %v3818
        %v3846 = vpack.c.b16 %v3821, %v3820
        %v3847 = vpack.c.b16 %v3823, %v3822
        %v3848 = vpack.c.b16 %v3825, %v3824
        %v3849 = vpack.c.b16 %v3827, %v3826
        %v3850 = vpack.c.b16 %v3829, %v3828
        %v3851 = vpack.c.b16 %v3831, %v3830
        %v3852 = vpack.c.b16 %v3833, %v3832
        %v3853 = vpack.c.b16 %v3835, %v3834
        %v3854 = vpack.c.b16 %v3837, %v3836
        %v3855 = vpack.c.b16 %v3839, %v3838
        %3872 = vmatprep.subr.bf16.mxu0 0
        %3873 = vmatpush1.bf16.msra.mxu0 %v3840
        %3874 = vmatprep.subr.bf16.mxu0 0
        %3875 = vmatpush1.bf16.msra.mxu0 %v3841
        %3876 = vmatprep.subr.bf16.mxu0 0
        %3877 = vmatpush1.bf16.msra.mxu0 %v3842
        %3878 = vmatprep.subr.bf16.mxu0 0
        %3879 = vmatpush1.bf16.msra.mxu0 %v3843
        %3880 = vmatprep.subr.bf16.mxu0 0
        %3881 = vmatpush1.bf16.msra.mxu0 %v3844
        %3882 = vmatprep.subr.bf16.mxu0 0
        %3883 = vmatpush1.bf16.msra.mxu0 %v3845
        %3884 = vmatprep.subr.bf16.mxu0 0
        %3885 = vmatpush1.bf16.msra.mxu0 %v3846
        %3886 = vmatprep.subr.bf16.mxu0 0
        %3887 = vmatpush1.bf16.msra.mxu0 %v3847
        %3888 = vmatprep.subr.bf16.mxu0 0
        %3889 = vmatpush1.bf16.msra.mxu0 %v3848
        %3890 = vmatprep.subr.bf16.mxu0 0
        %3891 = vmatpush1.bf16.msra.mxu0 %v3849
        %3892 = vmatprep.subr.bf16.mxu0 0
        %3893 = vmatpush1.bf16.msra.mxu0 %v3850
        %3894 = vmatprep.subr.bf16.mxu0 0
        %3895 = vmatpush1.bf16.msra.mxu0 %v3851
        %3896 = vmatprep.subr.bf16.mxu0 0
        %3897 = vmatpush1.bf16.msra.mxu0 %v3852
        %3898 = vmatprep.subr.bf16.mxu0 0
        %3899 = vmatpush1.bf16.msra.mxu0 %v3853
        %3900 = vmatprep.subr.bf16.mxu0 0
        %3901 = vmatpush1.bf16.msra.mxu0 %v3854
        %3902 = vmatprep.subr.bf16.mxu0 0
        %3903 = vmatpush1.bf16.msra.mxu0 %v3855
        %3904 = vmatprep.mubr.bf16.mxu0 %v3712
        %3905 = vmatmul.mubr.bf16.gmra.mrb[0].mxu0 %v3648
        %v3906 = vpop.f32.mrb[0].mxu0
        %v3907 = vadd.f32 0.0, %v3906
        %v3908 = vpop.f32.mrb[0].mxu0
        %v3909 = vpop.f32.mrb[0].mxu0
        %v3910 = vadd.f32 0.0, %v3909
        %v3911 = vpop.f32.mrb[0].mxu0
        %3912 = vmatprep.mubr.bf16.mxu0 %v3713
        %3913 = vmatmul.mubr.bf16.gmra.mrb[0].mxu0 %v3649
        %v3914 = vpop.f32.mrb[0].mxu0
        %v3915 = vadd.f32 0.0, %v3914
        %v3916 = vpop.f32.mrb[0].mxu0
        %v3917 = vpop.f32.mrb[0].mxu0
        %v3918 = vadd.f32 0.0, %v3917
        %v3919 = vpop.f32.mrb[0].mxu0
        %3920 = vmatprep.mubr.bf16.mxu0 %v3714
        %3921 = vmatmul.mubr.bf16.gmra.mrb[0].mxu0 %v3650
        %v3922 = vpop.f32.mrb[0].mxu0
        %v3923 = vadd.f32 0.0, %v3922
        %v3924 = vpop.f32.mrb[0].mxu0
        %v3925 = vpop.f32.mrb[0].mxu0
        %v3926 = vadd.f32 0.0, %v3925
        %v3927 = vpop.f32.mrb[0].mxu0
        %3928 = vmatprep.mubr.bf16.mxu0 %v3715
        %3929 = vmatmul.mubr.bf16.gmra.mrb[0].mxu0 %v3651
        %v3930 = vpop.f32.mrb[0].mxu0
        %v3931 = vadd.f32 0.0, %v3930
        %v3932 = vpop.f32.mrb[0].mxu0
        %v3933 = vpop.f32.mrb[0].mxu0
        %v3934 = vadd.f32 0.0, %v3933
        %v3935 = vpop.f32.mrb[0].mxu0
        %3936 = vmatprep.mubr.bf16.mxu0 %v3716
        %3937 = vmatmul.mubr.bf16.gmra.mrb[0].mxu0 %v3652
        %v3938 = vpop.f32.mrb[0].mxu0
        %v3939 = vadd.f32 0.0, %v3938
        %v3940 = vpop.f32.mrb[0].mxu0
        %v3941 = vpop.f32.mrb[0].mxu0
        %v3942 = vadd.f32 0.0, %v3941
        %v3943 = vpop.f32.mrb[0].mxu0
        %3944 = vmatprep.mubr.bf16.mxu0 %v3717
        %3945 = vmatmul.mubr.bf16.gmra.mrb[0].mxu0 %v3653
        %v3946 = vpop.f32.mrb[0].mxu0
        %v3947 = vadd.f32 0.0, %v3946
        %v3948 = vpop.f32.mrb[0].mxu0
        %v3949 = vpop.f32.mrb[0].mxu0
        %v3950 = vadd.f32 0.0, %v3949
        %v3951 = vpop.f32.mrb[0].mxu0
        %3952 = vmatprep.mubr.bf16.mxu0 %v3718
        %3953 = vmatmul.mubr.bf16.gmra.mrb[0].mxu0 %v3654
        %v3954 = vpop.f32.mrb[0].mxu0
        %v3955 = vadd.f32 0.0, %v3954
        %v3956 = vpop.f32.mrb[0].mxu0
        %v3957 = vpop.f32.mrb[0].mxu0
        %v3958 = vadd.f32 0.0, %v3957
        %v3959 = vpop.f32.mrb[0].mxu0
        %3960 = vmatprep.mubr.bf16.mxu0 %v3719
        %3961 = vmatmul.mubr.bf16.gmra.mrb[0].mxu0 %v3655
        %v3962 = vpop.f32.mrb[0].mxu0
        %v3963 = vadd.f32 0.0, %v3962
        %v3964 = vpop.f32.mrb[0].mxu0
        %v3965 = vpop.f32.mrb[0].mxu0
        %v3966 = vadd.f32 0.0, %v3965
        %v3967 = vpop.f32.mrb[0].mxu0
        %3968 = vmatprep.mubr.bf16.mxu0 %v3720
        %3969 = vmatmul.mubr.bf16.gmra.mrb[0].mxu0 %v3656
        %v3970 = vpop.f32.mrb[0].mxu0
        %v3971 = vadd.f32 0.0, %v3970
        %v3972 = vpop.f32.mrb[0].mxu0
        %v3973 = vpop.f32.mrb[0].mxu0
        %v3974 = vadd.f32 0.0, %v3973
        %v3975 = vpop.f32.mrb[0].mxu0
        %3976 = vmatprep.mubr.bf16.mxu0 %v3721
        %3977 = vmatmul.mubr.bf16.gmra.mrb[0].mxu0 %v3657
        %v3978 = vpop.f32.mrb[0].mxu0
        %v3979 = vadd.f32 0.0, %v3978
        %v3980 = vpop.f32.mrb[0].mxu0
        %v3981 = vpop.f32.mrb[0].mxu0
        %v3982 = vadd.f32 0.0, %v3981
        %v3983 = vpop.f32.mrb[0].mxu0
        %3984 = vmatprep.mubr.bf16.mxu0 %v3722
        %3985 = vmatmul.mubr.bf16.gmra.mrb[0].mxu0 %v3658
        %v3986 = vpop.f32.mrb[0].mxu0
        %v3987 = vadd.f32 0.0, %v3986
        %v3988 = vpop.f32.mrb[0].mxu0
        %v3989 = vpop.f32.mrb[0].mxu0
        %v3990 = vadd.f32 0.0, %v3989
        %v3991 = vpop.f32.mrb[0].mxu0
        %3992 = vmatprep.mubr.bf16.mxu0 %v3723
        %3993 = vmatmul.mubr.bf16.gmra.mrb[0].mxu0 %v3659
        %v3994 = vpop.f32.mrb[0].mxu0
        %v3995 = vadd.f32 0.0, %v3994
        %v3996 = vpop.f32.mrb[0].mxu0
        %v3997 = vpop.f32.mrb[0].mxu0
        %v3998 = vadd.f32 0.0, %v3997
        %v3999 = vpop.f32.mrb[0].mxu0
        %4000 = vmatprep.mubr.bf16.mxu0 %v3724
        %4001 = vmatmul.mubr.bf16.gmra.mrb[0].mxu0 %v3660
        %v4002 = vpop.f32.mrb[0].mxu0
        %v4003 = vadd.f32 0.0, %v4002
        %v4004 = vpop.f32.mrb[0].mxu0
        %v4005 = vpop.f32.mrb[0].mxu0
        %v4006 = vadd.f32 0.0, %v4005
        %v4007 = vpop.f32.mrb[0].mxu0
        %4008 = vmatprep.mubr.bf16.mxu0 %v3725
        %4009 = vmatmul.mubr.bf16.gmra.mrb[0].mxu0 %v3661
        %v4010 = vpop.f32.mrb[0].mxu0
        %v4011 = vadd.f32 0.0, %v4010
        %v4012 = vpop.f32.mrb[0].mxu0
        %v4013 = vpop.f32.mrb[0].mxu0
        %v4014 = vadd.f32 0.0, %v4013
        %v4015 = vpop.f32.mrb[0].mxu0
        %4016 = vmatprep.mubr.bf16.mxu0 %v3726
        %4017 = vmatmul.mubr.bf16.gmra.mrb[0].mxu0 %v3662
        %v4018 = vpop.f32.mrb[0].mxu0
        %v4019 = vadd.f32 0.0, %v4018
        %v4020 = vpop.f32.mrb[0].mxu0
        %v4021 = vpop.f32.mrb[0].mxu0
        %v4022 = vadd.f32 0.0, %v4021
        %v4023 = vpop.f32.mrb[0].mxu0
        %4024 = vmatprep.mubr.bf16.mxu0 %v3727
        %4025 = vmatmul.mubr.bf16.gmra.mrb[0].mxu0 %v3663
        %v4026 = vpop.f32.mrb[0].mxu0
        %v4027 = vadd.f32 0.0, %v4026
        %v4028 = vpop.f32.mrb[0].mxu0
        %v4029 = vpop.f32.mrb[0].mxu0
        %v4030 = vadd.f32 0.0, %v4029
        %v4031 = vpop.f32.mrb[0].mxu0
        %4032 = vdwg.mxu0
        %v4033 = vld [vmem:[#allocation2] sm:$0xff]
        %v4034 = vld [vmem:[#allocation2 + $0x8] sm:$0xff]
        %v4035 = vld [vmem:[#allocation2 + $0x10] sm:$0xff]
        %v4036 = vld [vmem:[#allocation2 + $0x18] sm:$0xff]
        %v4037 = vld [vmem:[#allocation2 + $0x20] sm:$0xff]
        %v4038 = vld [vmem:[#allocation2 + $0x28] sm:$0xff]
        %v4039 = vld [vmem:[#allocation2 + $0x30] sm:$0xff]
        %v4040 = vld [vmem:[#allocation2 + $0x38] sm:$0xff]
        %v4041 = vld [vmem:[#allocation2 + $0x40] sm:$0xff]
        %v4042 = vld [vmem:[#allocation2 + $0x48] sm:$0xff]
        %v4043 = vld [vmem:[#allocation2 + $0x50] sm:$0xff]
        %v4044 = vld [vmem:[#allocation2 + $0x58] sm:$0xff]
        %v4045 = vld [vmem:[#allocation2 + $0x60] sm:$0xff]
        %v4046 = vld [vmem:[#allocation2 + $0x68] sm:$0xff]
        %v4047 = vld [vmem:[#allocation2 + $0x70] sm:$0xff]
        %v4048 = vld [vmem:[#allocation2 + $0x78] sm:$0xff]
        %v4049 = vld [vmem:[#allocation2 + $0x80] sm:$0xff]
        %v4050 = vld [vmem:[#allocation2 + $0x88] sm:$0xff]
        %v4051 = vld [vmem:[#allocation2 + $0x90] sm:$0xff]
        %v4052 = vld [vmem:[#allocation2 + $0x98] sm:$0xff]
        %v4053 = vld [vmem:[#allocation2 + $0xa0] sm:$0xff]
        %v4054 = vld [vmem:[#allocation2 + $0xa8] sm:$0xff]
        %v4055 = vld [vmem:[#allocation2 + $0xb0] sm:$0xff]
        %v4056 = vld [vmem:[#allocation2 + $0xb8] sm:$0xff]
        %v4057 = vld [vmem:[#allocation2 + $0xc0] sm:$0xff]
        %v4058 = vld [vmem:[#allocation2 + $0xc8] sm:$0xff]
        %v4059 = vld [vmem:[#allocation2 + $0xd0] sm:$0xff]
        %v4060 = vld [vmem:[#allocation2 + $0xd8] sm:$0xff]
        %v4061 = vld [vmem:[#allocation2 + $0xe0] sm:$0xff]
        %v4062 = vld [vmem:[#allocation2 + $0xe8] sm:$0xff]
        %v4063 = vld [vmem:[#allocation2 + $0xf0] sm:$0xff]
        %v4064 = vld [vmem:[#allocation2 + $0xf8] sm:$0xff]
        %v4065 = vadd.f32 %v4033, %v3907
        %v4066 = vadd.f32 %v4034, %v3910
        %v4067 = vadd.f32 %v4035, %v3915
        %v4068 = vadd.f32 %v4036, %v3918
        %v4069 = vadd.f32 %v4037, %v3923
        %v4070 = vadd.f32 %v4038, %v3926
        %v4071 = vadd.f32 %v4039, %v3931
        %v4072 = vadd.f32 %v4040, %v3934
        %v4073 = vadd.f32 %v4041, %v3939
        %v4074 = vadd.f32 %v4042, %v3942
        %v4075 = vadd.f32 %v4043, %v3947
        %v4076 = vadd.f32 %v4044, %v3950
        %v4077 = vadd.f32 %v4045, %v3955
        %v4078 = vadd.f32 %v4046, %v3958
        %v4079 = vadd.f32 %v4047, %v3963
        %v4080 = vadd.f32 %v4048, %v3966
        %v4081 = vadd.f32 %v4049, %v3971
        %v4082 = vadd.f32 %v4050, %v3974
        %v4083 = vadd.f32 %v4051, %v3979
        %v4084 = vadd.f32 %v4052, %v3982
        %v4085 = vadd.f32 %v4053, %v3987
        %v4086 = vadd.f32 %v4054, %v3990
        %v4087 = vadd.f32 %v4055, %v3995
        %v4088 = vadd.f32 %v4056, %v3998
        %v4089 = vadd.f32 %v4057, %v4003
        %v4090 = vadd.f32 %v4058, %v4006
        %v4091 = vadd.f32 %v4059, %v4011
        %v4092 = vadd.f32 %v4060, %v4014
        %v4093 = vadd.f32 %v4061, %v4019
        %v4094 = vadd.f32 %v4062, %v4022
        %v4095 = vadd.f32 %v4063, %v4027
        %v4096 = vadd.f32 %v4064, %v4030
        %4097 = vst [vmem:[#allocation2] sm:$0xff] %v4065
        %4098 = vst [vmem:[#allocation2 + $0x8] sm:$0xff] %v4066
        %4099 = vst [vmem:[#allocation2 + $0x10] sm:$0xff] %v4067
        %4100 = vst [vmem:[#allocation2 + $0x18] sm:$0xff] %v4068
        %4101 = vst [vmem:[#allocation2 + $0x20] sm:$0xff] %v4069
        %4102 = vst [vmem:[#allocation2 + $0x28] sm:$0xff] %v4070
        %4103 = vst [vmem:[#allocation2 + $0x30] sm:$0xff] %v4071
        %4104 = vst [vmem:[#allocation2 + $0x38] sm:$0xff] %v4072
        %4105 = vst [vmem:[#allocation2 + $0x40] sm:$0xff] %v4073
        %4106 = vst [vmem:[#allocation2 + $0x48] sm:$0xff] %v4074
        %4107 = vst [vmem:[#allocation2 + $0x50] sm:$0xff] %v4075
        %4108 = vst [vmem:[#allocation2 + $0x58] sm:$0xff] %v4076
        %4109 = vst [vmem:[#allocation2 + $0x60] sm:$0xff] %v4077
        %4110 = vst [vmem:[#allocation2 + $0x68] sm:$0xff] %v4078
        %4111 = vst [vmem:[#allocation2 + $0x70] sm:$0xff] %v4079
        %4112 = vst [vmem:[#allocation2 + $0x78] sm:$0xff] %v4080
        %4113 = vst [vmem:[#allocation2 + $0x80] sm:$0xff] %v4081
        %4114 = vst [vmem:[#allocation2 + $0x88] sm:$0xff] %v4082
        %4115 = vst [vmem:[#allocation2 + $0x90] sm:$0xff] %v4083
        %4116 = vst [vmem:[#allocation2 + $0x98] sm:$0xff] %v4084
        %4117 = vst [vmem:[#allocation2 + $0xa0] sm:$0xff] %v4085
        %4118 = vst [vmem:[#allocation2 + $0xa8] sm:$0xff] %v4086
        %4119 = vst [vmem:[#allocation2 + $0xb0] sm:$0xff] %v4087
        %4120 = vst [vmem:[#allocation2 + $0xb8] sm:$0xff] %v4088
        %4121 = vst [vmem:[#allocation2 + $0xc0] sm:$0xff] %v4089
        %4122 = vst [vmem:[#allocation2 + $0xc8] sm:$0xff] %v4090
        %4123 = vst [vmem:[#allocation2 + $0xd0] sm:$0xff] %v4091
        %4124 = vst [vmem:[#allocation2 + $0xd8] sm:$0xff] %v4092
        %4125 = vst [vmem:[#allocation2 + $0xe0] sm:$0xff] %v4093
        %4126 = vst [vmem:[#allocation2 + $0xe8] sm:$0xff] %v4094
        %4127 = vst [vmem:[#allocation2 + $0xf0] sm:$0xff] %v4095
        %4128 = vst [vmem:[#allocation2 + $0xf8] sm:$0xff] %v4096
        %v4129 = vld [vmem:[%s3151] sm:$0xe]
        %v4130 = vld [vmem:[%s3151 + $0x4] sm:$0xf]
        %v4131 = vld [vmem:[%s3151 + $0x8] sm:$0x1]
        %v4132 = vld [vmem:[%s3151 + $0xc] sm:$0xe]
        %v4133 = vld [vmem:[%s3151 + $0x10] sm:$0xf]
        %v4134 = vld [vmem:[%s3151 + $0x14] sm:$0x1]
        %v4135 = vld [vmem:[%s3151 + $0x18] sm:$0xe]
        %v4136 = vld [vmem:[%s3151 + $0x1c] sm:$0xf]
        %v4137 = vld [vmem:[%s3151 + $0x20] sm:$0x1]
        %v4138 = vld [vmem:[%s3151 + $0x24] sm:$0xe]
        %v4139 = vld [vmem:[%s3151 + $0x28] sm:$0xf]
        %v4140 = vld [vmem:[%s3151 + $0x2c] sm:$0x1]
        %v4141 = vld [vmem:[%s3151 + $0x30] sm:$0xe]
        %v4142 = vld [vmem:[%s3151 + $0x34] sm:$0xf]
        %v4143 = vld [vmem:[%s3151 + $0x38] sm:$0x1]
        %v4144 = vld [vmem:[%s3151 + $0x3c] sm:$0xe]
        %v4145 = vld [vmem:[%s3151 + $0x40] sm:$0xf]
        %v4146 = vld [vmem:[%s3151 + $0x44] sm:$0x1]
        %v4147 = vld [vmem:[%s3151 + $0x48] sm:$0xe]
        %v4148 = vld [vmem:[%s3151 + $0x4c] sm:$0xf]
        %v4149 = vld [vmem:[%s3151 + $0x50] sm:$0x1]
        %v4150 = vld [vmem:[%s3151 + $0x54] sm:$0xe]
        %v4151 = vld [vmem:[%s3151 + $0x58] sm:$0xf]
        %v4152 = vld [vmem:[%s3151 + $0x5c] sm:$0x1]
        %v4153 = vld [vmem:[%s3151 + $0x60] sm:$0xe]
        %v4154 = vld [vmem:[%s3151 + $0x64] sm:$0xf]
        %v4155 = vld [vmem:[%s3151 + $0x68] sm:$0x1]
        %v4156 = vld [vmem:[%s3151 + $0x6c] sm:$0xe]
        %v4157 = vld [vmem:[%s3151 + $0x70] sm:$0xf]
        %v4158 = vld [vmem:[%s3151 + $0x74] sm:$0x1]
        %v4159 = vld [vmem:[%s3151 + $0x78] sm:$0xe]
        %v4160 = vld [vmem:[%s3151 + $0x7c] sm:$0xf]
        %v4161 = vld [vmem:[%s3151 + $0x80] sm:$0x1]
        %v4162 = vld [vmem:[%s3151 + $0x84] sm:$0xe]
        %v4163 = vld [vmem:[%s3151 + $0x88] sm:$0xf]
        %v4164 = vld [vmem:[%s3151 + $0x8c] sm:$0x1]
        %v4165 = vld [vmem:[%s3151 + $0x90] sm:$0xe]
        %v4166 = vld [vmem:[%s3151 + $0x94] sm:$0xf]
        %v4167 = vld [vmem:[%s3151 + $0x98] sm:$0x1]
        %v4168 = vld [vmem:[%s3151 + $0x9c] sm:$0xe]
        %v4169 = vld [vmem:[%s3151 + $0xa0] sm:$0xf]
        %v4170 = vld [vmem:[%s3151 + $0xa4] sm:$0x1]
        %v4171 = vld [vmem:[%s3151 + $0xa8] sm:$0xe]
        %v4172 = vld [vmem:[%s3151 + $0xac] sm:$0xf]
        %v4173 = vld [vmem:[%s3151 + $0xb0] sm:$0x1]
        %v4174 = vld [vmem:[%s3151 + $0xb4] sm:$0xe]
        %v4175 = vld [vmem:[%s3151 + $0xb8] sm:$0xf]
        %v4176 = vld [vmem:[%s3151 + $0xbc] sm:$0x1]
        %v4225 = vrot.slane %v4129, 5
        %v4226 = vrot.slane %v4225, 4
        %v4227 = vrot.slane %v4130, 5
        %v4228 = vsel %vm1339, %v4226, %v4227
        %v4229 = vrot.slane %v4227, 4
        %v4230 = vrot.slane %v4131, 5
        %v4231 = vsel %vm1339, %v4229, %v4230
        %v4232 = vrot.slane %v4132, 5
        %v4233 = vrot.slane %v4232, 4
        %v4234 = vrot.slane %v4133, 5
        %v4235 = vsel %vm1339, %v4233, %v4234
        %v4236 = vrot.slane %v4234, 4
        %v4237 = vrot.slane %v4134, 5
        %v4238 = vsel %vm1339, %v4236, %v4237
        %v4239 = vrot.slane %v4135, 5
        %v4240 = vrot.slane %v4239, 4
        %v4241 = vrot.slane %v4136, 5
        %v4242 = vsel %vm1339, %v4240, %v4241
        %v4243 = vrot.slane %v4241, 4
        %v4244 = vrot.slane %v4137, 5
        %v4245 = vsel %vm1339, %v4243, %v4244
        %v4246 = vrot.slane %v4138, 5
        %v4247 = vrot.slane %v4246, 4
        %v4248 = vrot.slane %v4139, 5
        %v4249 = vsel %vm1339, %v4247, %v4248
        %v4250 = vrot.slane %v4248, 4
        %v4251 = vrot.slane %v4140, 5
        %v4252 = vsel %vm1339, %v4250, %v4251
        %v4253 = vrot.slane %v4141, 5
        %v4254 = vrot.slane %v4253, 4
        %v4255 = vrot.slane %v4142, 5
        %v4256 = vsel %vm1339, %v4254, %v4255
        %v4257 = vrot.slane %v4255, 4
        %v4258 = vrot.slane %v4143, 5
        %v4259 = vsel %vm1339, %v4257, %v4258
        %v4260 = vrot.slane %v4144, 5
        %v4261 = vrot.slane %v4260, 4
        %v4262 = vrot.slane %v4145, 5
        %v4263 = vsel %vm1339, %v4261, %v4262
        %v4264 = vrot.slane %v4262, 4
        %v4265 = vrot.slane %v4146, 5
        %v4266 = vsel %vm1339, %v4264, %v4265
        %v4267 = vrot.slane %v4147, 5
        %v4268 = vrot.slane %v4267, 4
        %v4269 = vrot.slane %v4148, 5
        %v4270 = vsel %vm1339, %v4268, %v4269
        %v4271 = vrot.slane %v4269, 4
        %v4272 = vrot.slane %v4149, 5
        %v4273 = vsel %vm1339, %v4271, %v4272
        %v4274 = vrot.slane %v4150, 5
        %v4275 = vrot.slane %v4274, 4
        %v4276 = vrot.slane %v4151, 5
        %v4277 = vsel %vm1339, %v4275, %v4276
        %v4278 = vrot.slane %v4276, 4
        %v4279 = vrot.slane %v4152, 5
        %v4280 = vsel %vm1339, %v4278, %v4279
        %v4281 = vrot.slane %v4153, 5
        %v4282 = vrot.slane %v4281, 4
        %v4283 = vrot.slane %v4154, 5
        %v4284 = vsel %vm1339, %v4282, %v4283
        %v4285 = vrot.slane %v4283, 4
        %v4286 = vrot.slane %v4155, 5
        %v4287 = vsel %vm1339, %v4285, %v4286
        %v4288 = vrot.slane %v4156, 5
        %v4289 = vrot.slane %v4288, 4
        %v4290 = vrot.slane %v4157, 5
        %v4291 = vsel %vm1339, %v4289, %v4290
        %v4292 = vrot.slane %v4290, 4
        %v4293 = vrot.slane %v4158, 5
        %v4294 = vsel %vm1339, %v4292, %v4293
        %v4295 = vrot.slane %v4159, 5
        %v4296 = vrot.slane %v4295, 4
        %v4297 = vrot.slane %v4160, 5
        %v4298 = vsel %vm1339, %v4296, %v4297
        %v4299 = vrot.slane %v4297, 4
        %v4300 = vrot.slane %v4161, 5
        %v4301 = vsel %vm1339, %v4299, %v4300
        %v4302 = vrot.slane %v4162, 5
        %v4303 = vrot.slane %v4302, 4
        %v4304 = vrot.slane %v4163, 5
        %v4305 = vsel %vm1339, %v4303, %v4304
        %v4306 = vrot.slane %v4304, 4
        %v4307 = vrot.slane %v4164, 5
        %v4308 = vsel %vm1339, %v4306, %v4307
        %v4309 = vrot.slane %v4165, 5
        %v4310 = vrot.slane %v4309, 4
        %v4311 = vrot.slane %v4166, 5
        %v4312 = vsel %vm1339, %v4310, %v4311
        %v4313 = vrot.slane %v4311, 4
        %v4314 = vrot.slane %v4167, 5
        %v4315 = vsel %vm1339, %v4313, %v4314
        %v4316 = vrot.slane %v4168, 5
        %v4317 = vrot.slane %v4316, 4
        %v4318 = vrot.slane %v4169, 5
        %v4319 = vsel %vm1339, %v4317, %v4318
        %v4320 = vrot.slane %v4318, 4
        %v4321 = vrot.slane %v4170, 5
        %v4322 = vsel %vm1339, %v4320, %v4321
        %v4323 = vrot.slane %v4171, 5
        %v4324 = vrot.slane %v4323, 4
        %v4325 = vrot.slane %v4172, 5
        %v4326 = vsel %vm1339, %v4324, %v4325
        %v4327 = vrot.slane %v4325, 4
        %v4328 = vrot.slane %v4173, 5
        %v4329 = vsel %vm1339, %v4327, %v4328
        %v4330 = vrot.slane %v4174, 5
        %v4331 = vrot.slane %v4330, 4
        %v4332 = vrot.slane %v4175, 5
        %v4333 = vsel %vm1339, %v4331, %v4332
        %v4334 = vrot.slane %v4332, 4
        %v4335 = vrot.slane %v4176, 5
        %v4336 = vsel %vm1339, %v4334, %v4335
        %v4337 = vld [vmem:[%s1 + $0x200] sm:$0xf]
        %v4338 = vld [vmem:[%s1 + $0x204] sm:$0xf]
        %v4339 = vld [vmem:[%s1 + $0x208] sm:$0xf]
        %v4340 = vld [vmem:[%s1 + $0x20c] sm:$0xf]
        %v4341 = vld [vmem:[%s1 + $0x210] sm:$0xf]
        %v4342 = vld [vmem:[%s1 + $0x214] sm:$0xf]
        %v4343 = vld [vmem:[%s1 + $0x218] sm:$0xf]
        %v4344 = vld [vmem:[%s1 + $0x21c] sm:$0xf]
        %v4345 = vld [vmem:[%s1 + $0x220] sm:$0xf]
        %v4346 = vld [vmem:[%s1 + $0x224] sm:$0xf]
        %v4347 = vld [vmem:[%s1 + $0x228] sm:$0xf]
        %v4348 = vld [vmem:[%s1 + $0x22c] sm:$0xf]
        %v4349 = vld [vmem:[%s1 + $0x230] sm:$0xf]
        %v4350 = vld [vmem:[%s1 + $0x234] sm:$0xf]
        %v4351 = vld [vmem:[%s1 + $0x238] sm:$0xf]
        %v4352 = vld [vmem:[%s1 + $0x23c] sm:$0xf]
        %v4353 = vunpack.c.l.b16 %v4228
        %v4354 = vunpack.c.l.b16 %v4231
        %v4355 = vunpack.c.l.b16 %v4235
        %v4356 = vunpack.c.l.b16 %v4238
        %v4357 = vunpack.c.l.b16 %v4242
        %v4358 = vunpack.c.l.b16 %v4245
        %v4359 = vunpack.c.l.b16 %v4249
        %v4360 = vunpack.c.l.b16 %v4252
        %v4361 = vunpack.c.l.b16 %v4256
        %v4362 = vunpack.c.l.b16 %v4259
        %v4363 = vunpack.c.l.b16 %v4263
        %v4364 = vunpack.c.l.b16 %v4266
        %v4365 = vunpack.c.l.b16 %v4270
        %v4366 = vunpack.c.l.b16 %v4273
        %v4367 = vunpack.c.l.b16 %v4277
        %v4368 = vunpack.c.l.b16 %v4280
        %v4369 = vunpack.c.l.b16 %v4284
        %v4370 = vunpack.c.l.b16 %v4287
        %v4371 = vunpack.c.l.b16 %v4291
        %v4372 = vunpack.c.l.b16 %v4294
        %v4373 = vunpack.c.l.b16 %v4298
        %v4374 = vunpack.c.l.b16 %v4301
        %v4375 = vunpack.c.l.b16 %v4305
        %v4376 = vunpack.c.l.b16 %v4308
        %v4377 = vunpack.c.l.b16 %v4312
        %v4378 = vunpack.c.l.b16 %v4315
        %v4379 = vunpack.c.l.b16 %v4319
        %v4380 = vunpack.c.l.b16 %v4322
        %v4381 = vunpack.c.l.b16 %v4326
        %v4382 = vunpack.c.l.b16 %v4329
        %v4383 = vunpack.c.l.b16 %v4333
        %v4384 = vunpack.c.l.b16 %v4336
        %v4385 = vpack.c.b16 %v4354, %v4353
        %v4386 = vpack.c.b16 %v4356, %v4355
        %v4387 = vpack.c.b16 %v4358, %v4357
        %v4388 = vpack.c.b16 %v4360, %v4359
        %v4389 = vpack.c.b16 %v4362, %v4361
        %v4390 = vpack.c.b16 %v4364, %v4363
        %v4391 = vpack.c.b16 %v4366, %v4365
        %v4392 = vpack.c.b16 %v4368, %v4367
        %v4393 = vpack.c.b16 %v4370, %v4369
        %v4394 = vpack.c.b16 %v4372, %v4371
        %v4395 = vpack.c.b16 %v4374, %v4373
        %v4396 = vpack.c.b16 %v4376, %v4375
        %v4397 = vpack.c.b16 %v4378, %v4377
        %v4398 = vpack.c.b16 %v4380, %v4379
        %v4399 = vpack.c.b16 %v4382, %v4381
        %v4400 = vpack.c.b16 %v4384, %v4383
        %v4433 = vunpack.c.l.b16 %v4337
        %v4434 = vunpack.c.l.b16 %v4338
        %v4435 = vunpack.c.l.b16 %v4339
        %v4436 = vunpack.c.l.b16 %v4340
        %v4437 = vunpack.c.l.b16 %v4341
        %v4438 = vunpack.c.l.b16 %v4342
        %v4439 = vunpack.c.l.b16 %v4343
        %v4440 = vunpack.c.l.b16 %v4344
        %v4441 = vunpack.c.l.b16 %v4345
        %v4442 = vunpack.c.l.b16 %v4346
        %v4443 = vunpack.c.l.b16 %v4347
        %v4444 = vunpack.c.l.b16 %v4348
        %v4445 = vunpack.c.l.b16 %v4349
        %v4446 = vunpack.c.l.b16 %v4350
        %v4447 = vunpack.c.l.b16 %v4351
        %v4448 = vunpack.c.l.b16 %v4352
        %v4449 = vpack.c.b16 %v4434, %v4433
        %v4450 = vpack.c.b16 %v4436, %v4435
        %v4451 = vpack.c.b16 %v4438, %v4437
        %v4452 = vpack.c.b16 %v4440, %v4439
        %v4453 = vpack.c.b16 %v4442, %v4441
        %v4454 = vpack.c.b16 %v4444, %v4443
        %v4455 = vpack.c.b16 %v4446, %v4445
        %v4456 = vpack.c.b16 %v4448, %v4447
        %4465 = vmatprep.subr.bf16.mxu0 0
        %4466 = vmatpush1.bf16.msra.mxu0 %v4449
        %4467 = vmatprep.subr.bf16.mxu0 0
        %4468 = vmatpush1.bf16.msra.mxu0 %v4450
        %4469 = vmatprep.subr.bf16.mxu0 0
        %4470 = vmatpush1.bf16.msra.mxu0 %v4451
        %4471 = vmatprep.subr.bf16.mxu0 0
        %4472 = vmatpush1.bf16.msra.mxu0 %v4452
        %4473 = vmatprep.subr.bf16.mxu0 0
        %4474 = vmatpush1.bf16.msra.mxu0 %v4453
        %4475 = vmatprep.subr.bf16.mxu0 0
        %4476 = vmatpush1.bf16.msra.mxu0 %v4454
        %4477 = vmatprep.subr.bf16.mxu0 0
        %4478 = vmatpush1.bf16.msra.mxu0 %v4455
        %4479 = vmatprep.subr.bf16.mxu0 0
        %4480 = vmatpush1.bf16.msra.mxu0 %v4456
        %4481 = vmatprep.subr.bf16.mxu0 0
        %4482 = vmatpush1.bf16.msra.mxu0 0
        %4483 = vmatprep.subr.bf16.mxu0 0
        %4484 = vmatpush1.bf16.msra.mxu0 0
        %4485 = vmatprep.subr.bf16.mxu0 0
        %4486 = vmatpush1.bf16.msra.mxu0 0
        %4487 = vmatprep.subr.bf16.mxu0 0
        %4488 = vmatpush1.bf16.msra.mxu0 0
        %4489 = vmatprep.subr.bf16.mxu0 0
        %4490 = vmatpush1.bf16.msra.mxu0 0
        %4491 = vmatprep.subr.bf16.mxu0 0
        %4492 = vmatpush1.bf16.msra.mxu0 0
        %4493 = vmatprep.subr.bf16.mxu0 0
        %4494 = vmatpush1.bf16.msra.mxu0 0
        %4495 = vmatprep.subr.bf16.mxu0 0
        %4496 = vmatpush1.bf16.msra.mxu0 0
        %4497 = vmatprep.mubr.bf16.mxu0 0
        %4498 = vmatmul.mubr.bf16.gmra.mrb[0].mxu0 %v4385
        %v4499 = vpop.f32.mrb[0].mxu0
        %v4500 = vadd.f32 0.0, %v4499
        %v4501 = vpop.f32.mrb[0].mxu0
        %v4502 = vpop.f32.mrb[0].mxu0
        %v4503 = vadd.f32 0.0, %v4502
        %v4504 = vpop.f32.mrb[0].mxu0
        %4505 = vmatprep.mubr.bf16.mxu0 0
        %4506 = vmatmul.mubr.bf16.gmra.mrb[0].mxu0 %v4386
        %v4507 = vpop.f32.mrb[0].mxu0
        %v4508 = vadd.f32 0.0, %v4507
        %v4509 = vpop.f32.mrb[0].mxu0
        %v4510 = vpop.f32.mrb[0].mxu0
        %v4511 = vadd.f32 0.0, %v4510
        %v4512 = vpop.f32.mrb[0].mxu0
        %4513 = vmatprep.mubr.bf16.mxu0 0
        %4514 = vmatmul.mubr.bf16.gmra.mrb[0].mxu0 %v4387
        %v4515 = vpop.f32.mrb[0].mxu0
        %v4516 = vadd.f32 0.0, %v4515
        %v4517 = vpop.f32.mrb[0].mxu0
        %v4518 = vpop.f32.mrb[0].mxu0
        %v4519 = vadd.f32 0.0, %v4518
        %v4520 = vpop.f32.mrb[0].mxu0
        %4521 = vmatprep.mubr.bf16.mxu0 0
        %4522 = vmatmul.mubr.bf16.gmra.mrb[0].mxu0 %v4388
        %v4523 = vpop.f32.mrb[0].mxu0
        %v4524 = vadd.f32 0.0, %v4523
        %v4525 = vpop.f32.mrb[0].mxu0
        %v4526 = vpop.f32.mrb[0].mxu0
        %v4527 = vadd.f32 0.0, %v4526
        %v4528 = vpop.f32.mrb[0].mxu0
        %4529 = vmatprep.mubr.bf16.mxu0 0
        %4530 = vmatmul.mubr.bf16.gmra.mrb[0].mxu0 %v4389
        %v4531 = vpop.f32.mrb[0].mxu0
        %v4532 = vadd.f32 0.0, %v4531
        %v4533 = vpop.f32.mrb[0].mxu0
        %v4534 = vpop.f32.mrb[0].mxu0
        %v4535 = vadd.f32 0.0, %v4534
        %v4536 = vpop.f32.mrb[0].mxu0
        %4537 = vmatprep.mubr.bf16.mxu0 0
        %4538 = vmatmul.mubr.bf16.gmra.mrb[0].mxu0 %v4390
        %v4539 = vpop.f32.mrb[0].mxu0
        %v4540 = vadd.f32 0.0, %v4539
        %v4541 = vpop.f32.mrb[0].mxu0
        %v4542 = vpop.f32.mrb[0].mxu0
        %v4543 = vadd.f32 0.0, %v4542
        %v4544 = vpop.f32.mrb[0].mxu0
        %4545 = vmatprep.mubr.bf16.mxu0 0
        %4546 = vmatmul.mubr.bf16.gmra.mrb[0].mxu0 %v4391
        %v4547 = vpop.f32.mrb[0].mxu0
        %v4548 = vadd.f32 0.0, %v4547
        %v4549 = vpop.f32.mrb[0].mxu0
        %v4550 = vpop.f32.mrb[0].mxu0
        %v4551 = vadd.f32 0.0, %v4550
        %v4552 = vpop.f32.mrb[0].mxu0
        %4553 = vmatprep.mubr.bf16.mxu0 0
        %4554 = vmatmul.mubr.bf16.gmra.mrb[0].mxu0 %v4392
        %v4555 = vpop.f32.mrb[0].mxu0
        %v4556 = vadd.f32 0.0, %v4555
        %v4557 = vpop.f32.mrb[0].mxu0
        %v4558 = vpop.f32.mrb[0].mxu0
        %v4559 = vadd.f32 0.0, %v4558
        %v4560 = vpop.f32.mrb[0].mxu0
        %4561 = vmatprep.mubr.bf16.mxu0 0
        %4562 = vmatmul.mubr.bf16.gmra.mrb[0].mxu0 %v4393
        %v4563 = vpop.f32.mrb[0].mxu0
        %v4564 = vadd.f32 0.0, %v4563
        %v4565 = vpop.f32.mrb[0].mxu0
        %v4566 = vpop.f32.mrb[0].mxu0
        %v4567 = vadd.f32 0.0, %v4566
        %v4568 = vpop.f32.mrb[0].mxu0
        %4569 = vmatprep.mubr.bf16.mxu0 0
        %4570 = vmatmul.mubr.bf16.gmra.mrb[0].mxu0 %v4394
        %v4571 = vpop.f32.mrb[0].mxu0
        %v4572 = vadd.f32 0.0, %v4571
        %v4573 = vpop.f32.mrb[0].mxu0
        %v4574 = vpop.f32.mrb[0].mxu0
        %v4575 = vadd.f32 0.0, %v4574
        %v4576 = vpop.f32.mrb[0].mxu0
        %4577 = vmatprep.mubr.bf16.mxu0 0
        %4578 = vmatmul.mubr.bf16.gmra.mrb[0].mxu0 %v4395
        %v4579 = vpop.f32.mrb[0].mxu0
        %v4580 = vadd.f32 0.0, %v4579
        %v4581 = vpop.f32.mrb[0].mxu0
        %v4582 = vpop.f32.mrb[0].mxu0
        %v4583 = vadd.f32 0.0, %v4582
        %v4584 = vpop.f32.mrb[0].mxu0
        %4585 = vmatprep.mubr.bf16.mxu0 0
        %4586 = vmatmul.mubr.bf16.gmra.mrb[0].mxu0 %v4396
        %v4587 = vpop.f32.mrb[0].mxu0
        %v4588 = vadd.f32 0.0, %v4587
        %v4589 = vpop.f32.mrb[0].mxu0
        %v4590 = vpop.f32.mrb[0].mxu0
        %v4591 = vadd.f32 0.0, %v4590
        %v4592 = vpop.f32.mrb[0].mxu0
        %4593 = vmatprep.mubr.bf16.mxu0 0
        %4594 = vmatmul.mubr.bf16.gmra.mrb[0].mxu0 %v4397
        %v4595 = vpop.f32.mrb[0].mxu0
        %v4596 = vadd.f32 0.0, %v4595
        %v4597 = vpop.f32.mrb[0].mxu0
        %v4598 = vpop.f32.mrb[0].mxu0
        %v4599 = vadd.f32 0.0, %v4598
        %v4600 = vpop.f32.mrb[0].mxu0
        %4601 = vmatprep.mubr.bf16.mxu0 0
        %4602 = vmatmul.mubr.bf16.gmra.mrb[0].mxu0 %v4398
        %v4603 = vpop.f32.mrb[0].mxu0
        %v4604 = vadd.f32 0.0, %v4603
        %v4605 = vpop.f32.mrb[0].mxu0
        %v4606 = vpop.f32.mrb[0].mxu0
        %v4607 = vadd.f32 0.0, %v4606
        %v4608 = vpop.f32.mrb[0].mxu0
        %4609 = vmatprep.mubr.bf16.mxu0 0
        %4610 = vmatmul.mubr.bf16.gmra.mrb[0].mxu0 %v4399
        %v4611 = vpop.f32.mrb[0].mxu0
        %v4612 = vadd.f32 0.0, %v4611
        %v4613 = vpop.f32.mrb[0].mxu0
        %v4614 = vpop.f32.mrb[0].mxu0
        %v4615 = vadd.f32 0.0, %v4614
        %v4616 = vpop.f32.mrb[0].mxu0
        %4617 = vmatprep.mubr.bf16.mxu0 0
        %4618 = vmatmul.mubr.bf16.gmra.mrb[0].mxu0 %v4400
        %v4619 = vpop.f32.mrb[0].mxu0
        %v4620 = vadd.f32 0.0, %v4619
        %v4621 = vpop.f32.mrb[0].mxu0
        %v4622 = vpop.f32.mrb[0].mxu0
        %v4623 = vadd.f32 0.0, %v4622
        %v4624 = vpop.f32.mrb[0].mxu0
        %4625 = vdwg.mxu0
        %v4626 = vld [vmem:[#allocation2] sm:$0xff]
        %v4627 = vld [vmem:[#allocation2 + $0x8] sm:$0xff]
        %v4628 = vld [vmem:[#allocation2 + $0x10] sm:$0xff]
        %v4629 = vld [vmem:[#allocation2 + $0x18] sm:$0xff]
        %v4630 = vld [vmem:[#allocation2 + $0x20] sm:$0xff]
        %v4631 = vld [vmem:[#allocation2 + $0x28] sm:$0xff]
        %v4632 = vld [vmem:[#allocation2 + $0x30] sm:$0xff]
        %v4633 = vld [vmem:[#allocation2 + $0x38] sm:$0xff]
        %v4634 = vld [vmem:[#allocation2 + $0x40] sm:$0xff]
        %v4635 = vld [vmem:[#allocation2 + $0x48] sm:$0xff]
        %v4636 = vld [vmem:[#allocation2 + $0x50] sm:$0xff]
        %v4637 = vld [vmem:[#allocation2 + $0x58] sm:$0xff]
        %v4638 = vld [vmem:[#allocation2 + $0x60] sm:$0xff]
        %v4639 = vld [vmem:[#allocation2 + $0x68] sm:$0xff]
        %v4640 = vld [vmem:[#allocation2 + $0x70] sm:$0xff]
        %v4641 = vld [vmem:[#allocation2 + $0x78] sm:$0xff]
        %v4642 = vld [vmem:[#allocation2 + $0x80] sm:$0xff]
        %v4643 = vld [vmem:[#allocation2 + $0x88] sm:$0xff]
        %v4644 = vld [vmem:[#allocation2 + $0x90] sm:$0xff]
        %v4645 = vld [vmem:[#allocation2 + $0x98] sm:$0xff]
        %v4646 = vld [vmem:[#allocation2 + $0xa0] sm:$0xff]
        %v4647 = vld [vmem:[#allocation2 + $0xa8] sm:$0xff]
        %v4648 = vld [vmem:[#allocation2 + $0xb0] sm:$0xff]
        %v4649 = vld [vmem:[#allocation2 + $0xb8] sm:$0xff]
        %v4650 = vld [vmem:[#allocation2 + $0xc0] sm:$0xff]
        %v4651 = vld [vmem:[#allocation2 + $0xc8] sm:$0xff]
        %v4652 = vld [vmem:[#allocation2 + $0xd0] sm:$0xff]
        %v4653 = vld [vmem:[#allocation2 + $0xd8] sm:$0xff]
        %v4654 = vld [vmem:[#allocation2 + $0xe0] sm:$0xff]
        %v4655 = vld [vmem:[#allocation2 + $0xe8] sm:$0xff]
        %v4656 = vld [vmem:[#allocation2 + $0xf0] sm:$0xff]
        %v4657 = vld [vmem:[#allocation2 + $0xf8] sm:$0xff]
        %v4658 = vadd.f32 %v4626, %v4500
        %v4659 = vadd.f32 %v4627, %v4503
        %v4660 = vadd.f32 %v4628, %v4508
        %v4661 = vadd.f32 %v4629, %v4511
        %v4662 = vadd.f32 %v4630, %v4516
        %v4663 = vadd.f32 %v4631, %v4519
        %v4664 = vadd.f32 %v4632, %v4524
        %v4665 = vadd.f32 %v4633, %v4527
        %v4666 = vadd.f32 %v4634, %v4532
        %v4667 = vadd.f32 %v4635, %v4535
        %v4668 = vadd.f32 %v4636, %v4540
        %v4669 = vadd.f32 %v4637, %v4543
        %v4670 = vadd.f32 %v4638, %v4548
        %v4671 = vadd.f32 %v4639, %v4551
        %v4672 = vadd.f32 %v4640, %v4556
        %v4673 = vadd.f32 %v4641, %v4559
        %v4674 = vadd.f32 %v4642, %v4564
        %v4675 = vadd.f32 %v4643, %v4567
        %v4676 = vadd.f32 %v4644, %v4572
        %v4677 = vadd.f32 %v4645, %v4575
        %v4678 = vadd.f32 %v4646, %v4580
        %v4679 = vadd.f32 %v4647, %v4583
        %v4680 = vadd.f32 %v4648, %v4588
        %v4681 = vadd.f32 %v4649, %v4591
        %v4682 = vadd.f32 %v4650, %v4596
        %v4683 = vadd.f32 %v4651, %v4599
        %v4684 = vadd.f32 %v4652, %v4604
        %v4685 = vadd.f32 %v4653, %v4607
        %v4686 = vadd.f32 %v4654, %v4612
        %v4687 = vadd.f32 %v4655, %v4615
        %v4688 = vadd.f32 %v4656, %v4620
        %v4689 = vadd.f32 %v4657, %v4623
        %4690 = vst [vmem:[#allocation2] sm:$0xff] %v4658
        %4691 = vst [vmem:[#allocation2 + $0x8] sm:$0xff] %v4659
        %4692 = vst [vmem:[#allocation2 + $0x10] sm:$0xff] %v4660
        %4693 = vst [vmem:[#allocation2 + $0x18] sm:$0xff] %v4661
        %4694 = vst [vmem:[#allocation2 + $0x20] sm:$0xff] %v4662
        %4695 = vst [vmem:[#allocation2 + $0x28] sm:$0xff] %v4663
        %4696 = vst [vmem:[#allocation2 + $0x30] sm:$0xff] %v4664
        %4697 = vst [vmem:[#allocation2 + $0x38] sm:$0xff] %v4665
        %4698 = vst [vmem:[#allocation2 + $0x40] sm:$0xff] %v4666
        %4699 = vst [vmem:[#allocation2 + $0x48] sm:$0xff] %v4667
        %4700 = vst [vmem:[#allocation2 + $0x50] sm:$0xff] %v4668
        %4701 = vst [vmem:[#allocation2 + $0x58] sm:$0xff] %v4669
        %4702 = vst [vmem:[#allocation2 + $0x60] sm:$0xff] %v4670
        %4703 = vst [vmem:[#allocation2 + $0x68] sm:$0xff] %v4671
        %4704 = vst [vmem:[#allocation2 + $0x70] sm:$0xff] %v4672
        %4705 = vst [vmem:[#allocation2 + $0x78] sm:$0xff] %v4673
        %4706 = vst [vmem:[#allocation2 + $0x80] sm:$0xff] %v4674
        %4707 = vst [vmem:[#allocation2 + $0x88] sm:$0xff] %v4675
        %4708 = vst [vmem:[#allocation2 + $0x90] sm:$0xff] %v4676
        %4709 = vst [vmem:[#allocation2 + $0x98] sm:$0xff] %v4677
        %4710 = vst [vmem:[#allocation2 + $0xa0] sm:$0xff] %v4678
        %4711 = vst [vmem:[#allocation2 + $0xa8] sm:$0xff] %v4679
        %4712 = vst [vmem:[#allocation2 + $0xb0] sm:$0xff] %v4680
        %4713 = vst [vmem:[#allocation2 + $0xb8] sm:$0xff] %v4681
        %4714 = vst [vmem:[#allocation2 + $0xc0] sm:$0xff] %v4682
        %4715 = vst [vmem:[#allocation2 + $0xc8] sm:$0xff] %v4683
        %4716 = vst [vmem:[#allocation2 + $0xd0] sm:$0xff] %v4684
        %4717 = vst [vmem:[#allocation2 + $0xd8] sm:$0xff] %v4685
        %4718 = vst [vmem:[#allocation2 + $0xe0] sm:$0xff] %v4686
        %4719 = vst [vmem:[#allocation2 + $0xe8] sm:$0xff] %v4687
        %4720 = vst [vmem:[#allocation2 + $0xf0] sm:$0xff] %v4688
        %4721 = vst [vmem:[#allocation2 + $0xf8] sm:$0xff] %v4689
        %v4722 = vld [vmem:[#allocation2] sm:$0xff]
        %v4723 = vld [vmem:[#allocation2 + $0x8] sm:$0xff]
        %v4724 = vld [vmem:[#allocation2 + $0x10] sm:$0xff]
        %v4725 = vld [vmem:[#allocation2 + $0x18] sm:$0xff]
        %v4726 = vld [vmem:[#allocation2 + $0x20] sm:$0xff]
        %v4727 = vld [vmem:[#allocation2 + $0x28] sm:$0xff]
        %v4728 = vld [vmem:[#allocation2 + $0x30] sm:$0xff]
        %v4729 = vld [vmem:[#allocation2 + $0x38] sm:$0xff]
        %v4730 = vld [vmem:[#allocation2 + $0x40] sm:$0xff]
        %v4731 = vld [vmem:[#allocation2 + $0x48] sm:$0xff]
        %v4732 = vld [vmem:[#allocation2 + $0x50] sm:$0xff]
        %v4733 = vld [vmem:[#allocation2 + $0x58] sm:$0xff]
        %v4734 = vld [vmem:[#allocation2 + $0x60] sm:$0xff]
        %v4735 = vld [vmem:[#allocation2 + $0x68] sm:$0xff]
        %v4736 = vld [vmem:[#allocation2 + $0x70] sm:$0xff]
        %v4737 = vld [vmem:[#allocation2 + $0x78] sm:$0xff]
        %v4738 = vld [vmem:[#allocation2 + $0x80] sm:$0xff]
        %v4739 = vld [vmem:[#allocation2 + $0x88] sm:$0xff]
        %v4740 = vld [vmem:[#allocation2 + $0x90] sm:$0xff]
        %v4741 = vld [vmem:[#allocation2 + $0x98] sm:$0xff]
        %v4742 = vld [vmem:[#allocation2 + $0xa0] sm:$0xff]
        %v4743 = vld [vmem:[#allocation2 + $0xa8] sm:$0xff]
        %v4744 = vld [vmem:[#allocation2 + $0xb0] sm:$0xff]
        %v4745 = vld [vmem:[#allocation2 + $0xb8] sm:$0xff]
        %v4746 = vld [vmem:[#allocation2 + $0xc0] sm:$0xff]
        %v4747 = vld [vmem:[#allocation2 + $0xc8] sm:$0xff]
        %v4748 = vld [vmem:[#allocation2 + $0xd0] sm:$0xff]
        %v4749 = vld [vmem:[#allocation2 + $0xd8] sm:$0xff]
        %v4750 = vld [vmem:[#allocation2 + $0xe0] sm:$0xff]
        %v4751 = vld [vmem:[#allocation2 + $0xe8] sm:$0xff]
        %v4752 = vld [vmem:[#allocation2 + $0xf0] sm:$0xff]
        %v4753 = vld [vmem:[#allocation2 + $0xf8] sm:$0xff]
        %v4754 = vld [vmem:[%s2] sm:$0x1]
        %v4756 = vlaneseq
        %v4757 = vshrl.u32 %v4756, 7
        %v4758 = vsub.s32 0, %v4757
        %v4759 = vrot.slane %v4754, %v4758
        %v4761 = vadd.f32 %v4722, %v4759
        %v4762 = vadd.f32 %v4723, %v4759
        %v4763 = vadd.f32 %v4724, %v4759
        %v4764 = vadd.f32 %v4725, %v4759
        %v4765 = vadd.f32 %v4726, %v4759
        %v4766 = vadd.f32 %v4727, %v4759
        %v4767 = vadd.f32 %v4728, %v4759
        %v4768 = vadd.f32 %v4729, %v4759
        %v4769 = vadd.f32 %v4730, %v4759
        %v4770 = vadd.f32 %v4731, %v4759
        %v4771 = vadd.f32 %v4732, %v4759
        %v4772 = vadd.f32 %v4733, %v4759
        %v4773 = vadd.f32 %v4734, %v4759
        %v4774 = vadd.f32 %v4735, %v4759
        %v4775 = vadd.f32 %v4736, %v4759
        %v4776 = vadd.f32 %v4737, %v4759
        %v4777 = vadd.f32 %v4738, %v4759
        %v4778 = vadd.f32 %v4739, %v4759
        %v4779 = vadd.f32 %v4740, %v4759
        %v4780 = vadd.f32 %v4741, %v4759
        %v4781 = vadd.f32 %v4742, %v4759
        %v4782 = vadd.f32 %v4743, %v4759
        %v4783 = vadd.f32 %v4744, %v4759
        %v4784 = vadd.f32 %v4745, %v4759
        %v4785 = vadd.f32 %v4746, %v4759
        %v4786 = vadd.f32 %v4747, %v4759
        %v4787 = vadd.f32 %v4748, %v4759
        %v4788 = vadd.f32 %v4749, %v4759
        %v4789 = vadd.f32 %v4750, %v4759
        %v4790 = vadd.f32 %v4751, %v4759
        %v4791 = vadd.f32 %v4752, %v4759
        %v4792 = vadd.f32 %v4753, %v4759
        %v4793 = vadd.f32 %v4761, %v4762
        %v4794 = vadd.f32 %v4793, %v4763
        %v4795 = vadd.f32 %v4794, %v4764
        %v4796 = vadd.f32 %v4795, %v4765
        %v4797 = vadd.f32 %v4796, %v4766
        %v4798 = vadd.f32 %v4797, %v4767
        %v4799 = vadd.f32 %v4798, %v4768
        %v4800 = vadd.f32 %v4799, %v4769
        %v4801 = vadd.f32 %v4800, %v4770
        %v4802 = vadd.f32 %v4801, %v4771
        %v4803 = vadd.f32 %v4802, %v4772
        %v4804 = vadd.f32 %v4803, %v4773
        %v4805 = vadd.f32 %v4804, %v4774
        %v4806 = vadd.f32 %v4805, %v4775
        %v4807 = vadd.f32 %v4806, %v4776
        %v4808 = vadd.f32 %v4807, %v4777
        %v4809 = vadd.f32 %v4808, %v4778
        %v4810 = vadd.f32 %v4809, %v4779
        %v4811 = vadd.f32 %v4810, %v4780
        %v4812 = vadd.f32 %v4811, %v4781
        %v4813 = vadd.f32 %v4812, %v4782
        %v4814 = vadd.f32 %v4813, %v4783
        %v4815 = vadd.f32 %v4814, %v4784
        %v4816 = vadd.f32 %v4815, %v4785
        %v4817 = vadd.f32 %v4816, %v4786
        %v4818 = vadd.f32 %v4817, %v4787
        %v4819 = vadd.f32 %v4818, %v4788
        %v4820 = vadd.f32 %v4819, %v4789
        %v4821 = vadd.f32 %v4820, %v4790
        %v4822 = vadd.f32 %v4821, %v4791
        %v4823 = vadd.f32 %v4822, %v4792
        %v4824 = vrot.slane %v4823, 4
        %v4825 = vadd.f32 %v4823, %v4824
        %v4826 = vrot.slane %v4825, 2
        %v4827 = vadd.f32 %v4825, %v4826
        %v4828 = vrot.slane %v4827, 1
        %v4829 = vadd.f32 %v4827, %v4828
        %v4830 = vrcp.pop 256.0
        %v4831 = vmul.f32 %v4829, %v4830
        %v4832 = vpack.c.bf16 %v4831, %v4831
        %v4833 = vld [vmem:[%s4] sm:$0xf]
        %v4834 = vld [vmem:[%s4 + $0x4] sm:$0xf]
        %v4835 = vld [vmem:[%s4 + $0x8] sm:$0xf]
        %v4836 = vld [vmem:[%s4 + $0xc] sm:$0xf]
        %v4837 = vld [vmem:[%s4 + $0x10] sm:$0xf]
        %v4838 = vld [vmem:[%s4 + $0x14] sm:$0xf]
        %v4839 = vld [vmem:[%s4 + $0x18] sm:$0xf]
        %v4840 = vld [vmem:[%s4 + $0x1c] sm:$0xf]
        %v4841 = vld [vmem:[%s4 + $0x20] sm:$0xf]
        %v4842 = vld [vmem:[%s4 + $0x24] sm:$0xf]
        %v4843 = vld [vmem:[%s4 + $0x28] sm:$0xf]
        %v4844 = vld [vmem:[%s4 + $0x2c] sm:$0xf]
        %v4845 = vld [vmem:[%s4 + $0x30] sm:$0xf]
        %v4846 = vld [vmem:[%s4 + $0x34] sm:$0xf]
        %v4847 = vld [vmem:[%s4 + $0x38] sm:$0xf]
        %v4848 = vld [vmem:[%s4 + $0x3c] sm:$0xf]
        %v4849 = vld [vmem:[%s5] sm:$0x1]
        %v4851 = vlaneseq
        %v4852 = vshrl.u32 %v4851, 7
        %v4853 = vsub.s32 0, %v4852
        %v4854 = vrot.slane %v4849, %v4853
        %v4872 = vunpack.c.l.b16 %v4833
        %v4873 = vunpack.c.l.b16 %v4834
        %v4874 = vunpack.c.l.b16 %v4835
        %v4875 = vunpack.c.l.b16 %v4836
        %v4876 = vunpack.c.l.b16 %v4837
        %v4877 = vunpack.c.l.b16 %v4838
        %v4878 = vunpack.c.l.b16 %v4839
        %v4879 = vunpack.c.l.b16 %v4840
        %v4880 = vunpack.c.l.b16 %v4841
        %v4881 = vunpack.c.l.b16 %v4842
        %v4882 = vunpack.c.l.b16 %v4843
        %v4883 = vunpack.c.l.b16 %v4844
        %v4884 = vunpack.c.l.b16 %v4845
        %v4885 = vunpack.c.l.b16 %v4846
        %v4886 = vunpack.c.l.b16 %v4847
        %v4887 = vunpack.c.l.b16 %v4848
        %v4888 = vpack.c.b16 %v4873, %v4872
        %v4889 = vpack.c.b16 %v4875, %v4874
        %v4890 = vpack.c.b16 %v4877, %v4876
        %v4891 = vpack.c.b16 %v4879, %v4878
        %v4892 = vpack.c.b16 %v4881, %v4880
        %v4893 = vpack.c.b16 %v4883, %v4882
        %v4894 = vpack.c.b16 %v4885, %v4884
        %v4895 = vpack.c.b16 %v4887, %v4886
        %4904 = vmatprep.subr.bf16.mxu0 0
        %4905 = vmatpush1.bf16.msra.mxu0 %v4888
        %4906 = vmatprep.subr.bf16.mxu0 0
        %4907 = vmatpush1.bf16.msra.mxu0 %v4889
        %4908 = vmatprep.subr.bf16.mxu0 0
        %4909 = vmatpush1.bf16.msra.mxu0 %v4890
        %4910 = vmatprep.subr.bf16.mxu0 0
        %4911 = vmatpush1.bf16.msra.mxu0 %v4891
        %4912 = vmatprep.subr.bf16.mxu0 0
        %4913 = vmatpush1.bf16.msra.mxu0 %v4892
        %4914 = vmatprep.subr.bf16.mxu0 0
        %4915 = vmatpush1.bf16.msra.mxu0 %v4893
        %4916 = vmatprep.subr.bf16.mxu0 0
        %4917 = vmatpush1.bf16.msra.mxu0 %v4894
        %4918 = vmatprep.subr.bf16.mxu0 0
        %4919 = vmatpush1.bf16.msra.mxu0 %v4895
        %4920 = vmatprep.subr.bf16.mxu0 0
        %4921 = vmatpush1.bf16.msra.mxu0 0
        %4922 = vmatprep.subr.bf16.mxu0 0
        %4923 = vmatpush1.bf16.msra.mxu0 0
        %4924 = vmatprep.subr.bf16.mxu0 0
        %4925 = vmatpush1.bf16.msra.mxu0 0
        %4926 = vmatprep.subr.bf16.mxu0 0
        %4927 = vmatpush1.bf16.msra.mxu0 0
        %4928 = vmatprep.subr.bf16.mxu0 0
        %4929 = vmatpush1.bf16.msra.mxu0 0
        %4930 = vmatprep.subr.bf16.mxu0 0
        %4931 = vmatpush1.bf16.msra.mxu0 0
        %4932 = vmatprep.subr.bf16.mxu0 0
        %4933 = vmatpush1.bf16.msra.mxu0 0
        %4934 = vmatprep.subr.bf16.mxu0 0
        %4935 = vmatpush1.bf16.msra.mxu0 0
        %4936 = vmatprep.mubr.bf16.mxu0 0
        %4937 = vmatmul.mubr.bf16.gmra.mrb[0].mxu0 %v4832
        %v4938 = vpop.f32.mrb[0].mxu0
        %v4939 = vadd.f32 %v4854, %v4938
        %v4940 = vpop.f32.mrb[0].mxu0
        %v4941 = vpop.f32.mrb[0].mxu0
        %v4942 = vpop.f32.mrb[0].mxu0
        %4943 = vdwg.mxu0
        %v4944 = vmax.f32 %v4939, 0.0
        %v4945 = vpack.c.bf16 %v4944, %v4944
        %v4946 = vld [vmem:[%s6] sm:$0xf]
        %v4947 = vld [vmem:[%s7] sm:$0x1]
        %v4949 = vlaneseq
        %v4950 = vshrl.u32 %v4949, 7
        %v4951 = vsub.s32 0, %v4950
        %v4952 = vrot.slane %v4947, %v4951
        %vm4954 = vcmask 64512
        %v4956 = vsel %vm4954, %v4945, 0
        %vm4958 = vcmask 1043456
        %v4960 = vsel %vm4958, %v4946, 0
        %4962 = vmatprep.subr.bf16.mxu0 0
        %4963 = vmatpush1.bf16.msra.mxu0 %v4960
        %4964 = vmatprep.subr.bf16.mxu0 0
        %4965 = vmatpush1.bf16.msra.mxu0 0
        %4966 = vmatprep.subr.bf16.mxu0 0
        %4967 = vmatpush1.bf16.msra.mxu0 0
        %4968 = vmatprep.subr.bf16.mxu0 0
        %4969 = vmatpush1.bf16.msra.mxu0 0
        %4970 = vmatprep.subr.bf16.mxu0 0
        %4971 = vmatpush1.bf16.msra.mxu0 0
        %4972 = vmatprep.subr.bf16.mxu0 0
        %4973 = vmatpush1.bf16.msra.mxu0 0
        %4974 = vmatprep.subr.bf16.mxu0 0
        %4975 = vmatpush1.bf16.msra.mxu0 0
        %4976 = vmatprep.subr.bf16.mxu0 0
        %4977 = vmatpush1.bf16.msra.mxu0 0
        %4978 = vmatprep.subr.bf16.mxu0 0
        %4979 = vmatpush1.bf16.msra.mxu0 0
        %4980 = vmatprep.subr.bf16.mxu0 0
        %4981 = vmatpush1.bf16.msra.mxu0 0
        %4982 = vmatprep.subr.bf16.mxu0 0
        %4983 = vmatpush1.bf16.msra.mxu0 0
        %4984 = vmatprep.subr.bf16.mxu0 0
        %4985 = vmatpush1.bf16.msra.mxu0 0
        %4986 = vmatprep.subr.bf16.mxu0 0
        %4987 = vmatpush1.bf16.msra.mxu0 0
        %4988 = vmatprep.subr.bf16.mxu0 0
        %4989 = vmatpush1.bf16.msra.mxu0 0
        %4990 = vmatprep.subr.bf16.mxu0 0
        %4991 = vmatpush1.bf16.msra.mxu0 0
        %4992 = vmatprep.subr.bf16.mxu0 0
        %4993 = vmatpush1.bf16.msra.mxu0 0
        %4994 = vmatprep.mubr.bf16.mxu0 0
        %4995 = vmatmul.mubr.bf16.gmra.mrb[0].mxu0 %v4956
        %v4996 = vpop.f32.mrb[0].mxu0
        %v4997 = vadd.f32 %v4952, %v4996
        %v4998 = vpop.f32.mrb[0].mxu0
        %v4999 = vpop.f32.mrb[0].mxu0
        %v5000 = vpop.f32.mrb[0].mxu0
        %5001 = vdwg.mxu0
        %v5002 = vxor.u32 %v4997, 2147483648
        %v5003 = vmul.f32 %v5002, 1.442695
        %v5004 = vpow.pop %v5003
        %v5005 = vadd.f32 %v5004, 1.0
        %v5006 = vrcp.pop %v5005
        %v5007 = vmul.f32 1.0, %v5006
        %v5008 = vld [vmem:[%s323] sm:$0xf]
        %v5009 = vld [vmem:[%s323 + $0x4] sm:$0xf]
        %v5010 = vld [vmem:[%s323 + $0x8] sm:$0xf]
        %v5011 = vld [vmem:[%s323 + $0xc] sm:$0xf]
        %v5012 = vld [vmem:[%s323 + $0x10] sm:$0xf]
        %v5013 = vld [vmem:[%s323 + $0x14] sm:$0xf]
        %v5014 = vld [vmem:[%s323 + $0x18] sm:$0xf]
        %v5015 = vld [vmem:[%s323 + $0x1c] sm:$0xf]
        %v5016 = vld [vmem:[%s323 + $0x20] sm:$0xf]
        %v5017 = vld [vmem:[%s323 + $0x24] sm:$0xf]
        %v5018 = vld [vmem:[%s323 + $0x28] sm:$0xf]
        %v5019 = vld [vmem:[%s323 + $0x2c] sm:$0xf]
        %v5020 = vld [vmem:[%s323 + $0x30] sm:$0xf]
        %v5021 = vld [vmem:[%s323 + $0x34] sm:$0xf]
        %v5022 = vld [vmem:[%s323 + $0x38] sm:$0xf]
        %v5023 = vld [vmem:[%s323 + $0x3c] sm:$0xf]
        %v5024 = vld [vmem:[%s323 + $0x40] sm:$0xf]
        %v5025 = vld [vmem:[%s323 + $0x44] sm:$0xf]
        %v5026 = vld [vmem:[%s323 + $0x48] sm:$0xf]
        %v5027 = vld [vmem:[%s323 + $0x4c] sm:$0xf]
        %v5028 = vld [vmem:[%s323 + $0x50] sm:$0xf]
        %v5029 = vld [vmem:[%s323 + $0x54] sm:$0xf]
        %v5030 = vld [vmem:[%s323 + $0x58] sm:$0xf]
        %v5031 = vld [vmem:[%s323 + $0x5c] sm:$0xf]
        %v5032 = vld [vmem:[%s323 + $0x60] sm:$0xf]
        %v5033 = vld [vmem:[%s323 + $0x64] sm:$0xf]
        %v5034 = vld [vmem:[%s323 + $0x68] sm:$0xf]
        %v5035 = vld [vmem:[%s323 + $0x6c] sm:$0xf]
        %v5036 = vld [vmem:[%s323 + $0x70] sm:$0xf]
        %v5037 = vld [vmem:[%s323 + $0x74] sm:$0xf]
        %v5038 = vld [vmem:[%s323 + $0x78] sm:$0xf]
        %v5039 = vld [vmem:[%s323 + $0x7c] sm:$0xf]
        %v5040 = vunpack.c.l.bf16 %v5008
        %v5041 = vunpack.c.l.bf16 %v5009
        %v5042 = vunpack.c.l.bf16 %v5010
        %v5043 = vunpack.c.l.bf16 %v5011
        %v5044 = vunpack.c.l.bf16 %v5012
        %v5045 = vunpack.c.l.bf16 %v5013
        %v5046 = vunpack.c.l.bf16 %v5014
        %v5047 = vunpack.c.l.bf16 %v5015
        %v5048 = vunpack.c.l.bf16 %v5016
        %v5049 = vunpack.c.l.bf16 %v5017
        %v5050 = vunpack.c.l.bf16 %v5018
        %v5051 = vunpack.c.l.bf16 %v5019
        %v5052 = vunpack.c.l.bf16 %v5020
        %v5053 = vunpack.c.l.bf16 %v5021
        %v5054 = vunpack.c.l.bf16 %v5022
        %v5055 = vunpack.c.l.bf16 %v5023
        %v5056 = vunpack.c.l.bf16 %v5024
        %v5057 = vunpack.c.l.bf16 %v5025
        %v5058 = vunpack.c.l.bf16 %v5026
        %v5059 = vunpack.c.l.bf16 %v5027
        %v5060 = vunpack.c.l.bf16 %v5028
        %v5061 = vunpack.c.l.bf16 %v5029
        %v5062 = vunpack.c.l.bf16 %v5030
        %v5063 = vunpack.c.l.bf16 %v5031
        %v5064 = vunpack.c.l.bf16 %v5032
        %v5065 = vunpack.c.l.bf16 %v5033
        %v5066 = vunpack.c.l.bf16 %v5034
        %v5067 = vunpack.c.l.bf16 %v5035
        %v5068 = vunpack.c.l.bf16 %v5036
        %v5069 = vunpack.c.l.bf16 %v5037
        %v5070 = vunpack.c.l.bf16 %v5038
        %v5071 = vunpack.c.l.bf16 %v5039
        %v5072 = vlaneseq
        %v5073 = vshrl.u32 %v5072, 7
        %v5074 = vsub.s32 0, %v5073
        %v5075 = vrot.slane %v5007, %v5074
        %v5076 = vmul.f32 %v5075, %v4761
        %v5077 = vmul.f32 %v5075, %v4762
        %v5078 = vmul.f32 %v5075, %v4763
        %v5079 = vmul.f32 %v5075, %v4764
        %v5080 = vmul.f32 %v5075, %v4765
        %v5081 = vmul.f32 %v5075, %v4766
        %v5082 = vmul.f32 %v5075, %v4767
        %v5083 = vmul.f32 %v5075, %v4768
        %v5084 = vmul.f32 %v5075, %v4769
        %v5085 = vmul.f32 %v5075, %v4770
        %v5086 = vmul.f32 %v5075, %v4771
        %v5087 = vmul.f32 %v5075, %v4772
        %v5088 = vmul.f32 %v5075, %v4773
        %v5089 = vmul.f32 %v5075, %v4774
        %v5090 = vmul.f32 %v5075, %v4775
        %v5091 = vmul.f32 %v5075, %v4776
        %v5092 = vmul.f32 %v5075, %v4777
        %v5093 = vmul.f32 %v5075, %v4778
        %v5094 = vmul.f32 %v5075, %v4779
        %v5095 = vmul.f32 %v5075, %v4780
        %v5096 = vmul.f32 %v5075, %v4781
        %v5097 = vmul.f32 %v5075, %v4782
        %v5098 = vmul.f32 %v5075, %v4783
        %v5099 = vmul.f32 %v5075, %v4784
        %v5100 = vmul.f32 %v5075, %v4785
        %v5101 = vmul.f32 %v5075, %v4786
        %v5102 = vmul.f32 %v5075, %v4787
        %v5103 = vmul.f32 %v5075, %v4788
        %v5104 = vmul.f32 %v5075, %v4789
        %v5105 = vmul.f32 %v5075, %v4790
        %v5106 = vmul.f32 %v5075, %v4791
        %v5107 = vmul.f32 %v5075, %v4792
        %v5108 = vadd.f32 %v5076, %v5040
        %v5109 = vadd.f32 %v5077, %v5041
        %v5110 = vadd.f32 %v5078, %v5042
        %v5111 = vadd.f32 %v5079, %v5043
        %v5112 = vadd.f32 %v5080, %v5044
        %v5113 = vadd.f32 %v5081, %v5045
        %v5114 = vadd.f32 %v5082, %v5046
        %v5115 = vadd.f32 %v5083, %v5047
        %v5116 = vadd.f32 %v5084, %v5048
        %v5117 = vadd.f32 %v5085, %v5049
        %v5118 = vadd.f32 %v5086, %v5050
        %v5119 = vadd.f32 %v5087, %v5051
        %v5120 = vadd.f32 %v5088, %v5052
        %v5121 = vadd.f32 %v5089, %v5053
        %v5122 = vadd.f32 %v5090, %v5054
        %v5123 = vadd.f32 %v5091, %v5055
        %v5124 = vadd.f32 %v5092, %v5056
        %v5125 = vadd.f32 %v5093, %v5057
        %v5126 = vadd.f32 %v5094, %v5058
        %v5127 = vadd.f32 %v5095, %v5059
        %v5128 = vadd.f32 %v5096, %v5060
        %v5129 = vadd.f32 %v5097, %v5061
        %v5130 = vadd.f32 %v5098, %v5062
        %v5131 = vadd.f32 %v5099, %v5063
        %v5132 = vadd.f32 %v5100, %v5064
        %v5133 = vadd.f32 %v5101, %v5065
        %v5134 = vadd.f32 %v5102, %v5066
        %v5135 = vadd.f32 %v5103, %v5067
        %v5136 = vadd.f32 %v5104, %v5068
        %v5137 = vadd.f32 %v5105, %v5069
        %v5138 = vadd.f32 %v5106, %v5070
        %v5139 = vadd.f32 %v5107, %v5071
        %v5140 = vmax.f32 %v5108, 0.0
        %v5141 = vmax.f32 %v5109, 0.0
        %v5142 = vmax.f32 %v5110, 0.0
        %v5143 = vmax.f32 %v5111, 0.0
        %v5144 = vmax.f32 %v5112, 0.0
        %v5145 = vmax.f32 %v5113, 0.0
        %v5146 = vmax.f32 %v5114, 0.0
        %v5147 = vmax.f32 %v5115, 0.0
        %v5148 = vmax.f32 %v5116, 0.0
        %v5149 = vmax.f32 %v5117, 0.0
        %v5150 = vmax.f32 %v5118, 0.0
        %v5151 = vmax.f32 %v5119, 0.0
        %v5152 = vmax.f32 %v5120, 0.0
        %v5153 = vmax.f32 %v5121, 0.0
        %v5154 = vmax.f32 %v5122, 0.0
        %v5155 = vmax.f32 %v5123, 0.0
        %v5156 = vmax.f32 %v5124, 0.0
        %v5157 = vmax.f32 %v5125, 0.0
        %v5158 = vmax.f32 %v5126, 0.0
        %v5159 = vmax.f32 %v5127, 0.0
        %v5160 = vmax.f32 %v5128, 0.0
        %v5161 = vmax.f32 %v5129, 0.0
        %v5162 = vmax.f32 %v5130, 0.0
        %v5163 = vmax.f32 %v5131, 0.0
        %v5164 = vmax.f32 %v5132, 0.0
        %v5165 = vmax.f32 %v5133, 0.0
        %v5166 = vmax.f32 %v5134, 0.0
        %v5167 = vmax.f32 %v5135, 0.0
        %v5168 = vmax.f32 %v5136, 0.0
        %v5169 = vmax.f32 %v5137, 0.0
        %v5170 = vmax.f32 %v5138, 0.0
        %v5171 = vmax.f32 %v5139, 0.0
        %5172 = vst [vmem:[%s313] sm:$0xff] %v5140
        %5173 = vst [vmem:[%s313 + $0x8] sm:$0xff] %v5141
        %5174 = vst [vmem:[%s313 + $0x10] sm:$0xff] %v5142
        %5175 = vst [vmem:[%s313 + $0x18] sm:$0xff] %v5143
        %5176 = vst [vmem:[%s313 + $0x20] sm:$0xff] %v5144
        %5177 = vst [vmem:[%s313 + $0x28] sm:$0xff] %v5145
        %5178 = vst [vmem:[%s313 + $0x30] sm:$0xff] %v5146
        %5179 = vst [vmem:[%s313 + $0x38] sm:$0xff] %v5147
        %5180 = vst [vmem:[%s313 + $0x40] sm:$0xff] %v5148
        %5181 = vst [vmem:[%s313 + $0x48] sm:$0xff] %v5149
        %5182 = vst [vmem:[%s313 + $0x50] sm:$0xff] %v5150
        %5183 = vst [vmem:[%s313 + $0x58] sm:$0xff] %v5151
        %5184 = vst [vmem:[%s313 + $0x60] sm:$0xff] %v5152
        %5185 = vst [vmem:[%s313 + $0x68] sm:$0xff] %v5153
        %5186 = vst [vmem:[%s313 + $0x70] sm:$0xff] %v5154
        %5187 = vst [vmem:[%s313 + $0x78] sm:$0xff] %v5155
        %5188 = vst [vmem:[%s313 + $0x80] sm:$0xff] %v5156
        %5189 = vst [vmem:[%s313 + $0x88] sm:$0xff] %v5157
        %5190 = vst [vmem:[%s313 + $0x90] sm:$0xff] %v5158
        %5191 = vst [vmem:[%s313 + $0x98] sm:$0xff] %v5159
        %5192 = vst [vmem:[%s313 + $0xa0] sm:$0xff] %v5160
        %5193 = vst [vmem:[%s313 + $0xa8] sm:$0xff] %v5161
        %5194 = vst [vmem:[%s313 + $0xb0] sm:$0xff] %v5162
        %5195 = vst [vmem:[%s313 + $0xb8] sm:$0xff] %v5163
        %5196 = vst [vmem:[%s313 + $0xc0] sm:$0xff] %v5164
        %5197 = vst [vmem:[%s313 + $0xc8] sm:$0xff] %v5165
        %5198 = vst [vmem:[%s313 + $0xd0] sm:$0xff] %v5166
        %5199 = vst [vmem:[%s313 + $0xd8] sm:$0xff] %v5167
        %5200 = vst [vmem:[%s313 + $0xe0] sm:$0xff] %v5168
        %5201 = vst [vmem:[%s313 + $0xe8] sm:$0xff] %v5169
        %5202 = vst [vmem:[%s313 + $0xf0] sm:$0xff] %v5170
        %5203 = vst [vmem:[%s313 + $0xf8] sm:$0xff] %v5171
        %s5204 = sand.u32 %s208, 1
        %s5205 = scalar_lea.sflag [#allocation4], %s5204
        %s5206 = sand.u32 %s208, 1
        %s5207 = smul.addr %s5206, 256
        %s5208 = scalar_lea.vmem [#allocation3], %s5207
        // Predicated region
        $region53: #{basic_block_forward.3} parent=51 // pred_check
          %p5209 = pneg %p218
        $region54: #{basic_block_forward.3} parent=51 // pred_check_branch
          %5211 = sbr.rel (%p5209) target = $region56
        $region55: #{basic_block_forward.3} parent=51 // pred_region
          %s5213 = ssub.s32 4096, 4096
          %5214 = vsyncadd %s5205, %s5213
          %s5215 = smul.addr %s22, 32
          %s5216 = smul.addr %s5215, 128
          %s5217 = scalar_lea.hbm %s8, %s5216
          %s5218 = sshll.u32 %s5208, 4
          %s5219 = int_to_ptr.vmem [resolvable:$true] %s5218
          %5224 = dma.vmem_to_hbm [thread:$0]  %s5219, 4096, %s5217, %s5205, 128, 128, 8
        $region56: #{basic_block_forward.3} parent=51 // pred_fallthru
          _
      $region52: #{basic_block_forward.3} parent=5 // pred_fallthru
        _
      %p5225 = scmp.le.s32.totalorder 2, %s17
      // Predicated region
      $region57: #{basic_block_forward.3} parent=5 // pred_check
        %p5226 = pneg %p5225
      $region58: #{basic_block_forward.3} parent=5 // pred_check_branch
        %5228 = sbr.rel (%p5226) target = $region60
      $region59: #{basic_block_forward.3} parent=5 // pred_region
        %s5229 = ssub.s32 %s17, 2
        // Predicated region
        $region61: #{basic_block_forward.3} parent=59 // pred_check
          %p5230 = pneg %p224
        $region62: #{basic_block_forward.3} parent=59 // pred_check_branch
          %5232 = sbr.rel (%p5230) target = $region64
        $region63: #{basic_block_forward.3} parent=59 // pred_region
          %s5233 = sand.u32 %s209, 1
          %s5234 = scalar_lea.sflag [#allocation4], %s5233
          %s5235 = sand.u32 %s209, 1
          %s5236 = smul.addr %s5235, 256
          %s5237 = scalar_lea.vmem [#allocation3], %s5236
          %5238 = dma.done %s5234, 4096
        $region64: #{basic_block_forward.3} parent=59 // pred_fallthru
          _
      $region60: #{basic_block_forward.3} parent=5 // pred_fallthru
        _
    $region6: #{basic_block_forward.3} parent=1 // loop_footer
      %s21 = sadd.s32 1, %s17
    $region7: #{basic_block_forward.3} parent=1 // loop_footer_branch
      %16 = sbr.rel target = $region3
    $region8: #{basic_block_forward.3} parent=1 // loop_exit
      _
    %5239 = vsyncpa [#allocation4], 1
    %s5240 = scalar_lea.sflag [#allocation4], 1
    %5241 = vsyncpa %s5240, 1

</llo_original>
